<compile_context>
chip_gen: v7x
topology: tpu7x:2x2x1
jax: 0.10.0
libtpu: 0.0.40
codegen_flags: <defaults>
</compile_context>

<pallas_src>
import functools

import jax
import jax.numpy as jnp
import numpy as np
from jax.experimental import pallas as pl
from jax.experimental.pallas import tpu as pltpu

LANE = 128  # TPU lane width; every channel group is zero-padded to this.


# ------------------------------- kernel -------------------------------------


def _vae_kernel(xin_ref, w_ref, b_ref, out_ref, *, L, wmap, bmap, compute_dtype):
    M = xin_ref.shape[0]                       # Bt * L rows in this slab
    cd = compute_dtype

    def getw(name):
        off, rows, cols = wmap[name]
        return w_ref[off:off + rows, :cols]    # static, lane-group aligned

    def getb(name):
        row, cols = bmap[name]
        return b_ref[row:row + 1, :cols]       # (1, cols) f32, broadcasts

    # Hoisted boundary masks: row r belongs to sequence position (r % L).
    pos = jax.lax.broadcasted_iota(jnp.int32, (M, 1), 0) % L
    not_first = pos != 0                       # valid left neighbour exists
    not_last = pos != (L - 1)                  # valid right neighbour exists

    def mm(a, name):
        # Weights were pre-cast to compute_dtype host-side; f32 accumulation.
        return jnp.dot(a, getw(name), preferred_element_type=jnp.float32)

    def conv(a, name):
        # Conv1d(kernel=3, padding=1): shift the matmul OUTPUT instead of the
        # input.  Each tap lives in its own 128-lane group of the packed
        # weight, so the slices, sublane rolls and adds below are all
        # lane-group aligned (no lane relayouts, no channel concat).
        u = mm(a, name)                        # (M, 3*128) f32
        u0 = u[:, 0:LANE]                      # tap applied to x[l-1]
        u1 = u[:, LANE:2 * LANE]               # tap applied to x[l]
        u2 = u[:, 2 * LANE:3 * LANE]           # tap applied to x[l+1]
        left = jnp.where(not_first, pltpu.roll(u0, shift=1, axis=0), 0.0)
        right = jnp.where(not_last, pltpu.roll(u2, shift=M - 1, axis=0), 0.0)
        return (left + u1 + right + getb(name)).astype(cd)

    x0 = xin_ref[:, 0:LANE].astype(cd)         # x, zero-padded to 128 lanes
    eps = xin_ref[:, LANE:2 * LANE]            # eps, zero-padded, f32

    # ---- EncoderCNN (no activation between convs, per PyTorch forward) ----
    h = conv(x0, "c1")
    h = conv(h, "c2")
    h = conv(h, "c3")
    # Fused fc_mean|fc_logvar head: mean in lanes [0,128), logvar in [128,256).
    mlv = mm(h, "fcmlv") + getb("fcmlv")       # (M, 256) f32
    mean = mlv[:, 0:LANE]
    logvar = mlv[:, LANE:2 * LANE]

    # ---- sample_latent: z = mean + eps * exp(0.5 * logvar) ----
    # (padded lanes: mean=logvar=eps=0 -> z=0 there, decoder fc rows are 0)
    z = mean + eps * jnp.exp(0.5 * logvar)

    # ---- DecoderCNN ----
    d = mm(z.astype(cd), "dfc") + getb("dfc")  # (M, 128) f32
    d = jnp.where(d > 0, d, 0.01 * d).astype(cd)   # LeakyReLU (default 0.01)
    d = conv(d, "d1")
    d = conv(d, "d2")
    d = conv(d, "d3")                          # recon in lanes [0, output_size)

    # Lane-dense fused output slab: recon | mean | logvar, one 128-lane group
    # each -> unmasked stores and a single wide output DMA stream.
    out_ref[:, 0:LANE] = d.astype(out_ref.dtype)
    out_ref[:, LANE:2 * LANE] = mean.astype(out_ref.dtype)
    out_ref[:, 2 * LANE:3 * LANE] = logvar.astype(out_ref.dtype)


# -------------------------- host-side param packing -------------------------

_PACK_ORDER = ("c1", "c2", "c3", "fcmlv", "dfc", "d1", "d2", "d3")


def _pack_conv_w(w):
    """PyTorch Conv1d weight (Cout, Cin, 3) -> (128, 3*128).
    K (input channels) zero-padded to 128 rows; tap k (applied to x[l-1+k])
    occupies lane group k, zero-padded to 128 output lanes."""
    w = np.asarray(w, np.float32)
    cout, cin, _ = w.shape
    out = np.zeros((LANE, 3 * LANE), np.float32)
    for k in range(3):
        out[:cin, k * LANE:k * LANE + cout] = w[:, :, k].T
    return out


def pack_params(p):
    """Pack all weights into one (8*128, 384) slab + one (8, 384) bias slab.
    Every block is 128 rows; conv blocks use 3*128 cols (one lane group per
    tap), the fused mean|logvar head uses 2*128 cols, the decoder fc 128."""
    latent = int(p["fcm_w"].shape[0])

    def conv_entry(wk, bk):
        w = _pack_conv_w(p[wk])
        b = np.zeros((LANE,), np.float32)
        bv = np.asarray(p[bk], np.float32)
        b[:bv.shape[0]] = bv
        return w, b

    fcmlv_w = np.zeros((LANE, 2 * LANE), np.float32)
    fcmlv_w[:, :latent] = np.asarray(p["fcm_w"], np.float32).T
    fcmlv_w[:, LANE:LANE + latent] = np.asarray(p["fclv_w"], np.float32).T
    fcmlv_b = np.zeros((2 * LANE,), np.float32)
    fcmlv_b[:latent] = np.asarray(p["fcm_b"], np.float32)
    fcmlv_b[LANE:LANE + latent] = np.asarray(p["fclv_b"], np.float32)

    dfc_w = np.zeros((LANE, LANE), np.float32)
    dfc_w[:latent, :] = np.asarray(p["dfc_w"], np.float32).T
    dfc_b = np.asarray(p["dfc_b"], np.float32).copy()      # exactly 128 wide

    entries = {
        "c1": conv_entry("c1_w", "c1_b"),
        "c2": conv_entry("c2_w", "c2_b"),
        "c3": conv_entry("c3_w", "c3_b"),
        "fcmlv": (fcmlv_w, fcmlv_b),
        "dfc": (dfc_w, dfc_b),
        "d1": conv_entry("d1_w", "d1_b"),
        "d2": conv_entry("d2_w", "d2_b"),
        "d3": conv_entry("d3_w", "d3_b"),
    }

    n_cols = 3 * LANE
    n_bias_rows = -(-len(_PACK_ORDER) // 8) * 8
    w_slab = np.zeros((len(_PACK_ORDER) * LANE, n_cols), np.float32)
    b_slab = np.zeros((n_bias_rows, n_cols), np.float32)
    wmap, bmap = {}, {}
    for i, name in enumerate(_PACK_ORDER):
        w, b = entries[name]
        off = i * LANE
        wmap[name] = (off, LANE, int(w.shape[1]))
        bmap[name] = (i, int(b.shape[0]))
        w_slab[off:off + LANE, :w.shape[1]] = w
        b_slab[i, :b.shape[0]] = b

    layout = {"wmap": wmap, "bmap": bmap, "latent_dim": latent,
              "output_size": int(p["d3_w"].shape[0]),
              "input_size": int(p["c1_w"].shape[1])}
    return jnp.asarray(w_slab), jnp.asarray(b_slab), layout


# -------------------------------- wrapper ------------------------------------


def _default_min_grid_steps():
    """>=2 'parallel' grid steps keeps both v7x TensorCores busy; on single-TC
    chips (v5e/v6e) one big slab avoids per-step overhead in the serial grid."""
    try:
        kind = jax.devices()[0].device_kind.lower()
    except Exception:
        return 2
    single_tc = ("v5 lite" in kind or "v5e" in kind or "v5litepod" in kind
                 or "v6" in kind)
    return 1 if single_tc else 2


def _choose_block_batch(B, L, *, min_grid_steps, max_rows=2048):
    """Largest batch tile whose row count (Bt*L) satisfies the sublane rule
    ((Bt*L) % 8 == 0, or the full array), fits max_rows, and — when possible —
    leaves at least min_grid_steps grid steps."""
    cands = [bt for bt in range(1, B + 1)
             if B % bt == 0 and bt * L <= max_rows and (bt * L) % 8 == 0]
    if B * L <= max_rows:
        cands.append(B)                    # full array is always legal
    cands = sorted(set(cands))
    if not cands:
        return B
    stepped = [bt for bt in cands if B // bt >= min_grid_steps]
    return max(stepped) if stepped else max(cands)


def vae_cnn_forward(x, eps, packed, *, compute_dtype=jnp.float32,
                    block_batch=None):
    """x: (B, L, input_size), eps: (B, L, latent_dim) -> (recon, mean, logvar)."""
    w_slab, b_slab, layout = packed
    B, L, Cin = x.shape
    latent = layout["latent_dim"]
    out_sz = layout["output_size"]
    assert Cin == layout["input_size"] and eps.shape == (B, L, latent)
    assert Cin <= LANE and latent <= LANE and out_sz <= LANE

    Bt = block_batch or _choose_block_batch(
        B, L, min_grid_steps=_default_min_grid_steps())
    assert B % Bt == 0 and ((Bt * L) % 8 == 0 or Bt == B)
    M = Bt * L
    grid = (B // Bt,)

    # One fused, lane-group-padded input slab: x in lanes [0,Cin) of group 0,
    # eps in lanes [0,latent) of group 1, zeros elsewhere.
    xin = jnp.zeros((B * L, 2 * LANE), jnp.float32)
    xin = xin.at[:, :Cin].set(x.reshape(B * L, Cin).astype(jnp.float32))
    xin = xin.at[:, LANE:LANE + latent].set(
        eps.reshape(B * L, latent).astype(jnp.float32))

    # Pre-cast weights to the MXU operand dtype host-side (halves weight DMA
    # and removes per-step casts on the bf16 path); biases stay f32.
    w_cd = w_slab.astype(compute_dtype)

    kernel = functools.partial(
        _vae_kernel, L=L, wmap=layout["wmap"], bmap=layout["bmap"],
        compute_dtype=compute_dtype)

    out2 = pl.pallas_call(
        kernel,
        out_shape=jax.ShapeDtypeStruct((B * L, 3 * LANE), jnp.float32),
        grid_spec=pltpu.PrefetchScalarGridSpec(
            num_scalar_prefetch=0,
            grid=grid,
            in_specs=[
                pl.BlockSpec((M, 2 * LANE), lambda g: (g, 0)),
                # TODO(synk): pipeline_mode=pl.Buffered(1) on the two constant
                # blocks below would drop one redundant VMEM buffer (~1.5 MiB);
                # left at the default for maximum compatibility.
                pl.BlockSpec(tuple(w_cd.shape), lambda g: (0, 0)),
                pl.BlockSpec(tuple(b_slab.shape), lambda g: (0, 0)),
            ],
            out_specs=pl.BlockSpec((M, 3 * LANE), lambda g: (g, 0)),
        ),
        compiler_params=pltpu.CompilerParams(
            dimension_semantics=("parallel",)),
    )(xin, w_cd, b_slab)

    recon = out2[:, :out_sz].reshape(B, L, out_sz)
    mean = out2[:, LANE:LANE + latent].reshape(B, L, latent)
    logvar = out2[:, 2 * LANE:2 * LANE + latent].reshape(B, L, latent)
    return recon, mean, logvar


# --------------------------- reference (pure JAX) ----------------------------


def _conv1d_ref(x, w, b):
    # x: (B, L, Cin); w: PyTorch layout (Cout, Cin, 3); b: (Cout,)
    xm1 = jnp.pad(x, ((0, 0), (1, 0), (0, 0)))[:, :-1]
    xp1 = jnp.pad(x, ((0, 0), (0, 1), (0, 0)))[:, 1:]
    return (jnp.einsum("blc,oc->blo", xm1, w[:, :, 0])
            + jnp.einsum("blc,oc->blo", x, w[:, :, 1])
            + jnp.einsum("blc,oc->blo", xp1, w[:, :, 2]) + b)


def vae_cnn_ref(x, eps, p):
    h = _conv1d_ref(x, p["c1_w"], p["c1_b"])
    h = _conv1d_ref(h, p["c2_w"], p["c2_b"])
    h = _conv1d_ref(h, p["c3_w"], p["c3_b"])
    mean = h @ p["fcm_w"].T + p["fcm_b"]
    logvar = h @ p["fclv_w"].T + p["fclv_b"]
    z = mean + eps * jnp.exp(0.5 * logvar)
    d = z @ p["dfc_w"].T + p["dfc_b"]
    d = jnp.where(d > 0, d, 0.01 * d)
    d = _conv1d_ref(d, p["d1_w"], p["d1_b"])
    d = _conv1d_ref(d, p["d2_w"], p["d2_b"])
    d = _conv1d_ref(d, p["d3_w"], p["d3_b"])
    return d, mean, logvar


# -------------------------------- param init ---------------------------------


def init_params(key, input_size, latent_dim, output_size):
    """Synthetic weights in PyTorch layout: Conv1d (Cout, Cin, 3), Linear (out, in)."""
    ks = iter(jax.random.split(key, 18))

    def conv_w(cout, cin):
        return (jax.random.normal(next(ks), (cout, cin, 3), jnp.float32)
                / np.sqrt(3 * cin))

    def lin_w(cout, cin):
        return jax.random.normal(next(ks), (cout, cin), jnp.float32) / np.sqrt(cin)

    def bias(cout):
        return jax.random.normal(next(ks), (cout,), jnp.float32) * 0.01

    p = {}
    p["c1_w"], p["c1_b"] = conv_w(32, input_size), bias(32)
    p["c2_w"], p["c2_b"] = conv_w(64, 32), bias(64)
    p["c3_w"], p["c3_b"] = conv_w(128, 64), bias(128)
    p["fcm_w"], p["fcm_b"] = lin_w(latent_dim, 128), bias(latent_dim)
    p["fclv_w"], p["fclv_b"] = lin_w(latent_dim, 128), bias(latent_dim)
    p["dfc_w"], p["dfc_b"] = lin_w(128, latent_dim), bias(128)
    p["d1_w"], p["d1_b"] = conv_w(64, 128), bias(64)
    p["d2_w"], p["d2_b"] = conv_w(32, 64), bias(32)
    p["d3_w"], p["d3_b"] = conv_w(output_size, 32), bias(output_size)
    return p


# ----------------------------------- main ------------------------------------


if __name__ == "__main__":
    B, L = 32, 16                      # 512 rows total; 1 or 2 grid steps
    input_size, latent_dim, output_size = 8, 16, 8

    key = jax.random.PRNGKey(0)
    k_x, k_eps, k_p = jax.random.split(key, 3)

    x = jax.random.normal(k_x, (B, L, input_size), jnp.float32)
    # Reparameterization noise is generated outside the kernel so the Pallas
    # result is checkable against a pure-JAX reference.
    eps = jax.random.normal(k_eps, (B, L, latent_dim), jnp.float32)
    params = init_params(k_p, input_size, latent_dim, output_size)
    packed = pack_params(params)

    # f32 MXU-operand path (tight check).
    recon, mean, logvar = jax.block_until_ready(
        vae_cnn_forward(x, eps, packed, compute_dtype=jnp.float32))
    r_ref, m_ref, lv_ref = vae_cnn_ref(x, eps, params)
    np.testing.assert_allclose(np.asarray(recon), np.asarray(r_ref),
                               rtol=1e-4, atol=1e-4)
    np.testing.assert_allclose(np.asarray(mean), np.asarray(m_ref),
                               rtol=1e-4, atol=1e-4)
    np.testing.assert_allclose(np.asarray(logvar), np.asarray(lv_ref),
                               rtol=1e-4, atol=1e-4)

    # bf16 MXU-operand / bf16-activation path (v6e/v7x fast path), loose check.
    recon_bf, mean_bf, logvar_bf = jax.block_until_ready(
        vae_cnn_forward(x, eps, packed, compute_dtype=jnp.bfloat16))
    np.testing.assert_allclose(np.asarray(recon_bf), np.asarray(r_ref),
                               rtol=1e-1, atol=1e-1)
    np.testing.assert_allclose(np.asarray(mean_bf), np.asarray(m_ref),
                               rtol=1e-1, atol=1e-1)
    np.testing.assert_allclose(np.asarray(logvar_bf), np.asarray(lv_ref),
                               rtol=1e-1, atol=1e-1)

    print("KERNEL_OK")
</pallas_src>

<mosaic_0001>
module attributes {stable_mosaic.version = 11 : i64} {
  func.func @_vae_kernel(%arg0: i32, %arg1: memref<256x256xf32, #tpu.memory_space<vmem>>, %arg2: memref<1024x384xf32, #tpu.memory_space<vmem>>, %arg3: memref<8x384xf32, #tpu.memory_space<vmem>>, %arg4: memref<256x384xf32, #tpu.memory_space<vmem>>) attributes {dimension_semantics = [#tpu.dimension_semantics<parallel>], iteration_bounds = array<i64: 2>, scalar_prefetch = 0 : i64, scratch_operands = 0 : i64, tpu.core_type = #tpu.core_type<tc>, window_params = [{transform_indices = @transform_0, window_bounds = array<i64: 256, 256>}, {pipeline_mode = #tpu.pipeline_mode<synchronous>, transform_indices = @transform_1, window_bounds = array<i64: 1024, 384>}, {pipeline_mode = #tpu.pipeline_mode<synchronous>, transform_indices = @transform_2, window_bounds = array<i64: 8, 384>}, {transform_indices = @transform_3, window_bounds = array<i64: 256, 384>}]} {
    %0 = tpu.iota {dimensions = array<i32: 0>} : vector<256x1xi32>
    %c16_i32 = arith.constant 16 : i32
    %c0_i32 = arith.constant 0 : i32
    %1 = arith.cmpi eq, %c16_i32, %c0_i32 : i32
    %c1_i32 = arith.constant 1 : i32
    %2 = arith.select %1, %c1_i32, %c16_i32 : i32
    %3 = vector.broadcast %2 : i32 to vector<256x1xi32>
    %4 = arith.remsi %0, %3 : vector<256x1xi32>
    %c0_i32_0 = arith.constant 0 : i32
    %5 = vector.broadcast %c0_i32_0 : i32 to vector<256x1xi32>
    %6 = arith.cmpi ne, %4, %5 : vector<256x1xi32>
    %c0_i32_1 = arith.constant 0 : i32
    %7 = vector.broadcast %c0_i32_1 : i32 to vector<256x1xi32>
    %8 = arith.cmpi slt, %4, %7 : vector<256x1xi32>
    %c0_i32_2 = arith.constant 0 : i32
    %9 = arith.cmpi slt, %2, %c0_i32_2 : i32
    %10 = vector.broadcast %9 : i1 to vector<256x1xi1>
    %11 = vector.broadcast %10 : vector<256x1xi1> to vector<256x1xi1>
    %12 = arith.xori %8, %11 : vector<256x1xi1>
    %13 = arith.andi %12, %6 : vector<256x1xi1>
    %14 = vector.broadcast %2 : i32 to vector<256x1xi32>
    %15 = arith.addi %4, %14 : vector<256x1xi32>
    %16 = arith.select %13, %15, %4 : vector<256x1xi1>, vector<256x1xi32>
    %c0_i32_3 = arith.constant 0 : i32
    %17 = vector.broadcast %c0_i32_3 : i32 to vector<256x1xi32>
    %18 = arith.cmpi ne, %16, %17 : vector<256x1xi32>
    %c15_i32 = arith.constant 15 : i32
    %19 = vector.broadcast %c15_i32 : i32 to vector<256x1xi32>
    %20 = arith.cmpi ne, %16, %19 : vector<256x1xi32>
    %c0 = arith.constant 0 : index
    %c0_4 = arith.constant 0 : index
    %21 = vector.load %arg1[%c0, %c0_4] : memref<256x256xf32, #tpu.memory_space<vmem>>, vector<256x128xf32>
    %c0_5 = arith.constant 0 : index
    %c128 = arith.constant 128 : index
    %22 = vector.load %arg1[%c0_5, %c128] : memref<256x256xf32, #tpu.memory_space<vmem>>, vector<256x128xf32>
    %c0_6 = arith.constant 0 : index
    %c0_7 = arith.constant 0 : index
    %23 = vector.load %arg2[%c0_6, %c0_7] : memref<1024x384xf32, #tpu.memory_space<vmem>>, vector<128x384xf32>
    %cst = arith.constant dense<0.000000e+00> : vector<256x384xf32>
    %24 = tpu.matmul %21, %23, %cst {dimension_numbers = #tpu.dot_dimension_numbers<[1], [0], [0], [1], [0, 0, 1, 1], [], []>} : vector<256x128xf32>, vector<128x384xf32>, vector<256x384xf32> -> vector<256x384xf32>
    %25 = vector.extract_strided_slice %24 {offsets = [0, 0], sizes = [256, 128], strides = [1, 1]} : vector<256x384xf32> to vector<256x128xf32>
    %26 = vector.extract_strided_slice %24 {offsets = [0, 128], sizes = [256, 128], strides = [1, 1]} : vector<256x384xf32> to vector<256x128xf32>
    %27 = vector.extract_strided_slice %24 {offsets = [0, 256], sizes = [256, 128], strides = [1, 1]} : vector<256x384xf32> to vector<256x128xf32>
    %c1_i32_8 = arith.constant 1 : i32
    %28 = tpu.dynamic_rotate %25 by %c1_i32_8 dim 0 : vector<256x128xf32>, i32 -> vector<256x128xf32>
    %cst_9 = arith.constant 0.000000e+00 : f32
    %29 = vector.shape_cast %18 : vector<256x1xi1> to vector<256x1xi1>
    %30 = vector.broadcast %29 : vector<256x1xi1> to vector<256x128xi1>
    %31 = vector.broadcast %cst_9 : f32 to vector<256x128xf32>
    %32 = arith.select %30, %28, %31 : vector<256x128xi1>, vector<256x128xf32>
    %c255_i32 = arith.constant 255 : i32
    %33 = tpu.dynamic_rotate %27 by %c255_i32 dim 0 : vector<256x128xf32>, i32 -> vector<256x128xf32>
    %cst_10 = arith.constant 0.000000e+00 : f32
    %34 = vector.shape_cast %20 : vector<256x1xi1> to vector<256x1xi1>
    %35 = vector.broadcast %34 : vector<256x1xi1> to vector<256x128xi1>
    %36 = vector.broadcast %cst_10 : f32 to vector<256x128xf32>
    %37 = arith.select %35, %33, %36 : vector<256x128xi1>, vector<256x128xf32>
    %38 = arith.addf %32, %26 : vector<256x128xf32>
    %39 = arith.addf %38, %37 : vector<256x128xf32>
    %c0_11 = arith.constant 0 : index
    %c0_12 = arith.constant 0 : index
    %40 = vector.load %arg3[%c0_11, %c0_12] : memref<8x384xf32, #tpu.memory_space<vmem>>, vector<1x128xf32>
    %41 = vector.broadcast %40 : vector<1x128xf32> to vector<256x128xf32>
    %42 = arith.addf %39, %41 : vector<256x128xf32>
    %c128_13 = arith.constant 128 : index
    %c0_14 = arith.constant 0 : index
    %43 = vector.load %arg2[%c128_13, %c0_14] : memref<1024x384xf32, #tpu.memory_space<vmem>>, vector<128x384xf32>
    %cst_15 = arith.constant dense<0.000000e+00> : vector<256x384xf32>
    %44 = tpu.matmul %42, %43, %cst_15 {dimension_numbers = #tpu.dot_dimension_numbers<[1], [0], [0], [1], [0, 0, 1, 1], [], []>} : vector<256x128xf32>, vector<128x384xf32>, vector<256x384xf32> -> vector<256x384xf32>
    %45 = vector.extract_strided_slice %44 {offsets = [0, 0], sizes = [256, 128], strides = [1, 1]} : vector<256x384xf32> to vector<256x128xf32>
    %46 = vector.extract_strided_slice %44 {offsets = [0, 128], sizes = [256, 128], strides = [1, 1]} : vector<256x384xf32> to vector<256x128xf32>
    %47 = vector.extract_strided_slice %44 {offsets = [0, 256], sizes = [256, 128], strides = [1, 1]} : vector<256x384xf32> to vector<256x128xf32>
    %c1_i32_16 = arith.constant 1 : i32
    %48 = tpu.dynamic_rotate %45 by %c1_i32_16 dim 0 : vector<256x128xf32>, i32 -> vector<256x128xf32>
    %cst_17 = arith.constant 0.000000e+00 : f32
    %49 = vector.shape_cast %18 : vector<256x1xi1> to vector<256x1xi1>
    %50 = vector.broadcast %49 : vector<256x1xi1> to vector<256x128xi1>
    %51 = vector.broadcast %cst_17 : f32 to vector<256x128xf32>
    %52 = arith.select %50, %48, %51 : vector<256x128xi1>, vector<256x128xf32>
    %c255_i32_18 = arith.constant 255 : i32
    %53 = tpu.dynamic_rotate %47 by %c255_i32_18 dim 0 : vector<256x128xf32>, i32 -> vector<256x128xf32>
    %cst_19 = arith.constant 0.000000e+00 : f32
    %54 = vector.shape_cast %20 : vector<256x1xi1> to vector<256x1xi1>
    %55 = vector.broadcast %54 : vector<256x1xi1> to vector<256x128xi1>
    %56 = vector.broadcast %cst_19 : f32 to vector<256x128xf32>
    %57 = arith.select %55, %53, %56 : vector<256x128xi1>, vector<256x128xf32>
    %58 = arith.addf %52, %46 : vector<256x128xf32>
    %59 = arith.addf %58, %57 : vector<256x128xf32>
    %c1 = arith.constant 1 : index
    %c0_20 = arith.constant 0 : index
    %60 = vector.load %arg3[%c1, %c0_20] : memref<8x384xf32, #tpu.memory_space<vmem>>, vector<1x128xf32>
    %61 = vector.broadcast %60 : vector<1x128xf32> to vector<256x128xf32>
    %62 = arith.addf %59, %61 : vector<256x128xf32>
    %c256 = arith.constant 256 : index
    %c0_21 = arith.constant 0 : index
    %63 = vector.load %arg2[%c256, %c0_21] : memref<1024x384xf32, #tpu.memory_space<vmem>>, vector<128x384xf32>
    %cst_22 = arith.constant dense<0.000000e+00> : vector<256x384xf32>
    %64 = tpu.matmul %62, %63, %cst_22 {dimension_numbers = #tpu.dot_dimension_numbers<[1], [0], [0], [1], [0, 0, 1, 1], [], []>} : vector<256x128xf32>, vector<128x384xf32>, vector<256x384xf32> -> vector<256x384xf32>
    %65 = vector.extract_strided_slice %64 {offsets = [0, 0], sizes = [256, 128], strides = [1, 1]} : vector<256x384xf32> to vector<256x128xf32>
    %66 = vector.extract_strided_slice %64 {offsets = [0, 128], sizes = [256, 128], strides = [1, 1]} : vector<256x384xf32> to vector<256x128xf32>
    %67 = vector.extract_strided_slice %64 {offsets = [0, 256], sizes = [256, 128], strides = [1, 1]} : vector<256x384xf32> to vector<256x128xf32>
    %c1_i32_23 = arith.constant 1 : i32
    %68 = tpu.dynamic_rotate %65 by %c1_i32_23 dim 0 : vector<256x128xf32>, i32 -> vector<256x128xf32>
    %cst_24 = arith.constant 0.000000e+00 : f32
    %69 = vector.shape_cast %18 : vector<256x1xi1> to vector<256x1xi1>
    %70 = vector.broadcast %69 : vector<256x1xi1> to vector<256x128xi1>
    %71 = vector.broadcast %cst_24 : f32 to vector<256x128xf32>
    %72 = arith.select %70, %68, %71 : vector<256x128xi1>, vector<256x128xf32>
    %c255_i32_25 = arith.constant 255 : i32
    %73 = tpu.dynamic_rotate %67 by %c255_i32_25 dim 0 : vector<256x128xf32>, i32 -> vector<256x128xf32>
    %cst_26 = arith.constant 0.000000e+00 : f32
    %74 = vector.shape_cast %20 : vector<256x1xi1> to vector<256x1xi1>
    %75 = vector.broadcast %74 : vector<256x1xi1> to vector<256x128xi1>
    %76 = vector.broadcast %cst_26 : f32 to vector<256x128xf32>
    %77 = arith.select %75, %73, %76 : vector<256x128xi1>, vector<256x128xf32>
    %78 = arith.addf %72, %66 : vector<256x128xf32>
    %79 = arith.addf %78, %77 : vector<256x128xf32>
    %c2 = arith.constant 2 : index
    %c0_27 = arith.constant 0 : index
    %80 = vector.load %arg3[%c2, %c0_27] : memref<8x384xf32, #tpu.memory_space<vmem>>, vector<1x128xf32>
    %81 = vector.broadcast %80 : vector<1x128xf32> to vector<256x128xf32>
    %82 = arith.addf %79, %81 : vector<256x128xf32>
    %c384 = arith.constant 384 : index
    %c0_28 = arith.constant 0 : index
    %83 = vector.load %arg2[%c384, %c0_28] : memref<1024x384xf32, #tpu.memory_space<vmem>>, vector<128x256xf32>
    %cst_29 = arith.constant dense<0.000000e+00> : vector<256x256xf32>
    %84 = tpu.matmul %82, %83, %cst_29 {dimension_numbers = #tpu.dot_dimension_numbers<[1], [0], [0], [1], [0, 0, 1, 1], [], []>} : vector<256x128xf32>, vector<128x256xf32>, vector<256x256xf32> -> vector<256x256xf32>
    %c3 = arith.constant 3 : index
    %c0_30 = arith.constant 0 : index
    %85 = vector.load %arg3[%c3, %c0_30] : memref<8x384xf32, #tpu.memory_space<vmem>>, vector<1x256xf32>
    %86 = vector.broadcast %85 : vector<1x256xf32> to vector<256x256xf32>
    %87 = arith.addf %84, %86 : vector<256x256xf32>
    %88 = vector.extract_strided_slice %87 {offsets = [0, 0], sizes = [256, 128], strides = [1, 1]} : vector<256x256xf32> to vector<256x128xf32>
    %89 = vector.extract_strided_slice %87 {offsets = [0, 128], sizes = [256, 128], strides = [1, 1]} : vector<256x256xf32> to vector<256x128xf32>
    %cst_31 = arith.constant 5.000000e-01 : f32
    %90 = vector.broadcast %cst_31 : f32 to vector<256x128xf32>
    %91 = arith.mulf %90, %89 : vector<256x128xf32>
    %92 = math.exp %91 : vector<256x128xf32>
    %93 = arith.mulf %22, %92 : vector<256x128xf32>
    %94 = arith.addf %88, %93 : vector<256x128xf32>
    %c512 = arith.constant 512 : index
    %c0_32 = arith.constant 0 : index
    %95 = vector.load %arg2[%c512, %c0_32] : memref<1024x384xf32, #tpu.memory_space<vmem>>, vector<128x128xf32>
    %cst_33 = arith.constant dense<0.000000e+00> : vector<256x128xf32>
    %96 = tpu.matmul %94, %95, %cst_33 {dimension_numbers = #tpu.dot_dimension_numbers<[1], [0], [0], [1], [0, 0, 1, 1], [], []>} : vector<256x128xf32>, vector<128x128xf32>, vector<256x128xf32> -> vector<256x128xf32>
    %c4 = arith.constant 4 : index
    %c0_34 = arith.constant 0 : index
    %97 = vector.load %arg3[%c4, %c0_34] : memref<8x384xf32, #tpu.memory_space<vmem>>, vector<1x128xf32>
    %98 = vector.broadcast %97 : vector<1x128xf32> to vector<256x128xf32>
    %99 = arith.addf %96, %98 : vector<256x128xf32>
    %cst_35 = arith.constant 0.000000e+00 : f32
    %100 = vector.broadcast %cst_35 : f32 to vector<256x128xf32>
    %101 = arith.cmpf ogt, %99, %100 : vector<256x128xf32>
    %cst_36 = arith.constant 0.00999999977 : f32
    %102 = vector.broadcast %cst_36 : f32 to vector<256x128xf32>
    %103 = arith.mulf %102, %99 : vector<256x128xf32>
    %104 = arith.select %101, %99, %103 : vector<256x128xi1>, vector<256x128xf32>
    %c640 = arith.constant 640 : index
    %c0_37 = arith.constant 0 : index
    %105 = vector.load %arg2[%c640, %c0_37] : memref<1024x384xf32, #tpu.memory_space<vmem>>, vector<128x384xf32>
    %cst_38 = arith.constant dense<0.000000e+00> : vector<256x384xf32>
    %106 = tpu.matmul %104, %105, %cst_38 {dimension_numbers = #tpu.dot_dimension_numbers<[1], [0], [0], [1], [0, 0, 1, 1], [], []>} : vector<256x128xf32>, vector<128x384xf32>, vector<256x384xf32> -> vector<256x384xf32>
    %107 = vector.extract_strided_slice %106 {offsets = [0, 0], sizes = [256, 128], strides = [1, 1]} : vector<256x384xf32> to vector<256x128xf32>
    %108 = vector.extract_strided_slice %106 {offsets = [0, 128], sizes = [256, 128], strides = [1, 1]} : vector<256x384xf32> to vector<256x128xf32>
    %109 = vector.extract_strided_slice %106 {offsets = [0, 256], sizes = [256, 128], strides = [1, 1]} : vector<256x384xf32> to vector<256x128xf32>
    %c1_i32_39 = arith.constant 1 : i32
    %110 = tpu.dynamic_rotate %107 by %c1_i32_39 dim 0 : vector<256x128xf32>, i32 -> vector<256x128xf32>
    %cst_40 = arith.constant 0.000000e+00 : f32
    %111 = vector.shape_cast %18 : vector<256x1xi1> to vector<256x1xi1>
    %112 = vector.broadcast %111 : vector<256x1xi1> to vector<256x128xi1>
    %113 = vector.broadcast %cst_40 : f32 to vector<256x128xf32>
    %114 = arith.select %112, %110, %113 : vector<256x128xi1>, vector<256x128xf32>
    %c255_i32_41 = arith.constant 255 : i32
    %115 = tpu.dynamic_rotate %109 by %c255_i32_41 dim 0 : vector<256x128xf32>, i32 -> vector<256x128xf32>
    %cst_42 = arith.constant 0.000000e+00 : f32
    %116 = vector.shape_cast %20 : vector<256x1xi1> to vector<256x1xi1>
    %117 = vector.broadcast %116 : vector<256x1xi1> to vector<256x128xi1>
    %118 = vector.broadcast %cst_42 : f32 to vector<256x128xf32>
    %119 = arith.select %117, %115, %118 : vector<256x128xi1>, vector<256x128xf32>
    %120 = arith.addf %114, %108 : vector<256x128xf32>
    %121 = arith.addf %120, %119 : vector<256x128xf32>
    %c5 = arith.constant 5 : index
    %c0_43 = arith.constant 0 : index
    %122 = vector.load %arg3[%c5, %c0_43] : memref<8x384xf32, #tpu.memory_space<vmem>>, vector<1x128xf32>
    %123 = vector.broadcast %122 : vector<1x128xf32> to vector<256x128xf32>
    %124 = arith.addf %121, %123 : vector<256x128xf32>
    %c768 = arith.constant 768 : index
    %c0_44 = arith.constant 0 : index
    %125 = vector.load %arg2[%c768, %c0_44] : memref<1024x384xf32, #tpu.memory_space<vmem>>, vector<128x384xf32>
    %cst_45 = arith.constant dense<0.000000e+00> : vector<256x384xf32>
    %126 = tpu.matmul %124, %125, %cst_45 {dimension_numbers = #tpu.dot_dimension_numbers<[1], [0], [0], [1], [0, 0, 1, 1], [], []>} : vector<256x128xf32>, vector<128x384xf32>, vector<256x384xf32> -> vector<256x384xf32>
    %127 = vector.extract_strided_slice %126 {offsets = [0, 0], sizes = [256, 128], strides = [1, 1]} : vector<256x384xf32> to vector<256x128xf32>
    %128 = vector.extract_strided_slice %126 {offsets = [0, 128], sizes = [256, 128], strides = [1, 1]} : vector<256x384xf32> to vector<256x128xf32>
    %129 = vector.extract_strided_slice %126 {offsets = [0, 256], sizes = [256, 128], strides = [1, 1]} : vector<256x384xf32> to vector<256x128xf32>
    %c1_i32_46 = arith.constant 1 : i32
    %130 = tpu.dynamic_rotate %127 by %c1_i32_46 dim 0 : vector<256x128xf32>, i32 -> vector<256x128xf32>
    %cst_47 = arith.constant 0.000000e+00 : f32
    %131 = vector.shape_cast %18 : vector<256x1xi1> to vector<256x1xi1>
    %132 = vector.broadcast %131 : vector<256x1xi1> to vector<256x128xi1>
    %133 = vector.broadcast %cst_47 : f32 to vector<256x128xf32>
    %134 = arith.select %132, %130, %133 : vector<256x128xi1>, vector<256x128xf32>
    %c255_i32_48 = arith.constant 255 : i32
    %135 = tpu.dynamic_rotate %129 by %c255_i32_48 dim 0 : vector<256x128xf32>, i32 -> vector<256x128xf32>
    %cst_49 = arith.constant 0.000000e+00 : f32
    %136 = vector.shape_cast %20 : vector<256x1xi1> to vector<256x1xi1>
    %137 = vector.broadcast %136 : vector<256x1xi1> to vector<256x128xi1>
    %138 = vector.broadcast %cst_49 : f32 to vector<256x128xf32>
    %139 = arith.select %137, %135, %138 : vector<256x128xi1>, vector<256x128xf32>
    %140 = arith.addf %134, %128 : vector<256x128xf32>
    %141 = arith.addf %140, %139 : vector<256x128xf32>
    %c6 = arith.constant 6 : index
    %c0_50 = arith.constant 0 : index
    %142 = vector.load %arg3[%c6, %c0_50] : memref<8x384xf32, #tpu.memory_space<vmem>>, vector<1x128xf32>
    %143 = vector.broadcast %142 : vector<1x128xf32> to vector<256x128xf32>
    %144 = arith.addf %141, %143 : vector<256x128xf32>
    %c896 = arith.constant 896 : index
    %c0_51 = arith.constant 0 : index
    %145 = vector.load %arg2[%c896, %c0_51] : memref<1024x384xf32, #tpu.memory_space<vmem>>, vector<128x384xf32>
    %cst_52 = arith.constant dense<0.000000e+00> : vector<256x384xf32>
    %146 = tpu.matmul %144, %145, %cst_52 {dimension_numbers = #tpu.dot_dimension_numbers<[1], [0], [0], [1], [0, 0, 1, 1], [], []>} : vector<256x128xf32>, vector<128x384xf32>, vector<256x384xf32> -> vector<256x384xf32>
    %147 = vector.extract_strided_slice %146 {offsets = [0, 0], sizes = [256, 128], strides = [1, 1]} : vector<256x384xf32> to vector<256x128xf32>
    %148 = vector.extract_strided_slice %146 {offsets = [0, 128], sizes = [256, 128], strides = [1, 1]} : vector<256x384xf32> to vector<256x128xf32>
    %149 = vector.extract_strided_slice %146 {offsets = [0, 256], sizes = [256, 128], strides = [1, 1]} : vector<256x384xf32> to vector<256x128xf32>
    %c1_i32_53 = arith.constant 1 : i32
    %150 = tpu.dynamic_rotate %147 by %c1_i32_53 dim 0 : vector<256x128xf32>, i32 -> vector<256x128xf32>
    %cst_54 = arith.constant 0.000000e+00 : f32
    %151 = vector.shape_cast %18 : vector<256x1xi1> to vector<256x1xi1>
    %152 = vector.broadcast %151 : vector<256x1xi1> to vector<256x128xi1>
    %153 = vector.broadcast %cst_54 : f32 to vector<256x128xf32>
    %154 = arith.select %152, %150, %153 : vector<256x128xi1>, vector<256x128xf32>
    %c255_i32_55 = arith.constant 255 : i32
    %155 = tpu.dynamic_rotate %149 by %c255_i32_55 dim 0 : vector<256x128xf32>, i32 -> vector<256x128xf32>
    %cst_56 = arith.constant 0.000000e+00 : f32
    %156 = vector.shape_cast %20 : vector<256x1xi1> to vector<256x1xi1>
    %157 = vector.broadcast %156 : vector<256x1xi1> to vector<256x128xi1>
    %158 = vector.broadcast %cst_56 : f32 to vector<256x128xf32>
    %159 = arith.select %157, %155, %158 : vector<256x128xi1>, vector<256x128xf32>
    %160 = arith.addf %154, %148 : vector<256x128xf32>
    %161 = arith.addf %160, %159 : vector<256x128xf32>
    %c7 = arith.constant 7 : index
    %c0_57 = arith.constant 0 : index
    %162 = vector.load %arg3[%c7, %c0_57] : memref<8x384xf32, #tpu.memory_space<vmem>>, vector<1x128xf32>
    %163 = vector.broadcast %162 : vector<1x128xf32> to vector<256x128xf32>
    %164 = arith.addf %161, %163 : vector<256x128xf32>
    %c0_58 = arith.constant 0 : index
    %c0_59 = arith.constant 0 : index
    %165 = vector.load %arg4[%c0_58, %c0_59] : memref<256x384xf32, #tpu.memory_space<vmem>>, vector<256x128xf32>
    tpu.vector_store %arg4[%c0_58, %c0_59], %164 {strides = array<i32>} : memref<256x384xf32, #tpu.memory_space<vmem>>, vector<256x128xf32>,
    %c0_60 = arith.constant 0 : index
    %c128_61 = arith.constant 128 : index
    %166 = vector.load %arg4[%c0_60, %c128_61] : memref<256x384xf32, #tpu.memory_space<vmem>>, vector<256x128xf32>
    tpu.vector_store %arg4[%c0_60, %c128_61], %88 {strides = array<i32>} : memref<256x384xf32, #tpu.memory_space<vmem>>, vector<256x128xf32>,
    %c0_62 = arith.constant 0 : index
    %c256_63 = arith.constant 256 : index
    %167 = vector.load %arg4[%c0_62, %c256_63] : memref<256x384xf32, #tpu.memory_space<vmem>>, vector<256x128xf32>
    tpu.vector_store %arg4[%c0_62, %c256_63], %89 {strides = array<i32>} : memref<256x384xf32, #tpu.memory_space<vmem>>, vector<256x128xf32>,
    return
  }
  func.func @transform_0(%arg0: i32) -> (i32, i32) {
    %c0_i32 = arith.constant 0 : i32
    %c0_i32_0 = arith.constant 0 : i32
    return %arg0, %c0_i32 : i32, i32
  }
  func.func @transform_1(%arg0: i32) -> (i32, i32) {
    %c0_i32 = arith.constant 0 : i32
    %c0_i32_0 = arith.constant 0 : i32
    %c0_i32_1 = arith.constant 0 : i32
    return %c0_i32, %c0_i32_0 : i32, i32
  }
  func.func @transform_2(%arg0: i32) -> (i32, i32) {
    %c0_i32 = arith.constant 0 : i32
    %c0_i32_0 = arith.constant 0 : i32
    %c0_i32_1 = arith.constant 0 : i32
    return %c0_i32, %c0_i32_0 : i32, i32
  }
  func.func @transform_3(%arg0: i32) -> (i32, i32) {
    %c0_i32 = arith.constant 0 : i32
    %c0_i32_0 = arith.constant 0 : i32
    return %arg0, %c0_i32 : i32, i32
  }
}

</mosaic_0001>

<llo_original>
// kernel: tpu_custom_call.1
$region0: #{tpu_custom_call.1}
  #allocation0 [shape = 'u32[]', space=smem, size = 0x4, offset = 0x4, fixed_abs, tag = 'smem constant byte address 0x4 - core index']
  #allocation1 [shape = 'u32[144,128]{1,0:T(1,128)}', space=vmem, size = 0x12000, scoped, tag = 'internal scratch']
  %s0 = inlined_call_operand.hbm [shape: f32[512,256], index: 0, kind: input, shape index: {}]
  %s1 = inlined_call_operand.hbm [shape: f32[1024,384], index: 1, kind: input, shape index: {}]
  %s2 = inlined_call_operand.hbm [shape: f32[8,384], index: 2, kind: input, shape index: {}]
  %s3 = inlined_call_operand.hbm [shape: f32[512,384], index: 3, kind: output, shape index: {}]
  %s4 = sld [smem:[#allocation0]]
  $region57: #{tpu_custom_call.1} parent=0
    _
  %s6 = ssub.s32 1, %s4
  %s7 = scalar_select 0, %s6, %s4
  $region1: #{tpu_custom_call.1} parent=0
    #allocation2 [shape = 'u8[524288]{0}', space=vmem, size = 0x80000, scoped, tag = 'input window, operand 0']
    #allocation3 [shape = 's32[2]{0}', space=sflag, size = 0x8, scoped, tag = 'scoped memory for tpu_custom_call.1']
    #allocation4 [shape = 's32[2]{0}', space=sflag, size = 0x8, scoped, tag = 'scoped memory for tpu_custom_call.1']
    #allocation5 [shape = 'u8[1572864]{0}', space=vmem, size = 0x180000, scoped, tag = 'input window, operand 1, single buffered']
    #allocation6 [shape = 's32[1]{0}', space=sflag, size = 0x4, scoped, tag = 'scoped memory for tpu_custom_call.1']
    #allocation7 [shape = 'u8[12288]{0}', space=vmem, size = 0x3000, scoped, tag = 'input window, operand 2, single buffered']
    #allocation8 [shape = 'u8[786432]{0}', space=vmem, size = 0xc0000, scoped, tag = 'output window, operand 0']
    %8 = vsyncpa [#allocation3], 0
    %s9 = scalar_lea.sflag [#allocation3], 1
    %10 = vsyncpa %s9, 0
    %11 = vsyncpa [#allocation6], 0
    %12 = vsyncpa [#allocation4], 0
    %s13 = scalar_lea.sflag [#allocation4], 1
    %14 = vsyncpa %s13, 0
    loop: start=0, step=1, limit=4
    $region2: #{tpu_custom_call.1} parent=1 // loop_pre_header
      _
    $region3: #{tpu_custom_call.1} parent=1 // loop_header
      %s16 = sphi 0, %s20
      %p17 = scmp.ge.s32.totalorder %s16, 4
      %s26 = sphi 0, %s28
      %s29 = sphi 0, %s26
      %s30 = sphi 0, %s29
      %s46 = sphi 0, %s30
      %s50 = sphi 0, %s50
      %s52 = sphi 0, %s50
      %s53 = sphi 0, %s52
      %s67 = sphi 0, %s53
      %s71 = sphi 0, %s71
      %s73 = sphi 0, %s71
      %s74 = sphi 0, %s73
      %s88 = sphi 0, %s74
      %s94 = sphi 0, %s96
      %s97 = sphi 0, %s94
      %s98 = sphi 0, %s97
      %s114 = sphi 0, %s98
    $region4: #{tpu_custom_call.1} parent=1 // loop_header_branch
      %19 = sbr.rel (%p17) target = $region8
    $region5: #{tpu_custom_call.1} parent=1 // loop_body
      %s21 = ssub.s32 %s16, 1
      %s22 = ssub.s32 %s16, 2
      %s23 = sadd.s32 %s16, 1
      %s24 = ssub.s32 %s16, %s23
      %p25 = scmp.eq.s32.totalorder %s24, 0
      %s27 = sadd.s32 %s26, 1
      %s28 = scalar_select %p25, %s26, %s27
      %p31 = pneg %p25
      %p32 = scmp.eq.s32.totalorder %s16, 1
      %p33 = por %p31, %p32
      %p34 = scmp.ne.s32.totalorder %s26, %s29
      %p35 = scmp.eq.s32.totalorder %s16, 0
      %p36 = por %p34, %p35
      %p37 = scmp.ne.s32.totalorder %s26, %s29
      %p38 = scmp.eq.s32.totalorder %s21, 1
      %p39 = por %p37, %p38
      %p40 = scmp.ne.s32.totalorder %s29, %s30
      %p41 = scmp.eq.s32.totalorder %s21, 0
      %p42 = por %p40, %p41
      %p43 = scmp.ne.s32.totalorder %s29, %s30
      %p44 = scmp.eq.s32.totalorder %s22, 1
      %p45 = por %p43, %p44
      %p47 = scmp.ne.s32.totalorder %s30, %s46
      %p48 = scmp.eq.s32.totalorder %s22, 0
      %p49 = por %p47, %p48
      %s51 = sadd.s32 %s50, 1
      %p54 = scmp.eq.s32.totalorder %s16, 1
      %p55 = scmp.ne.s32.totalorder %s50, %s52
      %p56 = scmp.eq.s32.totalorder %s16, 0
      %p57 = por %p55, %p56
      %p58 = scmp.ne.s32.totalorder %s50, %s52
      %p59 = scmp.eq.s32.totalorder %s21, 1
      %p60 = por %p58, %p59
      %p61 = scmp.ne.s32.totalorder %s52, %s53
      %p62 = scmp.eq.s32.totalorder %s21, 0
      %p63 = por %p61, %p62
      %p64 = scmp.ne.s32.totalorder %s52, %s53
      %p65 = scmp.eq.s32.totalorder %s22, 1
      %p66 = por %p64, %p65
      %p68 = scmp.ne.s32.totalorder %s53, %s67
      %p69 = scmp.eq.s32.totalorder %s22, 0
      %p70 = por %p68, %p69
      %s72 = sadd.s32 %s71, 1
      %p75 = scmp.eq.s32.totalorder %s16, 1
      %p76 = scmp.ne.s32.totalorder %s71, %s73
      %p77 = scmp.eq.s32.totalorder %s16, 0
      %p78 = por %p76, %p77
      %p79 = scmp.ne.s32.totalorder %s71, %s73
      %p80 = scmp.eq.s32.totalorder %s21, 1
      %p81 = por %p79, %p80
      %p82 = scmp.ne.s32.totalorder %s73, %s74
      %p83 = scmp.eq.s32.totalorder %s21, 0
      %p84 = por %p82, %p83
      %p85 = scmp.ne.s32.totalorder %s73, %s74
      %p86 = scmp.eq.s32.totalorder %s22, 1
      %p87 = por %p85, %p86
      %p89 = scmp.ne.s32.totalorder %s74, %s88
      %p90 = scmp.eq.s32.totalorder %s22, 0
      %p91 = por %p89, %p90
      %s92 = ssub.s32 %s16, %s23
      %p93 = scmp.eq.s32.totalorder %s92, 0
      %s95 = sadd.s32 %s94, 1
      %s96 = scalar_select %p93, %s94, %s95
      %p99 = pneg %p93
      %p100 = scmp.eq.s32.totalorder %s16, 1
      %p101 = por %p99, %p100
      %p102 = scmp.ne.s32.totalorder %s94, %s97
      %p103 = scmp.eq.s32.totalorder %s16, 0
      %p104 = por %p102, %p103
      %p105 = scmp.ne.s32.totalorder %s94, %s97
      %p106 = scmp.eq.s32.totalorder %s21, 1
      %p107 = por %p105, %p106
      %p108 = scmp.ne.s32.totalorder %s97, %s98
      %p109 = scmp.eq.s32.totalorder %s21, 0
      %p110 = por %p108, %p109
      %p111 = scmp.ne.s32.totalorder %s97, %s98
      %p112 = scmp.eq.s32.totalorder %s22, 1
      %p113 = por %p111, %p112
      %p115 = scmp.ne.s32.totalorder %s98, %s114
      %p116 = scmp.eq.s32.totalorder %s22, 0
      %p117 = por %p115, %p116
      %p118 = scmp.le.s32.totalorder 1, %s16
      %p119 = scmp.lt.s32.totalorder %s16, 3
      %p120 = pnand %p118, %p119
      %p121 = pneg %p120
      // Predicated region
      $region9: #{tpu_custom_call.1} parent=5 // pred_check
        _
      $region10: #{tpu_custom_call.1} parent=5 // pred_check_branch
        %123 = sbr.rel (%p120) target = $region12
      $region11: #{tpu_custom_call.1} parent=5 // pred_region
        %s124 = ssub.s32 %s16, 1
        // Predicated region
        $region13: #{tpu_custom_call.1} parent=11 // pred_check
          %p125 = pneg %p63
        $region14: #{tpu_custom_call.1} parent=11 // pred_check_branch
          %127 = sbr.rel (%p125) target = $region16
        $region15: #{tpu_custom_call.1} parent=11 // pred_region
          %s129 = ssub.s32 49152, 49152
          %130 = vsyncadd [#allocation6], %s129
          %s131 = sshll.u32 [#allocation5], 4
          %s132 = int_to_ptr.vmem [resolvable:$true] %s131
          %137 = dma.hbm_to_vmem [thread:$0]  %s1, 49152, %s132, [#allocation6], 384, 384, 24
        $region16: #{tpu_custom_call.1} parent=11 // pred_fallthru
          _
        // Predicated region
        $region17: #{tpu_custom_call.1} parent=11 // pred_check
          %p138 = pneg %p84
        $region18: #{tpu_custom_call.1} parent=11 // pred_check_branch
          %140 = sbr.rel (%p138) target = $region20
        $region19: #{tpu_custom_call.1} parent=11 // pred_region
          %s142 = ssub.s32 384, 384
          %143 = vsyncadd [#allocation6], %s142
          %s145 = sshll.u32 [#allocation7], 4
          %s146 = int_to_ptr.vmem [resolvable:$true] %s145
          %148 = dma.hbm_to_vmem [thread:$0]  %s2, 384, %s146, [#allocation6]
        $region20: #{tpu_custom_call.1} parent=11 // pred_fallthru
          _
      $region12: #{tpu_custom_call.1} parent=5 // pred_fallthru
        _
      %p149 = scmp.lt.s32.totalorder %s16, 2
      // Predicated region
      $region21: #{tpu_custom_call.1} parent=5 // pred_check
        %p150 = pneg %p149
      $region22: #{tpu_custom_call.1} parent=5 // pred_check_branch
        %152 = sbr.rel (%p150) target = $region24
      $region23: #{tpu_custom_call.1} parent=5 // pred_region
        // Predicated region
        $region25: #{tpu_custom_call.1} parent=23 // pred_check
          %p153 = pneg %p36
        $region26: #{tpu_custom_call.1} parent=23 // pred_check_branch
          %155 = sbr.rel (%p153) target = $region28
        $region27: #{tpu_custom_call.1} parent=23 // pred_region
          %s156 = sand.u32 %s26, 1
          %s157 = scalar_lea.sflag [#allocation3], %s156
          %s158 = sand.u32 %s26, 1
          %s159 = smul.addr %s158, 512
          %s160 = scalar_lea.vmem [#allocation2], %s159
          %s161 = smul.u32 32, %s16
          %s163 = ssub.s32 8192, 8192
          %164 = vsyncadd %s157, %s163
          %s165 = smul.addr %s161, 2
          %s166 = smul.addr %s165, 128
          %s167 = scalar_lea.hbm %s0, %s166
          %s168 = sshll.u32 %s160, 4
          %s169 = int_to_ptr.vmem [resolvable:$true] %s168
          %174 = dma.hbm_to_vmem [thread:$0]  %s167, 8192, %s169, %s157, 256, 256, 16
        $region28: #{tpu_custom_call.1} parent=23 // pred_fallthru
          _
      $region24: #{tpu_custom_call.1} parent=5 // pred_fallthru
        _
      %p175 = scmp.le.s32.totalorder 1, %s16
      %p176 = scmp.lt.s32.totalorder %s16, 3
      %p177 = pnand %p175, %p176
      %p178 = pneg %p177
      // Predicated region
      $region29: #{tpu_custom_call.1} parent=5 // pred_check
        _
      $region30: #{tpu_custom_call.1} parent=5 // pred_check_branch
        %180 = sbr.rel (%p177) target = $region32
      $region31: #{tpu_custom_call.1} parent=5 // pred_region
        %s181 = ssub.s32 %s16, 1
        %s182 = sand.u32 %s29, 1
        %s183 = scalar_lea.sflag [#allocation3], %s182
        %s184 = sand.u32 %s29, 1
        %s185 = smul.addr %s184, 512
        %s186 = scalar_lea.vmem [#allocation2], %s185
        // Predicated region
        $region33: #{tpu_custom_call.1} parent=31 // pred_check
          %p187 = pneg %p42
        $region34: #{tpu_custom_call.1} parent=31 // pred_check_branch
          %189 = sbr.rel (%p187) target = $region36
        $region35: #{tpu_custom_call.1} parent=31 // pred_region
          %190 = dma.done %s183, 8192
        $region36: #{tpu_custom_call.1} parent=31 // pred_fallthru
          _
        // Predicated region
        $region37: #{tpu_custom_call.1} parent=31 // pred_check
          %p191 = pneg %p63
        $region38: #{tpu_custom_call.1} parent=31 // pred_check_branch
          %193 = sbr.rel (%p191) target = $region40
        $region39: #{tpu_custom_call.1} parent=31 // pred_region
          %194 = dma.done [#allocation6], 49152
        $region40: #{tpu_custom_call.1} parent=31 // pred_fallthru
          _
        // Predicated region
        $region41: #{tpu_custom_call.1} parent=31 // pred_check
          %p195 = pneg %p84
        $region42: #{tpu_custom_call.1} parent=31 // pred_check_branch
          %197 = sbr.rel (%p195) target = $region44
        $region43: #{tpu_custom_call.1} parent=31 // pred_region
          %198 = dma.done [#allocation6], 384
        $region44: #{tpu_custom_call.1} parent=31 // pred_fallthru
          _
        %s199 = sand.u32 %s29, 1
        %s200 = scalar_lea.sflag [#allocation3], %s199
        %s201 = sand.u32 %s29, 1
        %s202 = smul.addr %s201, 512
        %s203 = scalar_lea.vmem [#allocation2], %s202
        %p204 = pneg %p42
        %p205 = pneg %p39
        %p206 = pneg %p63
        %p207 = pneg %p60
        %p208 = pneg %p84
        %p209 = pneg %p81
        %p210 = pneg %p110
        %p211 = pneg %p107
        %s212 = sand.u32 %s97, 1
        %s213 = scalar_lea.sflag [#allocation4], %s212
        %s214 = sand.u32 %s97, 1
        %s215 = smul.addr %s214, 768
        %s216 = scalar_lea.vmem [#allocation8], %s215
        %s217 = smul.u32 32, %s21
        %s218 = smul.u32 32, %s21
        %v219 = vlaneseq
        %v220 = vshrl.u32 %v219, 7
        %v221 = vadd.s32 %v220, 8
        %v222 = vadd.s32 %v220, 16
        %v223 = vadd.s32 %v220, 24
        %v224 = vadd.s32 %v220, 32
        %v225 = vadd.s32 %v220, 40
        %v226 = vadd.s32 %v220, 48
        %v227 = vadd.s32 %v220, 56
        %v228 = vadd.s32 %v220, 64
        %v229 = vadd.s32 %v220, 72
        %v230 = vadd.s32 %v220, 80
        %v231 = vadd.s32 %v220, 88
        %v232 = vadd.s32 %v220, 96
        %v233 = vadd.s32 %v220, 104
        %v234 = vadd.s32 %v220, 112
        %v235 = vadd.s32 %v220, 120
        %v236 = vadd.s32 %v220, 128
        %v237 = vadd.s32 %v220, 136
        %v238 = vadd.s32 %v220, 144
        %v239 = vadd.s32 %v220, 152
        %v240 = vadd.s32 %v220, 160
        %v241 = vadd.s32 %v220, 168
        %v242 = vadd.s32 %v220, 176
        %v243 = vadd.s32 %v220, 184
        %v244 = vadd.s32 %v220, 192
        %v245 = vadd.s32 %v220, 200
        %v246 = vadd.s32 %v220, 208
        %v247 = vadd.s32 %v220, 216
        %v248 = vadd.s32 %v220, 224
        %v249 = vadd.s32 %v220, 232
        %v250 = vadd.s32 %v220, 240
        %v251 = vadd.s32 %v220, 248
        %vm252 = vcmp.lt.s32.totalorder %v220, 0
        %v253 = vsub.s32 0, %v220
        %v254 = vsel %vm252, %v253, %v220
        %v255 = vshrl.u32 %v254, 4
        %v256 = vand.u32 %v254, 15
        %v257 = vsub.s32 0, %v256
        %v258 = vsel %vm252, %v257, %v256
        %vm259 = vcmp.lt.s32.totalorder %v221, 0
        %v260 = vsub.s32 0, %v221
        %v261 = vsel %vm259, %v260, %v221
        %v262 = vshrl.u32 %v261, 4
        %v263 = vand.u32 %v261, 15
        %v264 = vsub.s32 0, %v263
        %v265 = vsel %vm259, %v264, %v263
        %vm266 = vcmp.lt.s32.totalorder %v222, 0
        %v267 = vsub.s32 0, %v222
        %v268 = vsel %vm266, %v267, %v222
        %v269 = vshrl.u32 %v268, 4
        %v270 = vand.u32 %v268, 15
        %v271 = vsub.s32 0, %v270
        %v272 = vsel %vm266, %v271, %v270
        %vm273 = vcmp.lt.s32.totalorder %v223, 0
        %v274 = vsub.s32 0, %v223
        %v275 = vsel %vm273, %v274, %v223
        %v276 = vshrl.u32 %v275, 4
        %v277 = vand.u32 %v275, 15
        %v278 = vsub.s32 0, %v277
        %v279 = vsel %vm273, %v278, %v277
        %vm280 = vcmp.lt.s32.totalorder %v224, 0
        %v281 = vsub.s32 0, %v224
        %v282 = vsel %vm280, %v281, %v224
        %v283 = vshrl.u32 %v282, 4
        %v284 = vand.u32 %v282, 15
        %v285 = vsub.s32 0, %v284
        %v286 = vsel %vm280, %v285, %v284
        %vm287 = vcmp.lt.s32.totalorder %v225, 0
        %v288 = vsub.s32 0, %v225
        %v289 = vsel %vm287, %v288, %v225
        %v290 = vshrl.u32 %v289, 4
        %v291 = vand.u32 %v289, 15
        %v292 = vsub.s32 0, %v291
        %v293 = vsel %vm287, %v292, %v291
        %vm294 = vcmp.lt.s32.totalorder %v226, 0
        %v295 = vsub.s32 0, %v226
        %v296 = vsel %vm294, %v295, %v226
        %v297 = vshrl.u32 %v296, 4
        %v298 = vand.u32 %v296, 15
        %v299 = vsub.s32 0, %v298
        %v300 = vsel %vm294, %v299, %v298
        %vm301 = vcmp.lt.s32.totalorder %v227, 0
        %v302 = vsub.s32 0, %v227
        %v303 = vsel %vm301, %v302, %v227
        %v304 = vshrl.u32 %v303, 4
        %v305 = vand.u32 %v303, 15
        %v306 = vsub.s32 0, %v305
        %v307 = vsel %vm301, %v306, %v305
        %vm308 = vcmp.lt.s32.totalorder %v228, 0
        %v309 = vsub.s32 0, %v228
        %v310 = vsel %vm308, %v309, %v228
        %v311 = vshrl.u32 %v310, 4
        %v312 = vand.u32 %v310, 15
        %v313 = vsub.s32 0, %v312
        %v314 = vsel %vm308, %v313, %v312
        %vm315 = vcmp.lt.s32.totalorder %v229, 0
        %v316 = vsub.s32 0, %v229
        %v317 = vsel %vm315, %v316, %v229
        %v318 = vshrl.u32 %v317, 4
        %v319 = vand.u32 %v317, 15
        %v320 = vsub.s32 0, %v319
        %v321 = vsel %vm315, %v320, %v319
        %vm322 = vcmp.lt.s32.totalorder %v230, 0
        %v323 = vsub.s32 0, %v230
        %v324 = vsel %vm322, %v323, %v230
        %v325 = vshrl.u32 %v324, 4
        %v326 = vand.u32 %v324, 15
        %v327 = vsub.s32 0, %v326
        %v328 = vsel %vm322, %v327, %v326
        %vm329 = vcmp.lt.s32.totalorder %v231, 0
        %v330 = vsub.s32 0, %v231
        %v331 = vsel %vm329, %v330, %v231
        %v332 = vshrl.u32 %v331, 4
        %v333 = vand.u32 %v331, 15
        %v334 = vsub.s32 0, %v333
        %v335 = vsel %vm329, %v334, %v333
        %vm336 = vcmp.lt.s32.totalorder %v232, 0
        %v337 = vsub.s32 0, %v232
        %v338 = vsel %vm336, %v337, %v232
        %v339 = vshrl.u32 %v338, 4
        %v340 = vand.u32 %v338, 15
        %v341 = vsub.s32 0, %v340
        %v342 = vsel %vm336, %v341, %v340
        %vm343 = vcmp.lt.s32.totalorder %v233, 0
        %v344 = vsub.s32 0, %v233
        %v345 = vsel %vm343, %v344, %v233
        %v346 = vshrl.u32 %v345, 4
        %v347 = vand.u32 %v345, 15
        %v348 = vsub.s32 0, %v347
        %v349 = vsel %vm343, %v348, %v347
        %vm350 = vcmp.lt.s32.totalorder %v234, 0
        %v351 = vsub.s32 0, %v234
        %v352 = vsel %vm350, %v351, %v234
        %v353 = vshrl.u32 %v352, 4
        %v354 = vand.u32 %v352, 15
        %v355 = vsub.s32 0, %v354
        %v356 = vsel %vm350, %v355, %v354
        %vm357 = vcmp.lt.s32.totalorder %v235, 0
        %v358 = vsub.s32 0, %v235
        %v359 = vsel %vm357, %v358, %v235
        %v360 = vshrl.u32 %v359, 4
        %v361 = vand.u32 %v359, 15
        %v362 = vsub.s32 0, %v361
        %v363 = vsel %vm357, %v362, %v361
        %vm364 = vcmp.lt.s32.totalorder %v236, 0
        %v365 = vsub.s32 0, %v236
        %v366 = vsel %vm364, %v365, %v236
        %v367 = vshrl.u32 %v366, 4
        %v368 = vand.u32 %v366, 15
        %v369 = vsub.s32 0, %v368
        %v370 = vsel %vm364, %v369, %v368
        %vm371 = vcmp.lt.s32.totalorder %v237, 0
        %v372 = vsub.s32 0, %v237
        %v373 = vsel %vm371, %v372, %v237
        %v374 = vshrl.u32 %v373, 4
        %v375 = vand.u32 %v373, 15
        %v376 = vsub.s32 0, %v375
        %v377 = vsel %vm371, %v376, %v375
        %vm378 = vcmp.lt.s32.totalorder %v238, 0
        %v379 = vsub.s32 0, %v238
        %v380 = vsel %vm378, %v379, %v238
        %v381 = vshrl.u32 %v380, 4
        %v382 = vand.u32 %v380, 15
        %v383 = vsub.s32 0, %v382
        %v384 = vsel %vm378, %v383, %v382
        %vm385 = vcmp.lt.s32.totalorder %v239, 0
        %v386 = vsub.s32 0, %v239
        %v387 = vsel %vm385, %v386, %v239
        %v388 = vshrl.u32 %v387, 4
        %v389 = vand.u32 %v387, 15
        %v390 = vsub.s32 0, %v389
        %v391 = vsel %vm385, %v390, %v389
        %vm392 = vcmp.lt.s32.totalorder %v240, 0
        %v393 = vsub.s32 0, %v240
        %v394 = vsel %vm392, %v393, %v240
        %v395 = vshrl.u32 %v394, 4
        %v396 = vand.u32 %v394, 15
        %v397 = vsub.s32 0, %v396
        %v398 = vsel %vm392, %v397, %v396
        %vm399 = vcmp.lt.s32.totalorder %v241, 0
        %v400 = vsub.s32 0, %v241
        %v401 = vsel %vm399, %v400, %v241
        %v402 = vshrl.u32 %v401, 4
        %v403 = vand.u32 %v401, 15
        %v404 = vsub.s32 0, %v403
        %v405 = vsel %vm399, %v404, %v403
        %vm406 = vcmp.lt.s32.totalorder %v242, 0
        %v407 = vsub.s32 0, %v242
        %v408 = vsel %vm406, %v407, %v242
        %v409 = vshrl.u32 %v408, 4
        %v410 = vand.u32 %v408, 15
        %v411 = vsub.s32 0, %v410
        %v412 = vsel %vm406, %v411, %v410
        %vm413 = vcmp.lt.s32.totalorder %v243, 0
        %v414 = vsub.s32 0, %v243
        %v415 = vsel %vm413, %v414, %v243
        %v416 = vshrl.u32 %v415, 4
        %v417 = vand.u32 %v415, 15
        %v418 = vsub.s32 0, %v417
        %v419 = vsel %vm413, %v418, %v417
        %vm420 = vcmp.lt.s32.totalorder %v244, 0
        %v421 = vsub.s32 0, %v244
        %v422 = vsel %vm420, %v421, %v244
        %v423 = vshrl.u32 %v422, 4
        %v424 = vand.u32 %v422, 15
        %v425 = vsub.s32 0, %v424
        %v426 = vsel %vm420, %v425, %v424
        %vm427 = vcmp.lt.s32.totalorder %v245, 0
        %v428 = vsub.s32 0, %v245
        %v429 = vsel %vm427, %v428, %v245
        %v430 = vshrl.u32 %v429, 4
        %v431 = vand.u32 %v429, 15
        %v432 = vsub.s32 0, %v431
        %v433 = vsel %vm427, %v432, %v431
        %vm434 = vcmp.lt.s32.totalorder %v246, 0
        %v435 = vsub.s32 0, %v246
        %v436 = vsel %vm434, %v435, %v246
        %v437 = vshrl.u32 %v436, 4
        %v438 = vand.u32 %v436, 15
        %v439 = vsub.s32 0, %v438
        %v440 = vsel %vm434, %v439, %v438
        %vm441 = vcmp.lt.s32.totalorder %v247, 0
        %v442 = vsub.s32 0, %v247
        %v443 = vsel %vm441, %v442, %v247
        %v444 = vshrl.u32 %v443, 4
        %v445 = vand.u32 %v443, 15
        %v446 = vsub.s32 0, %v445
        %v447 = vsel %vm441, %v446, %v445
        %vm448 = vcmp.lt.s32.totalorder %v248, 0
        %v449 = vsub.s32 0, %v248
        %v450 = vsel %vm448, %v449, %v248
        %v451 = vshrl.u32 %v450, 4
        %v452 = vand.u32 %v450, 15
        %v453 = vsub.s32 0, %v452
        %v454 = vsel %vm448, %v453, %v452
        %vm455 = vcmp.lt.s32.totalorder %v249, 0
        %v456 = vsub.s32 0, %v249
        %v457 = vsel %vm455, %v456, %v249
        %v458 = vshrl.u32 %v457, 4
        %v459 = vand.u32 %v457, 15
        %v460 = vsub.s32 0, %v459
        %v461 = vsel %vm455, %v460, %v459
        %vm462 = vcmp.lt.s32.totalorder %v250, 0
        %v463 = vsub.s32 0, %v250
        %v464 = vsel %vm462, %v463, %v250
        %v465 = vshrl.u32 %v464, 4
        %v466 = vand.u32 %v464, 15
        %v467 = vsub.s32 0, %v466
        %v468 = vsel %vm462, %v467, %v466
        %vm469 = vcmp.lt.s32.totalorder %v251, 0
        %v470 = vsub.s32 0, %v251
        %v471 = vsel %vm469, %v470, %v251
        %v472 = vshrl.u32 %v471, 4
        %v473 = vand.u32 %v471, 15
        %v474 = vsub.s32 0, %v473
        %v475 = vsel %vm469, %v474, %v473
        %vm476 = vcmp.ne.s32.totalorder %v258, 0
        %vm477 = vcmp.ne.s32.totalorder %v265, 0
        %vm478 = vcmp.ne.s32.totalorder %v272, 0
        %vm479 = vcmp.ne.s32.totalorder %v279, 0
        %vm480 = vcmp.ne.s32.totalorder %v286, 0
        %vm481 = vcmp.ne.s32.totalorder %v293, 0
        %vm482 = vcmp.ne.s32.totalorder %v300, 0
        %vm483 = vcmp.ne.s32.totalorder %v307, 0
        %vm484 = vcmp.ne.s32.totalorder %v314, 0
        %vm485 = vcmp.ne.s32.totalorder %v321, 0
        %vm486 = vcmp.ne.s32.totalorder %v328, 0
        %vm487 = vcmp.ne.s32.totalorder %v335, 0
        %vm488 = vcmp.ne.s32.totalorder %v342, 0
        %vm489 = vcmp.ne.s32.totalorder %v349, 0
        %vm490 = vcmp.ne.s32.totalorder %v356, 0
        %vm491 = vcmp.ne.s32.totalorder %v363, 0
        %vm492 = vcmp.ne.s32.totalorder %v370, 0
        %vm493 = vcmp.ne.s32.totalorder %v377, 0
        %vm494 = vcmp.ne.s32.totalorder %v384, 0
        %vm495 = vcmp.ne.s32.totalorder %v391, 0
        %vm496 = vcmp.ne.s32.totalorder %v398, 0
        %vm497 = vcmp.ne.s32.totalorder %v405, 0
        %vm498 = vcmp.ne.s32.totalorder %v412, 0
        %vm499 = vcmp.ne.s32.totalorder %v419, 0
        %vm500 = vcmp.ne.s32.totalorder %v426, 0
        %vm501 = vcmp.ne.s32.totalorder %v433, 0
        %vm502 = vcmp.ne.s32.totalorder %v440, 0
        %vm503 = vcmp.ne.s32.totalorder %v447, 0
        %vm504 = vcmp.ne.s32.totalorder %v454, 0
        %vm505 = vcmp.ne.s32.totalorder %v461, 0
        %vm506 = vcmp.ne.s32.totalorder %v468, 0
        %vm507 = vcmp.ne.s32.totalorder %v475, 0
        %vm508 = vcmp.lt.s32.totalorder %v258, 0
        %vm509 = vcmp.lt.s32.totalorder %v265, 0
        %vm510 = vcmp.lt.s32.totalorder %v272, 0
        %vm511 = vcmp.lt.s32.totalorder %v279, 0
        %vm512 = vcmp.lt.s32.totalorder %v286, 0
        %vm513 = vcmp.lt.s32.totalorder %v293, 0
        %vm514 = vcmp.lt.s32.totalorder %v300, 0
        %vm515 = vcmp.lt.s32.totalorder %v307, 0
        %vm516 = vcmp.lt.s32.totalorder %v314, 0
        %vm517 = vcmp.lt.s32.totalorder %v321, 0
        %vm518 = vcmp.lt.s32.totalorder %v328, 0
        %vm519 = vcmp.lt.s32.totalorder %v335, 0
        %vm520 = vcmp.lt.s32.totalorder %v342, 0
        %vm521 = vcmp.lt.s32.totalorder %v349, 0
        %vm522 = vcmp.lt.s32.totalorder %v356, 0
        %vm523 = vcmp.lt.s32.totalorder %v363, 0
        %vm524 = vcmp.lt.s32.totalorder %v370, 0
        %vm525 = vcmp.lt.s32.totalorder %v377, 0
        %vm526 = vcmp.lt.s32.totalorder %v384, 0
        %vm527 = vcmp.lt.s32.totalorder %v391, 0
        %vm528 = vcmp.lt.s32.totalorder %v398, 0
        %vm529 = vcmp.lt.s32.totalorder %v405, 0
        %vm530 = vcmp.lt.s32.totalorder %v412, 0
        %vm531 = vcmp.lt.s32.totalorder %v419, 0
        %vm532 = vcmp.lt.s32.totalorder %v426, 0
        %vm533 = vcmp.lt.s32.totalorder %v433, 0
        %vm534 = vcmp.lt.s32.totalorder %v440, 0
        %vm535 = vcmp.lt.s32.totalorder %v447, 0
        %vm536 = vcmp.lt.s32.totalorder %v454, 0
        %vm537 = vcmp.lt.s32.totalorder %v461, 0
        %vm538 = vcmp.lt.s32.totalorder %v468, 0
        %vm539 = vcmp.lt.s32.totalorder %v475, 0
        %vm540 = vmand %vm508, %vm476
        %vm541 = vmand %vm509, %vm477
        %vm542 = vmand %vm510, %vm478
        %vm543 = vmand %vm511, %vm479
        %vm544 = vmand %vm512, %vm480
        %vm545 = vmand %vm513, %vm481
        %vm546 = vmand %vm514, %vm482
        %vm547 = vmand %vm515, %vm483
        %vm548 = vmand %vm516, %vm484
        %vm549 = vmand %vm517, %vm485
        %vm550 = vmand %vm518, %vm486
        %vm551 = vmand %vm519, %vm487
        %vm552 = vmand %vm520, %vm488
        %vm553 = vmand %vm521, %vm489
        %vm554 = vmand %vm522, %vm490
        %vm555 = vmand %vm523, %vm491
        %vm556 = vmand %vm524, %vm492
        %vm557 = vmand %vm525, %vm493
        %vm558 = vmand %vm526, %vm494
        %vm559 = vmand %vm527, %vm495
        %vm560 = vmand %vm528, %vm496
        %vm561 = vmand %vm529, %vm497
        %vm562 = vmand %vm530, %vm498
        %vm563 = vmand %vm531, %vm499
        %vm564 = vmand %vm532, %vm500
        %vm565 = vmand %vm533, %vm501
        %vm566 = vmand %vm534, %vm502
        %vm567 = vmand %vm535, %vm503
        %vm568 = vmand %vm536, %vm504
        %vm569 = vmand %vm537, %vm505
        %vm570 = vmand %vm538, %vm506
        %vm571 = vmand %vm539, %vm507
        %v572 = vadd.s32 %v258, 16
        %v573 = vadd.s32 %v265, 16
        %v574 = vadd.s32 %v272, 16
        %v575 = vadd.s32 %v279, 16
        %v576 = vadd.s32 %v286, 16
        %v577 = vadd.s32 %v293, 16
        %v578 = vadd.s32 %v300, 16
        %v579 = vadd.s32 %v307, 16
        %v580 = vadd.s32 %v314, 16
        %v581 = vadd.s32 %v321, 16
        %v582 = vadd.s32 %v328, 16
        %v583 = vadd.s32 %v335, 16
        %v584 = vadd.s32 %v342, 16
        %v585 = vadd.s32 %v349, 16
        %v586 = vadd.s32 %v356, 16
        %v587 = vadd.s32 %v363, 16
        %v588 = vadd.s32 %v370, 16
        %v589 = vadd.s32 %v377, 16
        %v590 = vadd.s32 %v384, 16
        %v591 = vadd.s32 %v391, 16
        %v592 = vadd.s32 %v398, 16
        %v593 = vadd.s32 %v405, 16
        %v594 = vadd.s32 %v412, 16
        %v595 = vadd.s32 %v419, 16
        %v596 = vadd.s32 %v426, 16
        %v597 = vadd.s32 %v433, 16
        %v598 = vadd.s32 %v440, 16
        %v599 = vadd.s32 %v447, 16
        %v600 = vadd.s32 %v454, 16
        %v601 = vadd.s32 %v461, 16
        %v602 = vadd.s32 %v468, 16
        %v603 = vadd.s32 %v475, 16
        %v604 = vsel %vm540, %v572, %v258
        %v605 = vsel %vm541, %v573, %v265
        %v606 = vsel %vm542, %v574, %v272
        %v607 = vsel %vm543, %v575, %v279
        %v608 = vsel %vm544, %v576, %v286
        %v609 = vsel %vm545, %v577, %v293
        %v610 = vsel %vm546, %v578, %v300
        %v611 = vsel %vm547, %v579, %v307
        %v612 = vsel %vm548, %v580, %v314
        %v613 = vsel %vm549, %v581, %v321
        %v614 = vsel %vm550, %v582, %v328
        %v615 = vsel %vm551, %v583, %v335
        %v616 = vsel %vm552, %v584, %v342
        %v617 = vsel %vm553, %v585, %v349
        %v618 = vsel %vm554, %v586, %v356
        %v619 = vsel %vm555, %v587, %v363
        %v620 = vsel %vm556, %v588, %v370
        %v621 = vsel %vm557, %v589, %v377
        %v622 = vsel %vm558, %v590, %v384
        %v623 = vsel %vm559, %v591, %v391
        %v624 = vsel %vm560, %v592, %v398
        %v625 = vsel %vm561, %v593, %v405
        %v626 = vsel %vm562, %v594, %v412
        %v627 = vsel %vm563, %v595, %v419
        %v628 = vsel %vm564, %v596, %v426
        %v629 = vsel %vm565, %v597, %v433
        %v630 = vsel %vm566, %v598, %v440
        %v631 = vsel %vm567, %v599, %v447
        %v632 = vsel %vm568, %v600, %v454
        %v633 = vsel %vm569, %v601, %v461
        %v634 = vsel %vm570, %v602, %v468
        %v635 = vsel %vm571, %v603, %v475
        %vm636 = vcmp.ne.s32.totalorder %v604, 0
        %vm637 = vcmp.ne.s32.totalorder %v605, 0
        %vm638 = vcmp.ne.s32.totalorder %v606, 0
        %vm639 = vcmp.ne.s32.totalorder %v607, 0
        %vm640 = vcmp.ne.s32.totalorder %v608, 0
        %vm641 = vcmp.ne.s32.totalorder %v609, 0
        %vm642 = vcmp.ne.s32.totalorder %v610, 0
        %vm643 = vcmp.ne.s32.totalorder %v611, 0
        %vm644 = vcmp.ne.s32.totalorder %v612, 0
        %vm645 = vcmp.ne.s32.totalorder %v613, 0
        %vm646 = vcmp.ne.s32.totalorder %v614, 0
        %vm647 = vcmp.ne.s32.totalorder %v615, 0
        %vm648 = vcmp.ne.s32.totalorder %v616, 0
        %vm649 = vcmp.ne.s32.totalorder %v617, 0
        %vm650 = vcmp.ne.s32.totalorder %v618, 0
        %vm651 = vcmp.ne.s32.totalorder %v619, 0
        %vm652 = vcmp.ne.s32.totalorder %v620, 0
        %vm653 = vcmp.ne.s32.totalorder %v621, 0
        %vm654 = vcmp.ne.s32.totalorder %v622, 0
        %vm655 = vcmp.ne.s32.totalorder %v623, 0
        %vm656 = vcmp.ne.s32.totalorder %v624, 0
        %vm657 = vcmp.ne.s32.totalorder %v625, 0
        %vm658 = vcmp.ne.s32.totalorder %v626, 0
        %vm659 = vcmp.ne.s32.totalorder %v627, 0
        %vm660 = vcmp.ne.s32.totalorder %v628, 0
        %vm661 = vcmp.ne.s32.totalorder %v629, 0
        %vm662 = vcmp.ne.s32.totalorder %v630, 0
        %vm663 = vcmp.ne.s32.totalorder %v631, 0
        %vm664 = vcmp.ne.s32.totalorder %v632, 0
        %vm665 = vcmp.ne.s32.totalorder %v633, 0
        %vm666 = vcmp.ne.s32.totalorder %v634, 0
        %vm667 = vcmp.ne.s32.totalorder %v635, 0
        %vm668 = vcmp.ne.s32.totalorder %v604, 15
        %vm669 = vcmp.ne.s32.totalorder %v605, 15
        %vm670 = vcmp.ne.s32.totalorder %v606, 15
        %vm671 = vcmp.ne.s32.totalorder %v607, 15
        %vm672 = vcmp.ne.s32.totalorder %v608, 15
        %vm673 = vcmp.ne.s32.totalorder %v609, 15
        %vm674 = vcmp.ne.s32.totalorder %v610, 15
        %vm675 = vcmp.ne.s32.totalorder %v611, 15
        %vm676 = vcmp.ne.s32.totalorder %v612, 15
        %vm677 = vcmp.ne.s32.totalorder %v613, 15
        %vm678 = vcmp.ne.s32.totalorder %v614, 15
        %vm679 = vcmp.ne.s32.totalorder %v615, 15
        %vm680 = vcmp.ne.s32.totalorder %v616, 15
        %vm681 = vcmp.ne.s32.totalorder %v617, 15
        %vm682 = vcmp.ne.s32.totalorder %v618, 15
        %vm683 = vcmp.ne.s32.totalorder %v619, 15
        %vm684 = vcmp.ne.s32.totalorder %v620, 15
        %vm685 = vcmp.ne.s32.totalorder %v621, 15
        %vm686 = vcmp.ne.s32.totalorder %v622, 15
        %vm687 = vcmp.ne.s32.totalorder %v623, 15
        %vm688 = vcmp.ne.s32.totalorder %v624, 15
        %vm689 = vcmp.ne.s32.totalorder %v625, 15
        %vm690 = vcmp.ne.s32.totalorder %v626, 15
        %vm691 = vcmp.ne.s32.totalorder %v627, 15
        %vm692 = vcmp.ne.s32.totalorder %v628, 15
        %vm693 = vcmp.ne.s32.totalorder %v629, 15
        %vm694 = vcmp.ne.s32.totalorder %v630, 15
        %vm695 = vcmp.ne.s32.totalorder %v631, 15
        %vm696 = vcmp.ne.s32.totalorder %v632, 15
        %vm697 = vcmp.ne.s32.totalorder %v633, 15
        %vm698 = vcmp.ne.s32.totalorder %v634, 15
        %vm699 = vcmp.ne.s32.totalorder %v635, 15
        %v700 = vld [vmem:[%s186] sm:$0xff]
        %v701 = vld [vmem:[%s186 + $0x10] sm:$0xff]
        %v702 = vld [vmem:[%s186 + $0x20] sm:$0xff]
        %v703 = vld [vmem:[%s186 + $0x30] sm:$0xff]
        %v704 = vld [vmem:[%s186 + $0x40] sm:$0xff]
        %v705 = vld [vmem:[%s186 + $0x50] sm:$0xff]
        %v706 = vld [vmem:[%s186 + $0x60] sm:$0xff]
        %v707 = vld [vmem:[%s186 + $0x70] sm:$0xff]
        %v708 = vld [vmem:[%s186 + $0x80] sm:$0xff]
        %v709 = vld [vmem:[%s186 + $0x90] sm:$0xff]
        %v710 = vld [vmem:[%s186 + $0xa0] sm:$0xff]
        %v711 = vld [vmem:[%s186 + $0xb0] sm:$0xff]
        %v712 = vld [vmem:[%s186 + $0xc0] sm:$0xff]
        %v713 = vld [vmem:[%s186 + $0xd0] sm:$0xff]
        %v714 = vld [vmem:[%s186 + $0xe0] sm:$0xff]
        %v715 = vld [vmem:[%s186 + $0xf0] sm:$0xff]
        %v716 = vld [vmem:[%s186 + $0x100] sm:$0xff]
        %v717 = vld [vmem:[%s186 + $0x110] sm:$0xff]
        %v718 = vld [vmem:[%s186 + $0x120] sm:$0xff]
        %v719 = vld [vmem:[%s186 + $0x130] sm:$0xff]
        %v720 = vld [vmem:[%s186 + $0x140] sm:$0xff]
        %v721 = vld [vmem:[%s186 + $0x150] sm:$0xff]
        %v722 = vld [vmem:[%s186 + $0x160] sm:$0xff]
        %v723 = vld [vmem:[%s186 + $0x170] sm:$0xff]
        %v724 = vld [vmem:[%s186 + $0x180] sm:$0xff]
        %v725 = vld [vmem:[%s186 + $0x190] sm:$0xff]
        %v726 = vld [vmem:[%s186 + $0x1a0] sm:$0xff]
        %v727 = vld [vmem:[%s186 + $0x1b0] sm:$0xff]
        %v728 = vld [vmem:[%s186 + $0x1c0] sm:$0xff]
        %v729 = vld [vmem:[%s186 + $0x1d0] sm:$0xff]
        %v730 = vld [vmem:[%s186 + $0x1e0] sm:$0xff]
        %v731 = vld [vmem:[%s186 + $0x1f0] sm:$0xff]
        %v732 = vld [vmem:[%s186 + $0x8] sm:$0xff]
        %v733 = vld [vmem:[%s186 + $0x18] sm:$0xff]
        %v734 = vld [vmem:[%s186 + $0x28] sm:$0xff]
        %v735 = vld [vmem:[%s186 + $0x38] sm:$0xff]
        %v736 = vld [vmem:[%s186 + $0x48] sm:$0xff]
        %v737 = vld [vmem:[%s186 + $0x58] sm:$0xff]
        %v738 = vld [vmem:[%s186 + $0x68] sm:$0xff]
        %v739 = vld [vmem:[%s186 + $0x78] sm:$0xff]
        %v740 = vld [vmem:[%s186 + $0x88] sm:$0xff]
        %v741 = vld [vmem:[%s186 + $0x98] sm:$0xff]
        %v742 = vld [vmem:[%s186 + $0xa8] sm:$0xff]
        %v743 = vld [vmem:[%s186 + $0xb8] sm:$0xff]
        %v744 = vld [vmem:[%s186 + $0xc8] sm:$0xff]
        %v745 = vld [vmem:[%s186 + $0xd8] sm:$0xff]
        %v746 = vld [vmem:[%s186 + $0xe8] sm:$0xff]
        %v747 = vld [vmem:[%s186 + $0xf8] sm:$0xff]
        %v748 = vld [vmem:[%s186 + $0x108] sm:$0xff]
        %v749 = vld [vmem:[%s186 + $0x118] sm:$0xff]
        %v750 = vld [vmem:[%s186 + $0x128] sm:$0xff]
        %v751 = vld [vmem:[%s186 + $0x138] sm:$0xff]
        %v752 = vld [vmem:[%s186 + $0x148] sm:$0xff]
        %v753 = vld [vmem:[%s186 + $0x158] sm:$0xff]
        %v754 = vld [vmem:[%s186 + $0x168] sm:$0xff]
        %v755 = vld [vmem:[%s186 + $0x178] sm:$0xff]
        %v756 = vld [vmem:[%s186 + $0x188] sm:$0xff]
        %v757 = vld [vmem:[%s186 + $0x198] sm:$0xff]
        %v758 = vld [vmem:[%s186 + $0x1a8] sm:$0xff]
        %v759 = vld [vmem:[%s186 + $0x1b8] sm:$0xff]
        %v760 = vld [vmem:[%s186 + $0x1c8] sm:$0xff]
        %v761 = vld [vmem:[%s186 + $0x1d8] sm:$0xff]
        %v762 = vld [vmem:[%s186 + $0x1e8] sm:$0xff]
        %v763 = vld [vmem:[%s186 + $0x1f8] sm:$0xff]
        %v764 = vld [vmem:[#allocation5] sm:$0xff]
        %v765 = vld [vmem:[#allocation5 + $0x8] sm:$0xff]
        %v766 = vld [vmem:[#allocation5 + $0x10] sm:$0xff]
        %v767 = vld [vmem:[#allocation5 + $0x18] sm:$0xff]
        %v768 = vld [vmem:[#allocation5 + $0x20] sm:$0xff]
        %v769 = vld [vmem:[#allocation5 + $0x28] sm:$0xff]
        %v770 = vld [vmem:[#allocation5 + $0x30] sm:$0xff]
        %v771 = vld [vmem:[#allocation5 + $0x38] sm:$0xff]
        %v772 = vld [vmem:[#allocation5 + $0x40] sm:$0xff]
        %v773 = vld [vmem:[#allocation5 + $0x48] sm:$0xff]
        %v774 = vld [vmem:[#allocation5 + $0x50] sm:$0xff]
        %v775 = vld [vmem:[#allocation5 + $0x58] sm:$0xff]
        %v776 = vld [vmem:[#allocation5 + $0x60] sm:$0xff]
        %v777 = vld [vmem:[#allocation5 + $0x68] sm:$0xff]
        %v778 = vld [vmem:[#allocation5 + $0x70] sm:$0xff]
        %v779 = vld [vmem:[#allocation5 + $0x78] sm:$0xff]
        %v780 = vld [vmem:[#allocation5 + $0x80] sm:$0xff]
        %v781 = vld [vmem:[#allocation5 + $0x88] sm:$0xff]
        %v782 = vld [vmem:[#allocation5 + $0x90] sm:$0xff]
        %v783 = vld [vmem:[#allocation5 + $0x98] sm:$0xff]
        %v784 = vld [vmem:[#allocation5 + $0xa0] sm:$0xff]
        %v785 = vld [vmem:[#allocation5 + $0xa8] sm:$0xff]
        %v786 = vld [vmem:[#allocation5 + $0xb0] sm:$0xff]
        %v787 = vld [vmem:[#allocation5 + $0xb8] sm:$0xff]
        %v788 = vld [vmem:[#allocation5 + $0xc0] sm:$0xff]
        %v789 = vld [vmem:[#allocation5 + $0xc8] sm:$0xff]
        %v790 = vld [vmem:[#allocation5 + $0xd0] sm:$0xff]
        %v791 = vld [vmem:[#allocation5 + $0xd8] sm:$0xff]
        %v792 = vld [vmem:[#allocation5 + $0xe0] sm:$0xff]
        %v793 = vld [vmem:[#allocation5 + $0xe8] sm:$0xff]
        %v794 = vld [vmem:[#allocation5 + $0xf0] sm:$0xff]
        %v795 = vld [vmem:[#allocation5 + $0xf8] sm:$0xff]
        %v796 = vld [vmem:[#allocation5 + $0x100] sm:$0xff]
        %v797 = vld [vmem:[#allocation5 + $0x108] sm:$0xff]
        %v798 = vld [vmem:[#allocation5 + $0x110] sm:$0xff]
        %v799 = vld [vmem:[#allocation5 + $0x118] sm:$0xff]
        %v800 = vld [vmem:[#allocation5 + $0x120] sm:$0xff]
        %v801 = vld [vmem:[#allocation5 + $0x128] sm:$0xff]
        %v802 = vld [vmem:[#allocation5 + $0x130] sm:$0xff]
        %v803 = vld [vmem:[#allocation5 + $0x138] sm:$0xff]
        %v804 = vld [vmem:[#allocation5 + $0x140] sm:$0xff]
        %v805 = vld [vmem:[#allocation5 + $0x148] sm:$0xff]
        %v806 = vld [vmem:[#allocation5 + $0x150] sm:$0xff]
        %v807 = vld [vmem:[#allocation5 + $0x158] sm:$0xff]
        %v808 = vld [vmem:[#allocation5 + $0x160] sm:$0xff]
        %v809 = vld [vmem:[#allocation5 + $0x168] sm:$0xff]
        %v810 = vld [vmem:[#allocation5 + $0x170] sm:$0xff]
        %v811 = vld [vmem:[#allocation5 + $0x178] sm:$0xff]
        %812 = vmatprep.subr.mxu0 %v765
        %813 = vmatpush1.msra.mxu0 %v764
        %814 = vmatprep.subr.mxu0 %v768
        %815 = vmatpush1.msra.mxu0 %v767
        %816 = vmatprep.subr.mxu0 %v771
        %817 = vmatpush1.msra.mxu0 %v770
        %818 = vmatprep.subr.mxu0 %v774
        %819 = vmatpush1.msra.mxu0 %v773
        %820 = vmatprep.subr.mxu0 %v777
        %821 = vmatpush1.msra.mxu0 %v776
        %822 = vmatprep.subr.mxu0 %v780
        %823 = vmatpush1.msra.mxu0 %v779
        %824 = vmatprep.subr.mxu0 %v783
        %825 = vmatpush1.msra.mxu0 %v782
        %826 = vmatprep.subr.mxu0 %v786
        %827 = vmatpush1.msra.mxu0 %v785
        %828 = vmatprep.subr.mxu0 %v789
        %829 = vmatpush1.msra.mxu0 %v788
        %830 = vmatprep.subr.mxu0 %v792
        %831 = vmatpush1.msra.mxu0 %v791
        %832 = vmatprep.subr.mxu0 %v795
        %833 = vmatpush1.msra.mxu0 %v794
        %834 = vmatprep.subr.mxu0 %v798
        %835 = vmatpush1.msra.mxu0 %v797
        %836 = vmatprep.subr.mxu0 %v801
        %837 = vmatpush1.msra.mxu0 %v800
        %838 = vmatprep.subr.mxu0 %v804
        %839 = vmatpush1.msra.mxu0 %v803
        %840 = vmatprep.subr.mxu0 %v807
        %841 = vmatpush1.msra.mxu0 %v806
        %842 = vmatprep.subr.mxu0 %v810
        %843 = vmatpush1.msra.mxu0 %v809
        %844 = vmatprep.subr.mxu0 0.0
        %845 = vmatpush1.msra.mxu0 0.0
        %846 = vmatprep.subr.mxu0 0.0
        %847 = vmatpush1.msra.mxu0 0.0
        %848 = vmatprep.subr.mxu0 0.0
        %849 = vmatpush1.msra.mxu0 0.0
        %850 = vmatprep.subr.mxu0 0.0
        %851 = vmatpush1.msra.mxu0 0.0
        %852 = vmatprep.subr.mxu0 0.0
        %853 = vmatpush1.msra.mxu0 0.0
        %854 = vmatprep.subr.mxu0 0.0
        %855 = vmatpush1.msra.mxu0 0.0
        %856 = vmatprep.subr.mxu0 0.0
        %857 = vmatpush1.msra.mxu0 0.0
        %858 = vmatprep.subr.mxu0 0.0
        %859 = vmatpush1.msra.mxu0 0.0
        %860 = vmatprep.subr.mxu0 0.0
        %861 = vmatpush1.msra.mxu0 0.0
        %862 = vmatprep.subr.mxu0 0.0
        %863 = vmatpush1.msra.mxu0 0.0
        %864 = vmatprep.subr.mxu0 0.0
        %865 = vmatpush1.msra.mxu0 0.0
        %866 = vmatprep.subr.mxu0 0.0
        %867 = vmatpush1.msra.mxu0 0.0
        %868 = vmatprep.subr.mxu0 0.0
        %869 = vmatpush1.msra.mxu0 0.0
        %870 = vmatprep.subr.mxu0 0.0
        %871 = vmatpush1.msra.mxu0 0.0
        %872 = vmatprep.subr.mxu0 0.0
        %873 = vmatpush1.msra.mxu0 0.0
        %874 = vmatprep.subr.mxu0 0.0
        %875 = vmatpush1.msra.mxu0 0.0
        %876 = vmatprep.mubr.f32.mxu0 0.0
        %877 = vmatmul.mubr.f32.gmra.mrb[0].mxu0 %v700
        %v878 = vpop.f32.mrb[0].mxu0
        %v879 = vadd.f32 0.0, %v878
        %v880 = vpop.f32.mrb[0].mxu0
        %v881 = vadd.f32 0.0, %v880
        %882 = vmatprep.mubr.f32.mxu0 0.0
        %883 = vmatmul.mubr.f32.gmra.mrb[0].mxu0 %v701
        %v884 = vpop.f32.mrb[0].mxu0
        %v885 = vadd.f32 0.0, %v884
        %v886 = vpop.f32.mrb[0].mxu0
        %v887 = vadd.f32 0.0, %v886
        %888 = vmatprep.mubr.f32.mxu0 0.0
        %889 = vmatmul.mubr.f32.gmra.mrb[0].mxu0 %v702
        %v890 = vpop.f32.mrb[0].mxu0
        %v891 = vadd.f32 0.0, %v890
        %v892 = vpop.f32.mrb[0].mxu0
        %v893 = vadd.f32 0.0, %v892
        %894 = vmatprep.mubr.f32.mxu0 0.0
        %895 = vmatmul.mubr.f32.gmra.mrb[0].mxu0 %v703
        %v896 = vpop.f32.mrb[0].mxu0
        %v897 = vadd.f32 0.0, %v896
        %v898 = vpop.f32.mrb[0].mxu0
        %v899 = vadd.f32 0.0, %v898
        %900 = vmatprep.mubr.f32.mxu0 0.0
        %901 = vmatmul.mubr.f32.gmra.mrb[0].mxu0 %v704
        %v902 = vpop.f32.mrb[0].mxu0
        %v903 = vadd.f32 0.0, %v902
        %v904 = vpop.f32.mrb[0].mxu0
        %v905 = vadd.f32 0.0, %v904
        %906 = vmatprep.mubr.f32.mxu0 0.0
        %907 = vmatmul.mubr.f32.gmra.mrb[0].mxu0 %v705
        %v908 = vpop.f32.mrb[0].mxu0
        %v909 = vadd.f32 0.0, %v908
        %v910 = vpop.f32.mrb[0].mxu0
        %v911 = vadd.f32 0.0, %v910
        %912 = vmatprep.mubr.f32.mxu0 0.0
        %913 = vmatmul.mubr.f32.gmra.mrb[0].mxu0 %v706
        %v914 = vpop.f32.mrb[0].mxu0
        %v915 = vadd.f32 0.0, %v914
        %v916 = vpop.f32.mrb[0].mxu0
        %v917 = vadd.f32 0.0, %v916
        %918 = vmatprep.mubr.f32.mxu0 0.0
        %919 = vmatmul.mubr.f32.gmra.mrb[0].mxu0 %v707
        %v920 = vpop.f32.mrb[0].mxu0
        %v921 = vadd.f32 0.0, %v920
        %v922 = vpop.f32.mrb[0].mxu0
        %v923 = vadd.f32 0.0, %v922
        %924 = vmatprep.mubr.f32.mxu0 0.0
        %925 = vmatmul.mubr.f32.gmra.mrb[0].mxu0 %v708
        %v926 = vpop.f32.mrb[0].mxu0
        %v927 = vadd.f32 0.0, %v926
        %v928 = vpop.f32.mrb[0].mxu0
        %v929 = vadd.f32 0.0, %v928
        %930 = vmatprep.mubr.f32.mxu0 0.0
        %931 = vmatmul.mubr.f32.gmra.mrb[0].mxu0 %v709
        %v932 = vpop.f32.mrb[0].mxu0
        %v933 = vadd.f32 0.0, %v932
        %v934 = vpop.f32.mrb[0].mxu0
        %v935 = vadd.f32 0.0, %v934
        %936 = vmatprep.mubr.f32.mxu0 0.0
        %937 = vmatmul.mubr.f32.gmra.mrb[0].mxu0 %v710
        %v938 = vpop.f32.mrb[0].mxu0
        %v939 = vadd.f32 0.0, %v938
        %v940 = vpop.f32.mrb[0].mxu0
        %v941 = vadd.f32 0.0, %v940
        %942 = vmatprep.mubr.f32.mxu0 0.0
        %943 = vmatmul.mubr.f32.gmra.mrb[0].mxu0 %v711
        %v944 = vpop.f32.mrb[0].mxu0
        %v945 = vadd.f32 0.0, %v944
        %v946 = vpop.f32.mrb[0].mxu0
        %v947 = vadd.f32 0.0, %v946
        %948 = vmatprep.mubr.f32.mxu0 0.0
        %949 = vmatmul.mubr.f32.gmra.mrb[0].mxu0 %v712
        %v950 = vpop.f32.mrb[0].mxu0
        %v951 = vadd.f32 0.0, %v950
        %v952 = vpop.f32.mrb[0].mxu0
        %v953 = vadd.f32 0.0, %v952
        %954 = vmatprep.mubr.f32.mxu0 0.0
        %955 = vmatmul.mubr.f32.gmra.mrb[0].mxu0 %v713
        %v956 = vpop.f32.mrb[0].mxu0
        %v957 = vadd.f32 0.0, %v956
        %v958 = vpop.f32.mrb[0].mxu0
        %v959 = vadd.f32 0.0, %v958
        %960 = vmatprep.mubr.f32.mxu0 0.0
        %961 = vmatmul.mubr.f32.gmra.mrb[0].mxu0 %v714
        %v962 = vpop.f32.mrb[0].mxu0
        %v963 = vadd.f32 0.0, %v962
        %v964 = vpop.f32.mrb[0].mxu0
        %v965 = vadd.f32 0.0, %v964
        %966 = vmatprep.mubr.f32.mxu0 0.0
        %967 = vmatmul.mubr.f32.gmra.mrb[0].mxu0 %v715
        %v968 = vpop.f32.mrb[0].mxu0
        %v969 = vadd.f32 0.0, %v968
        %v970 = vpop.f32.mrb[0].mxu0
        %v971 = vadd.f32 0.0, %v970
        %972 = vmatprep.mubr.f32.mxu0 0.0
        %973 = vmatmul.mubr.f32.gmra.mrb[0].mxu0 %v716
        %v974 = vpop.f32.mrb[0].mxu0
        %v975 = vadd.f32 0.0, %v974
        %v976 = vpop.f32.mrb[0].mxu0
        %v977 = vadd.f32 0.0, %v976
        %978 = vmatprep.mubr.f32.mxu0 0.0
        %979 = vmatmul.mubr.f32.gmra.mrb[0].mxu0 %v717
        %v980 = vpop.f32.mrb[0].mxu0
        %v981 = vadd.f32 0.0, %v980
        %v982 = vpop.f32.mrb[0].mxu0
        %v983 = vadd.f32 0.0, %v982
        %984 = vmatprep.mubr.f32.mxu0 0.0
        %985 = vmatmul.mubr.f32.gmra.mrb[0].mxu0 %v718
        %v986 = vpop.f32.mrb[0].mxu0
        %v987 = vadd.f32 0.0, %v986
        %v988 = vpop.f32.mrb[0].mxu0
        %v989 = vadd.f32 0.0, %v988
        %990 = vmatprep.mubr.f32.mxu0 0.0
        %991 = vmatmul.mubr.f32.gmra.mrb[0].mxu0 %v719
        %v992 = vpop.f32.mrb[0].mxu0
        %v993 = vadd.f32 0.0, %v992
        %v994 = vpop.f32.mrb[0].mxu0
        %v995 = vadd.f32 0.0, %v994
        %996 = vmatprep.mubr.f32.mxu0 0.0
        %997 = vmatmul.mubr.f32.gmra.mrb[0].mxu0 %v720
        %v998 = vpop.f32.mrb[0].mxu0
        %v999 = vadd.f32 0.0, %v998
        %v1000 = vpop.f32.mrb[0].mxu0
        %v1001 = vadd.f32 0.0, %v1000
        %1002 = vmatprep.mubr.f32.mxu0 0.0
        %1003 = vmatmul.mubr.f32.gmra.mrb[0].mxu0 %v721
        %v1004 = vpop.f32.mrb[0].mxu0
        %v1005 = vadd.f32 0.0, %v1004
        %v1006 = vpop.f32.mrb[0].mxu0
        %v1007 = vadd.f32 0.0, %v1006
        %1008 = vmatprep.mubr.f32.mxu0 0.0
        %1009 = vmatmul.mubr.f32.gmra.mrb[0].mxu0 %v722
        %v1010 = vpop.f32.mrb[0].mxu0
        %v1011 = vadd.f32 0.0, %v1010
        %v1012 = vpop.f32.mrb[0].mxu0
        %v1013 = vadd.f32 0.0, %v1012
        %1014 = vmatprep.mubr.f32.mxu0 0.0
        %1015 = vmatmul.mubr.f32.gmra.mrb[0].mxu0 %v723
        %v1016 = vpop.f32.mrb[0].mxu0
        %v1017 = vadd.f32 0.0, %v1016
        %v1018 = vpop.f32.mrb[0].mxu0
        %v1019 = vadd.f32 0.0, %v1018
        %1020 = vmatprep.mubr.f32.mxu0 0.0
        %1021 = vmatmul.mubr.f32.gmra.mrb[0].mxu0 %v724
        %v1022 = vpop.f32.mrb[0].mxu0
        %v1023 = vadd.f32 0.0, %v1022
        %v1024 = vpop.f32.mrb[0].mxu0
        %v1025 = vadd.f32 0.0, %v1024
        %1026 = vmatprep.mubr.f32.mxu0 0.0
        %1027 = vmatmul.mubr.f32.gmra.mrb[0].mxu0 %v725
        %v1028 = vpop.f32.mrb[0].mxu0
        %v1029 = vadd.f32 0.0, %v1028
        %v1030 = vpop.f32.mrb[0].mxu0
        %v1031 = vadd.f32 0.0, %v1030
        %1032 = vmatprep.mubr.f32.mxu0 0.0
        %1033 = vmatmul.mubr.f32.gmra.mrb[0].mxu0 %v726
        %v1034 = vpop.f32.mrb[0].mxu0
        %v1035 = vadd.f32 0.0, %v1034
        %v1036 = vpop.f32.mrb[0].mxu0
        %v1037 = vadd.f32 0.0, %v1036
        %1038 = vmatprep.mubr.f32.mxu0 0.0
        %1039 = vmatmul.mubr.f32.gmra.mrb[0].mxu0 %v727
        %v1040 = vpop.f32.mrb[0].mxu0
        %v1041 = vadd.f32 0.0, %v1040
        %v1042 = vpop.f32.mrb[0].mxu0
        %v1043 = vadd.f32 0.0, %v1042
        %1044 = vmatprep.mubr.f32.mxu0 0.0
        %1045 = vmatmul.mubr.f32.gmra.mrb[0].mxu0 %v728
        %v1046 = vpop.f32.mrb[0].mxu0
        %v1047 = vadd.f32 0.0, %v1046
        %v1048 = vpop.f32.mrb[0].mxu0
        %v1049 = vadd.f32 0.0, %v1048
        %1050 = vmatprep.mubr.f32.mxu0 0.0
        %1051 = vmatmul.mubr.f32.gmra.mrb[0].mxu0 %v729
        %v1052 = vpop.f32.mrb[0].mxu0
        %v1053 = vadd.f32 0.0, %v1052
        %v1054 = vpop.f32.mrb[0].mxu0
        %v1055 = vadd.f32 0.0, %v1054
        %1056 = vmatprep.mubr.f32.mxu0 0.0
        %1057 = vmatmul.mubr.f32.gmra.mrb[0].mxu0 %v730
        %v1058 = vpop.f32.mrb[0].mxu0
        %v1059 = vadd.f32 0.0, %v1058
        %v1060 = vpop.f32.mrb[0].mxu0
        %v1061 = vadd.f32 0.0, %v1060
        %1062 = vmatprep.mubr.f32.mxu0 0.0
        %1063 = vmatmul.mubr.f32.gmra.mrb[0].mxu0 %v731
        %v1064 = vpop.f32.mrb[0].mxu0
        %v1065 = vadd.f32 0.0, %v1064
        %v1066 = vpop.f32.mrb[0].mxu0
        %v1067 = vadd.f32 0.0, %v1066
        %1068 = vdwg.mxu0
        %1069 = vmatprep.subr.mxu0 0.0
        %1070 = vmatpush1.msra.mxu0 %v766
        %1071 = vmatprep.subr.mxu0 0.0
        %1072 = vmatpush1.msra.mxu0 %v769
        %1073 = vmatprep.subr.mxu0 0.0
        %1074 = vmatpush1.msra.mxu0 %v772
        %1075 = vmatprep.subr.mxu0 0.0
        %1076 = vmatpush1.msra.mxu0 %v775
        %1077 = vmatprep.subr.mxu0 0.0
        %1078 = vmatpush1.msra.mxu0 %v778
        %1079 = vmatprep.subr.mxu0 0.0
        %1080 = vmatpush1.msra.mxu0 %v781
        %1081 = vmatprep.subr.mxu0 0.0
        %1082 = vmatpush1.msra.mxu0 %v784
        %1083 = vmatprep.subr.mxu0 0.0
        %1084 = vmatpush1.msra.mxu0 %v787
        %1085 = vmatprep.subr.mxu0 0.0
        %1086 = vmatpush1.msra.mxu0 %v790
        %1087 = vmatprep.subr.mxu0 0.0
        %1088 = vmatpush1.msra.mxu0 %v793
        %1089 = vmatprep.subr.mxu0 0.0
        %1090 = vmatpush1.msra.mxu0 %v796
        %1091 = vmatprep.subr.mxu0 0.0
        %1092 = vmatpush1.msra.mxu0 %v799
        %1093 = vmatprep.subr.mxu0 0.0
        %1094 = vmatpush1.msra.mxu0 %v802
        %1095 = vmatprep.subr.mxu0 0.0
        %1096 = vmatpush1.msra.mxu0 %v805
        %1097 = vmatprep.subr.mxu0 0.0
        %1098 = vmatpush1.msra.mxu0 %v808
        %1099 = vmatprep.subr.mxu0 0.0
        %1100 = vmatpush1.msra.mxu0 %v811
        %1101 = vmatprep.subr.mxu0 0.0
        %1102 = vmatpush1.msra.mxu0 0.0
        %1103 = vmatprep.subr.mxu0 0.0
        %1104 = vmatpush1.msra.mxu0 0.0
        %1105 = vmatprep.subr.mxu0 0.0
        %1106 = vmatpush1.msra.mxu0 0.0
        %1107 = vmatprep.subr.mxu0 0.0
        %1108 = vmatpush1.msra.mxu0 0.0
        %1109 = vmatprep.subr.mxu0 0.0
        %1110 = vmatpush1.msra.mxu0 0.0
        %1111 = vmatprep.subr.mxu0 0.0
        %1112 = vmatpush1.msra.mxu0 0.0
        %1113 = vmatprep.subr.mxu0 0.0
        %1114 = vmatpush1.msra.mxu0 0.0
        %1115 = vmatprep.subr.mxu0 0.0
        %1116 = vmatpush1.msra.mxu0 0.0
        %1117 = vmatprep.subr.mxu0 0.0
        %1118 = vmatpush1.msra.mxu0 0.0
        %1119 = vmatprep.subr.mxu0 0.0
        %1120 = vmatpush1.msra.mxu0 0.0
        %1121 = vmatprep.subr.mxu0 0.0
        %1122 = vmatpush1.msra.mxu0 0.0
        %1123 = vmatprep.subr.mxu0 0.0
        %1124 = vmatpush1.msra.mxu0 0.0
        %1125 = vmatprep.subr.mxu0 0.0
        %1126 = vmatpush1.msra.mxu0 0.0
        %1127 = vmatprep.subr.mxu0 0.0
        %1128 = vmatpush1.msra.mxu0 0.0
        %1129 = vmatprep.subr.mxu0 0.0
        %1130 = vmatpush1.msra.mxu0 0.0
        %1131 = vmatprep.subr.mxu0 0.0
        %1132 = vmatpush1.msra.mxu0 0.0
        %1133 = vmatprep.mubr.f32.mxu0 0.0
        %1134 = vmatmul.mubr.f32.gmra.mrb[0].mxu0 %v700
        %v1135 = vpop.f32.mrb[0].mxu0
        %v1136 = vadd.f32 0.0, %v1135
        %v1137 = vpop.f32.mrb[0].mxu0
        %1138 = vmatprep.mubr.f32.mxu0 0.0
        %1139 = vmatmul.mubr.f32.gmra.mrb[0].mxu0 %v701
        %v1140 = vpop.f32.mrb[0].mxu0
        %v1141 = vadd.f32 0.0, %v1140
        %v1142 = vpop.f32.mrb[0].mxu0
        %1143 = vmatprep.mubr.f32.mxu0 0.0
        %1144 = vmatmul.mubr.f32.gmra.mrb[0].mxu0 %v702
        %v1145 = vpop.f32.mrb[0].mxu0
        %v1146 = vadd.f32 0.0, %v1145
        %v1147 = vpop.f32.mrb[0].mxu0
        %1148 = vmatprep.mubr.f32.mxu0 0.0
        %1149 = vmatmul.mubr.f32.gmra.mrb[0].mxu0 %v703
        %v1150 = vpop.f32.mrb[0].mxu0
        %v1151 = vadd.f32 0.0, %v1150
        %v1152 = vpop.f32.mrb[0].mxu0
        %1153 = vmatprep.mubr.f32.mxu0 0.0
        %1154 = vmatmul.mubr.f32.gmra.mrb[0].mxu0 %v704
        %v1155 = vpop.f32.mrb[0].mxu0
        %v1156 = vadd.f32 0.0, %v1155
        %v1157 = vpop.f32.mrb[0].mxu0
        %1158 = vmatprep.mubr.f32.mxu0 0.0
        %1159 = vmatmul.mubr.f32.gmra.mrb[0].mxu0 %v705
        %v1160 = vpop.f32.mrb[0].mxu0
        %v1161 = vadd.f32 0.0, %v1160
        %v1162 = vpop.f32.mrb[0].mxu0
        %1163 = vmatprep.mubr.f32.mxu0 0.0
        %1164 = vmatmul.mubr.f32.gmra.mrb[0].mxu0 %v706
        %v1165 = vpop.f32.mrb[0].mxu0
        %v1166 = vadd.f32 0.0, %v1165
        %v1167 = vpop.f32.mrb[0].mxu0
        %1168 = vmatprep.mubr.f32.mxu0 0.0
        %1169 = vmatmul.mubr.f32.gmra.mrb[0].mxu0 %v707
        %v1170 = vpop.f32.mrb[0].mxu0
        %v1171 = vadd.f32 0.0, %v1170
        %v1172 = vpop.f32.mrb[0].mxu0
        %1173 = vmatprep.mubr.f32.mxu0 0.0
        %1174 = vmatmul.mubr.f32.gmra.mrb[0].mxu0 %v708
        %v1175 = vpop.f32.mrb[0].mxu0
        %v1176 = vadd.f32 0.0, %v1175
        %v1177 = vpop.f32.mrb[0].mxu0
        %1178 = vmatprep.mubr.f32.mxu0 0.0
        %1179 = vmatmul.mubr.f32.gmra.mrb[0].mxu0 %v709
        %v1180 = vpop.f32.mrb[0].mxu0
        %v1181 = vadd.f32 0.0, %v1180
        %v1182 = vpop.f32.mrb[0].mxu0
        %1183 = vmatprep.mubr.f32.mxu0 0.0
        %1184 = vmatmul.mubr.f32.gmra.mrb[0].mxu0 %v710
        %v1185 = vpop.f32.mrb[0].mxu0
        %v1186 = vadd.f32 0.0, %v1185
        %v1187 = vpop.f32.mrb[0].mxu0
        %1188 = vmatprep.mubr.f32.mxu0 0.0
        %1189 = vmatmul.mubr.f32.gmra.mrb[0].mxu0 %v711
        %v1190 = vpop.f32.mrb[0].mxu0
        %v1191 = vadd.f32 0.0, %v1190
        %v1192 = vpop.f32.mrb[0].mxu0
        %1193 = vmatprep.mubr.f32.mxu0 0.0
        %1194 = vmatmul.mubr.f32.gmra.mrb[0].mxu0 %v712
        %v1195 = vpop.f32.mrb[0].mxu0
        %v1196 = vadd.f32 0.0, %v1195
        %v1197 = vpop.f32.mrb[0].mxu0
        %1198 = vmatprep.mubr.f32.mxu0 0.0
        %1199 = vmatmul.mubr.f32.gmra.mrb[0].mxu0 %v713
        %v1200 = vpop.f32.mrb[0].mxu0
        %v1201 = vadd.f32 0.0, %v1200
        %v1202 = vpop.f32.mrb[0].mxu0
        %1203 = vmatprep.mubr.f32.mxu0 0.0
        %1204 = vmatmul.mubr.f32.gmra.mrb[0].mxu0 %v714
        %v1205 = vpop.f32.mrb[0].mxu0
        %v1206 = vadd.f32 0.0, %v1205
        %v1207 = vpop.f32.mrb[0].mxu0
        %1208 = vmatprep.mubr.f32.mxu0 0.0
        %1209 = vmatmul.mubr.f32.gmra.mrb[0].mxu0 %v715
        %v1210 = vpop.f32.mrb[0].mxu0
        %v1211 = vadd.f32 0.0, %v1210
        %v1212 = vpop.f32.mrb[0].mxu0
        %1213 = vmatprep.mubr.f32.mxu0 0.0
        %1214 = vmatmul.mubr.f32.gmra.mrb[0].mxu0 %v716
        %v1215 = vpop.f32.mrb[0].mxu0
        %v1216 = vadd.f32 0.0, %v1215
        %v1217 = vpop.f32.mrb[0].mxu0
        %1218 = vmatprep.mubr.f32.mxu0 0.0
        %1219 = vmatmul.mubr.f32.gmra.mrb[0].mxu0 %v717
        %v1220 = vpop.f32.mrb[0].mxu0
        %v1221 = vadd.f32 0.0, %v1220
        %v1222 = vpop.f32.mrb[0].mxu0
        %1223 = vmatprep.mubr.f32.mxu0 0.0
        %1224 = vmatmul.mubr.f32.gmra.mrb[0].mxu0 %v718
        %v1225 = vpop.f32.mrb[0].mxu0
        %v1226 = vadd.f32 0.0, %v1225
        %v1227 = vpop.f32.mrb[0].mxu0
        %1228 = vmatprep.mubr.f32.mxu0 0.0
        %1229 = vmatmul.mubr.f32.gmra.mrb[0].mxu0 %v719
        %v1230 = vpop.f32.mrb[0].mxu0
        %v1231 = vadd.f32 0.0, %v1230
        %v1232 = vpop.f32.mrb[0].mxu0
        %1233 = vmatprep.mubr.f32.mxu0 0.0
        %1234 = vmatmul.mubr.f32.gmra.mrb[0].mxu0 %v720
        %v1235 = vpop.f32.mrb[0].mxu0
        %v1236 = vadd.f32 0.0, %v1235
        %v1237 = vpop.f32.mrb[0].mxu0
        %1238 = vmatprep.mubr.f32.mxu0 0.0
        %1239 = vmatmul.mubr.f32.gmra.mrb[0].mxu0 %v721
        %v1240 = vpop.f32.mrb[0].mxu0
        %v1241 = vadd.f32 0.0, %v1240
        %v1242 = vpop.f32.mrb[0].mxu0
        %1243 = vmatprep.mubr.f32.mxu0 0.0
        %1244 = vmatmul.mubr.f32.gmra.mrb[0].mxu0 %v722
        %v1245 = vpop.f32.mrb[0].mxu0
        %v1246 = vadd.f32 0.0, %v1245
        %v1247 = vpop.f32.mrb[0].mxu0
        %1248 = vmatprep.mubr.f32.mxu0 0.0
        %1249 = vmatmul.mubr.f32.gmra.mrb[0].mxu0 %v723
        %v1250 = vpop.f32.mrb[0].mxu0
        %v1251 = vadd.f32 0.0, %v1250
        %v1252 = vpop.f32.mrb[0].mxu0
        %1253 = vmatprep.mubr.f32.mxu0 0.0
        %1254 = vmatmul.mubr.f32.gmra.mrb[0].mxu0 %v724
        %v1255 = vpop.f32.mrb[0].mxu0
        %v1256 = vadd.f32 0.0, %v1255
        %v1257 = vpop.f32.mrb[0].mxu0
        %1258 = vmatprep.mubr.f32.mxu0 0.0
        %1259 = vmatmul.mubr.f32.gmra.mrb[0].mxu0 %v725
        %v1260 = vpop.f32.mrb[0].mxu0
        %v1261 = vadd.f32 0.0, %v1260
        %v1262 = vpop.f32.mrb[0].mxu0
        %1263 = vmatprep.mubr.f32.mxu0 0.0
        %1264 = vmatmul.mubr.f32.gmra.mrb[0].mxu0 %v726
        %v1265 = vpop.f32.mrb[0].mxu0
        %v1266 = vadd.f32 0.0, %v1265
        %v1267 = vpop.f32.mrb[0].mxu0
        %1268 = vmatprep.mubr.f32.mxu0 0.0
        %1269 = vmatmul.mubr.f32.gmra.mrb[0].mxu0 %v727
        %v1270 = vpop.f32.mrb[0].mxu0
        %v1271 = vadd.f32 0.0, %v1270
        %v1272 = vpop.f32.mrb[0].mxu0
        %1273 = vmatprep.mubr.f32.mxu0 0.0
        %1274 = vmatmul.mubr.f32.gmra.mrb[0].mxu0 %v728
        %v1275 = vpop.f32.mrb[0].mxu0
        %v1276 = vadd.f32 0.0, %v1275
        %v1277 = vpop.f32.mrb[0].mxu0
        %1278 = vmatprep.mubr.f32.mxu0 0.0
        %1279 = vmatmul.mubr.f32.gmra.mrb[0].mxu0 %v729
        %v1280 = vpop.f32.mrb[0].mxu0
        %v1281 = vadd.f32 0.0, %v1280
        %v1282 = vpop.f32.mrb[0].mxu0
        %1283 = vmatprep.mubr.f32.mxu0 0.0
        %1284 = vmatmul.mubr.f32.gmra.mrb[0].mxu0 %v730
        %v1285 = vpop.f32.mrb[0].mxu0
        %v1286 = vadd.f32 0.0, %v1285
        %v1287 = vpop.f32.mrb[0].mxu0
        %1288 = vmatprep.mubr.f32.mxu0 0.0
        %1289 = vmatmul.mubr.f32.gmra.mrb[0].mxu0 %v731
        %v1290 = vpop.f32.mrb[0].mxu0
        %v1291 = vadd.f32 0.0, %v1290
        %v1292 = vpop.f32.mrb[0].mxu0
        %1293 = vdwg.mxu0
        %v1294 = vrot.slane %v879, 7
        %v1295 = vrot.slane %v885, 7
        %v1296 = vrot.slane %v891, 7
        %v1297 = vrot.slane %v897, 7
        %v1298 = vrot.slane %v903, 7
        %v1299 = vrot.slane %v909, 7
        %v1300 = vrot.slane %v915, 7
        %v1301 = vrot.slane %v921, 7
        %v1302 = vrot.slane %v927, 7
        %v1303 = vrot.slane %v933, 7
        %v1304 = vrot.slane %v939, 7
        %v1305 = vrot.slane %v945, 7
        %v1306 = vrot.slane %v951, 7
        %v1307 = vrot.slane %v957, 7
        %v1308 = vrot.slane %v963, 7
        %v1309 = vrot.slane %v969, 7
        %v1310 = vrot.slane %v975, 7
        %v1311 = vrot.slane %v981, 7
        %v1312 = vrot.slane %v987, 7
        %v1313 = vrot.slane %v993, 7
        %v1314 = vrot.slane %v999, 7
        %v1315 = vrot.slane %v1005, 7
        %v1316 = vrot.slane %v1011, 7
        %v1317 = vrot.slane %v1017, 7
        %v1318 = vrot.slane %v1023, 7
        %v1319 = vrot.slane %v1029, 7
        %v1320 = vrot.slane %v1035, 7
        %v1321 = vrot.slane %v1041, 7
        %v1322 = vrot.slane %v1047, 7
        %v1323 = vrot.slane %v1053, 7
        %v1324 = vrot.slane %v1059, 7
        %v1325 = vrot.slane %v1065, 7
        %vm1326 = vcmp.lt.s32.totalorder %v220, 1
        %v1327 = vsel %vm1326, %v1324, %v1325
        %v1328 = vsel %vm1326, %v1323, %v1324
        %v1329 = vsel %vm1326, %v1322, %v1323
        %v1330 = vsel %vm1326, %v1321, %v1322
        %v1331 = vsel %vm1326, %v1320, %v1321
        %v1332 = vsel %vm1326, %v1319, %v1320
        %v1333 = vsel %vm1326, %v1318, %v1319
        %v1334 = vsel %vm1326, %v1317, %v1318
        %v1335 = vsel %vm1326, %v1316, %v1317
        %v1336 = vsel %vm1326, %v1315, %v1316
        %v1337 = vsel %vm1326, %v1314, %v1315
        %v1338 = vsel %vm1326, %v1313, %v1314
        %v1339 = vsel %vm1326, %v1312, %v1313
        %v1340 = vsel %vm1326, %v1311, %v1312
        %v1341 = vsel %vm1326, %v1310, %v1311
        %v1342 = vsel %vm1326, %v1309, %v1310
        %v1343 = vsel %vm1326, %v1308, %v1309
        %v1344 = vsel %vm1326, %v1307, %v1308
        %v1345 = vsel %vm1326, %v1306, %v1307
        %v1346 = vsel %vm1326, %v1305, %v1306
        %v1347 = vsel %vm1326, %v1304, %v1305
        %v1348 = vsel %vm1326, %v1303, %v1304
        %v1349 = vsel %vm1326, %v1302, %v1303
        %v1350 = vsel %vm1326, %v1301, %v1302
        %v1351 = vsel %vm1326, %v1300, %v1301
        %v1352 = vsel %vm1326, %v1299, %v1300
        %v1353 = vsel %vm1326, %v1298, %v1299
        %v1354 = vsel %vm1326, %v1297, %v1298
        %v1355 = vsel %vm1326, %v1296, %v1297
        %v1356 = vsel %vm1326, %v1295, %v1296
        %v1357 = vsel %vm1326, %v1294, %v1295
        %v1358 = vsel %vm1326, %v1325, %v1294
        %v1359 = vsel %vm636, 1, 0
        %v1360 = vsel %vm637, 1, 0
        %v1361 = vsel %vm638, 1, 0
        %v1362 = vsel %vm639, 1, 0
        %v1363 = vsel %vm640, 1, 0
        %v1364 = vsel %vm641, 1, 0
        %v1365 = vsel %vm642, 1, 0
        %v1366 = vsel %vm643, 1, 0
        %v1367 = vsel %vm644, 1, 0
        %v1368 = vsel %vm645, 1, 0
        %v1369 = vsel %vm646, 1, 0
        %v1370 = vsel %vm647, 1, 0
        %v1371 = vsel %vm648, 1, 0
        %v1372 = vsel %vm649, 1, 0
        %v1373 = vsel %vm650, 1, 0
        %v1374 = vsel %vm651, 1, 0
        %v1375 = vsel %vm652, 1, 0
        %v1376 = vsel %vm653, 1, 0
        %v1377 = vsel %vm654, 1, 0
        %v1378 = vsel %vm655, 1, 0
        %v1379 = vsel %vm656, 1, 0
        %v1380 = vsel %vm657, 1, 0
        %v1381 = vsel %vm658, 1, 0
        %v1382 = vsel %vm659, 1, 0
        %v1383 = vsel %vm660, 1, 0
        %v1384 = vsel %vm661, 1, 0
        %v1385 = vsel %vm662, 1, 0
        %v1386 = vsel %vm663, 1, 0
        %v1387 = vsel %vm664, 1, 0
        %v1388 = vsel %vm665, 1, 0
        %v1389 = vsel %vm666, 1, 0
        %v1390 = vsel %vm667, 1, 0
        %vm1391 = vcmp.eq.s32.totalorder %v1359, 1
        %vm1392 = vcmp.eq.s32.totalorder %v1360, 1
        %vm1393 = vcmp.eq.s32.totalorder %v1361, 1
        %vm1394 = vcmp.eq.s32.totalorder %v1362, 1
        %vm1395 = vcmp.eq.s32.totalorder %v1363, 1
        %vm1396 = vcmp.eq.s32.totalorder %v1364, 1
        %vm1397 = vcmp.eq.s32.totalorder %v1365, 1
        %vm1398 = vcmp.eq.s32.totalorder %v1366, 1
        %vm1399 = vcmp.eq.s32.totalorder %v1367, 1
        %vm1400 = vcmp.eq.s32.totalorder %v1368, 1
        %vm1401 = vcmp.eq.s32.totalorder %v1369, 1
        %vm1402 = vcmp.eq.s32.totalorder %v1370, 1
        %vm1403 = vcmp.eq.s32.totalorder %v1371, 1
        %vm1404 = vcmp.eq.s32.totalorder %v1372, 1
        %vm1405 = vcmp.eq.s32.totalorder %v1373, 1
        %vm1406 = vcmp.eq.s32.totalorder %v1374, 1
        %vm1407 = vcmp.eq.s32.totalorder %v1375, 1
        %vm1408 = vcmp.eq.s32.totalorder %v1376, 1
        %vm1409 = vcmp.eq.s32.totalorder %v1377, 1
        %vm1410 = vcmp.eq.s32.totalorder %v1378, 1
        %vm1411 = vcmp.eq.s32.totalorder %v1379, 1
        %vm1412 = vcmp.eq.s32.totalorder %v1380, 1
        %vm1413 = vcmp.eq.s32.totalorder %v1381, 1
        %vm1414 = vcmp.eq.s32.totalorder %v1382, 1
        %vm1415 = vcmp.eq.s32.totalorder %v1383, 1
        %vm1416 = vcmp.eq.s32.totalorder %v1384, 1
        %vm1417 = vcmp.eq.s32.totalorder %v1385, 1
        %vm1418 = vcmp.eq.s32.totalorder %v1386, 1
        %vm1419 = vcmp.eq.s32.totalorder %v1387, 1
        %vm1420 = vcmp.eq.s32.totalorder %v1388, 1
        %vm1421 = vcmp.eq.s32.totalorder %v1389, 1
        %vm1422 = vcmp.eq.s32.totalorder %v1390, 1
        %v1423 = vsel %vm1391, %v1358, 0.0
        %v1424 = vsel %vm1392, %v1357, 0.0
        %v1425 = vsel %vm1393, %v1356, 0.0
        %v1426 = vsel %vm1394, %v1355, 0.0
        %v1427 = vsel %vm1395, %v1354, 0.0
        %v1428 = vsel %vm1396, %v1353, 0.0
        %v1429 = vsel %vm1397, %v1352, 0.0
        %v1430 = vsel %vm1398, %v1351, 0.0
        %v1431 = vsel %vm1399, %v1350, 0.0
        %v1432 = vsel %vm1400, %v1349, 0.0
        %v1433 = vsel %vm1401, %v1348, 0.0
        %v1434 = vsel %vm1402, %v1347, 0.0
        %v1435 = vsel %vm1403, %v1346, 0.0
        %v1436 = vsel %vm1404, %v1345, 0.0
        %v1437 = vsel %vm1405, %v1344, 0.0
        %v1438 = vsel %vm1406, %v1343, 0.0
        %v1439 = vsel %vm1407, %v1342, 0.0
        %v1440 = vsel %vm1408, %v1341, 0.0
        %v1441 = vsel %vm1409, %v1340, 0.0
        %v1442 = vsel %vm1410, %v1339, 0.0
        %v1443 = vsel %vm1411, %v1338, 0.0
        %v1444 = vsel %vm1412, %v1337, 0.0
        %v1445 = vsel %vm1413, %v1336, 0.0
        %v1446 = vsel %vm1414, %v1335, 0.0
        %v1447 = vsel %vm1415, %v1334, 0.0
        %v1448 = vsel %vm1416, %v1333, 0.0
        %v1449 = vsel %vm1417, %v1332, 0.0
        %v1450 = vsel %vm1418, %v1331, 0.0
        %v1451 = vsel %vm1419, %v1330, 0.0
        %v1452 = vsel %vm1420, %v1329, 0.0
        %v1453 = vsel %vm1421, %v1328, 0.0
        %v1454 = vsel %vm1422, %v1327, 0.0
        %v1455 = vrot.slane %v1136, 1
        %v1456 = vrot.slane %v1141, 1
        %v1457 = vrot.slane %v1146, 1
        %v1458 = vrot.slane %v1151, 1
        %v1459 = vrot.slane %v1156, 1
        %v1460 = vrot.slane %v1161, 1
        %v1461 = vrot.slane %v1166, 1
        %v1462 = vrot.slane %v1171, 1
        %v1463 = vrot.slane %v1176, 1
        %v1464 = vrot.slane %v1181, 1
        %v1465 = vrot.slane %v1186, 1
        %v1466 = vrot.slane %v1191, 1
        %v1467 = vrot.slane %v1196, 1
        %v1468 = vrot.slane %v1201, 1
        %v1469 = vrot.slane %v1206, 1
        %v1470 = vrot.slane %v1211, 1
        %v1471 = vrot.slane %v1216, 1
        %v1472 = vrot.slane %v1221, 1
        %v1473 = vrot.slane %v1226, 1
        %v1474 = vrot.slane %v1231, 1
        %v1475 = vrot.slane %v1236, 1
        %v1476 = vrot.slane %v1241, 1
        %v1477 = vrot.slane %v1246, 1
        %v1478 = vrot.slane %v1251, 1
        %v1479 = vrot.slane %v1256, 1
        %v1480 = vrot.slane %v1261, 1
        %v1481 = vrot.slane %v1266, 1
        %v1482 = vrot.slane %v1271, 1
        %v1483 = vrot.slane %v1276, 1
        %v1484 = vrot.slane %v1281, 1
        %v1485 = vrot.slane %v1286, 1
        %v1486 = vrot.slane %v1291, 1
        %vm1487 = vcmp.lt.s32.totalorder %v220, 7
        %v1488 = vsel %vm1487, %v1485, %v1486
        %v1489 = vsel %vm1487, %v1484, %v1485
        %v1490 = vsel %vm1487, %v1483, %v1484
        %v1491 = vsel %vm1487, %v1482, %v1483
        %v1492 = vsel %vm1487, %v1481, %v1482
        %v1493 = vsel %vm1487, %v1480, %v1481
        %v1494 = vsel %vm1487, %v1479, %v1480
        %v1495 = vsel %vm1487, %v1478, %v1479
        %v1496 = vsel %vm1487, %v1477, %v1478
        %v1497 = vsel %vm1487, %v1476, %v1477
        %v1498 = vsel %vm1487, %v1475, %v1476
        %v1499 = vsel %vm1487, %v1474, %v1475
        %v1500 = vsel %vm1487, %v1473, %v1474
        %v1501 = vsel %vm1487, %v1472, %v1473
        %v1502 = vsel %vm1487, %v1471, %v1472
        %v1503 = vsel %vm1487, %v1470, %v1471
        %v1504 = vsel %vm1487, %v1469, %v1470
        %v1505 = vsel %vm1487, %v1468, %v1469
        %v1506 = vsel %vm1487, %v1467, %v1468
        %v1507 = vsel %vm1487, %v1466, %v1467
        %v1508 = vsel %vm1487, %v1465, %v1466
        %v1509 = vsel %vm1487, %v1464, %v1465
        %v1510 = vsel %vm1487, %v1463, %v1464
        %v1511 = vsel %vm1487, %v1462, %v1463
        %v1512 = vsel %vm1487, %v1461, %v1462
        %v1513 = vsel %vm1487, %v1460, %v1461
        %v1514 = vsel %vm1487, %v1459, %v1460
        %v1515 = vsel %vm1487, %v1458, %v1459
        %v1516 = vsel %vm1487, %v1457, %v1458
        %v1517 = vsel %vm1487, %v1456, %v1457
        %v1518 = vsel %vm1487, %v1455, %v1456
        %v1519 = vsel %vm1487, %v1486, %v1455
        %v1520 = vsel %vm668, 1, 0
        %v1521 = vsel %vm669, 1, 0
        %v1522 = vsel %vm670, 1, 0
        %v1523 = vsel %vm671, 1, 0
        %v1524 = vsel %vm672, 1, 0
        %v1525 = vsel %vm673, 1, 0
        %v1526 = vsel %vm674, 1, 0
        %v1527 = vsel %vm675, 1, 0
        %v1528 = vsel %vm676, 1, 0
        %v1529 = vsel %vm677, 1, 0
        %v1530 = vsel %vm678, 1, 0
        %v1531 = vsel %vm679, 1, 0
        %v1532 = vsel %vm680, 1, 0
        %v1533 = vsel %vm681, 1, 0
        %v1534 = vsel %vm682, 1, 0
        %v1535 = vsel %vm683, 1, 0
        %v1536 = vsel %vm684, 1, 0
        %v1537 = vsel %vm685, 1, 0
        %v1538 = vsel %vm686, 1, 0
        %v1539 = vsel %vm687, 1, 0
        %v1540 = vsel %vm688, 1, 0
        %v1541 = vsel %vm689, 1, 0
        %v1542 = vsel %vm690, 1, 0
        %v1543 = vsel %vm691, 1, 0
        %v1544 = vsel %vm692, 1, 0
        %v1545 = vsel %vm693, 1, 0
        %v1546 = vsel %vm694, 1, 0
        %v1547 = vsel %vm695, 1, 0
        %v1548 = vsel %vm696, 1, 0
        %v1549 = vsel %vm697, 1, 0
        %v1550 = vsel %vm698, 1, 0
        %v1551 = vsel %vm699, 1, 0
        %vm1552 = vcmp.eq.s32.totalorder %v1520, 1
        %vm1553 = vcmp.eq.s32.totalorder %v1521, 1
        %vm1554 = vcmp.eq.s32.totalorder %v1522, 1
        %vm1555 = vcmp.eq.s32.totalorder %v1523, 1
        %vm1556 = vcmp.eq.s32.totalorder %v1524, 1
        %vm1557 = vcmp.eq.s32.totalorder %v1525, 1
        %vm1558 = vcmp.eq.s32.totalorder %v1526, 1
        %vm1559 = vcmp.eq.s32.totalorder %v1527, 1
        %vm1560 = vcmp.eq.s32.totalorder %v1528, 1
        %vm1561 = vcmp.eq.s32.totalorder %v1529, 1
        %vm1562 = vcmp.eq.s32.totalorder %v1530, 1
        %vm1563 = vcmp.eq.s32.totalorder %v1531, 1
        %vm1564 = vcmp.eq.s32.totalorder %v1532, 1
        %vm1565 = vcmp.eq.s32.totalorder %v1533, 1
        %vm1566 = vcmp.eq.s32.totalorder %v1534, 1
        %vm1567 = vcmp.eq.s32.totalorder %v1535, 1
        %vm1568 = vcmp.eq.s32.totalorder %v1536, 1
        %vm1569 = vcmp.eq.s32.totalorder %v1537, 1
        %vm1570 = vcmp.eq.s32.totalorder %v1538, 1
        %vm1571 = vcmp.eq.s32.totalorder %v1539, 1
        %vm1572 = vcmp.eq.s32.totalorder %v1540, 1
        %vm1573 = vcmp.eq.s32.totalorder %v1541, 1
        %vm1574 = vcmp.eq.s32.totalorder %v1542, 1
        %vm1575 = vcmp.eq.s32.totalorder %v1543, 1
        %vm1576 = vcmp.eq.s32.totalorder %v1544, 1
        %vm1577 = vcmp.eq.s32.totalorder %v1545, 1
        %vm1578 = vcmp.eq.s32.totalorder %v1546, 1
        %vm1579 = vcmp.eq.s32.totalorder %v1547, 1
        %vm1580 = vcmp.eq.s32.totalorder %v1548, 1
        %vm1581 = vcmp.eq.s32.totalorder %v1549, 1
        %vm1582 = vcmp.eq.s32.totalorder %v1550, 1
        %vm1583 = vcmp.eq.s32.totalorder %v1551, 1
        %v1584 = vsel %vm1552, %v1518, 0.0
        %v1585 = vsel %vm1553, %v1517, 0.0
        %v1586 = vsel %vm1554, %v1516, 0.0
        %v1587 = vsel %vm1555, %v1515, 0.0
        %v1588 = vsel %vm1556, %v1514, 0.0
        %v1589 = vsel %vm1557, %v1513, 0.0
        %v1590 = vsel %vm1558, %v1512, 0.0
        %v1591 = vsel %vm1559, %v1511, 0.0
        %v1592 = vsel %vm1560, %v1510, 0.0
        %v1593 = vsel %vm1561, %v1509, 0.0
        %v1594 = vsel %vm1562, %v1508, 0.0
        %v1595 = vsel %vm1563, %v1507, 0.0
        %v1596 = vsel %vm1564, %v1506, 0.0
        %v1597 = vsel %vm1565, %v1505, 0.0
        %v1598 = vsel %vm1566, %v1504, 0.0
        %v1599 = vsel %vm1567, %v1503, 0.0
        %v1600 = vsel %vm1568, %v1502, 0.0
        %v1601 = vsel %vm1569, %v1501, 0.0
        %v1602 = vsel %vm1570, %v1500, 0.0
        %v1603 = vsel %vm1571, %v1499, 0.0
        %v1604 = vsel %vm1572, %v1498, 0.0
        %v1605 = vsel %vm1573, %v1497, 0.0
        %v1606 = vsel %vm1574, %v1496, 0.0
        %v1607 = vsel %vm1575, %v1495, 0.0
        %v1608 = vsel %vm1576, %v1494, 0.0
        %v1609 = vsel %vm1577, %v1493, 0.0
        %v1610 = vsel %vm1578, %v1492, 0.0
        %v1611 = vsel %vm1579, %v1491, 0.0
        %v1612 = vsel %vm1580, %v1490, 0.0
        %v1613 = vsel %vm1581, %v1489, 0.0
        %v1614 = vsel %vm1582, %v1488, 0.0
        %v1615 = vsel %vm1583, %v1519, 0.0
        %v1616 = vadd.f32 %v1423, %v881
        %v1617 = vadd.f32 %v1424, %v887
        %v1618 = vadd.f32 %v1425, %v893
        %v1619 = vadd.f32 %v1426, %v899
        %v1620 = vadd.f32 %v1427, %v905
        %v1621 = vadd.f32 %v1428, %v911
        %v1622 = vadd.f32 %v1429, %v917
        %v1623 = vadd.f32 %v1430, %v923
        %v1624 = vadd.f32 %v1431, %v929
        %v1625 = vadd.f32 %v1432, %v935
        %v1626 = vadd.f32 %v1433, %v941
        %v1627 = vadd.f32 %v1434, %v947
        %v1628 = vadd.f32 %v1435, %v953
        %v1629 = vadd.f32 %v1436, %v959
        %v1630 = vadd.f32 %v1437, %v965
        %v1631 = vadd.f32 %v1438, %v971
        %v1632 = vadd.f32 %v1439, %v977
        %v1633 = vadd.f32 %v1440, %v983
        %v1634 = vadd.f32 %v1441, %v989
        %v1635 = vadd.f32 %v1442, %v995
        %v1636 = vadd.f32 %v1443, %v1001
        %v1637 = vadd.f32 %v1444, %v1007
        %v1638 = vadd.f32 %v1445, %v1013
        %v1639 = vadd.f32 %v1446, %v1019
        %v1640 = vadd.f32 %v1447, %v1025
        %v1641 = vadd.f32 %v1448, %v1031
        %v1642 = vadd.f32 %v1449, %v1037
        %v1643 = vadd.f32 %v1450, %v1043
        %v1644 = vadd.f32 %v1451, %v1049
        %v1645 = vadd.f32 %v1452, %v1055
        %v1646 = vadd.f32 %v1453, %v1061
        %v1647 = vadd.f32 %v1454, %v1067
        %v1648 = vadd.f32 %v1616, %v1584
        %v1649 = vadd.f32 %v1617, %v1585
        %v1650 = vadd.f32 %v1618, %v1586
        %v1651 = vadd.f32 %v1619, %v1587
        %v1652 = vadd.f32 %v1620, %v1588
        %v1653 = vadd.f32 %v1621, %v1589
        %v1654 = vadd.f32 %v1622, %v1590
        %v1655 = vadd.f32 %v1623, %v1591
        %v1656 = vadd.f32 %v1624, %v1592
        %v1657 = vadd.f32 %v1625, %v1593
        %v1658 = vadd.f32 %v1626, %v1594
        %v1659 = vadd.f32 %v1627, %v1595
        %v1660 = vadd.f32 %v1628, %v1596
        %v1661 = vadd.f32 %v1629, %v1597
        %v1662 = vadd.f32 %v1630, %v1598
        %v1663 = vadd.f32 %v1631, %v1599
        %v1664 = vadd.f32 %v1632, %v1600
        %v1665 = vadd.f32 %v1633, %v1601
        %v1666 = vadd.f32 %v1634, %v1602
        %v1667 = vadd.f32 %v1635, %v1603
        %v1668 = vadd.f32 %v1636, %v1604
        %v1669 = vadd.f32 %v1637, %v1605
        %v1670 = vadd.f32 %v1638, %v1606
        %v1671 = vadd.f32 %v1639, %v1607
        %v1672 = vadd.f32 %v1640, %v1608
        %v1673 = vadd.f32 %v1641, %v1609
        %v1674 = vadd.f32 %v1642, %v1610
        %v1675 = vadd.f32 %v1643, %v1611
        %v1676 = vadd.f32 %v1644, %v1612
        %v1677 = vadd.f32 %v1645, %v1613
        %v1678 = vadd.f32 %v1646, %v1614
        %v1679 = vadd.f32 %v1647, %v1615
        %v1680 = vld [vmem:[#allocation7] ss:$0 sm:$0xff]
        %v1681 = vadd.f32 %v1648, %v1680
        %v1682 = vadd.f32 %v1649, %v1680
        %v1683 = vadd.f32 %v1650, %v1680
        %v1684 = vadd.f32 %v1651, %v1680
        %v1685 = vadd.f32 %v1652, %v1680
        %v1686 = vadd.f32 %v1653, %v1680
        %v1687 = vadd.f32 %v1654, %v1680
        %v1688 = vadd.f32 %v1655, %v1680
        %v1689 = vadd.f32 %v1656, %v1680
        %v1690 = vadd.f32 %v1657, %v1680
        %v1691 = vadd.f32 %v1658, %v1680
        %v1692 = vadd.f32 %v1659, %v1680
        %v1693 = vadd.f32 %v1660, %v1680
        %v1694 = vadd.f32 %v1661, %v1680
        %v1695 = vadd.f32 %v1662, %v1680
        %v1696 = vadd.f32 %v1663, %v1680
        %v1697 = vadd.f32 %v1664, %v1680
        %v1698 = vadd.f32 %v1665, %v1680
        %v1699 = vadd.f32 %v1666, %v1680
        %v1700 = vadd.f32 %v1667, %v1680
        %v1701 = vadd.f32 %v1668, %v1680
        %v1702 = vadd.f32 %v1669, %v1680
        %v1703 = vadd.f32 %v1670, %v1680
        %v1704 = vadd.f32 %v1671, %v1680
        %v1705 = vadd.f32 %v1672, %v1680
        %v1706 = vadd.f32 %v1673, %v1680
        %v1707 = vadd.f32 %v1674, %v1680
        %v1708 = vadd.f32 %v1675, %v1680
        %v1709 = vadd.f32 %v1676, %v1680
        %v1710 = vadd.f32 %v1677, %v1680
        %v1711 = vadd.f32 %v1678, %v1680
        %v1712 = vadd.f32 %v1679, %v1680
        %v1713 = vld [vmem:[#allocation5 + $0x180] sm:$0xff]
        %v1714 = vld [vmem:[#allocation5 + $0x188] sm:$0xff]
        %v1715 = vld [vmem:[#allocation5 + $0x190] sm:$0xff]
        %v1716 = vld [vmem:[#allocation5 + $0x198] sm:$0xff]
        %v1717 = vld [vmem:[#allocation5 + $0x1a0] sm:$0xff]
        %v1718 = vld [vmem:[#allocation5 + $0x1a8] sm:$0xff]
        %v1719 = vld [vmem:[#allocation5 + $0x1b0] sm:$0xff]
        %v1720 = vld [vmem:[#allocation5 + $0x1b8] sm:$0xff]
        %v1721 = vld [vmem:[#allocation5 + $0x1c0] sm:$0xff]
        %v1722 = vld [vmem:[#allocation5 + $0x1c8] sm:$0xff]
        %v1723 = vld [vmem:[#allocation5 + $0x1d0] sm:$0xff]
        %v1724 = vld [vmem:[#allocation5 + $0x1d8] sm:$0xff]
        %v1725 = vld [vmem:[#allocation5 + $0x1e0] sm:$0xff]
        %v1726 = vld [vmem:[#allocation5 + $0x1e8] sm:$0xff]
        %v1727 = vld [vmem:[#allocation5 + $0x1f0] sm:$0xff]
        %v1728 = vld [vmem:[#allocation5 + $0x1f8] sm:$0xff]
        %v1729 = vld [vmem:[#allocation5 + $0x200] sm:$0xff]
        %v1730 = vld [vmem:[#allocation5 + $0x208] sm:$0xff]
        %v1731 = vld [vmem:[#allocation5 + $0x210] sm:$0xff]
        %v1732 = vld [vmem:[#allocation5 + $0x218] sm:$0xff]
        %v1733 = vld [vmem:[#allocation5 + $0x220] sm:$0xff]
        %v1734 = vld [vmem:[#allocation5 + $0x228] sm:$0xff]
        %v1735 = vld [vmem:[#allocation5 + $0x230] sm:$0xff]
        %v1736 = vld [vmem:[#allocation5 + $0x238] sm:$0xff]
        %v1737 = vld [vmem:[#allocation5 + $0x240] sm:$0xff]
        %v1738 = vld [vmem:[#allocation5 + $0x248] sm:$0xff]
        %v1739 = vld [vmem:[#allocation5 + $0x250] sm:$0xff]
        %v1740 = vld [vmem:[#allocation5 + $0x258] sm:$0xff]
        %v1741 = vld [vmem:[#allocation5 + $0x260] sm:$0xff]
        %v1742 = vld [vmem:[#allocation5 + $0x268] sm:$0xff]
        %v1743 = vld [vmem:[#allocation5 + $0x270] sm:$0xff]
        %v1744 = vld [vmem:[#allocation5 + $0x278] sm:$0xff]
        %v1745 = vld [vmem:[#allocation5 + $0x280] sm:$0xff]
        %v1746 = vld [vmem:[#allocation5 + $0x288] sm:$0xff]
        %v1747 = vld [vmem:[#allocation5 + $0x290] sm:$0xff]
        %v1748 = vld [vmem:[#allocation5 + $0x298] sm:$0xff]
        %v1749 = vld [vmem:[#allocation5 + $0x2a0] sm:$0xff]
        %v1750 = vld [vmem:[#allocation5 + $0x2a8] sm:$0xff]
        %v1751 = vld [vmem:[#allocation5 + $0x2b0] sm:$0xff]
        %v1752 = vld [vmem:[#allocation5 + $0x2b8] sm:$0xff]
        %v1753 = vld [vmem:[#allocation5 + $0x2c0] sm:$0xff]
        %v1754 = vld [vmem:[#allocation5 + $0x2c8] sm:$0xff]
        %v1755 = vld [vmem:[#allocation5 + $0x2d0] sm:$0xff]
        %v1756 = vld [vmem:[#allocation5 + $0x2d8] sm:$0xff]
        %v1757 = vld [vmem:[#allocation5 + $0x2e0] sm:$0xff]
        %v1758 = vld [vmem:[#allocation5 + $0x2e8] sm:$0xff]
        %v1759 = vld [vmem:[#allocation5 + $0x2f0] sm:$0xff]
        %v1760 = vld [vmem:[#allocation5 + $0x2f8] sm:$0xff]
        %1761 = vmatprep.subr.mxu0 %v1714
        %1762 = vmatpush1.msra.mxu0 %v1713
        %1763 = vmatprep.subr.mxu0 %v1717
        %1764 = vmatpush1.msra.mxu0 %v1716
        %1765 = vmatprep.subr.mxu0 %v1720
        %1766 = vmatpush1.msra.mxu0 %v1719
        %1767 = vmatprep.subr.mxu0 %v1723
        %1768 = vmatpush1.msra.mxu0 %v1722
        %1769 = vmatprep.subr.mxu0 %v1726
        %1770 = vmatpush1.msra.mxu0 %v1725
        %1771 = vmatprep.subr.mxu0 %v1729
        %1772 = vmatpush1.msra.mxu0 %v1728
        %1773 = vmatprep.subr.mxu0 %v1732
        %1774 = vmatpush1.msra.mxu0 %v1731
        %1775 = vmatprep.subr.mxu0 %v1735
        %1776 = vmatpush1.msra.mxu0 %v1734
        %1777 = vmatprep.subr.mxu0 %v1738
        %1778 = vmatpush1.msra.mxu0 %v1737
        %1779 = vmatprep.subr.mxu0 %v1741
        %1780 = vmatpush1.msra.mxu0 %v1740
        %1781 = vmatprep.subr.mxu0 %v1744
        %1782 = vmatpush1.msra.mxu0 %v1743
        %1783 = vmatprep.subr.mxu0 %v1747
        %1784 = vmatpush1.msra.mxu0 %v1746
        %1785 = vmatprep.subr.mxu0 %v1750
        %1786 = vmatpush1.msra.mxu0 %v1749
        %1787 = vmatprep.subr.mxu0 %v1753
        %1788 = vmatpush1.msra.mxu0 %v1752
        %1789 = vmatprep.subr.mxu0 %v1756
        %1790 = vmatpush1.msra.mxu0 %v1755
        %1791 = vmatprep.subr.mxu0 %v1759
        %1792 = vmatpush1.msra.mxu0 %v1758
        %1793 = vmatprep.subr.mxu0 0.0
        %1794 = vmatpush1.msra.mxu0 0.0
        %1795 = vmatprep.subr.mxu0 0.0
        %1796 = vmatpush1.msra.mxu0 0.0
        %1797 = vmatprep.subr.mxu0 0.0
        %1798 = vmatpush1.msra.mxu0 0.0
        %1799 = vmatprep.subr.mxu0 0.0
        %1800 = vmatpush1.msra.mxu0 0.0
        %1801 = vmatprep.subr.mxu0 0.0
        %1802 = vmatpush1.msra.mxu0 0.0
        %1803 = vmatprep.subr.mxu0 0.0
        %1804 = vmatpush1.msra.mxu0 0.0
        %1805 = vmatprep.subr.mxu0 0.0
        %1806 = vmatpush1.msra.mxu0 0.0
        %1807 = vmatprep.subr.mxu0 0.0
        %1808 = vmatpush1.msra.mxu0 0.0
        %1809 = vmatprep.subr.mxu0 0.0
        %1810 = vmatpush1.msra.mxu0 0.0
        %1811 = vmatprep.subr.mxu0 0.0
        %1812 = vmatpush1.msra.mxu0 0.0
        %1813 = vmatprep.subr.mxu0 0.0
        %1814 = vmatpush1.msra.mxu0 0.0
        %1815 = vmatprep.subr.mxu0 0.0
        %1816 = vmatpush1.msra.mxu0 0.0
        %1817 = vmatprep.subr.mxu0 0.0
        %1818 = vmatpush1.msra.mxu0 0.0
        %1819 = vmatprep.subr.mxu0 0.0
        %1820 = vmatpush1.msra.mxu0 0.0
        %1821 = vmatprep.subr.mxu0 0.0
        %1822 = vmatpush1.msra.mxu0 0.0
        %1823 = vmatprep.subr.mxu0 0.0
        %1824 = vmatpush1.msra.mxu0 0.0
        %1825 = vmatprep.mubr.f32.mxu0 0.0
        %1826 = vmatmul.mubr.f32.gmra.mrb[0].mxu0 %v1681
        %v1827 = vpop.f32.mrb[0].mxu0
        %v1828 = vadd.f32 0.0, %v1827
        %v1829 = vpop.f32.mrb[0].mxu0
        %v1830 = vadd.f32 0.0, %v1829
        %1831 = vmatprep.mubr.f32.mxu0 0.0
        %1832 = vmatmul.mubr.f32.gmra.mrb[0].mxu0 %v1682
        %v1833 = vpop.f32.mrb[0].mxu0
        %v1834 = vadd.f32 0.0, %v1833
        %v1835 = vpop.f32.mrb[0].mxu0
        %v1836 = vadd.f32 0.0, %v1835
        %1837 = vmatprep.mubr.f32.mxu0 0.0
        %1838 = vmatmul.mubr.f32.gmra.mrb[0].mxu0 %v1683
        %v1839 = vpop.f32.mrb[0].mxu0
        %v1840 = vadd.f32 0.0, %v1839
        %v1841 = vpop.f32.mrb[0].mxu0
        %v1842 = vadd.f32 0.0, %v1841
        %1843 = vmatprep.mubr.f32.mxu0 0.0
        %1844 = vmatmul.mubr.f32.gmra.mrb[0].mxu0 %v1684
        %v1845 = vpop.f32.mrb[0].mxu0
        %v1846 = vadd.f32 0.0, %v1845
        %v1847 = vpop.f32.mrb[0].mxu0
        %v1848 = vadd.f32 0.0, %v1847
        %1849 = vmatprep.mubr.f32.mxu0 0.0
        %1850 = vmatmul.mubr.f32.gmra.mrb[0].mxu0 %v1685
        %v1851 = vpop.f32.mrb[0].mxu0
        %v1852 = vadd.f32 0.0, %v1851
        %v1853 = vpop.f32.mrb[0].mxu0
        %v1854 = vadd.f32 0.0, %v1853
        %1855 = vmatprep.mubr.f32.mxu0 0.0
        %1856 = vmatmul.mubr.f32.gmra.mrb[0].mxu0 %v1686
        %v1857 = vpop.f32.mrb[0].mxu0
        %v1858 = vadd.f32 0.0, %v1857
        %v1859 = vpop.f32.mrb[0].mxu0
        %v1860 = vadd.f32 0.0, %v1859
        %1861 = vmatprep.mubr.f32.mxu0 0.0
        %1862 = vmatmul.mubr.f32.gmra.mrb[0].mxu0 %v1687
        %v1863 = vpop.f32.mrb[0].mxu0
        %v1864 = vadd.f32 0.0, %v1863
        %v1865 = vpop.f32.mrb[0].mxu0
        %v1866 = vadd.f32 0.0, %v1865
        %1867 = vmatprep.mubr.f32.mxu0 0.0
        %1868 = vmatmul.mubr.f32.gmra.mrb[0].mxu0 %v1688
        %v1869 = vpop.f32.mrb[0].mxu0
        %v1870 = vadd.f32 0.0, %v1869
        %v1871 = vpop.f32.mrb[0].mxu0
        %v1872 = vadd.f32 0.0, %v1871
        %1873 = vmatprep.mubr.f32.mxu0 0.0
        %1874 = vmatmul.mubr.f32.gmra.mrb[0].mxu0 %v1689
        %v1875 = vpop.f32.mrb[0].mxu0
        %v1876 = vadd.f32 0.0, %v1875
        %v1877 = vpop.f32.mrb[0].mxu0
        %v1878 = vadd.f32 0.0, %v1877
        %1879 = vmatprep.mubr.f32.mxu0 0.0
        %1880 = vmatmul.mubr.f32.gmra.mrb[0].mxu0 %v1690
        %v1881 = vpop.f32.mrb[0].mxu0
        %v1882 = vadd.f32 0.0, %v1881
        %v1883 = vpop.f32.mrb[0].mxu0
        %v1884 = vadd.f32 0.0, %v1883
        %1885 = vmatprep.mubr.f32.mxu0 0.0
        %1886 = vmatmul.mubr.f32.gmra.mrb[0].mxu0 %v1691
        %v1887 = vpop.f32.mrb[0].mxu0
        %v1888 = vadd.f32 0.0, %v1887
        %v1889 = vpop.f32.mrb[0].mxu0
        %v1890 = vadd.f32 0.0, %v1889
        %1891 = vmatprep.mubr.f32.mxu0 0.0
        %1892 = vmatmul.mubr.f32.gmra.mrb[0].mxu0 %v1692
        %v1893 = vpop.f32.mrb[0].mxu0
        %v1894 = vadd.f32 0.0, %v1893
        %v1895 = vpop.f32.mrb[0].mxu0
        %v1896 = vadd.f32 0.0, %v1895
        %1897 = vmatprep.mubr.f32.mxu0 0.0
        %1898 = vmatmul.mubr.f32.gmra.mrb[0].mxu0 %v1693
        %v1899 = vpop.f32.mrb[0].mxu0
        %v1900 = vadd.f32 0.0, %v1899
        %v1901 = vpop.f32.mrb[0].mxu0
        %v1902 = vadd.f32 0.0, %v1901
        %1903 = vmatprep.mubr.f32.mxu0 0.0
        %1904 = vmatmul.mubr.f32.gmra.mrb[0].mxu0 %v1694
        %v1905 = vpop.f32.mrb[0].mxu0
        %v1906 = vadd.f32 0.0, %v1905
        %v1907 = vpop.f32.mrb[0].mxu0
        %v1908 = vadd.f32 0.0, %v1907
        %1909 = vmatprep.mubr.f32.mxu0 0.0
        %1910 = vmatmul.mubr.f32.gmra.mrb[0].mxu0 %v1695
        %v1911 = vpop.f32.mrb[0].mxu0
        %v1912 = vadd.f32 0.0, %v1911
        %v1913 = vpop.f32.mrb[0].mxu0
        %v1914 = vadd.f32 0.0, %v1913
        %1915 = vmatprep.mubr.f32.mxu0 0.0
        %1916 = vmatmul.mubr.f32.gmra.mrb[0].mxu0 %v1696
        %v1917 = vpop.f32.mrb[0].mxu0
        %v1918 = vadd.f32 0.0, %v1917
        %v1919 = vpop.f32.mrb[0].mxu0
        %v1920 = vadd.f32 0.0, %v1919
        %1921 = vmatprep.mubr.f32.mxu0 0.0
        %1922 = vmatmul.mubr.f32.gmra.mrb[0].mxu0 %v1697
        %v1923 = vpop.f32.mrb[0].mxu0
        %v1924 = vadd.f32 0.0, %v1923
        %v1925 = vpop.f32.mrb[0].mxu0
        %v1926 = vadd.f32 0.0, %v1925
        %1927 = vmatprep.mubr.f32.mxu0 0.0
        %1928 = vmatmul.mubr.f32.gmra.mrb[0].mxu0 %v1698
        %v1929 = vpop.f32.mrb[0].mxu0
        %v1930 = vadd.f32 0.0, %v1929
        %v1931 = vpop.f32.mrb[0].mxu0
        %v1932 = vadd.f32 0.0, %v1931
        %1933 = vmatprep.mubr.f32.mxu0 0.0
        %1934 = vmatmul.mubr.f32.gmra.mrb[0].mxu0 %v1699
        %v1935 = vpop.f32.mrb[0].mxu0
        %v1936 = vadd.f32 0.0, %v1935
        %v1937 = vpop.f32.mrb[0].mxu0
        %v1938 = vadd.f32 0.0, %v1937
        %1939 = vmatprep.mubr.f32.mxu0 0.0
        %1940 = vmatmul.mubr.f32.gmra.mrb[0].mxu0 %v1700
        %v1941 = vpop.f32.mrb[0].mxu0
        %v1942 = vadd.f32 0.0, %v1941
        %v1943 = vpop.f32.mrb[0].mxu0
        %v1944 = vadd.f32 0.0, %v1943
        %1945 = vmatprep.mubr.f32.mxu0 0.0
        %1946 = vmatmul.mubr.f32.gmra.mrb[0].mxu0 %v1701
        %v1947 = vpop.f32.mrb[0].mxu0
        %v1948 = vadd.f32 0.0, %v1947
        %v1949 = vpop.f32.mrb[0].mxu0
        %v1950 = vadd.f32 0.0, %v1949
        %1951 = vmatprep.mubr.f32.mxu0 0.0
        %1952 = vmatmul.mubr.f32.gmra.mrb[0].mxu0 %v1702
        %v1953 = vpop.f32.mrb[0].mxu0
        %v1954 = vadd.f32 0.0, %v1953
        %v1955 = vpop.f32.mrb[0].mxu0
        %v1956 = vadd.f32 0.0, %v1955
        %1957 = vmatprep.mubr.f32.mxu0 0.0
        %1958 = vmatmul.mubr.f32.gmra.mrb[0].mxu0 %v1703
        %v1959 = vpop.f32.mrb[0].mxu0
        %v1960 = vadd.f32 0.0, %v1959
        %v1961 = vpop.f32.mrb[0].mxu0
        %v1962 = vadd.f32 0.0, %v1961
        %1963 = vmatprep.mubr.f32.mxu0 0.0
        %1964 = vmatmul.mubr.f32.gmra.mrb[0].mxu0 %v1704
        %v1965 = vpop.f32.mrb[0].mxu0
        %v1966 = vadd.f32 0.0, %v1965
        %v1967 = vpop.f32.mrb[0].mxu0
        %v1968 = vadd.f32 0.0, %v1967
        %1969 = vmatprep.mubr.f32.mxu0 0.0
        %1970 = vmatmul.mubr.f32.gmra.mrb[0].mxu0 %v1705
        %v1971 = vpop.f32.mrb[0].mxu0
        %v1972 = vadd.f32 0.0, %v1971
        %v1973 = vpop.f32.mrb[0].mxu0
        %v1974 = vadd.f32 0.0, %v1973
        %1975 = vmatprep.mubr.f32.mxu0 0.0
        %1976 = vmatmul.mubr.f32.gmra.mrb[0].mxu0 %v1706
        %v1977 = vpop.f32.mrb[0].mxu0
        %v1978 = vadd.f32 0.0, %v1977
        %v1979 = vpop.f32.mrb[0].mxu0
        %v1980 = vadd.f32 0.0, %v1979
        %1981 = vmatprep.mubr.f32.mxu0 0.0
        %1982 = vmatmul.mubr.f32.gmra.mrb[0].mxu0 %v1707
        %v1983 = vpop.f32.mrb[0].mxu0
        %v1984 = vadd.f32 0.0, %v1983
        %v1985 = vpop.f32.mrb[0].mxu0
        %v1986 = vadd.f32 0.0, %v1985
        %1987 = vmatprep.mubr.f32.mxu0 0.0
        %1988 = vmatmul.mubr.f32.gmra.mrb[0].mxu0 %v1708
        %v1989 = vpop.f32.mrb[0].mxu0
        %v1990 = vadd.f32 0.0, %v1989
        %v1991 = vpop.f32.mrb[0].mxu0
        %v1992 = vadd.f32 0.0, %v1991
        %1993 = vmatprep.mubr.f32.mxu0 0.0
        %1994 = vmatmul.mubr.f32.gmra.mrb[0].mxu0 %v1709
        %v1995 = vpop.f32.mrb[0].mxu0
        %v1996 = vadd.f32 0.0, %v1995
        %v1997 = vpop.f32.mrb[0].mxu0
        %v1998 = vadd.f32 0.0, %v1997
        %1999 = vmatprep.mubr.f32.mxu0 0.0
        %2000 = vmatmul.mubr.f32.gmra.mrb[0].mxu0 %v1710
        %v2001 = vpop.f32.mrb[0].mxu0
        %v2002 = vadd.f32 0.0, %v2001
        %v2003 = vpop.f32.mrb[0].mxu0
        %v2004 = vadd.f32 0.0, %v2003
        %2005 = vmatprep.mubr.f32.mxu0 0.0
        %2006 = vmatmul.mubr.f32.gmra.mrb[0].mxu0 %v1711
        %v2007 = vpop.f32.mrb[0].mxu0
        %v2008 = vadd.f32 0.0, %v2007
        %v2009 = vpop.f32.mrb[0].mxu0
        %v2010 = vadd.f32 0.0, %v2009
        %2011 = vmatprep.mubr.f32.mxu0 0.0
        %2012 = vmatmul.mubr.f32.gmra.mrb[0].mxu0 %v1712
        %v2013 = vpop.f32.mrb[0].mxu0
        %v2014 = vadd.f32 0.0, %v2013
        %v2015 = vpop.f32.mrb[0].mxu0
        %v2016 = vadd.f32 0.0, %v2015
        %2017 = vdwg.mxu0
        %2018 = vmatprep.subr.mxu0 0.0
        %2019 = vmatpush1.msra.mxu0 %v1715
        %2020 = vmatprep.subr.mxu0 0.0
        %2021 = vmatpush1.msra.mxu0 %v1718
        %2022 = vmatprep.subr.mxu0 0.0
        %2023 = vmatpush1.msra.mxu0 %v1721
        %2024 = vmatprep.subr.mxu0 0.0
        %2025 = vmatpush1.msra.mxu0 %v1724
        %2026 = vmatprep.subr.mxu0 0.0
        %2027 = vmatpush1.msra.mxu0 %v1727
        %2028 = vmatprep.subr.mxu0 0.0
        %2029 = vmatpush1.msra.mxu0 %v1730
        %2030 = vmatprep.subr.mxu0 0.0
        %2031 = vmatpush1.msra.mxu0 %v1733
        %2032 = vmatprep.subr.mxu0 0.0
        %2033 = vmatpush1.msra.mxu0 %v1736
        %2034 = vmatprep.subr.mxu0 0.0
        %2035 = vmatpush1.msra.mxu0 %v1739
        %2036 = vmatprep.subr.mxu0 0.0
        %2037 = vmatpush1.msra.mxu0 %v1742
        %2038 = vmatprep.subr.mxu0 0.0
        %2039 = vmatpush1.msra.mxu0 %v1745
        %2040 = vmatprep.subr.mxu0 0.0
        %2041 = vmatpush1.msra.mxu0 %v1748
        %2042 = vmatprep.subr.mxu0 0.0
        %2043 = vmatpush1.msra.mxu0 %v1751
        %2044 = vmatprep.subr.mxu0 0.0
        %2045 = vmatpush1.msra.mxu0 %v1754
        %2046 = vmatprep.subr.mxu0 0.0
        %2047 = vmatpush1.msra.mxu0 %v1757
        %2048 = vmatprep.subr.mxu0 0.0
        %2049 = vmatpush1.msra.mxu0 %v1760
        %2050 = vmatprep.subr.mxu0 0.0
        %2051 = vmatpush1.msra.mxu0 0.0
        %2052 = vmatprep.subr.mxu0 0.0
        %2053 = vmatpush1.msra.mxu0 0.0
        %2054 = vmatprep.subr.mxu0 0.0
        %2055 = vmatpush1.msra.mxu0 0.0
        %2056 = vmatprep.subr.mxu0 0.0
        %2057 = vmatpush1.msra.mxu0 0.0
        %2058 = vmatprep.subr.mxu0 0.0
        %2059 = vmatpush1.msra.mxu0 0.0
        %2060 = vmatprep.subr.mxu0 0.0
        %2061 = vmatpush1.msra.mxu0 0.0
        %2062 = vmatprep.subr.mxu0 0.0
        %2063 = vmatpush1.msra.mxu0 0.0
        %2064 = vmatprep.subr.mxu0 0.0
        %2065 = vmatpush1.msra.mxu0 0.0
        %2066 = vmatprep.subr.mxu0 0.0
        %2067 = vmatpush1.msra.mxu0 0.0
        %2068 = vmatprep.subr.mxu0 0.0
        %2069 = vmatpush1.msra.mxu0 0.0
        %2070 = vmatprep.subr.mxu0 0.0
        %2071 = vmatpush1.msra.mxu0 0.0
        %2072 = vmatprep.subr.mxu0 0.0
        %2073 = vmatpush1.msra.mxu0 0.0
        %2074 = vmatprep.subr.mxu0 0.0
        %2075 = vmatpush1.msra.mxu0 0.0
        %2076 = vmatprep.subr.mxu0 0.0
        %2077 = vmatpush1.msra.mxu0 0.0
        %2078 = vmatprep.subr.mxu0 0.0
        %2079 = vmatpush1.msra.mxu0 0.0
        %2080 = vmatprep.subr.mxu0 0.0
        %2081 = vmatpush1.msra.mxu0 0.0
        %2082 = vmatprep.mubr.f32.mxu0 0.0
        %2083 = vmatmul.mubr.f32.gmra.mrb[0].mxu0 %v1681
        %v2084 = vpop.f32.mrb[0].mxu0
        %v2085 = vadd.f32 0.0, %v2084
        %v2086 = vpop.f32.mrb[0].mxu0
        %2087 = vmatprep.mubr.f32.mxu0 0.0
        %2088 = vmatmul.mubr.f32.gmra.mrb[0].mxu0 %v1682
        %v2089 = vpop.f32.mrb[0].mxu0
        %v2090 = vadd.f32 0.0, %v2089
        %v2091 = vpop.f32.mrb[0].mxu0
        %2092 = vmatprep.mubr.f32.mxu0 0.0
        %2093 = vmatmul.mubr.f32.gmra.mrb[0].mxu0 %v1683
        %v2094 = vpop.f32.mrb[0].mxu0
        %v2095 = vadd.f32 0.0, %v2094
        %v2096 = vpop.f32.mrb[0].mxu0
        %2097 = vmatprep.mubr.f32.mxu0 0.0
        %2098 = vmatmul.mubr.f32.gmra.mrb[0].mxu0 %v1684
        %v2099 = vpop.f32.mrb[0].mxu0
        %v2100 = vadd.f32 0.0, %v2099
        %v2101 = vpop.f32.mrb[0].mxu0
        %2102 = vmatprep.mubr.f32.mxu0 0.0
        %2103 = vmatmul.mubr.f32.gmra.mrb[0].mxu0 %v1685
        %v2104 = vpop.f32.mrb[0].mxu0
        %v2105 = vadd.f32 0.0, %v2104
        %v2106 = vpop.f32.mrb[0].mxu0
        %2107 = vmatprep.mubr.f32.mxu0 0.0
        %2108 = vmatmul.mubr.f32.gmra.mrb[0].mxu0 %v1686
        %v2109 = vpop.f32.mrb[0].mxu0
        %v2110 = vadd.f32 0.0, %v2109
        %v2111 = vpop.f32.mrb[0].mxu0
        %2112 = vmatprep.mubr.f32.mxu0 0.0
        %2113 = vmatmul.mubr.f32.gmra.mrb[0].mxu0 %v1687
        %v2114 = vpop.f32.mrb[0].mxu0
        %v2115 = vadd.f32 0.0, %v2114
        %v2116 = vpop.f32.mrb[0].mxu0
        %2117 = vmatprep.mubr.f32.mxu0 0.0
        %2118 = vmatmul.mubr.f32.gmra.mrb[0].mxu0 %v1688
        %v2119 = vpop.f32.mrb[0].mxu0
        %v2120 = vadd.f32 0.0, %v2119
        %v2121 = vpop.f32.mrb[0].mxu0
        %2122 = vmatprep.mubr.f32.mxu0 0.0
        %2123 = vmatmul.mubr.f32.gmra.mrb[0].mxu0 %v1689
        %v2124 = vpop.f32.mrb[0].mxu0
        %v2125 = vadd.f32 0.0, %v2124
        %v2126 = vpop.f32.mrb[0].mxu0
        %2127 = vmatprep.mubr.f32.mxu0 0.0
        %2128 = vmatmul.mubr.f32.gmra.mrb[0].mxu0 %v1690
        %v2129 = vpop.f32.mrb[0].mxu0
        %v2130 = vadd.f32 0.0, %v2129
        %v2131 = vpop.f32.mrb[0].mxu0
        %2132 = vmatprep.mubr.f32.mxu0 0.0
        %2133 = vmatmul.mubr.f32.gmra.mrb[0].mxu0 %v1691
        %v2134 = vpop.f32.mrb[0].mxu0
        %v2135 = vadd.f32 0.0, %v2134
        %v2136 = vpop.f32.mrb[0].mxu0
        %2137 = vmatprep.mubr.f32.mxu0 0.0
        %2138 = vmatmul.mubr.f32.gmra.mrb[0].mxu0 %v1692
        %v2139 = vpop.f32.mrb[0].mxu0
        %v2140 = vadd.f32 0.0, %v2139
        %v2141 = vpop.f32.mrb[0].mxu0
        %2142 = vmatprep.mubr.f32.mxu0 0.0
        %2143 = vmatmul.mubr.f32.gmra.mrb[0].mxu0 %v1693
        %v2144 = vpop.f32.mrb[0].mxu0
        %v2145 = vadd.f32 0.0, %v2144
        %v2146 = vpop.f32.mrb[0].mxu0
        %2147 = vmatprep.mubr.f32.mxu0 0.0
        %2148 = vmatmul.mubr.f32.gmra.mrb[0].mxu0 %v1694
        %v2149 = vpop.f32.mrb[0].mxu0
        %v2150 = vadd.f32 0.0, %v2149
        %v2151 = vpop.f32.mrb[0].mxu0
        %2152 = vmatprep.mubr.f32.mxu0 0.0
        %2153 = vmatmul.mubr.f32.gmra.mrb[0].mxu0 %v1695
        %v2154 = vpop.f32.mrb[0].mxu0
        %v2155 = vadd.f32 0.0, %v2154
        %v2156 = vpop.f32.mrb[0].mxu0
        %2157 = vmatprep.mubr.f32.mxu0 0.0
        %2158 = vmatmul.mubr.f32.gmra.mrb[0].mxu0 %v1696
        %v2159 = vpop.f32.mrb[0].mxu0
        %v2160 = vadd.f32 0.0, %v2159
        %v2161 = vpop.f32.mrb[0].mxu0
        %2162 = vmatprep.mubr.f32.mxu0 0.0
        %2163 = vmatmul.mubr.f32.gmra.mrb[0].mxu0 %v1697
        %v2164 = vpop.f32.mrb[0].mxu0
        %v2165 = vadd.f32 0.0, %v2164
        %v2166 = vpop.f32.mrb[0].mxu0
        %2167 = vmatprep.mubr.f32.mxu0 0.0
        %2168 = vmatmul.mubr.f32.gmra.mrb[0].mxu0 %v1698
        %v2169 = vpop.f32.mrb[0].mxu0
        %v2170 = vadd.f32 0.0, %v2169
        %v2171 = vpop.f32.mrb[0].mxu0
        %2172 = vmatprep.mubr.f32.mxu0 0.0
        %2173 = vmatmul.mubr.f32.gmra.mrb[0].mxu0 %v1699
        %v2174 = vpop.f32.mrb[0].mxu0
        %v2175 = vadd.f32 0.0, %v2174
        %v2176 = vpop.f32.mrb[0].mxu0
        %2177 = vmatprep.mubr.f32.mxu0 0.0
        %2178 = vmatmul.mubr.f32.gmra.mrb[0].mxu0 %v1700
        %v2179 = vpop.f32.mrb[0].mxu0
        %v2180 = vadd.f32 0.0, %v2179
        %v2181 = vpop.f32.mrb[0].mxu0
        %2182 = vmatprep.mubr.f32.mxu0 0.0
        %2183 = vmatmul.mubr.f32.gmra.mrb[0].mxu0 %v1701
        %v2184 = vpop.f32.mrb[0].mxu0
        %v2185 = vadd.f32 0.0, %v2184
        %v2186 = vpop.f32.mrb[0].mxu0
        %2187 = vmatprep.mubr.f32.mxu0 0.0
        %2188 = vmatmul.mubr.f32.gmra.mrb[0].mxu0 %v1702
        %v2189 = vpop.f32.mrb[0].mxu0
        %v2190 = vadd.f32 0.0, %v2189
        %v2191 = vpop.f32.mrb[0].mxu0
        %2192 = vmatprep.mubr.f32.mxu0 0.0
        %2193 = vmatmul.mubr.f32.gmra.mrb[0].mxu0 %v1703
        %v2194 = vpop.f32.mrb[0].mxu0
        %v2195 = vadd.f32 0.0, %v2194
        %v2196 = vpop.f32.mrb[0].mxu0
        %2197 = vmatprep.mubr.f32.mxu0 0.0
        %2198 = vmatmul.mubr.f32.gmra.mrb[0].mxu0 %v1704
        %v2199 = vpop.f32.mrb[0].mxu0
        %v2200 = vadd.f32 0.0, %v2199
        %v2201 = vpop.f32.mrb[0].mxu0
        %2202 = vmatprep.mubr.f32.mxu0 0.0
        %2203 = vmatmul.mubr.f32.gmra.mrb[0].mxu0 %v1705
        %v2204 = vpop.f32.mrb[0].mxu0
        %v2205 = vadd.f32 0.0, %v2204
        %v2206 = vpop.f32.mrb[0].mxu0
        %2207 = vmatprep.mubr.f32.mxu0 0.0
        %2208 = vmatmul.mubr.f32.gmra.mrb[0].mxu0 %v1706
        %v2209 = vpop.f32.mrb[0].mxu0
        %v2210 = vadd.f32 0.0, %v2209
        %v2211 = vpop.f32.mrb[0].mxu0
        %2212 = vmatprep.mubr.f32.mxu0 0.0
        %2213 = vmatmul.mubr.f32.gmra.mrb[0].mxu0 %v1707
        %v2214 = vpop.f32.mrb[0].mxu0
        %v2215 = vadd.f32 0.0, %v2214
        %v2216 = vpop.f32.mrb[0].mxu0
        %2217 = vmatprep.mubr.f32.mxu0 0.0
        %2218 = vmatmul.mubr.f32.gmra.mrb[0].mxu0 %v1708
        %v2219 = vpop.f32.mrb[0].mxu0
        %v2220 = vadd.f32 0.0, %v2219
        %v2221 = vpop.f32.mrb[0].mxu0
        %2222 = vmatprep.mubr.f32.mxu0 0.0
        %2223 = vmatmul.mubr.f32.gmra.mrb[0].mxu0 %v1709
        %v2224 = vpop.f32.mrb[0].mxu0
        %v2225 = vadd.f32 0.0, %v2224
        %v2226 = vpop.f32.mrb[0].mxu0
        %2227 = vmatprep.mubr.f32.mxu0 0.0
        %2228 = vmatmul.mubr.f32.gmra.mrb[0].mxu0 %v1710
        %v2229 = vpop.f32.mrb[0].mxu0
        %v2230 = vadd.f32 0.0, %v2229
        %v2231 = vpop.f32.mrb[0].mxu0
        %2232 = vmatprep.mubr.f32.mxu0 0.0
        %2233 = vmatmul.mubr.f32.gmra.mrb[0].mxu0 %v1711
        %v2234 = vpop.f32.mrb[0].mxu0
        %v2235 = vadd.f32 0.0, %v2234
        %v2236 = vpop.f32.mrb[0].mxu0
        %2237 = vmatprep.mubr.f32.mxu0 0.0
        %2238 = vmatmul.mubr.f32.gmra.mrb[0].mxu0 %v1712
        %v2239 = vpop.f32.mrb[0].mxu0
        %v2240 = vadd.f32 0.0, %v2239
        %v2241 = vpop.f32.mrb[0].mxu0
        %2242 = vdwg.mxu0
        %v2243 = vrot.slane %v1828, 7
        %v2244 = vrot.slane %v1834, 7
        %v2245 = vrot.slane %v1840, 7
        %v2246 = vrot.slane %v1846, 7
        %v2247 = vrot.slane %v1852, 7
        %v2248 = vrot.slane %v1858, 7
        %v2249 = vrot.slane %v1864, 7
        %v2250 = vrot.slane %v1870, 7
        %v2251 = vrot.slane %v1876, 7
        %v2252 = vrot.slane %v1882, 7
        %v2253 = vrot.slane %v1888, 7
        %v2254 = vrot.slane %v1894, 7
        %v2255 = vrot.slane %v1900, 7
        %v2256 = vrot.slane %v1906, 7
        %v2257 = vrot.slane %v1912, 7
        %v2258 = vrot.slane %v1918, 7
        %v2259 = vrot.slane %v1924, 7
        %v2260 = vrot.slane %v1930, 7
        %v2261 = vrot.slane %v1936, 7
        %v2262 = vrot.slane %v1942, 7
        %v2263 = vrot.slane %v1948, 7
        %v2264 = vrot.slane %v1954, 7
        %v2265 = vrot.slane %v1960, 7
        %v2266 = vrot.slane %v1966, 7
        %v2267 = vrot.slane %v1972, 7
        %v2268 = vrot.slane %v1978, 7
        %v2269 = vrot.slane %v1984, 7
        %v2270 = vrot.slane %v1990, 7
        %v2271 = vrot.slane %v1996, 7
        %v2272 = vrot.slane %v2002, 7
        %v2273 = vrot.slane %v2008, 7
        %v2274 = vrot.slane %v2014, 7
        %v2275 = vsel %vm1326, %v2273, %v2274
        %v2276 = vsel %vm1326, %v2272, %v2273
        %v2277 = vsel %vm1326, %v2271, %v2272
        %v2278 = vsel %vm1326, %v2270, %v2271
        %v2279 = vsel %vm1326, %v2269, %v2270
        %v2280 = vsel %vm1326, %v2268, %v2269
        %v2281 = vsel %vm1326, %v2267, %v2268
        %v2282 = vsel %vm1326, %v2266, %v2267
        %v2283 = vsel %vm1326, %v2265, %v2266
        %v2284 = vsel %vm1326, %v2264, %v2265
        %v2285 = vsel %vm1326, %v2263, %v2264
        %v2286 = vsel %vm1326, %v2262, %v2263
        %v2287 = vsel %vm1326, %v2261, %v2262
        %v2288 = vsel %vm1326, %v2260, %v2261
        %v2289 = vsel %vm1326, %v2259, %v2260
        %v2290 = vsel %vm1326, %v2258, %v2259
        %v2291 = vsel %vm1326, %v2257, %v2258
        %v2292 = vsel %vm1326, %v2256, %v2257
        %v2293 = vsel %vm1326, %v2255, %v2256
        %v2294 = vsel %vm1326, %v2254, %v2255
        %v2295 = vsel %vm1326, %v2253, %v2254
        %v2296 = vsel %vm1326, %v2252, %v2253
        %v2297 = vsel %vm1326, %v2251, %v2252
        %v2298 = vsel %vm1326, %v2250, %v2251
        %v2299 = vsel %vm1326, %v2249, %v2250
        %v2300 = vsel %vm1326, %v2248, %v2249
        %v2301 = vsel %vm1326, %v2247, %v2248
        %v2302 = vsel %vm1326, %v2246, %v2247
        %v2303 = vsel %vm1326, %v2245, %v2246
        %v2304 = vsel %vm1326, %v2244, %v2245
        %v2305 = vsel %vm1326, %v2243, %v2244
        %v2306 = vsel %vm1326, %v2274, %v2243
        %v2307 = vsel %vm1391, %v2306, 0.0
        %v2308 = vsel %vm1392, %v2305, 0.0
        %v2309 = vsel %vm1393, %v2304, 0.0
        %v2310 = vsel %vm1394, %v2303, 0.0
        %v2311 = vsel %vm1395, %v2302, 0.0
        %v2312 = vsel %vm1396, %v2301, 0.0
        %v2313 = vsel %vm1397, %v2300, 0.0
        %v2314 = vsel %vm1398, %v2299, 0.0
        %v2315 = vsel %vm1399, %v2298, 0.0
        %v2316 = vsel %vm1400, %v2297, 0.0
        %v2317 = vsel %vm1401, %v2296, 0.0
        %v2318 = vsel %vm1402, %v2295, 0.0
        %v2319 = vsel %vm1403, %v2294, 0.0
        %v2320 = vsel %vm1404, %v2293, 0.0
        %v2321 = vsel %vm1405, %v2292, 0.0
        %v2322 = vsel %vm1406, %v2291, 0.0
        %v2323 = vsel %vm1407, %v2290, 0.0
        %v2324 = vsel %vm1408, %v2289, 0.0
        %v2325 = vsel %vm1409, %v2288, 0.0
        %v2326 = vsel %vm1410, %v2287, 0.0
        %v2327 = vsel %vm1411, %v2286, 0.0
        %v2328 = vsel %vm1412, %v2285, 0.0
        %v2329 = vsel %vm1413, %v2284, 0.0
        %v2330 = vsel %vm1414, %v2283, 0.0
        %v2331 = vsel %vm1415, %v2282, 0.0
        %v2332 = vsel %vm1416, %v2281, 0.0
        %v2333 = vsel %vm1417, %v2280, 0.0
        %v2334 = vsel %vm1418, %v2279, 0.0
        %v2335 = vsel %vm1419, %v2278, 0.0
        %v2336 = vsel %vm1420, %v2277, 0.0
        %v2337 = vsel %vm1421, %v2276, 0.0
        %v2338 = vsel %vm1422, %v2275, 0.0
        %v2339 = vrot.slane %v2085, 1
        %v2340 = vrot.slane %v2090, 1
        %v2341 = vrot.slane %v2095, 1
        %v2342 = vrot.slane %v2100, 1
        %v2343 = vrot.slane %v2105, 1
        %v2344 = vrot.slane %v2110, 1
        %v2345 = vrot.slane %v2115, 1
        %v2346 = vrot.slane %v2120, 1
        %v2347 = vrot.slane %v2125, 1
        %v2348 = vrot.slane %v2130, 1
        %v2349 = vrot.slane %v2135, 1
        %v2350 = vrot.slane %v2140, 1
        %v2351 = vrot.slane %v2145, 1
        %v2352 = vrot.slane %v2150, 1
        %v2353 = vrot.slane %v2155, 1
        %v2354 = vrot.slane %v2160, 1
        %v2355 = vrot.slane %v2165, 1
        %v2356 = vrot.slane %v2170, 1
        %v2357 = vrot.slane %v2175, 1
        %v2358 = vrot.slane %v2180, 1
        %v2359 = vrot.slane %v2185, 1
        %v2360 = vrot.slane %v2190, 1
        %v2361 = vrot.slane %v2195, 1
        %v2362 = vrot.slane %v2200, 1
        %v2363 = vrot.slane %v2205, 1
        %v2364 = vrot.slane %v2210, 1
        %v2365 = vrot.slane %v2215, 1
        %v2366 = vrot.slane %v2220, 1
        %v2367 = vrot.slane %v2225, 1
        %v2368 = vrot.slane %v2230, 1
        %v2369 = vrot.slane %v2235, 1
        %v2370 = vrot.slane %v2240, 1
        %v2371 = vsel %vm1487, %v2369, %v2370
        %v2372 = vsel %vm1487, %v2368, %v2369
        %v2373 = vsel %vm1487, %v2367, %v2368
        %v2374 = vsel %vm1487, %v2366, %v2367
        %v2375 = vsel %vm1487, %v2365, %v2366
        %v2376 = vsel %vm1487, %v2364, %v2365
        %v2377 = vsel %vm1487, %v2363, %v2364
        %v2378 = vsel %vm1487, %v2362, %v2363
        %v2379 = vsel %vm1487, %v2361, %v2362
        %v2380 = vsel %vm1487, %v2360, %v2361
        %v2381 = vsel %vm1487, %v2359, %v2360
        %v2382 = vsel %vm1487, %v2358, %v2359
        %v2383 = vsel %vm1487, %v2357, %v2358
        %v2384 = vsel %vm1487, %v2356, %v2357
        %v2385 = vsel %vm1487, %v2355, %v2356
        %v2386 = vsel %vm1487, %v2354, %v2355
        %v2387 = vsel %vm1487, %v2353, %v2354
        %v2388 = vsel %vm1487, %v2352, %v2353
        %v2389 = vsel %vm1487, %v2351, %v2352
        %v2390 = vsel %vm1487, %v2350, %v2351
        %v2391 = vsel %vm1487, %v2349, %v2350
        %v2392 = vsel %vm1487, %v2348, %v2349
        %v2393 = vsel %vm1487, %v2347, %v2348
        %v2394 = vsel %vm1487, %v2346, %v2347
        %v2395 = vsel %vm1487, %v2345, %v2346
        %v2396 = vsel %vm1487, %v2344, %v2345
        %v2397 = vsel %vm1487, %v2343, %v2344
        %v2398 = vsel %vm1487, %v2342, %v2343
        %v2399 = vsel %vm1487, %v2341, %v2342
        %v2400 = vsel %vm1487, %v2340, %v2341
        %v2401 = vsel %vm1487, %v2339, %v2340
        %v2402 = vsel %vm1487, %v2370, %v2339
        %v2403 = vsel %vm1552, %v2401, 0.0
        %v2404 = vsel %vm1553, %v2400, 0.0
        %v2405 = vsel %vm1554, %v2399, 0.0
        %v2406 = vsel %vm1555, %v2398, 0.0
        %v2407 = vsel %vm1556, %v2397, 0.0
        %v2408 = vsel %vm1557, %v2396, 0.0
        %v2409 = vsel %vm1558, %v2395, 0.0
        %v2410 = vsel %vm1559, %v2394, 0.0
        %v2411 = vsel %vm1560, %v2393, 0.0
        %v2412 = vsel %vm1561, %v2392, 0.0
        %v2413 = vsel %vm1562, %v2391, 0.0
        %v2414 = vsel %vm1563, %v2390, 0.0
        %v2415 = vsel %vm1564, %v2389, 0.0
        %v2416 = vsel %vm1565, %v2388, 0.0
        %v2417 = vsel %vm1566, %v2387, 0.0
        %v2418 = vsel %vm1567, %v2386, 0.0
        %v2419 = vsel %vm1568, %v2385, 0.0
        %v2420 = vsel %vm1569, %v2384, 0.0
        %v2421 = vsel %vm1570, %v2383, 0.0
        %v2422 = vsel %vm1571, %v2382, 0.0
        %v2423 = vsel %vm1572, %v2381, 0.0
        %v2424 = vsel %vm1573, %v2380, 0.0
        %v2425 = vsel %vm1574, %v2379, 0.0
        %v2426 = vsel %vm1575, %v2378, 0.0
        %v2427 = vsel %vm1576, %v2377, 0.0
        %v2428 = vsel %vm1577, %v2376, 0.0
        %v2429 = vsel %vm1578, %v2375, 0.0
        %v2430 = vsel %vm1579, %v2374, 0.0
        %v2431 = vsel %vm1580, %v2373, 0.0
        %v2432 = vsel %vm1581, %v2372, 0.0
        %v2433 = vsel %vm1582, %v2371, 0.0
        %v2434 = vsel %vm1583, %v2402, 0.0
        %v2435 = vadd.f32 %v2307, %v1830
        %v2436 = vadd.f32 %v2308, %v1836
        %v2437 = vadd.f32 %v2309, %v1842
        %v2438 = vadd.f32 %v2310, %v1848
        %v2439 = vadd.f32 %v2311, %v1854
        %v2440 = vadd.f32 %v2312, %v1860
        %v2441 = vadd.f32 %v2313, %v1866
        %v2442 = vadd.f32 %v2314, %v1872
        %v2443 = vadd.f32 %v2315, %v1878
        %v2444 = vadd.f32 %v2316, %v1884
        %v2445 = vadd.f32 %v2317, %v1890
        %v2446 = vadd.f32 %v2318, %v1896
        %v2447 = vadd.f32 %v2319, %v1902
        %v2448 = vadd.f32 %v2320, %v1908
        %v2449 = vadd.f32 %v2321, %v1914
        %v2450 = vadd.f32 %v2322, %v1920
        %v2451 = vadd.f32 %v2323, %v1926
        %v2452 = vadd.f32 %v2324, %v1932
        %v2453 = vadd.f32 %v2325, %v1938
        %v2454 = vadd.f32 %v2326, %v1944
        %v2455 = vadd.f32 %v2327, %v1950
        %v2456 = vadd.f32 %v2328, %v1956
        %v2457 = vadd.f32 %v2329, %v1962
        %v2458 = vadd.f32 %v2330, %v1968
        %v2459 = vadd.f32 %v2331, %v1974
        %v2460 = vadd.f32 %v2332, %v1980
        %v2461 = vadd.f32 %v2333, %v1986
        %v2462 = vadd.f32 %v2334, %v1992
        %v2463 = vadd.f32 %v2335, %v1998
        %v2464 = vadd.f32 %v2336, %v2004
        %v2465 = vadd.f32 %v2337, %v2010
        %v2466 = vadd.f32 %v2338, %v2016
        %v2467 = vadd.f32 %v2435, %v2403
        %v2468 = vadd.f32 %v2436, %v2404
        %v2469 = vadd.f32 %v2437, %v2405
        %v2470 = vadd.f32 %v2438, %v2406
        %v2471 = vadd.f32 %v2439, %v2407
        %v2472 = vadd.f32 %v2440, %v2408
        %v2473 = vadd.f32 %v2441, %v2409
        %v2474 = vadd.f32 %v2442, %v2410
        %v2475 = vadd.f32 %v2443, %v2411
        %v2476 = vadd.f32 %v2444, %v2412
        %v2477 = vadd.f32 %v2445, %v2413
        %v2478 = vadd.f32 %v2446, %v2414
        %v2479 = vadd.f32 %v2447, %v2415
        %v2480 = vadd.f32 %v2448, %v2416
        %v2481 = vadd.f32 %v2449, %v2417
        %v2482 = vadd.f32 %v2450, %v2418
        %v2483 = vadd.f32 %v2451, %v2419
        %v2484 = vadd.f32 %v2452, %v2420
        %v2485 = vadd.f32 %v2453, %v2421
        %v2486 = vadd.f32 %v2454, %v2422
        %v2487 = vadd.f32 %v2455, %v2423
        %v2488 = vadd.f32 %v2456, %v2424
        %v2489 = vadd.f32 %v2457, %v2425
        %v2490 = vadd.f32 %v2458, %v2426
        %v2491 = vadd.f32 %v2459, %v2427
        %v2492 = vadd.f32 %v2460, %v2428
        %v2493 = vadd.f32 %v2461, %v2429
        %v2494 = vadd.f32 %v2462, %v2430
        %v2495 = vadd.f32 %v2463, %v2431
        %v2496 = vadd.f32 %v2464, %v2432
        %v2497 = vadd.f32 %v2465, %v2433
        %v2498 = vadd.f32 %v2466, %v2434
        %v2499 = vld [vmem:[#allocation7 + $0x1] ss:$0 sm:$0xff]
        %v2500 = vadd.f32 %v2467, %v2499
        %v2501 = vadd.f32 %v2468, %v2499
        %v2502 = vadd.f32 %v2469, %v2499
        %v2503 = vadd.f32 %v2470, %v2499
        %v2504 = vadd.f32 %v2471, %v2499
        %v2505 = vadd.f32 %v2472, %v2499
        %v2506 = vadd.f32 %v2473, %v2499
        %v2507 = vadd.f32 %v2474, %v2499
        %v2508 = vadd.f32 %v2475, %v2499
        %v2509 = vadd.f32 %v2476, %v2499
        %v2510 = vadd.f32 %v2477, %v2499
        %v2511 = vadd.f32 %v2478, %v2499
        %v2512 = vadd.f32 %v2479, %v2499
        %v2513 = vadd.f32 %v2480, %v2499
        %v2514 = vadd.f32 %v2481, %v2499
        %v2515 = vadd.f32 %v2482, %v2499
        %v2516 = vadd.f32 %v2483, %v2499
        %v2517 = vadd.f32 %v2484, %v2499
        %v2518 = vadd.f32 %v2485, %v2499
        %v2519 = vadd.f32 %v2486, %v2499
        %v2520 = vadd.f32 %v2487, %v2499
        %v2521 = vadd.f32 %v2488, %v2499
        %v2522 = vadd.f32 %v2489, %v2499
        %v2523 = vadd.f32 %v2490, %v2499
        %v2524 = vadd.f32 %v2491, %v2499
        %v2525 = vadd.f32 %v2492, %v2499
        %v2526 = vadd.f32 %v2493, %v2499
        %v2527 = vadd.f32 %v2494, %v2499
        %v2528 = vadd.f32 %v2495, %v2499
        %v2529 = vadd.f32 %v2496, %v2499
        %v2530 = vadd.f32 %v2497, %v2499
        %v2531 = vadd.f32 %v2498, %v2499
        %v2532 = vld [vmem:[#allocation5 + $0x300] sm:$0xff]
        %v2533 = vld [vmem:[#allocation5 + $0x308] sm:$0xff]
        %v2534 = vld [vmem:[#allocation5 + $0x310] sm:$0xff]
        %v2535 = vld [vmem:[#allocation5 + $0x318] sm:$0xff]
        %v2536 = vld [vmem:[#allocation5 + $0x320] sm:$0xff]
        %v2537 = vld [vmem:[#allocation5 + $0x328] sm:$0xff]
        %v2538 = vld [vmem:[#allocation5 + $0x330] sm:$0xff]
        %v2539 = vld [vmem:[#allocation5 + $0x338] sm:$0xff]
        %v2540 = vld [vmem:[#allocation5 + $0x340] sm:$0xff]
        %v2541 = vld [vmem:[#allocation5 + $0x348] sm:$0xff]
        %v2542 = vld [vmem:[#allocation5 + $0x350] sm:$0xff]
        %v2543 = vld [vmem:[#allocation5 + $0x358] sm:$0xff]
        %v2544 = vld [vmem:[#allocation5 + $0x360] sm:$0xff]
        %v2545 = vld [vmem:[#allocation5 + $0x368] sm:$0xff]
        %v2546 = vld [vmem:[#allocation5 + $0x370] sm:$0xff]
        %v2547 = vld [vmem:[#allocation5 + $0x378] sm:$0xff]
        %v2548 = vld [vmem:[#allocation5 + $0x380] sm:$0xff]
        %v2549 = vld [vmem:[#allocation5 + $0x388] sm:$0xff]
        %v2550 = vld [vmem:[#allocation5 + $0x390] sm:$0xff]
        %v2551 = vld [vmem:[#allocation5 + $0x398] sm:$0xff]
        %v2552 = vld [vmem:[#allocation5 + $0x3a0] sm:$0xff]
        %v2553 = vld [vmem:[#allocation5 + $0x3a8] sm:$0xff]
        %v2554 = vld [vmem:[#allocation5 + $0x3b0] sm:$0xff]
        %v2555 = vld [vmem:[#allocation5 + $0x3b8] sm:$0xff]
        %v2556 = vld [vmem:[#allocation5 + $0x3c0] sm:$0xff]
        %v2557 = vld [vmem:[#allocation5 + $0x3c8] sm:$0xff]
        %v2558 = vld [vmem:[#allocation5 + $0x3d0] sm:$0xff]
        %v2559 = vld [vmem:[#allocation5 + $0x3d8] sm:$0xff]
        %v2560 = vld [vmem:[#allocation5 + $0x3e0] sm:$0xff]
        %v2561 = vld [vmem:[#allocation5 + $0x3e8] sm:$0xff]
        %v2562 = vld [vmem:[#allocation5 + $0x3f0] sm:$0xff]
        %v2563 = vld [vmem:[#allocation5 + $0x3f8] sm:$0xff]
        %v2564 = vld [vmem:[#allocation5 + $0x400] sm:$0xff]
        %v2565 = vld [vmem:[#allocation5 + $0x408] sm:$0xff]
        %v2566 = vld [vmem:[#allocation5 + $0x410] sm:$0xff]
        %v2567 = vld [vmem:[#allocation5 + $0x418] sm:$0xff]
        %v2568 = vld [vmem:[#allocation5 + $0x420] sm:$0xff]
        %v2569 = vld [vmem:[#allocation5 + $0x428] sm:$0xff]
        %v2570 = vld [vmem:[#allocation5 + $0x430] sm:$0xff]
        %v2571 = vld [vmem:[#allocation5 + $0x438] sm:$0xff]
        %v2572 = vld [vmem:[#allocation5 + $0x440] sm:$0xff]
        %v2573 = vld [vmem:[#allocation5 + $0x448] sm:$0xff]
        %v2574 = vld [vmem:[#allocation5 + $0x450] sm:$0xff]
        %v2575 = vld [vmem:[#allocation5 + $0x458] sm:$0xff]
        %v2576 = vld [vmem:[#allocation5 + $0x460] sm:$0xff]
        %v2577 = vld [vmem:[#allocation5 + $0x468] sm:$0xff]
        %v2578 = vld [vmem:[#allocation5 + $0x470] sm:$0xff]
        %v2579 = vld [vmem:[#allocation5 + $0x478] sm:$0xff]
        %2580 = vmatprep.subr.mxu0 %v2533
        %2581 = vmatpush1.msra.mxu0 %v2532
        %2582 = vmatprep.subr.mxu0 %v2536
        %2583 = vmatpush1.msra.mxu0 %v2535
        %2584 = vmatprep.subr.mxu0 %v2539
        %2585 = vmatpush1.msra.mxu0 %v2538
        %2586 = vmatprep.subr.mxu0 %v2542
        %2587 = vmatpush1.msra.mxu0 %v2541
        %2588 = vmatprep.subr.mxu0 %v2545
        %2589 = vmatpush1.msra.mxu0 %v2544
        %2590 = vmatprep.subr.mxu0 %v2548
        %2591 = vmatpush1.msra.mxu0 %v2547
        %2592 = vmatprep.subr.mxu0 %v2551
        %2593 = vmatpush1.msra.mxu0 %v2550
        %2594 = vmatprep.subr.mxu0 %v2554
        %2595 = vmatpush1.msra.mxu0 %v2553
        %2596 = vmatprep.subr.mxu0 %v2557
        %2597 = vmatpush1.msra.mxu0 %v2556
        %2598 = vmatprep.subr.mxu0 %v2560
        %2599 = vmatpush1.msra.mxu0 %v2559
        %2600 = vmatprep.subr.mxu0 %v2563
        %2601 = vmatpush1.msra.mxu0 %v2562
        %2602 = vmatprep.subr.mxu0 %v2566
        %2603 = vmatpush1.msra.mxu0 %v2565
        %2604 = vmatprep.subr.mxu0 %v2569
        %2605 = vmatpush1.msra.mxu0 %v2568
        %2606 = vmatprep.subr.mxu0 %v2572
        %2607 = vmatpush1.msra.mxu0 %v2571
        %2608 = vmatprep.subr.mxu0 %v2575
        %2609 = vmatpush1.msra.mxu0 %v2574
        %2610 = vmatprep.subr.mxu0 %v2578
        %2611 = vmatpush1.msra.mxu0 %v2577
        %2612 = vmatprep.subr.mxu0 0.0
        %2613 = vmatpush1.msra.mxu0 0.0
        %2614 = vmatprep.subr.mxu0 0.0
        %2615 = vmatpush1.msra.mxu0 0.0
        %2616 = vmatprep.subr.mxu0 0.0
        %2617 = vmatpush1.msra.mxu0 0.0
        %2618 = vmatprep.subr.mxu0 0.0
        %2619 = vmatpush1.msra.mxu0 0.0
        %2620 = vmatprep.subr.mxu0 0.0
        %2621 = vmatpush1.msra.mxu0 0.0
        %2622 = vmatprep.subr.mxu0 0.0
        %2623 = vmatpush1.msra.mxu0 0.0
        %2624 = vmatprep.subr.mxu0 0.0
        %2625 = vmatpush1.msra.mxu0 0.0
        %2626 = vmatprep.subr.mxu0 0.0
        %2627 = vmatpush1.msra.mxu0 0.0
        %2628 = vmatprep.subr.mxu0 0.0
        %2629 = vmatpush1.msra.mxu0 0.0
        %2630 = vmatprep.subr.mxu0 0.0
        %2631 = vmatpush1.msra.mxu0 0.0
        %2632 = vmatprep.subr.mxu0 0.0
        %2633 = vmatpush1.msra.mxu0 0.0
        %2634 = vmatprep.subr.mxu0 0.0
        %2635 = vmatpush1.msra.mxu0 0.0
        %2636 = vmatprep.subr.mxu0 0.0
        %2637 = vmatpush1.msra.mxu0 0.0
        %2638 = vmatprep.subr.mxu0 0.0
        %2639 = vmatpush1.msra.mxu0 0.0
        %2640 = vmatprep.subr.mxu0 0.0
        %2641 = vmatpush1.msra.mxu0 0.0
        %2642 = vmatprep.subr.mxu0 0.0
        %2643 = vmatpush1.msra.mxu0 0.0
        %2644 = vmatprep.mubr.f32.mxu0 0.0
        %2645 = vmatmul.mubr.f32.gmra.mrb[0].mxu0 %v2500
        %v2646 = vpop.f32.mrb[0].mxu0
        %v2647 = vadd.f32 0.0, %v2646
        %v2648 = vpop.f32.mrb[0].mxu0
        %v2649 = vadd.f32 0.0, %v2648
        %2650 = vmatprep.mubr.f32.mxu0 0.0
        %2651 = vmatmul.mubr.f32.gmra.mrb[0].mxu0 %v2501
        %v2652 = vpop.f32.mrb[0].mxu0
        %v2653 = vadd.f32 0.0, %v2652
        %v2654 = vpop.f32.mrb[0].mxu0
        %v2655 = vadd.f32 0.0, %v2654
        %2656 = vmatprep.mubr.f32.mxu0 0.0
        %2657 = vmatmul.mubr.f32.gmra.mrb[0].mxu0 %v2502
        %v2658 = vpop.f32.mrb[0].mxu0
        %v2659 = vadd.f32 0.0, %v2658
        %v2660 = vpop.f32.mrb[0].mxu0
        %v2661 = vadd.f32 0.0, %v2660
        %2662 = vmatprep.mubr.f32.mxu0 0.0
        %2663 = vmatmul.mubr.f32.gmra.mrb[0].mxu0 %v2503
        %v2664 = vpop.f32.mrb[0].mxu0
        %v2665 = vadd.f32 0.0, %v2664
        %v2666 = vpop.f32.mrb[0].mxu0
        %v2667 = vadd.f32 0.0, %v2666
        %2668 = vmatprep.mubr.f32.mxu0 0.0
        %2669 = vmatmul.mubr.f32.gmra.mrb[0].mxu0 %v2504
        %v2670 = vpop.f32.mrb[0].mxu0
        %v2671 = vadd.f32 0.0, %v2670
        %v2672 = vpop.f32.mrb[0].mxu0
        %v2673 = vadd.f32 0.0, %v2672
        %2674 = vmatprep.mubr.f32.mxu0 0.0
        %2675 = vmatmul.mubr.f32.gmra.mrb[0].mxu0 %v2505
        %v2676 = vpop.f32.mrb[0].mxu0
        %v2677 = vadd.f32 0.0, %v2676
        %v2678 = vpop.f32.mrb[0].mxu0
        %v2679 = vadd.f32 0.0, %v2678
        %2680 = vmatprep.mubr.f32.mxu0 0.0
        %2681 = vmatmul.mubr.f32.gmra.mrb[0].mxu0 %v2506
        %v2682 = vpop.f32.mrb[0].mxu0
        %v2683 = vadd.f32 0.0, %v2682
        %v2684 = vpop.f32.mrb[0].mxu0
        %v2685 = vadd.f32 0.0, %v2684
        %2686 = vmatprep.mubr.f32.mxu0 0.0
        %2687 = vmatmul.mubr.f32.gmra.mrb[0].mxu0 %v2507
        %v2688 = vpop.f32.mrb[0].mxu0
        %v2689 = vadd.f32 0.0, %v2688
        %v2690 = vpop.f32.mrb[0].mxu0
        %v2691 = vadd.f32 0.0, %v2690
        %2692 = vmatprep.mubr.f32.mxu0 0.0
        %2693 = vmatmul.mubr.f32.gmra.mrb[0].mxu0 %v2508
        %v2694 = vpop.f32.mrb[0].mxu0
        %v2695 = vadd.f32 0.0, %v2694
        %v2696 = vpop.f32.mrb[0].mxu0
        %v2697 = vadd.f32 0.0, %v2696
        %2698 = vmatprep.mubr.f32.mxu0 0.0
        %2699 = vmatmul.mubr.f32.gmra.mrb[0].mxu0 %v2509
        %v2700 = vpop.f32.mrb[0].mxu0
        %v2701 = vadd.f32 0.0, %v2700
        %v2702 = vpop.f32.mrb[0].mxu0
        %v2703 = vadd.f32 0.0, %v2702
        %2704 = vmatprep.mubr.f32.mxu0 0.0
        %2705 = vmatmul.mubr.f32.gmra.mrb[0].mxu0 %v2510
        %v2706 = vpop.f32.mrb[0].mxu0
        %v2707 = vadd.f32 0.0, %v2706
        %v2708 = vpop.f32.mrb[0].mxu0
        %v2709 = vadd.f32 0.0, %v2708
        %2710 = vmatprep.mubr.f32.mxu0 0.0
        %2711 = vmatmul.mubr.f32.gmra.mrb[0].mxu0 %v2511
        %v2712 = vpop.f32.mrb[0].mxu0
        %v2713 = vadd.f32 0.0, %v2712
        %v2714 = vpop.f32.mrb[0].mxu0
        %v2715 = vadd.f32 0.0, %v2714
        %2716 = vmatprep.mubr.f32.mxu0 0.0
        %2717 = vmatmul.mubr.f32.gmra.mrb[0].mxu0 %v2512
        %v2718 = vpop.f32.mrb[0].mxu0
        %v2719 = vadd.f32 0.0, %v2718
        %v2720 = vpop.f32.mrb[0].mxu0
        %v2721 = vadd.f32 0.0, %v2720
        %2722 = vmatprep.mubr.f32.mxu0 0.0
        %2723 = vmatmul.mubr.f32.gmra.mrb[0].mxu0 %v2513
        %v2724 = vpop.f32.mrb[0].mxu0
        %v2725 = vadd.f32 0.0, %v2724
        %v2726 = vpop.f32.mrb[0].mxu0
        %v2727 = vadd.f32 0.0, %v2726
        %2728 = vmatprep.mubr.f32.mxu0 0.0
        %2729 = vmatmul.mubr.f32.gmra.mrb[0].mxu0 %v2514
        %v2730 = vpop.f32.mrb[0].mxu0
        %v2731 = vadd.f32 0.0, %v2730
        %v2732 = vpop.f32.mrb[0].mxu0
        %v2733 = vadd.f32 0.0, %v2732
        %2734 = vmatprep.mubr.f32.mxu0 0.0
        %2735 = vmatmul.mubr.f32.gmra.mrb[0].mxu0 %v2515
        %v2736 = vpop.f32.mrb[0].mxu0
        %v2737 = vadd.f32 0.0, %v2736
        %v2738 = vpop.f32.mrb[0].mxu0
        %v2739 = vadd.f32 0.0, %v2738
        %2740 = vmatprep.mubr.f32.mxu0 0.0
        %2741 = vmatmul.mubr.f32.gmra.mrb[0].mxu0 %v2516
        %v2742 = vpop.f32.mrb[0].mxu0
        %v2743 = vadd.f32 0.0, %v2742
        %v2744 = vpop.f32.mrb[0].mxu0
        %v2745 = vadd.f32 0.0, %v2744
        %2746 = vmatprep.mubr.f32.mxu0 0.0
        %2747 = vmatmul.mubr.f32.gmra.mrb[0].mxu0 %v2517
        %v2748 = vpop.f32.mrb[0].mxu0
        %v2749 = vadd.f32 0.0, %v2748
        %v2750 = vpop.f32.mrb[0].mxu0
        %v2751 = vadd.f32 0.0, %v2750
        %2752 = vmatprep.mubr.f32.mxu0 0.0
        %2753 = vmatmul.mubr.f32.gmra.mrb[0].mxu0 %v2518
        %v2754 = vpop.f32.mrb[0].mxu0
        %v2755 = vadd.f32 0.0, %v2754
        %v2756 = vpop.f32.mrb[0].mxu0
        %v2757 = vadd.f32 0.0, %v2756
        %2758 = vmatprep.mubr.f32.mxu0 0.0
        %2759 = vmatmul.mubr.f32.gmra.mrb[0].mxu0 %v2519
        %v2760 = vpop.f32.mrb[0].mxu0
        %v2761 = vadd.f32 0.0, %v2760
        %v2762 = vpop.f32.mrb[0].mxu0
        %v2763 = vadd.f32 0.0, %v2762
        %2764 = vmatprep.mubr.f32.mxu0 0.0
        %2765 = vmatmul.mubr.f32.gmra.mrb[0].mxu0 %v2520
        %v2766 = vpop.f32.mrb[0].mxu0
        %v2767 = vadd.f32 0.0, %v2766
        %v2768 = vpop.f32.mrb[0].mxu0
        %v2769 = vadd.f32 0.0, %v2768
        %2770 = vmatprep.mubr.f32.mxu0 0.0
        %2771 = vmatmul.mubr.f32.gmra.mrb[0].mxu0 %v2521
        %v2772 = vpop.f32.mrb[0].mxu0
        %v2773 = vadd.f32 0.0, %v2772
        %v2774 = vpop.f32.mrb[0].mxu0
        %v2775 = vadd.f32 0.0, %v2774
        %2776 = vmatprep.mubr.f32.mxu0 0.0
        %2777 = vmatmul.mubr.f32.gmra.mrb[0].mxu0 %v2522
        %v2778 = vpop.f32.mrb[0].mxu0
        %v2779 = vadd.f32 0.0, %v2778
        %v2780 = vpop.f32.mrb[0].mxu0
        %v2781 = vadd.f32 0.0, %v2780
        %2782 = vmatprep.mubr.f32.mxu0 0.0
        %2783 = vmatmul.mubr.f32.gmra.mrb[0].mxu0 %v2523
        %v2784 = vpop.f32.mrb[0].mxu0
        %v2785 = vadd.f32 0.0, %v2784
        %v2786 = vpop.f32.mrb[0].mxu0
        %v2787 = vadd.f32 0.0, %v2786
        %2788 = vmatprep.mubr.f32.mxu0 0.0
        %2789 = vmatmul.mubr.f32.gmra.mrb[0].mxu0 %v2524
        %v2790 = vpop.f32.mrb[0].mxu0
        %v2791 = vadd.f32 0.0, %v2790
        %v2792 = vpop.f32.mrb[0].mxu0
        %v2793 = vadd.f32 0.0, %v2792
        %2794 = vmatprep.mubr.f32.mxu0 0.0
        %2795 = vmatmul.mubr.f32.gmra.mrb[0].mxu0 %v2525
        %v2796 = vpop.f32.mrb[0].mxu0
        %v2797 = vadd.f32 0.0, %v2796
        %v2798 = vpop.f32.mrb[0].mxu0
        %v2799 = vadd.f32 0.0, %v2798
        %2800 = vmatprep.mubr.f32.mxu0 0.0
        %2801 = vmatmul.mubr.f32.gmra.mrb[0].mxu0 %v2526
        %v2802 = vpop.f32.mrb[0].mxu0
        %v2803 = vadd.f32 0.0, %v2802
        %v2804 = vpop.f32.mrb[0].mxu0
        %v2805 = vadd.f32 0.0, %v2804
        %2806 = vmatprep.mubr.f32.mxu0 0.0
        %2807 = vmatmul.mubr.f32.gmra.mrb[0].mxu0 %v2527
        %v2808 = vpop.f32.mrb[0].mxu0
        %v2809 = vadd.f32 0.0, %v2808
        %v2810 = vpop.f32.mrb[0].mxu0
        %v2811 = vadd.f32 0.0, %v2810
        %2812 = vmatprep.mubr.f32.mxu0 0.0
        %2813 = vmatmul.mubr.f32.gmra.mrb[0].mxu0 %v2528
        %v2814 = vpop.f32.mrb[0].mxu0
        %v2815 = vadd.f32 0.0, %v2814
        %v2816 = vpop.f32.mrb[0].mxu0
        %v2817 = vadd.f32 0.0, %v2816
        %2818 = vmatprep.mubr.f32.mxu0 0.0
        %2819 = vmatmul.mubr.f32.gmra.mrb[0].mxu0 %v2529
        %v2820 = vpop.f32.mrb[0].mxu0
        %v2821 = vadd.f32 0.0, %v2820
        %v2822 = vpop.f32.mrb[0].mxu0
        %v2823 = vadd.f32 0.0, %v2822
        %2824 = vmatprep.mubr.f32.mxu0 0.0
        %2825 = vmatmul.mubr.f32.gmra.mrb[0].mxu0 %v2530
        %v2826 = vpop.f32.mrb[0].mxu0
        %v2827 = vadd.f32 0.0, %v2826
        %v2828 = vpop.f32.mrb[0].mxu0
        %v2829 = vadd.f32 0.0, %v2828
        %2830 = vmatprep.mubr.f32.mxu0 0.0
        %2831 = vmatmul.mubr.f32.gmra.mrb[0].mxu0 %v2531
        %v2832 = vpop.f32.mrb[0].mxu0
        %v2833 = vadd.f32 0.0, %v2832
        %v2834 = vpop.f32.mrb[0].mxu0
        %v2835 = vadd.f32 0.0, %v2834
        %2836 = vdwg.mxu0
        %2837 = vmatprep.subr.mxu0 0.0
        %2838 = vmatpush1.msra.mxu0 %v2534
        %2839 = vmatprep.subr.mxu0 0.0
        %2840 = vmatpush1.msra.mxu0 %v2537
        %2841 = vmatprep.subr.mxu0 0.0
        %2842 = vmatpush1.msra.mxu0 %v2540
        %2843 = vmatprep.subr.mxu0 0.0
        %2844 = vmatpush1.msra.mxu0 %v2543
        %2845 = vmatprep.subr.mxu0 0.0
        %2846 = vmatpush1.msra.mxu0 %v2546
        %2847 = vmatprep.subr.mxu0 0.0
        %2848 = vmatpush1.msra.mxu0 %v2549
        %2849 = vmatprep.subr.mxu0 0.0
        %2850 = vmatpush1.msra.mxu0 %v2552
        %2851 = vmatprep.subr.mxu0 0.0
        %2852 = vmatpush1.msra.mxu0 %v2555
        %2853 = vmatprep.subr.mxu0 0.0
        %2854 = vmatpush1.msra.mxu0 %v2558
        %2855 = vmatprep.subr.mxu0 0.0
        %2856 = vmatpush1.msra.mxu0 %v2561
        %2857 = vmatprep.subr.mxu0 0.0
        %2858 = vmatpush1.msra.mxu0 %v2564
        %2859 = vmatprep.subr.mxu0 0.0
        %2860 = vmatpush1.msra.mxu0 %v2567
        %2861 = vmatprep.subr.mxu0 0.0
        %2862 = vmatpush1.msra.mxu0 %v2570
        %2863 = vmatprep.subr.mxu0 0.0
        %2864 = vmatpush1.msra.mxu0 %v2573
        %2865 = vmatprep.subr.mxu0 0.0
        %2866 = vmatpush1.msra.mxu0 %v2576
        %2867 = vmatprep.subr.mxu0 0.0
        %2868 = vmatpush1.msra.mxu0 %v2579
        %2869 = vmatprep.subr.mxu0 0.0
        %2870 = vmatpush1.msra.mxu0 0.0
        %2871 = vmatprep.subr.mxu0 0.0
        %2872 = vmatpush1.msra.mxu0 0.0
        %2873 = vmatprep.subr.mxu0 0.0
        %2874 = vmatpush1.msra.mxu0 0.0
        %2875 = vmatprep.subr.mxu0 0.0
        %2876 = vmatpush1.msra.mxu0 0.0
        %2877 = vmatprep.subr.mxu0 0.0
        %2878 = vmatpush1.msra.mxu0 0.0
        %2879 = vmatprep.subr.mxu0 0.0
        %2880 = vmatpush1.msra.mxu0 0.0
        %2881 = vmatprep.subr.mxu0 0.0
        %2882 = vmatpush1.msra.mxu0 0.0
        %2883 = vmatprep.subr.mxu0 0.0
        %2884 = vmatpush1.msra.mxu0 0.0
        %2885 = vmatprep.subr.mxu0 0.0
        %2886 = vmatpush1.msra.mxu0 0.0
        %2887 = vmatprep.subr.mxu0 0.0
        %2888 = vmatpush1.msra.mxu0 0.0
        %2889 = vmatprep.subr.mxu0 0.0
        %2890 = vmatpush1.msra.mxu0 0.0
        %2891 = vmatprep.subr.mxu0 0.0
        %2892 = vmatpush1.msra.mxu0 0.0
        %2893 = vmatprep.subr.mxu0 0.0
        %2894 = vmatpush1.msra.mxu0 0.0
        %2895 = vmatprep.subr.mxu0 0.0
        %2896 = vmatpush1.msra.mxu0 0.0
        %2897 = vmatprep.subr.mxu0 0.0
        %2898 = vmatpush1.msra.mxu0 0.0
        %2899 = vmatprep.subr.mxu0 0.0
        %2900 = vmatpush1.msra.mxu0 0.0
        %2901 = vmatprep.mubr.f32.mxu0 0.0
        %2902 = vmatmul.mubr.f32.gmra.mrb[0].mxu0 %v2500
        %v2903 = vpop.f32.mrb[0].mxu0
        %v2904 = vadd.f32 0.0, %v2903
        %v2905 = vpop.f32.mrb[0].mxu0
        %2906 = vmatprep.mubr.f32.mxu0 0.0
        %2907 = vmatmul.mubr.f32.gmra.mrb[0].mxu0 %v2501
        %v2908 = vpop.f32.mrb[0].mxu0
        %v2909 = vadd.f32 0.0, %v2908
        %v2910 = vpop.f32.mrb[0].mxu0
        %2911 = vmatprep.mubr.f32.mxu0 0.0
        %2912 = vmatmul.mubr.f32.gmra.mrb[0].mxu0 %v2502
        %v2913 = vpop.f32.mrb[0].mxu0
        %v2914 = vadd.f32 0.0, %v2913
        %v2915 = vpop.f32.mrb[0].mxu0
        %2916 = vmatprep.mubr.f32.mxu0 0.0
        %2917 = vmatmul.mubr.f32.gmra.mrb[0].mxu0 %v2503
        %v2918 = vpop.f32.mrb[0].mxu0
        %v2919 = vadd.f32 0.0, %v2918
        %v2920 = vpop.f32.mrb[0].mxu0
        %2921 = vmatprep.mubr.f32.mxu0 0.0
        %2922 = vmatmul.mubr.f32.gmra.mrb[0].mxu0 %v2504
        %v2923 = vpop.f32.mrb[0].mxu0
        %v2924 = vadd.f32 0.0, %v2923
        %v2925 = vpop.f32.mrb[0].mxu0
        %2926 = vmatprep.mubr.f32.mxu0 0.0
        %2927 = vmatmul.mubr.f32.gmra.mrb[0].mxu0 %v2505
        %v2928 = vpop.f32.mrb[0].mxu0
        %v2929 = vadd.f32 0.0, %v2928
        %v2930 = vpop.f32.mrb[0].mxu0
        %2931 = vmatprep.mubr.f32.mxu0 0.0
        %2932 = vmatmul.mubr.f32.gmra.mrb[0].mxu0 %v2506
        %v2933 = vpop.f32.mrb[0].mxu0
        %v2934 = vadd.f32 0.0, %v2933
        %v2935 = vpop.f32.mrb[0].mxu0
        %2936 = vmatprep.mubr.f32.mxu0 0.0
        %2937 = vmatmul.mubr.f32.gmra.mrb[0].mxu0 %v2507
        %v2938 = vpop.f32.mrb[0].mxu0
        %v2939 = vadd.f32 0.0, %v2938
        %v2940 = vpop.f32.mrb[0].mxu0
        %2941 = vmatprep.mubr.f32.mxu0 0.0
        %2942 = vmatmul.mubr.f32.gmra.mrb[0].mxu0 %v2508
        %v2943 = vpop.f32.mrb[0].mxu0
        %v2944 = vadd.f32 0.0, %v2943
        %v2945 = vpop.f32.mrb[0].mxu0
        %2946 = vmatprep.mubr.f32.mxu0 0.0
        %2947 = vmatmul.mubr.f32.gmra.mrb[0].mxu0 %v2509
        %v2948 = vpop.f32.mrb[0].mxu0
        %v2949 = vadd.f32 0.0, %v2948
        %v2950 = vpop.f32.mrb[0].mxu0
        %2951 = vmatprep.mubr.f32.mxu0 0.0
        %2952 = vmatmul.mubr.f32.gmra.mrb[0].mxu0 %v2510
        %v2953 = vpop.f32.mrb[0].mxu0
        %v2954 = vadd.f32 0.0, %v2953
        %v2955 = vpop.f32.mrb[0].mxu0
        %2956 = vmatprep.mubr.f32.mxu0 0.0
        %2957 = vmatmul.mubr.f32.gmra.mrb[0].mxu0 %v2511
        %v2958 = vpop.f32.mrb[0].mxu0
        %v2959 = vadd.f32 0.0, %v2958
        %v2960 = vpop.f32.mrb[0].mxu0
        %2961 = vmatprep.mubr.f32.mxu0 0.0
        %2962 = vmatmul.mubr.f32.gmra.mrb[0].mxu0 %v2512
        %v2963 = vpop.f32.mrb[0].mxu0
        %v2964 = vadd.f32 0.0, %v2963
        %v2965 = vpop.f32.mrb[0].mxu0
        %2966 = vmatprep.mubr.f32.mxu0 0.0
        %2967 = vmatmul.mubr.f32.gmra.mrb[0].mxu0 %v2513
        %v2968 = vpop.f32.mrb[0].mxu0
        %v2969 = vadd.f32 0.0, %v2968
        %v2970 = vpop.f32.mrb[0].mxu0
        %2971 = vmatprep.mubr.f32.mxu0 0.0
        %2972 = vmatmul.mubr.f32.gmra.mrb[0].mxu0 %v2514
        %v2973 = vpop.f32.mrb[0].mxu0
        %v2974 = vadd.f32 0.0, %v2973
        %v2975 = vpop.f32.mrb[0].mxu0
        %2976 = vmatprep.mubr.f32.mxu0 0.0
        %2977 = vmatmul.mubr.f32.gmra.mrb[0].mxu0 %v2515
        %v2978 = vpop.f32.mrb[0].mxu0
        %v2979 = vadd.f32 0.0, %v2978
        %v2980 = vpop.f32.mrb[0].mxu0
        %2981 = vmatprep.mubr.f32.mxu0 0.0
        %2982 = vmatmul.mubr.f32.gmra.mrb[0].mxu0 %v2516
        %v2983 = vpop.f32.mrb[0].mxu0
        %v2984 = vadd.f32 0.0, %v2983
        %v2985 = vpop.f32.mrb[0].mxu0
        %2986 = vmatprep.mubr.f32.mxu0 0.0
        %2987 = vmatmul.mubr.f32.gmra.mrb[0].mxu0 %v2517
        %v2988 = vpop.f32.mrb[0].mxu0
        %v2989 = vadd.f32 0.0, %v2988
        %v2990 = vpop.f32.mrb[0].mxu0
        %2991 = vmatprep.mubr.f32.mxu0 0.0
        %2992 = vmatmul.mubr.f32.gmra.mrb[0].mxu0 %v2518
        %v2993 = vpop.f32.mrb[0].mxu0
        %v2994 = vadd.f32 0.0, %v2993
        %v2995 = vpop.f32.mrb[0].mxu0
        %2996 = vmatprep.mubr.f32.mxu0 0.0
        %2997 = vmatmul.mubr.f32.gmra.mrb[0].mxu0 %v2519
        %v2998 = vpop.f32.mrb[0].mxu0
        %v2999 = vadd.f32 0.0, %v2998
        %v3000 = vpop.f32.mrb[0].mxu0
        %3001 = vmatprep.mubr.f32.mxu0 0.0
        %3002 = vmatmul.mubr.f32.gmra.mrb[0].mxu0 %v2520
        %v3003 = vpop.f32.mrb[0].mxu0
        %v3004 = vadd.f32 0.0, %v3003
        %v3005 = vpop.f32.mrb[0].mxu0
        %3006 = vmatprep.mubr.f32.mxu0 0.0
        %3007 = vmatmul.mubr.f32.gmra.mrb[0].mxu0 %v2521
        %v3008 = vpop.f32.mrb[0].mxu0
        %v3009 = vadd.f32 0.0, %v3008
        %v3010 = vpop.f32.mrb[0].mxu0
        %3011 = vmatprep.mubr.f32.mxu0 0.0
        %3012 = vmatmul.mubr.f32.gmra.mrb[0].mxu0 %v2522
        %v3013 = vpop.f32.mrb[0].mxu0
        %v3014 = vadd.f32 0.0, %v3013
        %v3015 = vpop.f32.mrb[0].mxu0
        %3016 = vmatprep.mubr.f32.mxu0 0.0
        %3017 = vmatmul.mubr.f32.gmra.mrb[0].mxu0 %v2523
        %v3018 = vpop.f32.mrb[0].mxu0
        %v3019 = vadd.f32 0.0, %v3018
        %v3020 = vpop.f32.mrb[0].mxu0
        %3021 = vmatprep.mubr.f32.mxu0 0.0
        %3022 = vmatmul.mubr.f32.gmra.mrb[0].mxu0 %v2524
        %v3023 = vpop.f32.mrb[0].mxu0
        %v3024 = vadd.f32 0.0, %v3023
        %v3025 = vpop.f32.mrb[0].mxu0
        %3026 = vmatprep.mubr.f32.mxu0 0.0
        %3027 = vmatmul.mubr.f32.gmra.mrb[0].mxu0 %v2525
        %v3028 = vpop.f32.mrb[0].mxu0
        %v3029 = vadd.f32 0.0, %v3028
        %v3030 = vpop.f32.mrb[0].mxu0
        %3031 = vmatprep.mubr.f32.mxu0 0.0
        %3032 = vmatmul.mubr.f32.gmra.mrb[0].mxu0 %v2526
        %v3033 = vpop.f32.mrb[0].mxu0
        %v3034 = vadd.f32 0.0, %v3033
        %v3035 = vpop.f32.mrb[0].mxu0
        %3036 = vmatprep.mubr.f32.mxu0 0.0
        %3037 = vmatmul.mubr.f32.gmra.mrb[0].mxu0 %v2527
        %v3038 = vpop.f32.mrb[0].mxu0
        %v3039 = vadd.f32 0.0, %v3038
        %v3040 = vpop.f32.mrb[0].mxu0
        %3041 = vmatprep.mubr.f32.mxu0 0.0
        %3042 = vmatmul.mubr.f32.gmra.mrb[0].mxu0 %v2528
        %v3043 = vpop.f32.mrb[0].mxu0
        %v3044 = vadd.f32 0.0, %v3043
        %v3045 = vpop.f32.mrb[0].mxu0
        %3046 = vmatprep.mubr.f32.mxu0 0.0
        %3047 = vmatmul.mubr.f32.gmra.mrb[0].mxu0 %v2529
        %v3048 = vpop.f32.mrb[0].mxu0
        %v3049 = vadd.f32 0.0, %v3048
        %v3050 = vpop.f32.mrb[0].mxu0
        %3051 = vmatprep.mubr.f32.mxu0 0.0
        %3052 = vmatmul.mubr.f32.gmra.mrb[0].mxu0 %v2530
        %v3053 = vpop.f32.mrb[0].mxu0
        %v3054 = vadd.f32 0.0, %v3053
        %v3055 = vpop.f32.mrb[0].mxu0
        %3056 = vmatprep.mubr.f32.mxu0 0.0
        %3057 = vmatmul.mubr.f32.gmra.mrb[0].mxu0 %v2531
        %v3058 = vpop.f32.mrb[0].mxu0
        %v3059 = vadd.f32 0.0, %v3058
        %v3060 = vpop.f32.mrb[0].mxu0
        %3061 = vdwg.mxu0
        %v3062 = vrot.slane %v2647, 7
        %v3063 = vrot.slane %v2653, 7
        %v3064 = vrot.slane %v2659, 7
        %v3065 = vrot.slane %v2665, 7
        %v3066 = vrot.slane %v2671, 7
        %v3067 = vrot.slane %v2677, 7
        %v3068 = vrot.slane %v2683, 7
        %v3069 = vrot.slane %v2689, 7
        %v3070 = vrot.slane %v2695, 7
        %v3071 = vrot.slane %v2701, 7
        %v3072 = vrot.slane %v2707, 7
        %v3073 = vrot.slane %v2713, 7
        %v3074 = vrot.slane %v2719, 7
        %v3075 = vrot.slane %v2725, 7
        %v3076 = vrot.slane %v2731, 7
        %v3077 = vrot.slane %v2737, 7
        %v3078 = vrot.slane %v2743, 7
        %v3079 = vrot.slane %v2749, 7
        %v3080 = vrot.slane %v2755, 7
        %v3081 = vrot.slane %v2761, 7
        %v3082 = vrot.slane %v2767, 7
        %v3083 = vrot.slane %v2773, 7
        %v3084 = vrot.slane %v2779, 7
        %v3085 = vrot.slane %v2785, 7
        %v3086 = vrot.slane %v2791, 7
        %v3087 = vrot.slane %v2797, 7
        %v3088 = vrot.slane %v2803, 7
        %v3089 = vrot.slane %v2809, 7
        %v3090 = vrot.slane %v2815, 7
        %v3091 = vrot.slane %v2821, 7
        %v3092 = vrot.slane %v2827, 7
        %v3093 = vrot.slane %v2833, 7
        %v3094 = vsel %vm1326, %v3092, %v3093
        %v3095 = vsel %vm1326, %v3091, %v3092
        %v3096 = vsel %vm1326, %v3090, %v3091
        %v3097 = vsel %vm1326, %v3089, %v3090
        %v3098 = vsel %vm1326, %v3088, %v3089
        %v3099 = vsel %vm1326, %v3087, %v3088
        %v3100 = vsel %vm1326, %v3086, %v3087
        %v3101 = vsel %vm1326, %v3085, %v3086
        %v3102 = vsel %vm1326, %v3084, %v3085
        %v3103 = vsel %vm1326, %v3083, %v3084
        %v3104 = vsel %vm1326, %v3082, %v3083
        %v3105 = vsel %vm1326, %v3081, %v3082
        %v3106 = vsel %vm1326, %v3080, %v3081
        %v3107 = vsel %vm1326, %v3079, %v3080
        %v3108 = vsel %vm1326, %v3078, %v3079
        %v3109 = vsel %vm1326, %v3077, %v3078
        %v3110 = vsel %vm1326, %v3076, %v3077
        %v3111 = vsel %vm1326, %v3075, %v3076
        %v3112 = vsel %vm1326, %v3074, %v3075
        %v3113 = vsel %vm1326, %v3073, %v3074
        %v3114 = vsel %vm1326, %v3072, %v3073
        %v3115 = vsel %vm1326, %v3071, %v3072
        %v3116 = vsel %vm1326, %v3070, %v3071
        %v3117 = vsel %vm1326, %v3069, %v3070
        %v3118 = vsel %vm1326, %v3068, %v3069
        %v3119 = vsel %vm1326, %v3067, %v3068
        %v3120 = vsel %vm1326, %v3066, %v3067
        %v3121 = vsel %vm1326, %v3065, %v3066
        %v3122 = vsel %vm1326, %v3064, %v3065
        %v3123 = vsel %vm1326, %v3063, %v3064
        %v3124 = vsel %vm1326, %v3062, %v3063
        %v3125 = vsel %vm1326, %v3093, %v3062
        %v3126 = vsel %vm1391, %v3125, 0.0
        %v3127 = vsel %vm1392, %v3124, 0.0
        %v3128 = vsel %vm1393, %v3123, 0.0
        %v3129 = vsel %vm1394, %v3122, 0.0
        %v3130 = vsel %vm1395, %v3121, 0.0
        %v3131 = vsel %vm1396, %v3120, 0.0
        %v3132 = vsel %vm1397, %v3119, 0.0
        %v3133 = vsel %vm1398, %v3118, 0.0
        %v3134 = vsel %vm1399, %v3117, 0.0
        %v3135 = vsel %vm1400, %v3116, 0.0
        %v3136 = vsel %vm1401, %v3115, 0.0
        %v3137 = vsel %vm1402, %v3114, 0.0
        %v3138 = vsel %vm1403, %v3113, 0.0
        %v3139 = vsel %vm1404, %v3112, 0.0
        %v3140 = vsel %vm1405, %v3111, 0.0
        %v3141 = vsel %vm1406, %v3110, 0.0
        %v3142 = vsel %vm1407, %v3109, 0.0
        %v3143 = vsel %vm1408, %v3108, 0.0
        %v3144 = vsel %vm1409, %v3107, 0.0
        %v3145 = vsel %vm1410, %v3106, 0.0
        %v3146 = vsel %vm1411, %v3105, 0.0
        %v3147 = vsel %vm1412, %v3104, 0.0
        %v3148 = vsel %vm1413, %v3103, 0.0
        %v3149 = vsel %vm1414, %v3102, 0.0
        %v3150 = vsel %vm1415, %v3101, 0.0
        %v3151 = vsel %vm1416, %v3100, 0.0
        %v3152 = vsel %vm1417, %v3099, 0.0
        %v3153 = vsel %vm1418, %v3098, 0.0
        %v3154 = vsel %vm1419, %v3097, 0.0
        %v3155 = vsel %vm1420, %v3096, 0.0
        %v3156 = vsel %vm1421, %v3095, 0.0
        %v3157 = vsel %vm1422, %v3094, 0.0
        %v3158 = vrot.slane %v2904, 1
        %v3159 = vrot.slane %v2909, 1
        %v3160 = vrot.slane %v2914, 1
        %v3161 = vrot.slane %v2919, 1
        %v3162 = vrot.slane %v2924, 1
        %v3163 = vrot.slane %v2929, 1
        %v3164 = vrot.slane %v2934, 1
        %v3165 = vrot.slane %v2939, 1
        %v3166 = vrot.slane %v2944, 1
        %v3167 = vrot.slane %v2949, 1
        %v3168 = vrot.slane %v2954, 1
        %v3169 = vrot.slane %v2959, 1
        %v3170 = vrot.slane %v2964, 1
        %v3171 = vrot.slane %v2969, 1
        %v3172 = vrot.slane %v2974, 1
        %v3173 = vrot.slane %v2979, 1
        %v3174 = vrot.slane %v2984, 1
        %v3175 = vrot.slane %v2989, 1
        %v3176 = vrot.slane %v2994, 1
        %v3177 = vrot.slane %v2999, 1
        %v3178 = vrot.slane %v3004, 1
        %v3179 = vrot.slane %v3009, 1
        %v3180 = vrot.slane %v3014, 1
        %v3181 = vrot.slane %v3019, 1
        %v3182 = vrot.slane %v3024, 1
        %v3183 = vrot.slane %v3029, 1
        %v3184 = vrot.slane %v3034, 1
        %v3185 = vrot.slane %v3039, 1
        %v3186 = vrot.slane %v3044, 1
        %v3187 = vrot.slane %v3049, 1
        %v3188 = vrot.slane %v3054, 1
        %v3189 = vrot.slane %v3059, 1
        %v3190 = vsel %vm1487, %v3188, %v3189
        %v3191 = vsel %vm1487, %v3187, %v3188
        %v3192 = vsel %vm1487, %v3186, %v3187
        %v3193 = vsel %vm1487, %v3185, %v3186
        %v3194 = vsel %vm1487, %v3184, %v3185
        %v3195 = vsel %vm1487, %v3183, %v3184
        %v3196 = vsel %vm1487, %v3182, %v3183
        %v3197 = vsel %vm1487, %v3181, %v3182
        %v3198 = vsel %vm1487, %v3180, %v3181
        %v3199 = vsel %vm1487, %v3179, %v3180
        %v3200 = vsel %vm1487, %v3178, %v3179
        %v3201 = vsel %vm1487, %v3177, %v3178
        %v3202 = vsel %vm1487, %v3176, %v3177
        %v3203 = vsel %vm1487, %v3175, %v3176
        %v3204 = vsel %vm1487, %v3174, %v3175
        %v3205 = vsel %vm1487, %v3173, %v3174
        %v3206 = vsel %vm1487, %v3172, %v3173
        %v3207 = vsel %vm1487, %v3171, %v3172
        %v3208 = vsel %vm1487, %v3170, %v3171
        %v3209 = vsel %vm1487, %v3169, %v3170
        %v3210 = vsel %vm1487, %v3168, %v3169
        %v3211 = vsel %vm1487, %v3167, %v3168
        %v3212 = vsel %vm1487, %v3166, %v3167
        %v3213 = vsel %vm1487, %v3165, %v3166
        %v3214 = vsel %vm1487, %v3164, %v3165
        %v3215 = vsel %vm1487, %v3163, %v3164
        %v3216 = vsel %vm1487, %v3162, %v3163
        %v3217 = vsel %vm1487, %v3161, %v3162
        %v3218 = vsel %vm1487, %v3160, %v3161
        %v3219 = vsel %vm1487, %v3159, %v3160
        %v3220 = vsel %vm1487, %v3158, %v3159
        %v3221 = vsel %vm1487, %v3189, %v3158
        %v3222 = vsel %vm1552, %v3220, 0.0
        %v3223 = vsel %vm1553, %v3219, 0.0
        %v3224 = vsel %vm1554, %v3218, 0.0
        %v3225 = vsel %vm1555, %v3217, 0.0
        %v3226 = vsel %vm1556, %v3216, 0.0
        %v3227 = vsel %vm1557, %v3215, 0.0
        %v3228 = vsel %vm1558, %v3214, 0.0
        %v3229 = vsel %vm1559, %v3213, 0.0
        %v3230 = vsel %vm1560, %v3212, 0.0
        %v3231 = vsel %vm1561, %v3211, 0.0
        %v3232 = vsel %vm1562, %v3210, 0.0
        %v3233 = vsel %vm1563, %v3209, 0.0
        %v3234 = vsel %vm1564, %v3208, 0.0
        %v3235 = vsel %vm1565, %v3207, 0.0
        %v3236 = vsel %vm1566, %v3206, 0.0
        %v3237 = vsel %vm1567, %v3205, 0.0
        %v3238 = vsel %vm1568, %v3204, 0.0
        %v3239 = vsel %vm1569, %v3203, 0.0
        %v3240 = vsel %vm1570, %v3202, 0.0
        %v3241 = vsel %vm1571, %v3201, 0.0
        %v3242 = vsel %vm1572, %v3200, 0.0
        %v3243 = vsel %vm1573, %v3199, 0.0
        %v3244 = vsel %vm1574, %v3198, 0.0
        %v3245 = vsel %vm1575, %v3197, 0.0
        %v3246 = vsel %vm1576, %v3196, 0.0
        %v3247 = vsel %vm1577, %v3195, 0.0
        %v3248 = vsel %vm1578, %v3194, 0.0
        %v3249 = vsel %vm1579, %v3193, 0.0
        %v3250 = vsel %vm1580, %v3192, 0.0
        %v3251 = vsel %vm1581, %v3191, 0.0
        %v3252 = vsel %vm1582, %v3190, 0.0
        %v3253 = vsel %vm1583, %v3221, 0.0
        %v3254 = vadd.f32 %v3126, %v2649
        %v3255 = vadd.f32 %v3127, %v2655
        %v3256 = vadd.f32 %v3128, %v2661
        %v3257 = vadd.f32 %v3129, %v2667
        %v3258 = vadd.f32 %v3130, %v2673
        %v3259 = vadd.f32 %v3131, %v2679
        %v3260 = vadd.f32 %v3132, %v2685
        %v3261 = vadd.f32 %v3133, %v2691
        %v3262 = vadd.f32 %v3134, %v2697
        %v3263 = vadd.f32 %v3135, %v2703
        %v3264 = vadd.f32 %v3136, %v2709
        %v3265 = vadd.f32 %v3137, %v2715
        %v3266 = vadd.f32 %v3138, %v2721
        %v3267 = vadd.f32 %v3139, %v2727
        %v3268 = vadd.f32 %v3140, %v2733
        %v3269 = vadd.f32 %v3141, %v2739
        %v3270 = vadd.f32 %v3142, %v2745
        %v3271 = vadd.f32 %v3143, %v2751
        %v3272 = vadd.f32 %v3144, %v2757
        %v3273 = vadd.f32 %v3145, %v2763
        %v3274 = vadd.f32 %v3146, %v2769
        %v3275 = vadd.f32 %v3147, %v2775
        %v3276 = vadd.f32 %v3148, %v2781
        %v3277 = vadd.f32 %v3149, %v2787
        %v3278 = vadd.f32 %v3150, %v2793
        %v3279 = vadd.f32 %v3151, %v2799
        %v3280 = vadd.f32 %v3152, %v2805
        %v3281 = vadd.f32 %v3153, %v2811
        %v3282 = vadd.f32 %v3154, %v2817
        %v3283 = vadd.f32 %v3155, %v2823
        %v3284 = vadd.f32 %v3156, %v2829
        %v3285 = vadd.f32 %v3157, %v2835
        %v3286 = vadd.f32 %v3254, %v3222
        %v3287 = vadd.f32 %v3255, %v3223
        %v3288 = vadd.f32 %v3256, %v3224
        %v3289 = vadd.f32 %v3257, %v3225
        %v3290 = vadd.f32 %v3258, %v3226
        %v3291 = vadd.f32 %v3259, %v3227
        %v3292 = vadd.f32 %v3260, %v3228
        %v3293 = vadd.f32 %v3261, %v3229
        %v3294 = vadd.f32 %v3262, %v3230
        %v3295 = vadd.f32 %v3263, %v3231
        %v3296 = vadd.f32 %v3264, %v3232
        %v3297 = vadd.f32 %v3265, %v3233
        %v3298 = vadd.f32 %v3266, %v3234
        %v3299 = vadd.f32 %v3267, %v3235
        %v3300 = vadd.f32 %v3268, %v3236
        %v3301 = vadd.f32 %v3269, %v3237
        %v3302 = vadd.f32 %v3270, %v3238
        %v3303 = vadd.f32 %v3271, %v3239
        %v3304 = vadd.f32 %v3272, %v3240
        %v3305 = vadd.f32 %v3273, %v3241
        %v3306 = vadd.f32 %v3274, %v3242
        %v3307 = vadd.f32 %v3275, %v3243
        %v3308 = vadd.f32 %v3276, %v3244
        %v3309 = vadd.f32 %v3277, %v3245
        %v3310 = vadd.f32 %v3278, %v3246
        %v3311 = vadd.f32 %v3279, %v3247
        %v3312 = vadd.f32 %v3280, %v3248
        %v3313 = vadd.f32 %v3281, %v3249
        %v3314 = vadd.f32 %v3282, %v3250
        %v3315 = vadd.f32 %v3283, %v3251
        %v3316 = vadd.f32 %v3284, %v3252
        %v3317 = vadd.f32 %v3285, %v3253
        %v3318 = vld [vmem:[#allocation7 + $0x2] ss:$0 sm:$0xff]
        %v3319 = vadd.f32 %v3286, %v3318
        %v3320 = vadd.f32 %v3287, %v3318
        %v3321 = vadd.f32 %v3288, %v3318
        %v3322 = vadd.f32 %v3289, %v3318
        %v3323 = vadd.f32 %v3290, %v3318
        %v3324 = vadd.f32 %v3291, %v3318
        %v3325 = vadd.f32 %v3292, %v3318
        %v3326 = vadd.f32 %v3293, %v3318
        %v3327 = vadd.f32 %v3294, %v3318
        %v3328 = vadd.f32 %v3295, %v3318
        %v3329 = vadd.f32 %v3296, %v3318
        %v3330 = vadd.f32 %v3297, %v3318
        %v3331 = vadd.f32 %v3298, %v3318
        %v3332 = vadd.f32 %v3299, %v3318
        %v3333 = vadd.f32 %v3300, %v3318
        %v3334 = vadd.f32 %v3301, %v3318
        %v3335 = vadd.f32 %v3302, %v3318
        %v3336 = vadd.f32 %v3303, %v3318
        %v3337 = vadd.f32 %v3304, %v3318
        %v3338 = vadd.f32 %v3305, %v3318
        %v3339 = vadd.f32 %v3306, %v3318
        %v3340 = vadd.f32 %v3307, %v3318
        %v3341 = vadd.f32 %v3308, %v3318
        %v3342 = vadd.f32 %v3309, %v3318
        %v3343 = vadd.f32 %v3310, %v3318
        %v3344 = vadd.f32 %v3311, %v3318
        %v3345 = vadd.f32 %v3312, %v3318
        %v3346 = vadd.f32 %v3313, %v3318
        %v3347 = vadd.f32 %v3314, %v3318
        %v3348 = vadd.f32 %v3315, %v3318
        %v3349 = vadd.f32 %v3316, %v3318
        %v3350 = vadd.f32 %v3317, %v3318
        %v3351 = vld [vmem:[#allocation5 + $0x480] sm:$0xff]
        %v3352 = vld [vmem:[#allocation5 + $0x488] sm:$0xff]
        %v3353 = vld [vmem:[#allocation5 + $0x498] sm:$0xff]
        %v3354 = vld [vmem:[#allocation5 + $0x4a0] sm:$0xff]
        %v3355 = vld [vmem:[#allocation5 + $0x4b0] sm:$0xff]
        %v3356 = vld [vmem:[#allocation5 + $0x4b8] sm:$0xff]
        %v3357 = vld [vmem:[#allocation5 + $0x4c8] sm:$0xff]
        %v3358 = vld [vmem:[#allocation5 + $0x4d0] sm:$0xff]
        %v3359 = vld [vmem:[#allocation5 + $0x4e0] sm:$0xff]
        %v3360 = vld [vmem:[#allocation5 + $0x4e8] sm:$0xff]
        %v3361 = vld [vmem:[#allocation5 + $0x4f8] sm:$0xff]
        %v3362 = vld [vmem:[#allocation5 + $0x500] sm:$0xff]
        %v3363 = vld [vmem:[#allocation5 + $0x510] sm:$0xff]
        %v3364 = vld [vmem:[#allocation5 + $0x518] sm:$0xff]
        %v3365 = vld [vmem:[#allocation5 + $0x528] sm:$0xff]
        %v3366 = vld [vmem:[#allocation5 + $0x530] sm:$0xff]
        %v3367 = vld [vmem:[#allocation5 + $0x540] sm:$0xff]
        %v3368 = vld [vmem:[#allocation5 + $0x548] sm:$0xff]
        %v3369 = vld [vmem:[#allocation5 + $0x558] sm:$0xff]
        %v3370 = vld [vmem:[#allocation5 + $0x560] sm:$0xff]
        %v3371 = vld [vmem:[#allocation5 + $0x570] sm:$0xff]
        %v3372 = vld [vmem:[#allocation5 + $0x578] sm:$0xff]
        %v3373 = vld [vmem:[#allocation5 + $0x588] sm:$0xff]
        %v3374 = vld [vmem:[#allocation5 + $0x590] sm:$0xff]
        %v3375 = vld [vmem:[#allocation5 + $0x5a0] sm:$0xff]
        %v3376 = vld [vmem:[#allocation5 + $0x5a8] sm:$0xff]
        %v3377 = vld [vmem:[#allocation5 + $0x5b8] sm:$0xff]
        %v3378 = vld [vmem:[#allocation5 + $0x5c0] sm:$0xff]
        %v3379 = vld [vmem:[#allocation5 + $0x5d0] sm:$0xff]
        %v3380 = vld [vmem:[#allocation5 + $0x5d8] sm:$0xff]
        %v3381 = vld [vmem:[#allocation5 + $0x5e8] sm:$0xff]
        %v3382 = vld [vmem:[#allocation5 + $0x5f0] sm:$0xff]
        %s3383 = scalar_lea.vmem [#allocation7], 3
        %v3384 = vld [vmem:[%s3383] ss:$8 sm:$0x3]
        %v3386 = vlaneseq
        %v3387 = vshrl.u32 %v3386, 7
        %v3388 = vsub.s32 0, %v3387
        %v3389 = vrot.slane %v3384, %v3388
        %v3390 = vlaneseq
        %v3391 = vshrl.u32 %v3390, 7
        %v3392 = vsub.s32 1, %v3391
        %v3393 = vrot.slane %v3384, %v3392
        %3396 = vmatprep.subr.mxu0 %v3352
        %3397 = vmatpush1.msra.mxu0 %v3351
        %3398 = vmatprep.subr.mxu0 %v3354
        %3399 = vmatpush1.msra.mxu0 %v3353
        %3400 = vmatprep.subr.mxu0 %v3356
        %3401 = vmatpush1.msra.mxu0 %v3355
        %3402 = vmatprep.subr.mxu0 %v3358
        %3403 = vmatpush1.msra.mxu0 %v3357
        %3404 = vmatprep.subr.mxu0 %v3360
        %3405 = vmatpush1.msra.mxu0 %v3359
        %3406 = vmatprep.subr.mxu0 %v3362
        %3407 = vmatpush1.msra.mxu0 %v3361
        %3408 = vmatprep.subr.mxu0 %v3364
        %3409 = vmatpush1.msra.mxu0 %v3363
        %3410 = vmatprep.subr.mxu0 %v3366
        %3411 = vmatpush1.msra.mxu0 %v3365
        %3412 = vmatprep.subr.mxu0 %v3368
        %3413 = vmatpush1.msra.mxu0 %v3367
        %3414 = vmatprep.subr.mxu0 %v3370
        %3415 = vmatpush1.msra.mxu0 %v3369
        %3416 = vmatprep.subr.mxu0 %v3372
        %3417 = vmatpush1.msra.mxu0 %v3371
        %3418 = vmatprep.subr.mxu0 %v3374
        %3419 = vmatpush1.msra.mxu0 %v3373
        %3420 = vmatprep.subr.mxu0 %v3376
        %3421 = vmatpush1.msra.mxu0 %v3375
        %3422 = vmatprep.subr.mxu0 %v3378
        %3423 = vmatpush1.msra.mxu0 %v3377
        %3424 = vmatprep.subr.mxu0 %v3380
        %3425 = vmatpush1.msra.mxu0 %v3379
        %3426 = vmatprep.subr.mxu0 %v3382
        %3427 = vmatpush1.msra.mxu0 %v3381
        %3428 = vmatprep.subr.mxu0 0.0
        %3429 = vmatpush1.msra.mxu0 0.0
        %3430 = vmatprep.subr.mxu0 0.0
        %3431 = vmatpush1.msra.mxu0 0.0
        %3432 = vmatprep.subr.mxu0 0.0
        %3433 = vmatpush1.msra.mxu0 0.0
        %3434 = vmatprep.subr.mxu0 0.0
        %3435 = vmatpush1.msra.mxu0 0.0
        %3436 = vmatprep.subr.mxu0 0.0
        %3437 = vmatpush1.msra.mxu0 0.0
        %3438 = vmatprep.subr.mxu0 0.0
        %3439 = vmatpush1.msra.mxu0 0.0
        %3440 = vmatprep.subr.mxu0 0.0
        %3441 = vmatpush1.msra.mxu0 0.0
        %3442 = vmatprep.subr.mxu0 0.0
        %3443 = vmatpush1.msra.mxu0 0.0
        %3444 = vmatprep.subr.mxu0 0.0
        %3445 = vmatpush1.msra.mxu0 0.0
        %3446 = vmatprep.subr.mxu0 0.0
        %3447 = vmatpush1.msra.mxu0 0.0
        %3448 = vmatprep.subr.mxu0 0.0
        %3449 = vmatpush1.msra.mxu0 0.0
        %3450 = vmatprep.subr.mxu0 0.0
        %3451 = vmatpush1.msra.mxu0 0.0
        %3452 = vmatprep.subr.mxu0 0.0
        %3453 = vmatpush1.msra.mxu0 0.0
        %3454 = vmatprep.subr.mxu0 0.0
        %3455 = vmatpush1.msra.mxu0 0.0
        %3456 = vmatprep.subr.mxu0 0.0
        %3457 = vmatpush1.msra.mxu0 0.0
        %3458 = vmatprep.subr.mxu0 0.0
        %3459 = vmatpush1.msra.mxu0 0.0
        %3460 = vmatprep.mubr.f32.mxu0 0.0
        %3461 = vmatmul.mubr.f32.gmra.mrb[0].mxu0 %v3319
        %v3462 = vpop.f32.mrb[0].mxu0
        %v3463 = vadd.f32 %v3389, %v3462
        %v3464 = vpop.f32.mrb[0].mxu0
        %v3465 = vadd.f32 %v3393, %v3464
        %3466 = vmatprep.mubr.f32.mxu0 0.0
        %3467 = vmatmul.mubr.f32.gmra.mrb[0].mxu0 %v3320
        %v3468 = vpop.f32.mrb[0].mxu0
        %v3469 = vadd.f32 %v3389, %v3468
        %v3470 = vpop.f32.mrb[0].mxu0
        %v3471 = vadd.f32 %v3393, %v3470
        %3472 = vmatprep.mubr.f32.mxu0 0.0
        %3473 = vmatmul.mubr.f32.gmra.mrb[0].mxu0 %v3321
        %v3474 = vpop.f32.mrb[0].mxu0
        %v3475 = vadd.f32 %v3389, %v3474
        %v3476 = vpop.f32.mrb[0].mxu0
        %v3477 = vadd.f32 %v3393, %v3476
        %3478 = vmatprep.mubr.f32.mxu0 0.0
        %3479 = vmatmul.mubr.f32.gmra.mrb[0].mxu0 %v3322
        %v3480 = vpop.f32.mrb[0].mxu0
        %v3481 = vadd.f32 %v3389, %v3480
        %v3482 = vpop.f32.mrb[0].mxu0
        %v3483 = vadd.f32 %v3393, %v3482
        %3484 = vmatprep.mubr.f32.mxu0 0.0
        %3485 = vmatmul.mubr.f32.gmra.mrb[0].mxu0 %v3323
        %v3486 = vpop.f32.mrb[0].mxu0
        %v3487 = vadd.f32 %v3389, %v3486
        %v3488 = vpop.f32.mrb[0].mxu0
        %v3489 = vadd.f32 %v3393, %v3488
        %3490 = vmatprep.mubr.f32.mxu0 0.0
        %3491 = vmatmul.mubr.f32.gmra.mrb[0].mxu0 %v3324
        %v3492 = vpop.f32.mrb[0].mxu0
        %v3493 = vadd.f32 %v3389, %v3492
        %v3494 = vpop.f32.mrb[0].mxu0
        %v3495 = vadd.f32 %v3393, %v3494
        %3496 = vmatprep.mubr.f32.mxu0 0.0
        %3497 = vmatmul.mubr.f32.gmra.mrb[0].mxu0 %v3325
        %v3498 = vpop.f32.mrb[0].mxu0
        %v3499 = vadd.f32 %v3389, %v3498
        %v3500 = vpop.f32.mrb[0].mxu0
        %v3501 = vadd.f32 %v3393, %v3500
        %3502 = vmatprep.mubr.f32.mxu0 0.0
        %3503 = vmatmul.mubr.f32.gmra.mrb[0].mxu0 %v3326
        %v3504 = vpop.f32.mrb[0].mxu0
        %v3505 = vadd.f32 %v3389, %v3504
        %v3506 = vpop.f32.mrb[0].mxu0
        %v3507 = vadd.f32 %v3393, %v3506
        %3508 = vmatprep.mubr.f32.mxu0 0.0
        %3509 = vmatmul.mubr.f32.gmra.mrb[0].mxu0 %v3327
        %v3510 = vpop.f32.mrb[0].mxu0
        %v3511 = vadd.f32 %v3389, %v3510
        %v3512 = vpop.f32.mrb[0].mxu0
        %v3513 = vadd.f32 %v3393, %v3512
        %3514 = vmatprep.mubr.f32.mxu0 0.0
        %3515 = vmatmul.mubr.f32.gmra.mrb[0].mxu0 %v3328
        %v3516 = vpop.f32.mrb[0].mxu0
        %v3517 = vadd.f32 %v3389, %v3516
        %v3518 = vpop.f32.mrb[0].mxu0
        %v3519 = vadd.f32 %v3393, %v3518
        %3520 = vmatprep.mubr.f32.mxu0 0.0
        %3521 = vmatmul.mubr.f32.gmra.mrb[0].mxu0 %v3329
        %v3522 = vpop.f32.mrb[0].mxu0
        %v3523 = vadd.f32 %v3389, %v3522
        %v3524 = vpop.f32.mrb[0].mxu0
        %v3525 = vadd.f32 %v3393, %v3524
        %3526 = vmatprep.mubr.f32.mxu0 0.0
        %3527 = vmatmul.mubr.f32.gmra.mrb[0].mxu0 %v3330
        %v3528 = vpop.f32.mrb[0].mxu0
        %v3529 = vadd.f32 %v3389, %v3528
        %v3530 = vpop.f32.mrb[0].mxu0
        %v3531 = vadd.f32 %v3393, %v3530
        %3532 = vmatprep.mubr.f32.mxu0 0.0
        %3533 = vmatmul.mubr.f32.gmra.mrb[0].mxu0 %v3331
        %v3534 = vpop.f32.mrb[0].mxu0
        %v3535 = vadd.f32 %v3389, %v3534
        %v3536 = vpop.f32.mrb[0].mxu0
        %v3537 = vadd.f32 %v3393, %v3536
        %3538 = vmatprep.mubr.f32.mxu0 0.0
        %3539 = vmatmul.mubr.f32.gmra.mrb[0].mxu0 %v3332
        %v3540 = vpop.f32.mrb[0].mxu0
        %v3541 = vadd.f32 %v3389, %v3540
        %v3542 = vpop.f32.mrb[0].mxu0
        %v3543 = vadd.f32 %v3393, %v3542
        %3544 = vmatprep.mubr.f32.mxu0 0.0
        %3545 = vmatmul.mubr.f32.gmra.mrb[0].mxu0 %v3333
        %v3546 = vpop.f32.mrb[0].mxu0
        %v3547 = vadd.f32 %v3389, %v3546
        %v3548 = vpop.f32.mrb[0].mxu0
        %v3549 = vadd.f32 %v3393, %v3548
        %3550 = vmatprep.mubr.f32.mxu0 0.0
        %3551 = vmatmul.mubr.f32.gmra.mrb[0].mxu0 %v3334
        %v3552 = vpop.f32.mrb[0].mxu0
        %v3553 = vadd.f32 %v3389, %v3552
        %v3554 = vpop.f32.mrb[0].mxu0
        %v3555 = vadd.f32 %v3393, %v3554
        %3556 = vmatprep.mubr.f32.mxu0 0.0
        %3557 = vmatmul.mubr.f32.gmra.mrb[0].mxu0 %v3335
        %v3558 = vpop.f32.mrb[0].mxu0
        %v3559 = vadd.f32 %v3389, %v3558
        %v3560 = vpop.f32.mrb[0].mxu0
        %v3561 = vadd.f32 %v3393, %v3560
        %3562 = vmatprep.mubr.f32.mxu0 0.0
        %3563 = vmatmul.mubr.f32.gmra.mrb[0].mxu0 %v3336
        %v3564 = vpop.f32.mrb[0].mxu0
        %v3565 = vadd.f32 %v3389, %v3564
        %v3566 = vpop.f32.mrb[0].mxu0
        %v3567 = vadd.f32 %v3393, %v3566
        %3568 = vmatprep.mubr.f32.mxu0 0.0
        %3569 = vmatmul.mubr.f32.gmra.mrb[0].mxu0 %v3337
        %v3570 = vpop.f32.mrb[0].mxu0
        %v3571 = vadd.f32 %v3389, %v3570
        %v3572 = vpop.f32.mrb[0].mxu0
        %v3573 = vadd.f32 %v3393, %v3572
        %3574 = vmatprep.mubr.f32.mxu0 0.0
        %3575 = vmatmul.mubr.f32.gmra.mrb[0].mxu0 %v3338
        %v3576 = vpop.f32.mrb[0].mxu0
        %v3577 = vadd.f32 %v3389, %v3576
        %v3578 = vpop.f32.mrb[0].mxu0
        %v3579 = vadd.f32 %v3393, %v3578
        %3580 = vmatprep.mubr.f32.mxu0 0.0
        %3581 = vmatmul.mubr.f32.gmra.mrb[0].mxu0 %v3339
        %v3582 = vpop.f32.mrb[0].mxu0
        %v3583 = vadd.f32 %v3389, %v3582
        %v3584 = vpop.f32.mrb[0].mxu0
        %v3585 = vadd.f32 %v3393, %v3584
        %3586 = vmatprep.mubr.f32.mxu0 0.0
        %3587 = vmatmul.mubr.f32.gmra.mrb[0].mxu0 %v3340
        %v3588 = vpop.f32.mrb[0].mxu0
        %v3589 = vadd.f32 %v3389, %v3588
        %v3590 = vpop.f32.mrb[0].mxu0
        %v3591 = vadd.f32 %v3393, %v3590
        %3592 = vmatprep.mubr.f32.mxu0 0.0
        %3593 = vmatmul.mubr.f32.gmra.mrb[0].mxu0 %v3341
        %v3594 = vpop.f32.mrb[0].mxu0
        %v3595 = vadd.f32 %v3389, %v3594
        %v3596 = vpop.f32.mrb[0].mxu0
        %v3597 = vadd.f32 %v3393, %v3596
        %3598 = vmatprep.mubr.f32.mxu0 0.0
        %3599 = vmatmul.mubr.f32.gmra.mrb[0].mxu0 %v3342
        %v3600 = vpop.f32.mrb[0].mxu0
        %v3601 = vadd.f32 %v3389, %v3600
        %v3602 = vpop.f32.mrb[0].mxu0
        %v3603 = vadd.f32 %v3393, %v3602
        %3604 = vmatprep.mubr.f32.mxu0 0.0
        %3605 = vmatmul.mubr.f32.gmra.mrb[0].mxu0 %v3343
        %v3606 = vpop.f32.mrb[0].mxu0
        %v3607 = vadd.f32 %v3389, %v3606
        %v3608 = vpop.f32.mrb[0].mxu0
        %v3609 = vadd.f32 %v3393, %v3608
        %3610 = vmatprep.mubr.f32.mxu0 0.0
        %3611 = vmatmul.mubr.f32.gmra.mrb[0].mxu0 %v3344
        %v3612 = vpop.f32.mrb[0].mxu0
        %v3613 = vadd.f32 %v3389, %v3612
        %v3614 = vpop.f32.mrb[0].mxu0
        %v3615 = vadd.f32 %v3393, %v3614
        %3616 = vmatprep.mubr.f32.mxu0 0.0
        %3617 = vmatmul.mubr.f32.gmra.mrb[0].mxu0 %v3345
        %v3618 = vpop.f32.mrb[0].mxu0
        %v3619 = vadd.f32 %v3389, %v3618
        %v3620 = vpop.f32.mrb[0].mxu0
        %v3621 = vadd.f32 %v3393, %v3620
        %3622 = vmatprep.mubr.f32.mxu0 0.0
        %3623 = vmatmul.mubr.f32.gmra.mrb[0].mxu0 %v3346
        %v3624 = vpop.f32.mrb[0].mxu0
        %v3625 = vadd.f32 %v3389, %v3624
        %v3626 = vpop.f32.mrb[0].mxu0
        %v3627 = vadd.f32 %v3393, %v3626
        %3628 = vmatprep.mubr.f32.mxu0 0.0
        %3629 = vmatmul.mubr.f32.gmra.mrb[0].mxu0 %v3347
        %v3630 = vpop.f32.mrb[0].mxu0
        %v3631 = vadd.f32 %v3389, %v3630
        %v3632 = vpop.f32.mrb[0].mxu0
        %v3633 = vadd.f32 %v3393, %v3632
        %3634 = vmatprep.mubr.f32.mxu0 0.0
        %3635 = vmatmul.mubr.f32.gmra.mrb[0].mxu0 %v3348
        %v3636 = vpop.f32.mrb[0].mxu0
        %v3637 = vadd.f32 %v3389, %v3636
        %v3638 = vpop.f32.mrb[0].mxu0
        %v3639 = vadd.f32 %v3393, %v3638
        %3640 = vmatprep.mubr.f32.mxu0 0.0
        %3641 = vmatmul.mubr.f32.gmra.mrb[0].mxu0 %v3349
        %v3642 = vpop.f32.mrb[0].mxu0
        %v3643 = vadd.f32 %v3389, %v3642
        %v3644 = vpop.f32.mrb[0].mxu0
        %v3645 = vadd.f32 %v3393, %v3644
        %3646 = vmatprep.mubr.f32.mxu0 0.0
        %3647 = vmatmul.mubr.f32.gmra.mrb[0].mxu0 %v3350
        %v3648 = vpop.f32.mrb[0].mxu0
        %v3649 = vadd.f32 %v3389, %v3648
        %v3650 = vpop.f32.mrb[0].mxu0
        %v3651 = vadd.f32 %v3393, %v3650
        %3652 = vdwg.mxu0
        %v3653 = vmul.f32 %v3465, 0.5
        %v3654 = vmul.f32 %v3471, 0.5
        %v3655 = vmul.f32 %v3477, 0.5
        %v3656 = vmul.f32 %v3483, 0.5
        %v3657 = vmul.f32 %v3489, 0.5
        %v3658 = vmul.f32 %v3495, 0.5
        %v3659 = vmul.f32 %v3501, 0.5
        %v3660 = vmul.f32 %v3507, 0.5
        %v3661 = vmul.f32 %v3513, 0.5
        %v3662 = vmul.f32 %v3519, 0.5
        %v3663 = vmul.f32 %v3525, 0.5
        %v3664 = vmul.f32 %v3531, 0.5
        %v3665 = vmul.f32 %v3537, 0.5
        %v3666 = vmul.f32 %v3543, 0.5
        %v3667 = vmul.f32 %v3549, 0.5
        %v3668 = vmul.f32 %v3555, 0.5
        %v3669 = vmul.f32 %v3561, 0.5
        %v3670 = vmul.f32 %v3567, 0.5
        %v3671 = vmul.f32 %v3573, 0.5
        %v3672 = vmul.f32 %v3579, 0.5
        %v3673 = vmul.f32 %v3585, 0.5
        %v3674 = vmul.f32 %v3591, 0.5
        %v3675 = vmul.f32 %v3597, 0.5
        %v3676 = vmul.f32 %v3603, 0.5
        %v3677 = vmul.f32 %v3609, 0.5
        %v3678 = vmul.f32 %v3615, 0.5
        %v3679 = vmul.f32 %v3621, 0.5
        %v3680 = vmul.f32 %v3627, 0.5
        %v3681 = vmul.f32 %v3633, 0.5
        %v3682 = vmul.f32 %v3639, 0.5
        %v3683 = vmul.f32 %v3645, 0.5
        %v3684 = vmul.f32 %v3651, 0.5
        %v3685 = vmul.f32 %v3653, 1.442695
        %v3686 = vpow.pop %v3685
        %v3687 = vmul.f32 %v3654, 1.442695
        %v3688 = vpow.pop %v3687
        %v3689 = vmul.f32 %v3655, 1.442695
        %v3690 = vpow.pop %v3689
        %v3691 = vmul.f32 %v3656, 1.442695
        %v3692 = vpow.pop %v3691
        %v3693 = vmul.f32 %v3657, 1.442695
        %v3694 = vpow.pop %v3693
        %v3695 = vmul.f32 %v3658, 1.442695
        %v3696 = vpow.pop %v3695
        %v3697 = vmul.f32 %v3659, 1.442695
        %v3698 = vpow.pop %v3697
        %v3699 = vmul.f32 %v3660, 1.442695
        %v3700 = vpow.pop %v3699
        %v3701 = vmul.f32 %v3661, 1.442695
        %v3702 = vpow.pop %v3701
        %v3703 = vmul.f32 %v3662, 1.442695
        %v3704 = vpow.pop %v3703
        %v3705 = vmul.f32 %v3663, 1.442695
        %v3706 = vpow.pop %v3705
        %v3707 = vmul.f32 %v3664, 1.442695
        %v3708 = vpow.pop %v3707
        %v3709 = vmul.f32 %v3665, 1.442695
        %v3710 = vpow.pop %v3709
        %v3711 = vmul.f32 %v3666, 1.442695
        %v3712 = vpow.pop %v3711
        %v3713 = vmul.f32 %v3667, 1.442695
        %v3714 = vpow.pop %v3713
        %v3715 = vmul.f32 %v3668, 1.442695
        %v3716 = vpow.pop %v3715
        %v3717 = vmul.f32 %v3669, 1.442695
        %v3718 = vpow.pop %v3717
        %v3719 = vmul.f32 %v3670, 1.442695
        %v3720 = vpow.pop %v3719
        %v3721 = vmul.f32 %v3671, 1.442695
        %v3722 = vpow.pop %v3721
        %v3723 = vmul.f32 %v3672, 1.442695
        %v3724 = vpow.pop %v3723
        %v3725 = vmul.f32 %v3673, 1.442695
        %v3726 = vpow.pop %v3725
        %v3727 = vmul.f32 %v3674, 1.442695
        %v3728 = vpow.pop %v3727
        %v3729 = vmul.f32 %v3675, 1.442695
        %v3730 = vpow.pop %v3729
        %v3731 = vmul.f32 %v3676, 1.442695
        %v3732 = vpow.pop %v3731
        %v3733 = vmul.f32 %v3677, 1.442695
        %v3734 = vpow.pop %v3733
        %v3735 = vmul.f32 %v3678, 1.442695
        %v3736 = vpow.pop %v3735
        %v3737 = vmul.f32 %v3679, 1.442695
        %v3738 = vpow.pop %v3737
        %v3739 = vmul.f32 %v3680, 1.442695
        %v3740 = vpow.pop %v3739
        %v3741 = vmul.f32 %v3681, 1.442695
        %v3742 = vpow.pop %v3741
        %v3743 = vmul.f32 %v3682, 1.442695
        %v3744 = vpow.pop %v3743
        %v3745 = vmul.f32 %v3683, 1.442695
        %v3746 = vpow.pop %v3745
        %v3747 = vmul.f32 %v3684, 1.442695
        %v3748 = vpow.pop %v3747
        %v3749 = vmul.f32 %v732, %v3686
        %v3750 = vmul.f32 %v733, %v3688
        %v3751 = vmul.f32 %v734, %v3690
        %v3752 = vmul.f32 %v735, %v3692
        %v3753 = vmul.f32 %v736, %v3694
        %v3754 = vmul.f32 %v737, %v3696
        %v3755 = vmul.f32 %v738, %v3698
        %v3756 = vmul.f32 %v739, %v3700
        %v3757 = vmul.f32 %v740, %v3702
        %v3758 = vmul.f32 %v741, %v3704
        %v3759 = vmul.f32 %v742, %v3706
        %v3760 = vmul.f32 %v743, %v3708
        %v3761 = vmul.f32 %v744, %v3710
        %v3762 = vmul.f32 %v745, %v3712
        %v3763 = vmul.f32 %v746, %v3714
        %v3764 = vmul.f32 %v747, %v3716
        %v3765 = vmul.f32 %v748, %v3718
        %v3766 = vmul.f32 %v749, %v3720
        %v3767 = vmul.f32 %v750, %v3722
        %v3768 = vmul.f32 %v751, %v3724
        %v3769 = vmul.f32 %v752, %v3726
        %v3770 = vmul.f32 %v753, %v3728
        %v3771 = vmul.f32 %v754, %v3730
        %v3772 = vmul.f32 %v755, %v3732
        %v3773 = vmul.f32 %v756, %v3734
        %v3774 = vmul.f32 %v757, %v3736
        %v3775 = vmul.f32 %v758, %v3738
        %v3776 = vmul.f32 %v759, %v3740
        %v3777 = vmul.f32 %v760, %v3742
        %v3778 = vmul.f32 %v761, %v3744
        %v3779 = vmul.f32 %v762, %v3746
        %v3780 = vmul.f32 %v763, %v3748
        %v3781 = vadd.f32 %v3463, %v3749
        %v3782 = vadd.f32 %v3469, %v3750
        %v3783 = vadd.f32 %v3475, %v3751
        %v3784 = vadd.f32 %v3481, %v3752
        %v3785 = vadd.f32 %v3487, %v3753
        %v3786 = vadd.f32 %v3493, %v3754
        %v3787 = vadd.f32 %v3499, %v3755
        %v3788 = vadd.f32 %v3505, %v3756
        %v3789 = vadd.f32 %v3511, %v3757
        %v3790 = vadd.f32 %v3517, %v3758
        %v3791 = vadd.f32 %v3523, %v3759
        %v3792 = vadd.f32 %v3529, %v3760
        %v3793 = vadd.f32 %v3535, %v3761
        %v3794 = vadd.f32 %v3541, %v3762
        %v3795 = vadd.f32 %v3547, %v3763
        %v3796 = vadd.f32 %v3553, %v3764
        %v3797 = vadd.f32 %v3559, %v3765
        %v3798 = vadd.f32 %v3565, %v3766
        %v3799 = vadd.f32 %v3571, %v3767
        %v3800 = vadd.f32 %v3577, %v3768
        %v3801 = vadd.f32 %v3583, %v3769
        %v3802 = vadd.f32 %v3589, %v3770
        %v3803 = vadd.f32 %v3595, %v3771
        %v3804 = vadd.f32 %v3601, %v3772
        %v3805 = vadd.f32 %v3607, %v3773
        %v3806 = vadd.f32 %v3613, %v3774
        %v3807 = vadd.f32 %v3619, %v3775
        %v3808 = vadd.f32 %v3625, %v3776
        %v3809 = vadd.f32 %v3631, %v3777
        %v3810 = vadd.f32 %v3637, %v3778
        %v3811 = vadd.f32 %v3643, %v3779
        %v3812 = vadd.f32 %v3649, %v3780
        %v3813 = vld [vmem:[#allocation5 + $0x600] sm:$0xff]
        %v3814 = vld [vmem:[#allocation5 + $0x618] sm:$0xff]
        %v3815 = vld [vmem:[#allocation5 + $0x630] sm:$0xff]
        %v3816 = vld [vmem:[#allocation5 + $0x648] sm:$0xff]
        %v3817 = vld [vmem:[#allocation5 + $0x660] sm:$0xff]
        %v3818 = vld [vmem:[#allocation5 + $0x678] sm:$0xff]
        %v3819 = vld [vmem:[#allocation5 + $0x690] sm:$0xff]
        %v3820 = vld [vmem:[#allocation5 + $0x6a8] sm:$0xff]
        %v3821 = vld [vmem:[#allocation5 + $0x6c0] sm:$0xff]
        %v3822 = vld [vmem:[#allocation5 + $0x6d8] sm:$0xff]
        %v3823 = vld [vmem:[#allocation5 + $0x6f0] sm:$0xff]
        %v3824 = vld [vmem:[#allocation5 + $0x708] sm:$0xff]
        %v3825 = vld [vmem:[#allocation5 + $0x720] sm:$0xff]
        %v3826 = vld [vmem:[#allocation5 + $0x738] sm:$0xff]
        %v3827 = vld [vmem:[#allocation5 + $0x750] sm:$0xff]
        %v3828 = vld [vmem:[#allocation5 + $0x768] sm:$0xff]
        %v3829 = vld [vmem:[#allocation7 + $0x4] ss:$0 sm:$0xff]
        %3830 = vmatprep.subr.mxu0 0.0
        %3831 = vmatpush1.msra.mxu0 %v3813
        %3832 = vmatprep.subr.mxu0 0.0
        %3833 = vmatpush1.msra.mxu0 %v3814
        %3834 = vmatprep.subr.mxu0 0.0
        %3835 = vmatpush1.msra.mxu0 %v3815
        %3836 = vmatprep.subr.mxu0 0.0
        %3837 = vmatpush1.msra.mxu0 %v3816
        %3838 = vmatprep.subr.mxu0 0.0
        %3839 = vmatpush1.msra.mxu0 %v3817
        %3840 = vmatprep.subr.mxu0 0.0
        %3841 = vmatpush1.msra.mxu0 %v3818
        %3842 = vmatprep.subr.mxu0 0.0
        %3843 = vmatpush1.msra.mxu0 %v3819
        %3844 = vmatprep.subr.mxu0 0.0
        %3845 = vmatpush1.msra.mxu0 %v3820
        %3846 = vmatprep.subr.mxu0 0.0
        %3847 = vmatpush1.msra.mxu0 %v3821
        %3848 = vmatprep.subr.mxu0 0.0
        %3849 = vmatpush1.msra.mxu0 %v3822
        %3850 = vmatprep.subr.mxu0 0.0
        %3851 = vmatpush1.msra.mxu0 %v3823
        %3852 = vmatprep.subr.mxu0 0.0
        %3853 = vmatpush1.msra.mxu0 %v3824
        %3854 = vmatprep.subr.mxu0 0.0
        %3855 = vmatpush1.msra.mxu0 %v3825
        %3856 = vmatprep.subr.mxu0 0.0
        %3857 = vmatpush1.msra.mxu0 %v3826
        %3858 = vmatprep.subr.mxu0 0.0
        %3859 = vmatpush1.msra.mxu0 %v3827
        %3860 = vmatprep.subr.mxu0 0.0
        %3861 = vmatpush1.msra.mxu0 %v3828
        %3862 = vmatprep.subr.mxu0 0.0
        %3863 = vmatpush1.msra.mxu0 0.0
        %3864 = vmatprep.subr.mxu0 0.0
        %3865 = vmatpush1.msra.mxu0 0.0
        %3866 = vmatprep.subr.mxu0 0.0
        %3867 = vmatpush1.msra.mxu0 0.0
        %3868 = vmatprep.subr.mxu0 0.0
        %3869 = vmatpush1.msra.mxu0 0.0
        %3870 = vmatprep.subr.mxu0 0.0
        %3871 = vmatpush1.msra.mxu0 0.0
        %3872 = vmatprep.subr.mxu0 0.0
        %3873 = vmatpush1.msra.mxu0 0.0
        %3874 = vmatprep.subr.mxu0 0.0
        %3875 = vmatpush1.msra.mxu0 0.0
        %3876 = vmatprep.subr.mxu0 0.0
        %3877 = vmatpush1.msra.mxu0 0.0
        %3878 = vmatprep.subr.mxu0 0.0
        %3879 = vmatpush1.msra.mxu0 0.0
        %3880 = vmatprep.subr.mxu0 0.0
        %3881 = vmatpush1.msra.mxu0 0.0
        %3882 = vmatprep.subr.mxu0 0.0
        %3883 = vmatpush1.msra.mxu0 0.0
        %3884 = vmatprep.subr.mxu0 0.0
        %3885 = vmatpush1.msra.mxu0 0.0
        %3886 = vmatprep.subr.mxu0 0.0
        %3887 = vmatpush1.msra.mxu0 0.0
        %3888 = vmatprep.subr.mxu0 0.0
        %3889 = vmatpush1.msra.mxu0 0.0
        %3890 = vmatprep.subr.mxu0 0.0
        %3891 = vmatpush1.msra.mxu0 0.0
        %3892 = vmatprep.subr.mxu0 0.0
        %3893 = vmatpush1.msra.mxu0 0.0
        %3894 = vmatprep.mubr.f32.mxu0 0.0
        %3895 = vmatmul.mubr.f32.gmra.mrb[0].mxu0 %v3781
        %v3896 = vpop.f32.mrb[0].mxu0
        %v3897 = vadd.f32 %v3829, %v3896
        %v3898 = vpop.f32.mrb[0].mxu0
        %3899 = vmatprep.mubr.f32.mxu0 0.0
        %3900 = vmatmul.mubr.f32.gmra.mrb[0].mxu0 %v3782
        %v3901 = vpop.f32.mrb[0].mxu0
        %v3902 = vadd.f32 %v3829, %v3901
        %v3903 = vpop.f32.mrb[0].mxu0
        %3904 = vmatprep.mubr.f32.mxu0 0.0
        %3905 = vmatmul.mubr.f32.gmra.mrb[0].mxu0 %v3783
        %v3906 = vpop.f32.mrb[0].mxu0
        %v3907 = vadd.f32 %v3829, %v3906
        %v3908 = vpop.f32.mrb[0].mxu0
        %3909 = vmatprep.mubr.f32.mxu0 0.0
        %3910 = vmatmul.mubr.f32.gmra.mrb[0].mxu0 %v3784
        %v3911 = vpop.f32.mrb[0].mxu0
        %v3912 = vadd.f32 %v3829, %v3911
        %v3913 = vpop.f32.mrb[0].mxu0
        %3914 = vmatprep.mubr.f32.mxu0 0.0
        %3915 = vmatmul.mubr.f32.gmra.mrb[0].mxu0 %v3785
        %v3916 = vpop.f32.mrb[0].mxu0
        %v3917 = vadd.f32 %v3829, %v3916
        %v3918 = vpop.f32.mrb[0].mxu0
        %3919 = vmatprep.mubr.f32.mxu0 0.0
        %3920 = vmatmul.mubr.f32.gmra.mrb[0].mxu0 %v3786
        %v3921 = vpop.f32.mrb[0].mxu0
        %v3922 = vadd.f32 %v3829, %v3921
        %v3923 = vpop.f32.mrb[0].mxu0
        %3924 = vmatprep.mubr.f32.mxu0 0.0
        %3925 = vmatmul.mubr.f32.gmra.mrb[0].mxu0 %v3787
        %v3926 = vpop.f32.mrb[0].mxu0
        %v3927 = vadd.f32 %v3829, %v3926
        %v3928 = vpop.f32.mrb[0].mxu0
        %3929 = vmatprep.mubr.f32.mxu0 0.0
        %3930 = vmatmul.mubr.f32.gmra.mrb[0].mxu0 %v3788
        %v3931 = vpop.f32.mrb[0].mxu0
        %v3932 = vadd.f32 %v3829, %v3931
        %v3933 = vpop.f32.mrb[0].mxu0
        %3934 = vmatprep.mubr.f32.mxu0 0.0
        %3935 = vmatmul.mubr.f32.gmra.mrb[0].mxu0 %v3789
        %v3936 = vpop.f32.mrb[0].mxu0
        %v3937 = vadd.f32 %v3829, %v3936
        %v3938 = vpop.f32.mrb[0].mxu0
        %3939 = vmatprep.mubr.f32.mxu0 0.0
        %3940 = vmatmul.mubr.f32.gmra.mrb[0].mxu0 %v3790
        %v3941 = vpop.f32.mrb[0].mxu0
        %v3942 = vadd.f32 %v3829, %v3941
        %v3943 = vpop.f32.mrb[0].mxu0
        %3944 = vmatprep.mubr.f32.mxu0 0.0
        %3945 = vmatmul.mubr.f32.gmra.mrb[0].mxu0 %v3791
        %v3946 = vpop.f32.mrb[0].mxu0
        %v3947 = vadd.f32 %v3829, %v3946
        %v3948 = vpop.f32.mrb[0].mxu0
        %3949 = vmatprep.mubr.f32.mxu0 0.0
        %3950 = vmatmul.mubr.f32.gmra.mrb[0].mxu0 %v3792
        %v3951 = vpop.f32.mrb[0].mxu0
        %v3952 = vadd.f32 %v3829, %v3951
        %v3953 = vpop.f32.mrb[0].mxu0
        %3954 = vmatprep.mubr.f32.mxu0 0.0
        %3955 = vmatmul.mubr.f32.gmra.mrb[0].mxu0 %v3793
        %v3956 = vpop.f32.mrb[0].mxu0
        %v3957 = vadd.f32 %v3829, %v3956
        %v3958 = vpop.f32.mrb[0].mxu0
        %3959 = vmatprep.mubr.f32.mxu0 0.0
        %3960 = vmatmul.mubr.f32.gmra.mrb[0].mxu0 %v3794
        %v3961 = vpop.f32.mrb[0].mxu0
        %v3962 = vadd.f32 %v3829, %v3961
        %v3963 = vpop.f32.mrb[0].mxu0
        %3964 = vmatprep.mubr.f32.mxu0 0.0
        %3965 = vmatmul.mubr.f32.gmra.mrb[0].mxu0 %v3795
        %v3966 = vpop.f32.mrb[0].mxu0
        %v3967 = vadd.f32 %v3829, %v3966
        %v3968 = vpop.f32.mrb[0].mxu0
        %3969 = vmatprep.mubr.f32.mxu0 0.0
        %3970 = vmatmul.mubr.f32.gmra.mrb[0].mxu0 %v3796
        %v3971 = vpop.f32.mrb[0].mxu0
        %v3972 = vadd.f32 %v3829, %v3971
        %v3973 = vpop.f32.mrb[0].mxu0
        %3974 = vmatprep.mubr.f32.mxu0 0.0
        %3975 = vmatmul.mubr.f32.gmra.mrb[0].mxu0 %v3797
        %v3976 = vpop.f32.mrb[0].mxu0
        %v3977 = vadd.f32 %v3829, %v3976
        %v3978 = vpop.f32.mrb[0].mxu0
        %3979 = vmatprep.mubr.f32.mxu0 0.0
        %3980 = vmatmul.mubr.f32.gmra.mrb[0].mxu0 %v3798
        %v3981 = vpop.f32.mrb[0].mxu0
        %v3982 = vadd.f32 %v3829, %v3981
        %v3983 = vpop.f32.mrb[0].mxu0
        %3984 = vmatprep.mubr.f32.mxu0 0.0
        %3985 = vmatmul.mubr.f32.gmra.mrb[0].mxu0 %v3799
        %v3986 = vpop.f32.mrb[0].mxu0
        %v3987 = vadd.f32 %v3829, %v3986
        %v3988 = vpop.f32.mrb[0].mxu0
        %3989 = vmatprep.mubr.f32.mxu0 0.0
        %3990 = vmatmul.mubr.f32.gmra.mrb[0].mxu0 %v3800
        %v3991 = vpop.f32.mrb[0].mxu0
        %v3992 = vadd.f32 %v3829, %v3991
        %v3993 = vpop.f32.mrb[0].mxu0
        %3994 = vmatprep.mubr.f32.mxu0 0.0
        %3995 = vmatmul.mubr.f32.gmra.mrb[0].mxu0 %v3801
        %v3996 = vpop.f32.mrb[0].mxu0
        %v3997 = vadd.f32 %v3829, %v3996
        %v3998 = vpop.f32.mrb[0].mxu0
        %3999 = vmatprep.mubr.f32.mxu0 0.0
        %4000 = vmatmul.mubr.f32.gmra.mrb[0].mxu0 %v3802
        %v4001 = vpop.f32.mrb[0].mxu0
        %v4002 = vadd.f32 %v3829, %v4001
        %v4003 = vpop.f32.mrb[0].mxu0
        %4004 = vmatprep.mubr.f32.mxu0 0.0
        %4005 = vmatmul.mubr.f32.gmra.mrb[0].mxu0 %v3803
        %v4006 = vpop.f32.mrb[0].mxu0
        %v4007 = vadd.f32 %v3829, %v4006
        %v4008 = vpop.f32.mrb[0].mxu0
        %4009 = vmatprep.mubr.f32.mxu0 0.0
        %4010 = vmatmul.mubr.f32.gmra.mrb[0].mxu0 %v3804
        %v4011 = vpop.f32.mrb[0].mxu0
        %v4012 = vadd.f32 %v3829, %v4011
        %v4013 = vpop.f32.mrb[0].mxu0
        %4014 = vmatprep.mubr.f32.mxu0 0.0
        %4015 = vmatmul.mubr.f32.gmra.mrb[0].mxu0 %v3805
        %v4016 = vpop.f32.mrb[0].mxu0
        %v4017 = vadd.f32 %v3829, %v4016
        %v4018 = vpop.f32.mrb[0].mxu0
        %4019 = vmatprep.mubr.f32.mxu0 0.0
        %4020 = vmatmul.mubr.f32.gmra.mrb[0].mxu0 %v3806
        %v4021 = vpop.f32.mrb[0].mxu0
        %v4022 = vadd.f32 %v3829, %v4021
        %v4023 = vpop.f32.mrb[0].mxu0
        %4024 = vmatprep.mubr.f32.mxu0 0.0
        %4025 = vmatmul.mubr.f32.gmra.mrb[0].mxu0 %v3807
        %v4026 = vpop.f32.mrb[0].mxu0
        %v4027 = vadd.f32 %v3829, %v4026
        %v4028 = vpop.f32.mrb[0].mxu0
        %4029 = vmatprep.mubr.f32.mxu0 0.0
        %4030 = vmatmul.mubr.f32.gmra.mrb[0].mxu0 %v3808
        %v4031 = vpop.f32.mrb[0].mxu0
        %v4032 = vadd.f32 %v3829, %v4031
        %v4033 = vpop.f32.mrb[0].mxu0
        %4034 = vmatprep.mubr.f32.mxu0 0.0
        %4035 = vmatmul.mubr.f32.gmra.mrb[0].mxu0 %v3809
        %v4036 = vpop.f32.mrb[0].mxu0
        %v4037 = vadd.f32 %v3829, %v4036
        %v4038 = vpop.f32.mrb[0].mxu0
        %4039 = vmatprep.mubr.f32.mxu0 0.0
        %4040 = vmatmul.mubr.f32.gmra.mrb[0].mxu0 %v3810
        %v4041 = vpop.f32.mrb[0].mxu0
        %v4042 = vadd.f32 %v3829, %v4041
        %v4043 = vpop.f32.mrb[0].mxu0
        %4044 = vmatprep.mubr.f32.mxu0 0.0
        %4045 = vmatmul.mubr.f32.gmra.mrb[0].mxu0 %v3811
        %v4046 = vpop.f32.mrb[0].mxu0
        %v4047 = vadd.f32 %v3829, %v4046
        %v4048 = vpop.f32.mrb[0].mxu0
        %4049 = vmatprep.mubr.f32.mxu0 0.0
        %4050 = vmatmul.mubr.f32.gmra.mrb[0].mxu0 %v3812
        %v4051 = vpop.f32.mrb[0].mxu0
        %v4052 = vadd.f32 %v3829, %v4051
        %v4053 = vpop.f32.mrb[0].mxu0
        %4054 = vdwg.mxu0
        %vm4055 = vcmp.gt.f32.partialorder %v3897, 0.0
        %vm4056 = vcmp.gt.f32.partialorder %v3902, 0.0
        %vm4057 = vcmp.gt.f32.partialorder %v3907, 0.0
        %vm4058 = vcmp.gt.f32.partialorder %v3912, 0.0
        %vm4059 = vcmp.gt.f32.partialorder %v3917, 0.0
        %vm4060 = vcmp.gt.f32.partialorder %v3922, 0.0
        %vm4061 = vcmp.gt.f32.partialorder %v3927, 0.0
        %vm4062 = vcmp.gt.f32.partialorder %v3932, 0.0
        %vm4063 = vcmp.gt.f32.partialorder %v3937, 0.0
        %vm4064 = vcmp.gt.f32.partialorder %v3942, 0.0
        %vm4065 = vcmp.gt.f32.partialorder %v3947, 0.0
        %vm4066 = vcmp.gt.f32.partialorder %v3952, 0.0
        %vm4067 = vcmp.gt.f32.partialorder %v3957, 0.0
        %vm4068 = vcmp.gt.f32.partialorder %v3962, 0.0
        %vm4069 = vcmp.gt.f32.partialorder %v3967, 0.0
        %vm4070 = vcmp.gt.f32.partialorder %v3972, 0.0
        %vm4071 = vcmp.gt.f32.partialorder %v3977, 0.0
        %vm4072 = vcmp.gt.f32.partialorder %v3982, 0.0
        %vm4073 = vcmp.gt.f32.partialorder %v3987, 0.0
        %vm4074 = vcmp.gt.f32.partialorder %v3992, 0.0
        %vm4075 = vcmp.gt.f32.partialorder %v3997, 0.0
        %vm4076 = vcmp.gt.f32.partialorder %v4002, 0.0
        %vm4077 = vcmp.gt.f32.partialorder %v4007, 0.0
        %vm4078 = vcmp.gt.f32.partialorder %v4012, 0.0
        %vm4079 = vcmp.gt.f32.partialorder %v4017, 0.0
        %vm4080 = vcmp.gt.f32.partialorder %v4022, 0.0
        %vm4081 = vcmp.gt.f32.partialorder %v4027, 0.0
        %vm4082 = vcmp.gt.f32.partialorder %v4032, 0.0
        %vm4083 = vcmp.gt.f32.partialorder %v4037, 0.0
        %vm4084 = vcmp.gt.f32.partialorder %v4042, 0.0
        %vm4085 = vcmp.gt.f32.partialorder %v4047, 0.0
        %vm4086 = vcmp.gt.f32.partialorder %v4052, 0.0
        %v4087 = vmul.f32 %v3897, 0.01
        %v4088 = vmul.f32 %v3902, 0.01
        %v4089 = vmul.f32 %v3907, 0.01
        %v4090 = vmul.f32 %v3912, 0.01
        %v4091 = vmul.f32 %v3917, 0.01
        %v4092 = vmul.f32 %v3922, 0.01
        %v4093 = vmul.f32 %v3927, 0.01
        %v4094 = vmul.f32 %v3932, 0.01
        %v4095 = vmul.f32 %v3937, 0.01
        %v4096 = vmul.f32 %v3942, 0.01
        %v4097 = vmul.f32 %v3947, 0.01
        %v4098 = vmul.f32 %v3952, 0.01
        %v4099 = vmul.f32 %v3957, 0.01
        %v4100 = vmul.f32 %v3962, 0.01
        %v4101 = vmul.f32 %v3967, 0.01
        %v4102 = vmul.f32 %v3972, 0.01
        %v4103 = vmul.f32 %v3977, 0.01
        %v4104 = vmul.f32 %v3982, 0.01
        %v4105 = vmul.f32 %v3987, 0.01
        %v4106 = vmul.f32 %v3992, 0.01
        %v4107 = vmul.f32 %v3997, 0.01
        %v4108 = vmul.f32 %v4002, 0.01
        %v4109 = vmul.f32 %v4007, 0.01
        %v4110 = vmul.f32 %v4012, 0.01
        %v4111 = vmul.f32 %v4017, 0.01
        %v4112 = vmul.f32 %v4022, 0.01
        %v4113 = vmul.f32 %v4027, 0.01
        %v4114 = vmul.f32 %v4032, 0.01
        %v4115 = vmul.f32 %v4037, 0.01
        %v4116 = vmul.f32 %v4042, 0.01
        %v4117 = vmul.f32 %v4047, 0.01
        %v4118 = vmul.f32 %v4052, 0.01
        %v4119 = vsel %vm4055, %v3897, %v4087
        %v4120 = vsel %vm4056, %v3902, %v4088
        %v4121 = vsel %vm4057, %v3907, %v4089
        %v4122 = vsel %vm4058, %v3912, %v4090
        %v4123 = vsel %vm4059, %v3917, %v4091
        %v4124 = vsel %vm4060, %v3922, %v4092
        %v4125 = vsel %vm4061, %v3927, %v4093
        %v4126 = vsel %vm4062, %v3932, %v4094
        %v4127 = vsel %vm4063, %v3937, %v4095
        %v4128 = vsel %vm4064, %v3942, %v4096
        %v4129 = vsel %vm4065, %v3947, %v4097
        %v4130 = vsel %vm4066, %v3952, %v4098
        %v4131 = vsel %vm4067, %v3957, %v4099
        %v4132 = vsel %vm4068, %v3962, %v4100
        %v4133 = vsel %vm4069, %v3967, %v4101
        %v4134 = vsel %vm4070, %v3972, %v4102
        %v4135 = vsel %vm4071, %v3977, %v4103
        %v4136 = vsel %vm4072, %v3982, %v4104
        %v4137 = vsel %vm4073, %v3987, %v4105
        %v4138 = vsel %vm4074, %v3992, %v4106
        %v4139 = vsel %vm4075, %v3997, %v4107
        %v4140 = vsel %vm4076, %v4002, %v4108
        %v4141 = vsel %vm4077, %v4007, %v4109
        %v4142 = vsel %vm4078, %v4012, %v4110
        %v4143 = vsel %vm4079, %v4017, %v4111
        %v4144 = vsel %vm4080, %v4022, %v4112
        %v4145 = vsel %vm4081, %v4027, %v4113
        %v4146 = vsel %vm4082, %v4032, %v4114
        %v4147 = vsel %vm4083, %v4037, %v4115
        %v4148 = vsel %vm4084, %v4042, %v4116
        %v4149 = vsel %vm4085, %v4047, %v4117
        %v4150 = vsel %vm4086, %v4052, %v4118
        %v4151 = vld [vmem:[#allocation5 + $0x780] sm:$0xff]
        %v4152 = vld [vmem:[#allocation5 + $0x788] sm:$0xff]
        %v4153 = vld [vmem:[#allocation5 + $0x790] sm:$0xff]
        %v4154 = vld [vmem:[#allocation5 + $0x798] sm:$0xff]
        %v4155 = vld [vmem:[#allocation5 + $0x7a0] sm:$0xff]
        %v4156 = vld [vmem:[#allocation5 + $0x7a8] sm:$0xff]
        %v4157 = vld [vmem:[#allocation5 + $0x7b0] sm:$0xff]
        %v4158 = vld [vmem:[#allocation5 + $0x7b8] sm:$0xff]
        %v4159 = vld [vmem:[#allocation5 + $0x7c0] sm:$0xff]
        %v4160 = vld [vmem:[#allocation5 + $0x7c8] sm:$0xff]
        %v4161 = vld [vmem:[#allocation5 + $0x7d0] sm:$0xff]
        %v4162 = vld [vmem:[#allocation5 + $0x7d8] sm:$0xff]
        %v4163 = vld [vmem:[#allocation5 + $0x7e0] sm:$0xff]
        %v4164 = vld [vmem:[#allocation5 + $0x7e8] sm:$0xff]
        %v4165 = vld [vmem:[#allocation5 + $0x7f0] sm:$0xff]
        %v4166 = vld [vmem:[#allocation5 + $0x7f8] sm:$0xff]
        %v4167 = vld [vmem:[#allocation5 + $0x800] sm:$0xff]
        %v4168 = vld [vmem:[#allocation5 + $0x808] sm:$0xff]
        %v4169 = vld [vmem:[#allocation5 + $0x810] sm:$0xff]
        %v4170 = vld [vmem:[#allocation5 + $0x818] sm:$0xff]
        %v4171 = vld [vmem:[#allocation5 + $0x820] sm:$0xff]
        %v4172 = vld [vmem:[#allocation5 + $0x828] sm:$0xff]
        %v4173 = vld [vmem:[#allocation5 + $0x830] sm:$0xff]
        %v4174 = vld [vmem:[#allocation5 + $0x838] sm:$0xff]
        %v4175 = vld [vmem:[#allocation5 + $0x840] sm:$0xff]
        %v4176 = vld [vmem:[#allocation5 + $0x848] sm:$0xff]
        %v4177 = vld [vmem:[#allocation5 + $0x850] sm:$0xff]
        %v4178 = vld [vmem:[#allocation5 + $0x858] sm:$0xff]
        %v4179 = vld [vmem:[#allocation5 + $0x860] sm:$0xff]
        %v4180 = vld [vmem:[#allocation5 + $0x868] sm:$0xff]
        %v4181 = vld [vmem:[#allocation5 + $0x870] sm:$0xff]
        %v4182 = vld [vmem:[#allocation5 + $0x878] sm:$0xff]
        %v4183 = vld [vmem:[#allocation5 + $0x880] sm:$0xff]
        %v4184 = vld [vmem:[#allocation5 + $0x888] sm:$0xff]
        %v4185 = vld [vmem:[#allocation5 + $0x890] sm:$0xff]
        %v4186 = vld [vmem:[#allocation5 + $0x898] sm:$0xff]
        %v4187 = vld [vmem:[#allocation5 + $0x8a0] sm:$0xff]
        %v4188 = vld [vmem:[#allocation5 + $0x8a8] sm:$0xff]
        %v4189 = vld [vmem:[#allocation5 + $0x8b0] sm:$0xff]
        %v4190 = vld [vmem:[#allocation5 + $0x8b8] sm:$0xff]
        %v4191 = vld [vmem:[#allocation5 + $0x8c0] sm:$0xff]
        %v4192 = vld [vmem:[#allocation5 + $0x8c8] sm:$0xff]
        %v4193 = vld [vmem:[#allocation5 + $0x8d0] sm:$0xff]
        %v4194 = vld [vmem:[#allocation5 + $0x8d8] sm:$0xff]
        %v4195 = vld [vmem:[#allocation5 + $0x8e0] sm:$0xff]
        %v4196 = vld [vmem:[#allocation5 + $0x8e8] sm:$0xff]
        %v4197 = vld [vmem:[#allocation5 + $0x8f0] sm:$0xff]
        %v4198 = vld [vmem:[#allocation5 + $0x8f8] sm:$0xff]
        %4199 = vmatprep.subr.mxu0 %v4152
        %4200 = vmatpush1.msra.mxu0 %v4151
        %4201 = vmatprep.subr.mxu0 %v4155
        %4202 = vmatpush1.msra.mxu0 %v4154
        %4203 = vmatprep.subr.mxu0 %v4158
        %4204 = vmatpush1.msra.mxu0 %v4157
        %4205 = vmatprep.subr.mxu0 %v4161
        %4206 = vmatpush1.msra.mxu0 %v4160
        %4207 = vmatprep.subr.mxu0 %v4164
        %4208 = vmatpush1.msra.mxu0 %v4163
        %4209 = vmatprep.subr.mxu0 %v4167
        %4210 = vmatpush1.msra.mxu0 %v4166
        %4211 = vmatprep.subr.mxu0 %v4170
        %4212 = vmatpush1.msra.mxu0 %v4169
        %4213 = vmatprep.subr.mxu0 %v4173
        %4214 = vmatpush1.msra.mxu0 %v4172
        %4215 = vmatprep.subr.mxu0 %v4176
        %4216 = vmatpush1.msra.mxu0 %v4175
        %4217 = vmatprep.subr.mxu0 %v4179
        %4218 = vmatpush1.msra.mxu0 %v4178
        %4219 = vmatprep.subr.mxu0 %v4182
        %4220 = vmatpush1.msra.mxu0 %v4181
        %4221 = vmatprep.subr.mxu0 %v4185
        %4222 = vmatpush1.msra.mxu0 %v4184
        %4223 = vmatprep.subr.mxu0 %v4188
        %4224 = vmatpush1.msra.mxu0 %v4187
        %4225 = vmatprep.subr.mxu0 %v4191
        %4226 = vmatpush1.msra.mxu0 %v4190
        %4227 = vmatprep.subr.mxu0 %v4194
        %4228 = vmatpush1.msra.mxu0 %v4193
        %4229 = vmatprep.subr.mxu0 %v4197
        %4230 = vmatpush1.msra.mxu0 %v4196
        %4231 = vmatprep.subr.mxu0 0.0
        %4232 = vmatpush1.msra.mxu0 0.0
        %4233 = vmatprep.subr.mxu0 0.0
        %4234 = vmatpush1.msra.mxu0 0.0
        %4235 = vmatprep.subr.mxu0 0.0
        %4236 = vmatpush1.msra.mxu0 0.0
        %4237 = vmatprep.subr.mxu0 0.0
        %4238 = vmatpush1.msra.mxu0 0.0
        %4239 = vmatprep.subr.mxu0 0.0
        %4240 = vmatpush1.msra.mxu0 0.0
        %4241 = vmatprep.subr.mxu0 0.0
        %4242 = vmatpush1.msra.mxu0 0.0
        %4243 = vmatprep.subr.mxu0 0.0
        %4244 = vmatpush1.msra.mxu0 0.0
        %4245 = vmatprep.subr.mxu0 0.0
        %4246 = vmatpush1.msra.mxu0 0.0
        %4247 = vmatprep.subr.mxu0 0.0
        %4248 = vmatpush1.msra.mxu0 0.0
        %4249 = vmatprep.subr.mxu0 0.0
        %4250 = vmatpush1.msra.mxu0 0.0
        %4251 = vmatprep.subr.mxu0 0.0
        %4252 = vmatpush1.msra.mxu0 0.0
        %4253 = vmatprep.subr.mxu0 0.0
        %4254 = vmatpush1.msra.mxu0 0.0
        %4255 = vmatprep.subr.mxu0 0.0
        %4256 = vmatpush1.msra.mxu0 0.0
        %4257 = vmatprep.subr.mxu0 0.0
        %4258 = vmatpush1.msra.mxu0 0.0
        %4259 = vmatprep.subr.mxu0 0.0
        %4260 = vmatpush1.msra.mxu0 0.0
        %4261 = vmatprep.subr.mxu0 0.0
        %4262 = vmatpush1.msra.mxu0 0.0
        %4263 = vmatprep.mubr.f32.mxu0 0.0
        %4264 = vmatmul.mubr.f32.gmra.mrb[0].mxu0 %v4119
        %v4265 = vpop.f32.mrb[0].mxu0
        %v4266 = vadd.f32 0.0, %v4265
        %v4267 = vpop.f32.mrb[0].mxu0
        %v4268 = vadd.f32 0.0, %v4267
        %4269 = vmatprep.mubr.f32.mxu0 0.0
        %4270 = vmatmul.mubr.f32.gmra.mrb[0].mxu0 %v4120
        %v4271 = vpop.f32.mrb[0].mxu0
        %v4272 = vadd.f32 0.0, %v4271
        %v4273 = vpop.f32.mrb[0].mxu0
        %v4274 = vadd.f32 0.0, %v4273
        %4275 = vmatprep.mubr.f32.mxu0 0.0
        %4276 = vmatmul.mubr.f32.gmra.mrb[0].mxu0 %v4121
        %v4277 = vpop.f32.mrb[0].mxu0
        %v4278 = vadd.f32 0.0, %v4277
        %v4279 = vpop.f32.mrb[0].mxu0
        %v4280 = vadd.f32 0.0, %v4279
        %4281 = vmatprep.mubr.f32.mxu0 0.0
        %4282 = vmatmul.mubr.f32.gmra.mrb[0].mxu0 %v4122
        %v4283 = vpop.f32.mrb[0].mxu0
        %v4284 = vadd.f32 0.0, %v4283
        %v4285 = vpop.f32.mrb[0].mxu0
        %v4286 = vadd.f32 0.0, %v4285
        %4287 = vmatprep.mubr.f32.mxu0 0.0
        %4288 = vmatmul.mubr.f32.gmra.mrb[0].mxu0 %v4123
        %v4289 = vpop.f32.mrb[0].mxu0
        %v4290 = vadd.f32 0.0, %v4289
        %v4291 = vpop.f32.mrb[0].mxu0
        %v4292 = vadd.f32 0.0, %v4291
        %4293 = vmatprep.mubr.f32.mxu0 0.0
        %4294 = vmatmul.mubr.f32.gmra.mrb[0].mxu0 %v4124
        %v4295 = vpop.f32.mrb[0].mxu0
        %v4296 = vadd.f32 0.0, %v4295
        %v4297 = vpop.f32.mrb[0].mxu0
        %v4298 = vadd.f32 0.0, %v4297
        %4299 = vmatprep.mubr.f32.mxu0 0.0
        %4300 = vmatmul.mubr.f32.gmra.mrb[0].mxu0 %v4125
        %v4301 = vpop.f32.mrb[0].mxu0
        %v4302 = vadd.f32 0.0, %v4301
        %v4303 = vpop.f32.mrb[0].mxu0
        %v4304 = vadd.f32 0.0, %v4303
        %4305 = vmatprep.mubr.f32.mxu0 0.0
        %4306 = vmatmul.mubr.f32.gmra.mrb[0].mxu0 %v4126
        %v4307 = vpop.f32.mrb[0].mxu0
        %v4308 = vadd.f32 0.0, %v4307
        %v4309 = vpop.f32.mrb[0].mxu0
        %v4310 = vadd.f32 0.0, %v4309
        %4311 = vmatprep.mubr.f32.mxu0 0.0
        %4312 = vmatmul.mubr.f32.gmra.mrb[0].mxu0 %v4127
        %v4313 = vpop.f32.mrb[0].mxu0
        %v4314 = vadd.f32 0.0, %v4313
        %v4315 = vpop.f32.mrb[0].mxu0
        %v4316 = vadd.f32 0.0, %v4315
        %4317 = vmatprep.mubr.f32.mxu0 0.0
        %4318 = vmatmul.mubr.f32.gmra.mrb[0].mxu0 %v4128
        %v4319 = vpop.f32.mrb[0].mxu0
        %v4320 = vadd.f32 0.0, %v4319
        %v4321 = vpop.f32.mrb[0].mxu0
        %v4322 = vadd.f32 0.0, %v4321
        %4323 = vmatprep.mubr.f32.mxu0 0.0
        %4324 = vmatmul.mubr.f32.gmra.mrb[0].mxu0 %v4129
        %v4325 = vpop.f32.mrb[0].mxu0
        %v4326 = vadd.f32 0.0, %v4325
        %v4327 = vpop.f32.mrb[0].mxu0
        %v4328 = vadd.f32 0.0, %v4327
        %4329 = vmatprep.mubr.f32.mxu0 0.0
        %4330 = vmatmul.mubr.f32.gmra.mrb[0].mxu0 %v4130
        %v4331 = vpop.f32.mrb[0].mxu0
        %v4332 = vadd.f32 0.0, %v4331
        %v4333 = vpop.f32.mrb[0].mxu0
        %v4334 = vadd.f32 0.0, %v4333
        %4335 = vmatprep.mubr.f32.mxu0 0.0
        %4336 = vmatmul.mubr.f32.gmra.mrb[0].mxu0 %v4131
        %v4337 = vpop.f32.mrb[0].mxu0
        %v4338 = vadd.f32 0.0, %v4337
        %v4339 = vpop.f32.mrb[0].mxu0
        %v4340 = vadd.f32 0.0, %v4339
        %4341 = vmatprep.mubr.f32.mxu0 0.0
        %4342 = vmatmul.mubr.f32.gmra.mrb[0].mxu0 %v4132
        %v4343 = vpop.f32.mrb[0].mxu0
        %v4344 = vadd.f32 0.0, %v4343
        %v4345 = vpop.f32.mrb[0].mxu0
        %v4346 = vadd.f32 0.0, %v4345
        %4347 = vmatprep.mubr.f32.mxu0 0.0
        %4348 = vmatmul.mubr.f32.gmra.mrb[0].mxu0 %v4133
        %v4349 = vpop.f32.mrb[0].mxu0
        %v4350 = vadd.f32 0.0, %v4349
        %v4351 = vpop.f32.mrb[0].mxu0
        %v4352 = vadd.f32 0.0, %v4351
        %4353 = vmatprep.mubr.f32.mxu0 0.0
        %4354 = vmatmul.mubr.f32.gmra.mrb[0].mxu0 %v4134
        %v4355 = vpop.f32.mrb[0].mxu0
        %v4356 = vadd.f32 0.0, %v4355
        %v4357 = vpop.f32.mrb[0].mxu0
        %v4358 = vadd.f32 0.0, %v4357
        %4359 = vmatprep.mubr.f32.mxu0 0.0
        %4360 = vmatmul.mubr.f32.gmra.mrb[0].mxu0 %v4135
        %v4361 = vpop.f32.mrb[0].mxu0
        %v4362 = vadd.f32 0.0, %v4361
        %v4363 = vpop.f32.mrb[0].mxu0
        %v4364 = vadd.f32 0.0, %v4363
        %4365 = vmatprep.mubr.f32.mxu0 0.0
        %4366 = vmatmul.mubr.f32.gmra.mrb[0].mxu0 %v4136
        %v4367 = vpop.f32.mrb[0].mxu0
        %v4368 = vadd.f32 0.0, %v4367
        %v4369 = vpop.f32.mrb[0].mxu0
        %v4370 = vadd.f32 0.0, %v4369
        %4371 = vmatprep.mubr.f32.mxu0 0.0
        %4372 = vmatmul.mubr.f32.gmra.mrb[0].mxu0 %v4137
        %v4373 = vpop.f32.mrb[0].mxu0
        %v4374 = vadd.f32 0.0, %v4373
        %v4375 = vpop.f32.mrb[0].mxu0
        %v4376 = vadd.f32 0.0, %v4375
        %4377 = vmatprep.mubr.f32.mxu0 0.0
        %4378 = vmatmul.mubr.f32.gmra.mrb[0].mxu0 %v4138
        %v4379 = vpop.f32.mrb[0].mxu0
        %v4380 = vadd.f32 0.0, %v4379
        %v4381 = vpop.f32.mrb[0].mxu0
        %v4382 = vadd.f32 0.0, %v4381
        %4383 = vmatprep.mubr.f32.mxu0 0.0
        %4384 = vmatmul.mubr.f32.gmra.mrb[0].mxu0 %v4139
        %v4385 = vpop.f32.mrb[0].mxu0
        %v4386 = vadd.f32 0.0, %v4385
        %v4387 = vpop.f32.mrb[0].mxu0
        %v4388 = vadd.f32 0.0, %v4387
        %4389 = vmatprep.mubr.f32.mxu0 0.0
        %4390 = vmatmul.mubr.f32.gmra.mrb[0].mxu0 %v4140
        %v4391 = vpop.f32.mrb[0].mxu0
        %v4392 = vadd.f32 0.0, %v4391
        %v4393 = vpop.f32.mrb[0].mxu0
        %v4394 = vadd.f32 0.0, %v4393
        %4395 = vmatprep.mubr.f32.mxu0 0.0
        %4396 = vmatmul.mubr.f32.gmra.mrb[0].mxu0 %v4141
        %v4397 = vpop.f32.mrb[0].mxu0
        %v4398 = vadd.f32 0.0, %v4397
        %v4399 = vpop.f32.mrb[0].mxu0
        %v4400 = vadd.f32 0.0, %v4399
        %4401 = vmatprep.mubr.f32.mxu0 0.0
        %4402 = vmatmul.mubr.f32.gmra.mrb[0].mxu0 %v4142
        %v4403 = vpop.f32.mrb[0].mxu0
        %v4404 = vadd.f32 0.0, %v4403
        %v4405 = vpop.f32.mrb[0].mxu0
        %v4406 = vadd.f32 0.0, %v4405
        %4407 = vmatprep.mubr.f32.mxu0 0.0
        %4408 = vmatmul.mubr.f32.gmra.mrb[0].mxu0 %v4143
        %v4409 = vpop.f32.mrb[0].mxu0
        %v4410 = vadd.f32 0.0, %v4409
        %v4411 = vpop.f32.mrb[0].mxu0
        %v4412 = vadd.f32 0.0, %v4411
        %4413 = vmatprep.mubr.f32.mxu0 0.0
        %4414 = vmatmul.mubr.f32.gmra.mrb[0].mxu0 %v4144
        %v4415 = vpop.f32.mrb[0].mxu0
        %v4416 = vadd.f32 0.0, %v4415
        %v4417 = vpop.f32.mrb[0].mxu0
        %v4418 = vadd.f32 0.0, %v4417
        %4419 = vmatprep.mubr.f32.mxu0 0.0
        %4420 = vmatmul.mubr.f32.gmra.mrb[0].mxu0 %v4145
        %v4421 = vpop.f32.mrb[0].mxu0
        %v4422 = vadd.f32 0.0, %v4421
        %v4423 = vpop.f32.mrb[0].mxu0
        %v4424 = vadd.f32 0.0, %v4423
        %4425 = vmatprep.mubr.f32.mxu0 0.0
        %4426 = vmatmul.mubr.f32.gmra.mrb[0].mxu0 %v4146
        %v4427 = vpop.f32.mrb[0].mxu0
        %v4428 = vadd.f32 0.0, %v4427
        %v4429 = vpop.f32.mrb[0].mxu0
        %v4430 = vadd.f32 0.0, %v4429
        %4431 = vmatprep.mubr.f32.mxu0 0.0
        %4432 = vmatmul.mubr.f32.gmra.mrb[0].mxu0 %v4147
        %v4433 = vpop.f32.mrb[0].mxu0
        %v4434 = vadd.f32 0.0, %v4433
        %v4435 = vpop.f32.mrb[0].mxu0
        %v4436 = vadd.f32 0.0, %v4435
        %4437 = vmatprep.mubr.f32.mxu0 0.0
        %4438 = vmatmul.mubr.f32.gmra.mrb[0].mxu0 %v4148
        %v4439 = vpop.f32.mrb[0].mxu0
        %v4440 = vadd.f32 0.0, %v4439
        %v4441 = vpop.f32.mrb[0].mxu0
        %v4442 = vadd.f32 0.0, %v4441
        %4443 = vmatprep.mubr.f32.mxu0 0.0
        %4444 = vmatmul.mubr.f32.gmra.mrb[0].mxu0 %v4149
        %v4445 = vpop.f32.mrb[0].mxu0
        %v4446 = vadd.f32 0.0, %v4445
        %v4447 = vpop.f32.mrb[0].mxu0
        %v4448 = vadd.f32 0.0, %v4447
        %4449 = vmatprep.mubr.f32.mxu0 0.0
        %4450 = vmatmul.mubr.f32.gmra.mrb[0].mxu0 %v4150
        %v4451 = vpop.f32.mrb[0].mxu0
        %v4452 = vadd.f32 0.0, %v4451
        %v4453 = vpop.f32.mrb[0].mxu0
        %v4454 = vadd.f32 0.0, %v4453
        %4455 = vdwg.mxu0
        %4456 = vmatprep.subr.mxu0 0.0
        %4457 = vmatpush1.msra.mxu0 %v4153
        %4458 = vmatprep.subr.mxu0 0.0
        %4459 = vmatpush1.msra.mxu0 %v4156
        %4460 = vmatprep.subr.mxu0 0.0
        %4461 = vmatpush1.msra.mxu0 %v4159
        %4462 = vmatprep.subr.mxu0 0.0
        %4463 = vmatpush1.msra.mxu0 %v4162
        %4464 = vmatprep.subr.mxu0 0.0
        %4465 = vmatpush1.msra.mxu0 %v4165
        %4466 = vmatprep.subr.mxu0 0.0
        %4467 = vmatpush1.msra.mxu0 %v4168
        %4468 = vmatprep.subr.mxu0 0.0
        %4469 = vmatpush1.msra.mxu0 %v4171
        %4470 = vmatprep.subr.mxu0 0.0
        %4471 = vmatpush1.msra.mxu0 %v4174
        %4472 = vmatprep.subr.mxu0 0.0
        %4473 = vmatpush1.msra.mxu0 %v4177
        %4474 = vmatprep.subr.mxu0 0.0
        %4475 = vmatpush1.msra.mxu0 %v4180
        %4476 = vmatprep.subr.mxu0 0.0
        %4477 = vmatpush1.msra.mxu0 %v4183
        %4478 = vmatprep.subr.mxu0 0.0
        %4479 = vmatpush1.msra.mxu0 %v4186
        %4480 = vmatprep.subr.mxu0 0.0
        %4481 = vmatpush1.msra.mxu0 %v4189
        %4482 = vmatprep.subr.mxu0 0.0
        %4483 = vmatpush1.msra.mxu0 %v4192
        %4484 = vmatprep.subr.mxu0 0.0
        %4485 = vmatpush1.msra.mxu0 %v4195
        %4486 = vmatprep.subr.mxu0 0.0
        %4487 = vmatpush1.msra.mxu0 %v4198
        %4488 = vmatprep.subr.mxu0 0.0
        %4489 = vmatpush1.msra.mxu0 0.0
        %4490 = vmatprep.subr.mxu0 0.0
        %4491 = vmatpush1.msra.mxu0 0.0
        %4492 = vmatprep.subr.mxu0 0.0
        %4493 = vmatpush1.msra.mxu0 0.0
        %4494 = vmatprep.subr.mxu0 0.0
        %4495 = vmatpush1.msra.mxu0 0.0
        %4496 = vmatprep.subr.mxu0 0.0
        %4497 = vmatpush1.msra.mxu0 0.0
        %4498 = vmatprep.subr.mxu0 0.0
        %4499 = vmatpush1.msra.mxu0 0.0
        %4500 = vmatprep.subr.mxu0 0.0
        %4501 = vmatpush1.msra.mxu0 0.0
        %4502 = vmatprep.subr.mxu0 0.0
        %4503 = vmatpush1.msra.mxu0 0.0
        %4504 = vmatprep.subr.mxu0 0.0
        %4505 = vmatpush1.msra.mxu0 0.0
        %4506 = vmatprep.subr.mxu0 0.0
        %4507 = vmatpush1.msra.mxu0 0.0
        %4508 = vmatprep.subr.mxu0 0.0
        %4509 = vmatpush1.msra.mxu0 0.0
        %4510 = vmatprep.subr.mxu0 0.0
        %4511 = vmatpush1.msra.mxu0 0.0
        %4512 = vmatprep.subr.mxu0 0.0
        %4513 = vmatpush1.msra.mxu0 0.0
        %4514 = vmatprep.subr.mxu0 0.0
        %4515 = vmatpush1.msra.mxu0 0.0
        %4516 = vmatprep.subr.mxu0 0.0
        %4517 = vmatpush1.msra.mxu0 0.0
        %4518 = vmatprep.subr.mxu0 0.0
        %4519 = vmatpush1.msra.mxu0 0.0
        %4520 = vmatprep.mubr.f32.mxu0 0.0
        %4521 = vmatmul.mubr.f32.gmra.mrb[0].mxu0 %v4119
        %v4522 = vpop.f32.mrb[0].mxu0
        %v4523 = vadd.f32 0.0, %v4522
        %v4524 = vpop.f32.mrb[0].mxu0
        %4525 = vmatprep.mubr.f32.mxu0 0.0
        %4526 = vmatmul.mubr.f32.gmra.mrb[0].mxu0 %v4120
        %v4527 = vpop.f32.mrb[0].mxu0
        %v4528 = vadd.f32 0.0, %v4527
        %v4529 = vpop.f32.mrb[0].mxu0
        %4530 = vmatprep.mubr.f32.mxu0 0.0
        %4531 = vmatmul.mubr.f32.gmra.mrb[0].mxu0 %v4121
        %v4532 = vpop.f32.mrb[0].mxu0
        %v4533 = vadd.f32 0.0, %v4532
        %v4534 = vpop.f32.mrb[0].mxu0
        %4535 = vmatprep.mubr.f32.mxu0 0.0
        %4536 = vmatmul.mubr.f32.gmra.mrb[0].mxu0 %v4122
        %v4537 = vpop.f32.mrb[0].mxu0
        %v4538 = vadd.f32 0.0, %v4537
        %v4539 = vpop.f32.mrb[0].mxu0
        %4540 = vmatprep.mubr.f32.mxu0 0.0
        %4541 = vmatmul.mubr.f32.gmra.mrb[0].mxu0 %v4123
        %v4542 = vpop.f32.mrb[0].mxu0
        %v4543 = vadd.f32 0.0, %v4542
        %v4544 = vpop.f32.mrb[0].mxu0
        %4545 = vmatprep.mubr.f32.mxu0 0.0
        %4546 = vmatmul.mubr.f32.gmra.mrb[0].mxu0 %v4124
        %v4547 = vpop.f32.mrb[0].mxu0
        %v4548 = vadd.f32 0.0, %v4547
        %v4549 = vpop.f32.mrb[0].mxu0
        %4550 = vmatprep.mubr.f32.mxu0 0.0
        %4551 = vmatmul.mubr.f32.gmra.mrb[0].mxu0 %v4125
        %v4552 = vpop.f32.mrb[0].mxu0
        %v4553 = vadd.f32 0.0, %v4552
        %v4554 = vpop.f32.mrb[0].mxu0
        %4555 = vmatprep.mubr.f32.mxu0 0.0
        %4556 = vmatmul.mubr.f32.gmra.mrb[0].mxu0 %v4126
        %v4557 = vpop.f32.mrb[0].mxu0
        %v4558 = vadd.f32 0.0, %v4557
        %v4559 = vpop.f32.mrb[0].mxu0
        %4560 = vmatprep.mubr.f32.mxu0 0.0
        %4561 = vmatmul.mubr.f32.gmra.mrb[0].mxu0 %v4127
        %v4562 = vpop.f32.mrb[0].mxu0
        %v4563 = vadd.f32 0.0, %v4562
        %v4564 = vpop.f32.mrb[0].mxu0
        %4565 = vmatprep.mubr.f32.mxu0 0.0
        %4566 = vmatmul.mubr.f32.gmra.mrb[0].mxu0 %v4128
        %v4567 = vpop.f32.mrb[0].mxu0
        %v4568 = vadd.f32 0.0, %v4567
        %v4569 = vpop.f32.mrb[0].mxu0
        %4570 = vmatprep.mubr.f32.mxu0 0.0
        %4571 = vmatmul.mubr.f32.gmra.mrb[0].mxu0 %v4129
        %v4572 = vpop.f32.mrb[0].mxu0
        %v4573 = vadd.f32 0.0, %v4572
        %v4574 = vpop.f32.mrb[0].mxu0
        %4575 = vmatprep.mubr.f32.mxu0 0.0
        %4576 = vmatmul.mubr.f32.gmra.mrb[0].mxu0 %v4130
        %v4577 = vpop.f32.mrb[0].mxu0
        %v4578 = vadd.f32 0.0, %v4577
        %v4579 = vpop.f32.mrb[0].mxu0
        %4580 = vmatprep.mubr.f32.mxu0 0.0
        %4581 = vmatmul.mubr.f32.gmra.mrb[0].mxu0 %v4131
        %v4582 = vpop.f32.mrb[0].mxu0
        %v4583 = vadd.f32 0.0, %v4582
        %v4584 = vpop.f32.mrb[0].mxu0
        %4585 = vmatprep.mubr.f32.mxu0 0.0
        %4586 = vmatmul.mubr.f32.gmra.mrb[0].mxu0 %v4132
        %v4587 = vpop.f32.mrb[0].mxu0
        %v4588 = vadd.f32 0.0, %v4587
        %v4589 = vpop.f32.mrb[0].mxu0
        %4590 = vmatprep.mubr.f32.mxu0 0.0
        %4591 = vmatmul.mubr.f32.gmra.mrb[0].mxu0 %v4133
        %v4592 = vpop.f32.mrb[0].mxu0
        %v4593 = vadd.f32 0.0, %v4592
        %v4594 = vpop.f32.mrb[0].mxu0
        %4595 = vmatprep.mubr.f32.mxu0 0.0
        %4596 = vmatmul.mubr.f32.gmra.mrb[0].mxu0 %v4134
        %v4597 = vpop.f32.mrb[0].mxu0
        %v4598 = vadd.f32 0.0, %v4597
        %v4599 = vpop.f32.mrb[0].mxu0
        %4600 = vmatprep.mubr.f32.mxu0 0.0
        %4601 = vmatmul.mubr.f32.gmra.mrb[0].mxu0 %v4135
        %v4602 = vpop.f32.mrb[0].mxu0
        %v4603 = vadd.f32 0.0, %v4602
        %v4604 = vpop.f32.mrb[0].mxu0
        %4605 = vmatprep.mubr.f32.mxu0 0.0
        %4606 = vmatmul.mubr.f32.gmra.mrb[0].mxu0 %v4136
        %v4607 = vpop.f32.mrb[0].mxu0
        %v4608 = vadd.f32 0.0, %v4607
        %v4609 = vpop.f32.mrb[0].mxu0
        %4610 = vmatprep.mubr.f32.mxu0 0.0
        %4611 = vmatmul.mubr.f32.gmra.mrb[0].mxu0 %v4137
        %v4612 = vpop.f32.mrb[0].mxu0
        %v4613 = vadd.f32 0.0, %v4612
        %v4614 = vpop.f32.mrb[0].mxu0
        %4615 = vmatprep.mubr.f32.mxu0 0.0
        %4616 = vmatmul.mubr.f32.gmra.mrb[0].mxu0 %v4138
        %v4617 = vpop.f32.mrb[0].mxu0
        %v4618 = vadd.f32 0.0, %v4617
        %v4619 = vpop.f32.mrb[0].mxu0
        %4620 = vmatprep.mubr.f32.mxu0 0.0
        %4621 = vmatmul.mubr.f32.gmra.mrb[0].mxu0 %v4139
        %v4622 = vpop.f32.mrb[0].mxu0
        %v4623 = vadd.f32 0.0, %v4622
        %v4624 = vpop.f32.mrb[0].mxu0
        %4625 = vmatprep.mubr.f32.mxu0 0.0
        %4626 = vmatmul.mubr.f32.gmra.mrb[0].mxu0 %v4140
        %v4627 = vpop.f32.mrb[0].mxu0
        %v4628 = vadd.f32 0.0, %v4627
        %v4629 = vpop.f32.mrb[0].mxu0
        %4630 = vmatprep.mubr.f32.mxu0 0.0
        %4631 = vmatmul.mubr.f32.gmra.mrb[0].mxu0 %v4141
        %v4632 = vpop.f32.mrb[0].mxu0
        %v4633 = vadd.f32 0.0, %v4632
        %v4634 = vpop.f32.mrb[0].mxu0
        %4635 = vmatprep.mubr.f32.mxu0 0.0
        %4636 = vmatmul.mubr.f32.gmra.mrb[0].mxu0 %v4142
        %v4637 = vpop.f32.mrb[0].mxu0
        %v4638 = vadd.f32 0.0, %v4637
        %v4639 = vpop.f32.mrb[0].mxu0
        %4640 = vmatprep.mubr.f32.mxu0 0.0
        %4641 = vmatmul.mubr.f32.gmra.mrb[0].mxu0 %v4143
        %v4642 = vpop.f32.mrb[0].mxu0
        %v4643 = vadd.f32 0.0, %v4642
        %v4644 = vpop.f32.mrb[0].mxu0
        %4645 = vmatprep.mubr.f32.mxu0 0.0
        %4646 = vmatmul.mubr.f32.gmra.mrb[0].mxu0 %v4144
        %v4647 = vpop.f32.mrb[0].mxu0
        %v4648 = vadd.f32 0.0, %v4647
        %v4649 = vpop.f32.mrb[0].mxu0
        %4650 = vmatprep.mubr.f32.mxu0 0.0
        %4651 = vmatmul.mubr.f32.gmra.mrb[0].mxu0 %v4145
        %v4652 = vpop.f32.mrb[0].mxu0
        %v4653 = vadd.f32 0.0, %v4652
        %v4654 = vpop.f32.mrb[0].mxu0
        %4655 = vmatprep.mubr.f32.mxu0 0.0
        %4656 = vmatmul.mubr.f32.gmra.mrb[0].mxu0 %v4146
        %v4657 = vpop.f32.mrb[0].mxu0
        %v4658 = vadd.f32 0.0, %v4657
        %v4659 = vpop.f32.mrb[0].mxu0
        %4660 = vmatprep.mubr.f32.mxu0 0.0
        %4661 = vmatmul.mubr.f32.gmra.mrb[0].mxu0 %v4147
        %v4662 = vpop.f32.mrb[0].mxu0
        %v4663 = vadd.f32 0.0, %v4662
        %v4664 = vpop.f32.mrb[0].mxu0
        %4665 = vmatprep.mubr.f32.mxu0 0.0
        %4666 = vmatmul.mubr.f32.gmra.mrb[0].mxu0 %v4148
        %v4667 = vpop.f32.mrb[0].mxu0
        %v4668 = vadd.f32 0.0, %v4667
        %v4669 = vpop.f32.mrb[0].mxu0
        %4670 = vmatprep.mubr.f32.mxu0 0.0
        %4671 = vmatmul.mubr.f32.gmra.mrb[0].mxu0 %v4149
        %v4672 = vpop.f32.mrb[0].mxu0
        %v4673 = vadd.f32 0.0, %v4672
        %v4674 = vpop.f32.mrb[0].mxu0
        %4675 = vmatprep.mubr.f32.mxu0 0.0
        %4676 = vmatmul.mubr.f32.gmra.mrb[0].mxu0 %v4150
        %v4677 = vpop.f32.mrb[0].mxu0
        %v4678 = vadd.f32 0.0, %v4677
        %v4679 = vpop.f32.mrb[0].mxu0
        %4680 = vdwg.mxu0
        %v4681 = vrot.slane %v4266, 7
        %v4682 = vrot.slane %v4272, 7
        %v4683 = vrot.slane %v4278, 7
        %v4684 = vrot.slane %v4284, 7
        %v4685 = vrot.slane %v4290, 7
        %v4686 = vrot.slane %v4296, 7
        %v4687 = vrot.slane %v4302, 7
        %v4688 = vrot.slane %v4308, 7
        %v4689 = vrot.slane %v4314, 7
        %v4690 = vrot.slane %v4320, 7
        %v4691 = vrot.slane %v4326, 7
        %v4692 = vrot.slane %v4332, 7
        %v4693 = vrot.slane %v4338, 7
        %v4694 = vrot.slane %v4344, 7
        %v4695 = vrot.slane %v4350, 7
        %v4696 = vrot.slane %v4356, 7
        %v4697 = vrot.slane %v4362, 7
        %v4698 = vrot.slane %v4368, 7
        %v4699 = vrot.slane %v4374, 7
        %v4700 = vrot.slane %v4380, 7
        %v4701 = vrot.slane %v4386, 7
        %v4702 = vrot.slane %v4392, 7
        %v4703 = vrot.slane %v4398, 7
        %v4704 = vrot.slane %v4404, 7
        %v4705 = vrot.slane %v4410, 7
        %v4706 = vrot.slane %v4416, 7
        %v4707 = vrot.slane %v4422, 7
        %v4708 = vrot.slane %v4428, 7
        %v4709 = vrot.slane %v4434, 7
        %v4710 = vrot.slane %v4440, 7
        %v4711 = vrot.slane %v4446, 7
        %v4712 = vrot.slane %v4452, 7
        %v4713 = vsel %vm1326, %v4711, %v4712
        %v4714 = vsel %vm1326, %v4710, %v4711
        %v4715 = vsel %vm1326, %v4709, %v4710
        %v4716 = vsel %vm1326, %v4708, %v4709
        %v4717 = vsel %vm1326, %v4707, %v4708
        %v4718 = vsel %vm1326, %v4706, %v4707
        %v4719 = vsel %vm1326, %v4705, %v4706
        %v4720 = vsel %vm1326, %v4704, %v4705
        %v4721 = vsel %vm1326, %v4703, %v4704
        %v4722 = vsel %vm1326, %v4702, %v4703
        %v4723 = vsel %vm1326, %v4701, %v4702
        %v4724 = vsel %vm1326, %v4700, %v4701
        %v4725 = vsel %vm1326, %v4699, %v4700
        %v4726 = vsel %vm1326, %v4698, %v4699
        %v4727 = vsel %vm1326, %v4697, %v4698
        %v4728 = vsel %vm1326, %v4696, %v4697
        %v4729 = vsel %vm1326, %v4695, %v4696
        %v4730 = vsel %vm1326, %v4694, %v4695
        %v4731 = vsel %vm1326, %v4693, %v4694
        %v4732 = vsel %vm1326, %v4692, %v4693
        %v4733 = vsel %vm1326, %v4691, %v4692
        %v4734 = vsel %vm1326, %v4690, %v4691
        %v4735 = vsel %vm1326, %v4689, %v4690
        %v4736 = vsel %vm1326, %v4688, %v4689
        %v4737 = vsel %vm1326, %v4687, %v4688
        %v4738 = vsel %vm1326, %v4686, %v4687
        %v4739 = vsel %vm1326, %v4685, %v4686
        %v4740 = vsel %vm1326, %v4684, %v4685
        %v4741 = vsel %vm1326, %v4683, %v4684
        %v4742 = vsel %vm1326, %v4682, %v4683
        %v4743 = vsel %vm1326, %v4681, %v4682
        %v4744 = vsel %vm1326, %v4712, %v4681
        %v4745 = vsel %vm1391, %v4744, 0.0
        %v4746 = vsel %vm1392, %v4743, 0.0
        %v4747 = vsel %vm1393, %v4742, 0.0
        %v4748 = vsel %vm1394, %v4741, 0.0
        %v4749 = vsel %vm1395, %v4740, 0.0
        %v4750 = vsel %vm1396, %v4739, 0.0
        %v4751 = vsel %vm1397, %v4738, 0.0
        %v4752 = vsel %vm1398, %v4737, 0.0
        %v4753 = vsel %vm1399, %v4736, 0.0
        %v4754 = vsel %vm1400, %v4735, 0.0
        %v4755 = vsel %vm1401, %v4734, 0.0
        %v4756 = vsel %vm1402, %v4733, 0.0
        %v4757 = vsel %vm1403, %v4732, 0.0
        %v4758 = vsel %vm1404, %v4731, 0.0
        %v4759 = vsel %vm1405, %v4730, 0.0
        %v4760 = vsel %vm1406, %v4729, 0.0
        %v4761 = vsel %vm1407, %v4728, 0.0
        %v4762 = vsel %vm1408, %v4727, 0.0
        %v4763 = vsel %vm1409, %v4726, 0.0
        %v4764 = vsel %vm1410, %v4725, 0.0
        %v4765 = vsel %vm1411, %v4724, 0.0
        %v4766 = vsel %vm1412, %v4723, 0.0
        %v4767 = vsel %vm1413, %v4722, 0.0
        %v4768 = vsel %vm1414, %v4721, 0.0
        %v4769 = vsel %vm1415, %v4720, 0.0
        %v4770 = vsel %vm1416, %v4719, 0.0
        %v4771 = vsel %vm1417, %v4718, 0.0
        %v4772 = vsel %vm1418, %v4717, 0.0
        %v4773 = vsel %vm1419, %v4716, 0.0
        %v4774 = vsel %vm1420, %v4715, 0.0
        %v4775 = vsel %vm1421, %v4714, 0.0
        %v4776 = vsel %vm1422, %v4713, 0.0
        %v4777 = vrot.slane %v4523, 1
        %v4778 = vrot.slane %v4528, 1
        %v4779 = vrot.slane %v4533, 1
        %v4780 = vrot.slane %v4538, 1
        %v4781 = vrot.slane %v4543, 1
        %v4782 = vrot.slane %v4548, 1
        %v4783 = vrot.slane %v4553, 1
        %v4784 = vrot.slane %v4558, 1
        %v4785 = vrot.slane %v4563, 1
        %v4786 = vrot.slane %v4568, 1
        %v4787 = vrot.slane %v4573, 1
        %v4788 = vrot.slane %v4578, 1
        %v4789 = vrot.slane %v4583, 1
        %v4790 = vrot.slane %v4588, 1
        %v4791 = vrot.slane %v4593, 1
        %v4792 = vrot.slane %v4598, 1
        %v4793 = vrot.slane %v4603, 1
        %v4794 = vrot.slane %v4608, 1
        %v4795 = vrot.slane %v4613, 1
        %v4796 = vrot.slane %v4618, 1
        %v4797 = vrot.slane %v4623, 1
        %v4798 = vrot.slane %v4628, 1
        %v4799 = vrot.slane %v4633, 1
        %v4800 = vrot.slane %v4638, 1
        %v4801 = vrot.slane %v4643, 1
        %v4802 = vrot.slane %v4648, 1
        %v4803 = vrot.slane %v4653, 1
        %v4804 = vrot.slane %v4658, 1
        %v4805 = vrot.slane %v4663, 1
        %v4806 = vrot.slane %v4668, 1
        %v4807 = vrot.slane %v4673, 1
        %v4808 = vrot.slane %v4678, 1
        %v4809 = vsel %vm1487, %v4807, %v4808
        %v4810 = vsel %vm1487, %v4806, %v4807
        %v4811 = vsel %vm1487, %v4805, %v4806
        %v4812 = vsel %vm1487, %v4804, %v4805
        %v4813 = vsel %vm1487, %v4803, %v4804
        %v4814 = vsel %vm1487, %v4802, %v4803
        %v4815 = vsel %vm1487, %v4801, %v4802
        %v4816 = vsel %vm1487, %v4800, %v4801
        %v4817 = vsel %vm1487, %v4799, %v4800
        %v4818 = vsel %vm1487, %v4798, %v4799
        %v4819 = vsel %vm1487, %v4797, %v4798
        %v4820 = vsel %vm1487, %v4796, %v4797
        %v4821 = vsel %vm1487, %v4795, %v4796
        %v4822 = vsel %vm1487, %v4794, %v4795
        %v4823 = vsel %vm1487, %v4793, %v4794
        %v4824 = vsel %vm1487, %v4792, %v4793
        %v4825 = vsel %vm1487, %v4791, %v4792
        %v4826 = vsel %vm1487, %v4790, %v4791
        %v4827 = vsel %vm1487, %v4789, %v4790
        %v4828 = vsel %vm1487, %v4788, %v4789
        %v4829 = vsel %vm1487, %v4787, %v4788
        %v4830 = vsel %vm1487, %v4786, %v4787
        %v4831 = vsel %vm1487, %v4785, %v4786
        %v4832 = vsel %vm1487, %v4784, %v4785
        %v4833 = vsel %vm1487, %v4783, %v4784
        %v4834 = vsel %vm1487, %v4782, %v4783
        %v4835 = vsel %vm1487, %v4781, %v4782
        %v4836 = vsel %vm1487, %v4780, %v4781
        %v4837 = vsel %vm1487, %v4779, %v4780
        %v4838 = vsel %vm1487, %v4778, %v4779
        %v4839 = vsel %vm1487, %v4777, %v4778
        %v4840 = vsel %vm1487, %v4808, %v4777
        %v4841 = vsel %vm1552, %v4839, 0.0
        %v4842 = vsel %vm1553, %v4838, 0.0
        %v4843 = vsel %vm1554, %v4837, 0.0
        %v4844 = vsel %vm1555, %v4836, 0.0
        %v4845 = vsel %vm1556, %v4835, 0.0
        %v4846 = vsel %vm1557, %v4834, 0.0
        %v4847 = vsel %vm1558, %v4833, 0.0
        %v4848 = vsel %vm1559, %v4832, 0.0
        %v4849 = vsel %vm1560, %v4831, 0.0
        %v4850 = vsel %vm1561, %v4830, 0.0
        %v4851 = vsel %vm1562, %v4829, 0.0
        %v4852 = vsel %vm1563, %v4828, 0.0
        %v4853 = vsel %vm1564, %v4827, 0.0
        %v4854 = vsel %vm1565, %v4826, 0.0
        %v4855 = vsel %vm1566, %v4825, 0.0
        %v4856 = vsel %vm1567, %v4824, 0.0
        %v4857 = vsel %vm1568, %v4823, 0.0
        %v4858 = vsel %vm1569, %v4822, 0.0
        %v4859 = vsel %vm1570, %v4821, 0.0
        %v4860 = vsel %vm1571, %v4820, 0.0
        %v4861 = vsel %vm1572, %v4819, 0.0
        %v4862 = vsel %vm1573, %v4818, 0.0
        %v4863 = vsel %vm1574, %v4817, 0.0
        %v4864 = vsel %vm1575, %v4816, 0.0
        %v4865 = vsel %vm1576, %v4815, 0.0
        %v4866 = vsel %vm1577, %v4814, 0.0
        %v4867 = vsel %vm1578, %v4813, 0.0
        %v4868 = vsel %vm1579, %v4812, 0.0
        %v4869 = vsel %vm1580, %v4811, 0.0
        %v4870 = vsel %vm1581, %v4810, 0.0
        %v4871 = vsel %vm1582, %v4809, 0.0
        %v4872 = vsel %vm1583, %v4840, 0.0
        %v4873 = vadd.f32 %v4745, %v4268
        %v4874 = vadd.f32 %v4746, %v4274
        %v4875 = vadd.f32 %v4747, %v4280
        %v4876 = vadd.f32 %v4748, %v4286
        %v4877 = vadd.f32 %v4749, %v4292
        %v4878 = vadd.f32 %v4750, %v4298
        %v4879 = vadd.f32 %v4751, %v4304
        %v4880 = vadd.f32 %v4752, %v4310
        %v4881 = vadd.f32 %v4753, %v4316
        %v4882 = vadd.f32 %v4754, %v4322
        %v4883 = vadd.f32 %v4755, %v4328
        %v4884 = vadd.f32 %v4756, %v4334
        %v4885 = vadd.f32 %v4757, %v4340
        %v4886 = vadd.f32 %v4758, %v4346
        %v4887 = vadd.f32 %v4759, %v4352
        %v4888 = vadd.f32 %v4760, %v4358
        %v4889 = vadd.f32 %v4761, %v4364
        %v4890 = vadd.f32 %v4762, %v4370
        %v4891 = vadd.f32 %v4763, %v4376
        %v4892 = vadd.f32 %v4764, %v4382
        %v4893 = vadd.f32 %v4765, %v4388
        %v4894 = vadd.f32 %v4766, %v4394
        %v4895 = vadd.f32 %v4767, %v4400
        %v4896 = vadd.f32 %v4768, %v4406
        %v4897 = vadd.f32 %v4769, %v4412
        %v4898 = vadd.f32 %v4770, %v4418
        %v4899 = vadd.f32 %v4771, %v4424
        %v4900 = vadd.f32 %v4772, %v4430
        %v4901 = vadd.f32 %v4773, %v4436
        %v4902 = vadd.f32 %v4774, %v4442
        %v4903 = vadd.f32 %v4775, %v4448
        %v4904 = vadd.f32 %v4776, %v4454
        %v4905 = vadd.f32 %v4873, %v4841
        %v4906 = vadd.f32 %v4874, %v4842
        %v4907 = vadd.f32 %v4875, %v4843
        %v4908 = vadd.f32 %v4876, %v4844
        %v4909 = vadd.f32 %v4877, %v4845
        %v4910 = vadd.f32 %v4878, %v4846
        %v4911 = vadd.f32 %v4879, %v4847
        %v4912 = vadd.f32 %v4880, %v4848
        %v4913 = vadd.f32 %v4881, %v4849
        %v4914 = vadd.f32 %v4882, %v4850
        %v4915 = vadd.f32 %v4883, %v4851
        %v4916 = vadd.f32 %v4884, %v4852
        %v4917 = vadd.f32 %v4885, %v4853
        %v4918 = vadd.f32 %v4886, %v4854
        %v4919 = vadd.f32 %v4887, %v4855
        %v4920 = vadd.f32 %v4888, %v4856
        %v4921 = vadd.f32 %v4889, %v4857
        %v4922 = vadd.f32 %v4890, %v4858
        %v4923 = vadd.f32 %v4891, %v4859
        %v4924 = vadd.f32 %v4892, %v4860
        %v4925 = vadd.f32 %v4893, %v4861
        %v4926 = vadd.f32 %v4894, %v4862
        %v4927 = vadd.f32 %v4895, %v4863
        %v4928 = vadd.f32 %v4896, %v4864
        %v4929 = vadd.f32 %v4897, %v4865
        %v4930 = vadd.f32 %v4898, %v4866
        %v4931 = vadd.f32 %v4899, %v4867
        %v4932 = vadd.f32 %v4900, %v4868
        %v4933 = vadd.f32 %v4901, %v4869
        %v4934 = vadd.f32 %v4902, %v4870
        %v4935 = vadd.f32 %v4903, %v4871
        %v4936 = vadd.f32 %v4904, %v4872
        %v4937 = vld [vmem:[#allocation7 + $0x5] ss:$0 sm:$0xff]
        %v4938 = vadd.f32 %v4905, %v4937
        %v4939 = vadd.f32 %v4906, %v4937
        %v4940 = vadd.f32 %v4907, %v4937
        %v4941 = vadd.f32 %v4908, %v4937
        %v4942 = vadd.f32 %v4909, %v4937
        %v4943 = vadd.f32 %v4910, %v4937
        %v4944 = vadd.f32 %v4911, %v4937
        %v4945 = vadd.f32 %v4912, %v4937
        %v4946 = vadd.f32 %v4913, %v4937
        %v4947 = vadd.f32 %v4914, %v4937
        %v4948 = vadd.f32 %v4915, %v4937
        %v4949 = vadd.f32 %v4916, %v4937
        %v4950 = vadd.f32 %v4917, %v4937
        %v4951 = vadd.f32 %v4918, %v4937
        %v4952 = vadd.f32 %v4919, %v4937
        %v4953 = vadd.f32 %v4920, %v4937
        %v4954 = vadd.f32 %v4921, %v4937
        %v4955 = vadd.f32 %v4922, %v4937
        %v4956 = vadd.f32 %v4923, %v4937
        %v4957 = vadd.f32 %v4924, %v4937
        %v4958 = vadd.f32 %v4925, %v4937
        %v4959 = vadd.f32 %v4926, %v4937
        %v4960 = vadd.f32 %v4927, %v4937
        %v4961 = vadd.f32 %v4928, %v4937
        %v4962 = vadd.f32 %v4929, %v4937
        %v4963 = vadd.f32 %v4930, %v4937
        %v4964 = vadd.f32 %v4931, %v4937
        %v4965 = vadd.f32 %v4932, %v4937
        %v4966 = vadd.f32 %v4933, %v4937
        %v4967 = vadd.f32 %v4934, %v4937
        %v4968 = vadd.f32 %v4935, %v4937
        %v4969 = vadd.f32 %v4936, %v4937
        %v4970 = vld [vmem:[#allocation5 + $0x900] sm:$0xff]
        %v4971 = vld [vmem:[#allocation5 + $0x908] sm:$0xff]
        %v4972 = vld [vmem:[#allocation5 + $0x910] sm:$0xff]
        %v4973 = vld [vmem:[#allocation5 + $0x918] sm:$0xff]
        %v4974 = vld [vmem:[#allocation5 + $0x920] sm:$0xff]
        %v4975 = vld [vmem:[#allocation5 + $0x928] sm:$0xff]
        %v4976 = vld [vmem:[#allocation5 + $0x930] sm:$0xff]
        %v4977 = vld [vmem:[#allocation5 + $0x938] sm:$0xff]
        %v4978 = vld [vmem:[#allocation5 + $0x940] sm:$0xff]
        %v4979 = vld [vmem:[#allocation5 + $0x948] sm:$0xff]
        %v4980 = vld [vmem:[#allocation5 + $0x950] sm:$0xff]
        %v4981 = vld [vmem:[#allocation5 + $0x958] sm:$0xff]
        %v4982 = vld [vmem:[#allocation5 + $0x960] sm:$0xff]
        %v4983 = vld [vmem:[#allocation5 + $0x968] sm:$0xff]
        %v4984 = vld [vmem:[#allocation5 + $0x970] sm:$0xff]
        %v4985 = vld [vmem:[#allocation5 + $0x978] sm:$0xff]
        %v4986 = vld [vmem:[#allocation5 + $0x980] sm:$0xff]
        %v4987 = vld [vmem:[#allocation5 + $0x988] sm:$0xff]
        %v4988 = vld [vmem:[#allocation5 + $0x990] sm:$0xff]
        %v4989 = vld [vmem:[#allocation5 + $0x998] sm:$0xff]
        %v4990 = vld [vmem:[#allocation5 + $0x9a0] sm:$0xff]
        %v4991 = vld [vmem:[#allocation5 + $0x9a8] sm:$0xff]
        %v4992 = vld [vmem:[#allocation5 + $0x9b0] sm:$0xff]
        %v4993 = vld [vmem:[#allocation5 + $0x9b8] sm:$0xff]
        %v4994 = vld [vmem:[#allocation5 + $0x9c0] sm:$0xff]
        %v4995 = vld [vmem:[#allocation5 + $0x9c8] sm:$0xff]
        %v4996 = vld [vmem:[#allocation5 + $0x9d0] sm:$0xff]
        %v4997 = vld [vmem:[#allocation5 + $0x9d8] sm:$0xff]
        %v4998 = vld [vmem:[#allocation5 + $0x9e0] sm:$0xff]
        %v4999 = vld [vmem:[#allocation5 + $0x9e8] sm:$0xff]
        %v5000 = vld [vmem:[#allocation5 + $0x9f0] sm:$0xff]
        %v5001 = vld [vmem:[#allocation5 + $0x9f8] sm:$0xff]
        %v5002 = vld [vmem:[#allocation5 + $0xa00] sm:$0xff]
        %v5003 = vld [vmem:[#allocation5 + $0xa08] sm:$0xff]
        %v5004 = vld [vmem:[#allocation5 + $0xa10] sm:$0xff]
        %v5005 = vld [vmem:[#allocation5 + $0xa18] sm:$0xff]
        %v5006 = vld [vmem:[#allocation5 + $0xa20] sm:$0xff]
        %v5007 = vld [vmem:[#allocation5 + $0xa28] sm:$0xff]
        %v5008 = vld [vmem:[#allocation5 + $0xa30] sm:$0xff]
        %v5009 = vld [vmem:[#allocation5 + $0xa38] sm:$0xff]
        %v5010 = vld [vmem:[#allocation5 + $0xa40] sm:$0xff]
        %v5011 = vld [vmem:[#allocation5 + $0xa48] sm:$0xff]
        %v5012 = vld [vmem:[#allocation5 + $0xa50] sm:$0xff]
        %v5013 = vld [vmem:[#allocation5 + $0xa58] sm:$0xff]
        %v5014 = vld [vmem:[#allocation5 + $0xa60] sm:$0xff]
        %v5015 = vld [vmem:[#allocation5 + $0xa68] sm:$0xff]
        %v5016 = vld [vmem:[#allocation5 + $0xa70] sm:$0xff]
        %v5017 = vld [vmem:[#allocation5 + $0xa78] sm:$0xff]
        %5018 = vmatprep.subr.mxu0 %v4971
        %5019 = vmatpush1.msra.mxu0 %v4970
        %5020 = vmatprep.subr.mxu0 %v4974
        %5021 = vmatpush1.msra.mxu0 %v4973
        %5022 = vmatprep.subr.mxu0 %v4977
        %5023 = vmatpush1.msra.mxu0 %v4976
        %5024 = vmatprep.subr.mxu0 %v4980
        %5025 = vmatpush1.msra.mxu0 %v4979
        %5026 = vmatprep.subr.mxu0 %v4983
        %5027 = vmatpush1.msra.mxu0 %v4982
        %5028 = vmatprep.subr.mxu0 %v4986
        %5029 = vmatpush1.msra.mxu0 %v4985
        %5030 = vmatprep.subr.mxu0 %v4989
        %5031 = vmatpush1.msra.mxu0 %v4988
        %5032 = vmatprep.subr.mxu0 %v4992
        %5033 = vmatpush1.msra.mxu0 %v4991
        %5034 = vmatprep.subr.mxu0 %v4995
        %5035 = vmatpush1.msra.mxu0 %v4994
        %5036 = vmatprep.subr.mxu0 %v4998
        %5037 = vmatpush1.msra.mxu0 %v4997
        %5038 = vmatprep.subr.mxu0 %v5001
        %5039 = vmatpush1.msra.mxu0 %v5000
        %5040 = vmatprep.subr.mxu0 %v5004
        %5041 = vmatpush1.msra.mxu0 %v5003
        %5042 = vmatprep.subr.mxu0 %v5007
        %5043 = vmatpush1.msra.mxu0 %v5006
        %5044 = vmatprep.subr.mxu0 %v5010
        %5045 = vmatpush1.msra.mxu0 %v5009
        %5046 = vmatprep.subr.mxu0 %v5013
        %5047 = vmatpush1.msra.mxu0 %v5012
        %5048 = vmatprep.subr.mxu0 %v5016
        %5049 = vmatpush1.msra.mxu0 %v5015
        %5050 = vmatprep.subr.mxu0 0.0
        %5051 = vmatpush1.msra.mxu0 0.0
        %5052 = vmatprep.subr.mxu0 0.0
        %5053 = vmatpush1.msra.mxu0 0.0
        %5054 = vmatprep.subr.mxu0 0.0
        %5055 = vmatpush1.msra.mxu0 0.0
        %5056 = vmatprep.subr.mxu0 0.0
        %5057 = vmatpush1.msra.mxu0 0.0
        %5058 = vmatprep.subr.mxu0 0.0
        %5059 = vmatpush1.msra.mxu0 0.0
        %5060 = vmatprep.subr.mxu0 0.0
        %5061 = vmatpush1.msra.mxu0 0.0
        %5062 = vmatprep.subr.mxu0 0.0
        %5063 = vmatpush1.msra.mxu0 0.0
        %5064 = vmatprep.subr.mxu0 0.0
        %5065 = vmatpush1.msra.mxu0 0.0
        %5066 = vmatprep.subr.mxu0 0.0
        %5067 = vmatpush1.msra.mxu0 0.0
        %5068 = vmatprep.subr.mxu0 0.0
        %5069 = vmatpush1.msra.mxu0 0.0
        %5070 = vmatprep.subr.mxu0 0.0
        %5071 = vmatpush1.msra.mxu0 0.0
        %5072 = vmatprep.subr.mxu0 0.0
        %5073 = vmatpush1.msra.mxu0 0.0
        %5074 = vmatprep.subr.mxu0 0.0
        %5075 = vmatpush1.msra.mxu0 0.0
        %5076 = vmatprep.subr.mxu0 0.0
        %5077 = vmatpush1.msra.mxu0 0.0
        %5078 = vmatprep.subr.mxu0 0.0
        %5079 = vmatpush1.msra.mxu0 0.0
        %5080 = vmatprep.subr.mxu0 0.0
        %5081 = vmatpush1.msra.mxu0 0.0
        %5082 = vmatprep.mubr.f32.mxu0 0.0
        %5083 = vmatmul.mubr.f32.gmra.mrb[0].mxu0 %v4938
        %v5084 = vpop.f32.mrb[0].mxu0
        %v5085 = vadd.f32 0.0, %v5084
        %v5086 = vpop.f32.mrb[0].mxu0
        %v5087 = vadd.f32 0.0, %v5086
        %5088 = vmatprep.mubr.f32.mxu0 0.0
        %5089 = vmatmul.mubr.f32.gmra.mrb[0].mxu0 %v4939
        %v5090 = vpop.f32.mrb[0].mxu0
        %v5091 = vadd.f32 0.0, %v5090
        %v5092 = vpop.f32.mrb[0].mxu0
        %v5093 = vadd.f32 0.0, %v5092
        %5094 = vmatprep.mubr.f32.mxu0 0.0
        %5095 = vmatmul.mubr.f32.gmra.mrb[0].mxu0 %v4940
        %v5096 = vpop.f32.mrb[0].mxu0
        %v5097 = vadd.f32 0.0, %v5096
        %v5098 = vpop.f32.mrb[0].mxu0
        %v5099 = vadd.f32 0.0, %v5098
        %5100 = vmatprep.mubr.f32.mxu0 0.0
        %5101 = vmatmul.mubr.f32.gmra.mrb[0].mxu0 %v4941
        %v5102 = vpop.f32.mrb[0].mxu0
        %v5103 = vadd.f32 0.0, %v5102
        %v5104 = vpop.f32.mrb[0].mxu0
        %v5105 = vadd.f32 0.0, %v5104
        %5106 = vmatprep.mubr.f32.mxu0 0.0
        %5107 = vmatmul.mubr.f32.gmra.mrb[0].mxu0 %v4942
        %v5108 = vpop.f32.mrb[0].mxu0
        %v5109 = vadd.f32 0.0, %v5108
        %v5110 = vpop.f32.mrb[0].mxu0
        %v5111 = vadd.f32 0.0, %v5110
        %5112 = vmatprep.mubr.f32.mxu0 0.0
        %5113 = vmatmul.mubr.f32.gmra.mrb[0].mxu0 %v4943
        %v5114 = vpop.f32.mrb[0].mxu0
        %v5115 = vadd.f32 0.0, %v5114
        %v5116 = vpop.f32.mrb[0].mxu0
        %v5117 = vadd.f32 0.0, %v5116
        %5118 = vmatprep.mubr.f32.mxu0 0.0
        %5119 = vmatmul.mubr.f32.gmra.mrb[0].mxu0 %v4944
        %v5120 = vpop.f32.mrb[0].mxu0
        %v5121 = vadd.f32 0.0, %v5120
        %v5122 = vpop.f32.mrb[0].mxu0
        %v5123 = vadd.f32 0.0, %v5122
        %5124 = vmatprep.mubr.f32.mxu0 0.0
        %5125 = vmatmul.mubr.f32.gmra.mrb[0].mxu0 %v4945
        %v5126 = vpop.f32.mrb[0].mxu0
        %v5127 = vadd.f32 0.0, %v5126
        %v5128 = vpop.f32.mrb[0].mxu0
        %v5129 = vadd.f32 0.0, %v5128
        %5130 = vmatprep.mubr.f32.mxu0 0.0
        %5131 = vmatmul.mubr.f32.gmra.mrb[0].mxu0 %v4946
        %v5132 = vpop.f32.mrb[0].mxu0
        %v5133 = vadd.f32 0.0, %v5132
        %v5134 = vpop.f32.mrb[0].mxu0
        %v5135 = vadd.f32 0.0, %v5134
        %5136 = vmatprep.mubr.f32.mxu0 0.0
        %5137 = vmatmul.mubr.f32.gmra.mrb[0].mxu0 %v4947
        %v5138 = vpop.f32.mrb[0].mxu0
        %v5139 = vadd.f32 0.0, %v5138
        %v5140 = vpop.f32.mrb[0].mxu0
        %v5141 = vadd.f32 0.0, %v5140
        %5142 = vmatprep.mubr.f32.mxu0 0.0
        %5143 = vmatmul.mubr.f32.gmra.mrb[0].mxu0 %v4948
        %v5144 = vpop.f32.mrb[0].mxu0
        %v5145 = vadd.f32 0.0, %v5144
        %v5146 = vpop.f32.mrb[0].mxu0
        %v5147 = vadd.f32 0.0, %v5146
        %5148 = vmatprep.mubr.f32.mxu0 0.0
        %5149 = vmatmul.mubr.f32.gmra.mrb[0].mxu0 %v4949
        %v5150 = vpop.f32.mrb[0].mxu0
        %v5151 = vadd.f32 0.0, %v5150
        %v5152 = vpop.f32.mrb[0].mxu0
        %v5153 = vadd.f32 0.0, %v5152
        %5154 = vmatprep.mubr.f32.mxu0 0.0
        %5155 = vmatmul.mubr.f32.gmra.mrb[0].mxu0 %v4950
        %v5156 = vpop.f32.mrb[0].mxu0
        %v5157 = vadd.f32 0.0, %v5156
        %v5158 = vpop.f32.mrb[0].mxu0
        %v5159 = vadd.f32 0.0, %v5158
        %5160 = vmatprep.mubr.f32.mxu0 0.0
        %5161 = vmatmul.mubr.f32.gmra.mrb[0].mxu0 %v4951
        %v5162 = vpop.f32.mrb[0].mxu0
        %v5163 = vadd.f32 0.0, %v5162
        %v5164 = vpop.f32.mrb[0].mxu0
        %v5165 = vadd.f32 0.0, %v5164
        %5166 = vmatprep.mubr.f32.mxu0 0.0
        %5167 = vmatmul.mubr.f32.gmra.mrb[0].mxu0 %v4952
        %v5168 = vpop.f32.mrb[0].mxu0
        %v5169 = vadd.f32 0.0, %v5168
        %v5170 = vpop.f32.mrb[0].mxu0
        %v5171 = vadd.f32 0.0, %v5170
        %5172 = vmatprep.mubr.f32.mxu0 0.0
        %5173 = vmatmul.mubr.f32.gmra.mrb[0].mxu0 %v4953
        %v5174 = vpop.f32.mrb[0].mxu0
        %v5175 = vadd.f32 0.0, %v5174
        %v5176 = vpop.f32.mrb[0].mxu0
        %v5177 = vadd.f32 0.0, %v5176
        %5178 = vmatprep.mubr.f32.mxu0 0.0
        %5179 = vmatmul.mubr.f32.gmra.mrb[0].mxu0 %v4954
        %v5180 = vpop.f32.mrb[0].mxu0
        %v5181 = vadd.f32 0.0, %v5180
        %v5182 = vpop.f32.mrb[0].mxu0
        %v5183 = vadd.f32 0.0, %v5182
        %5184 = vmatprep.mubr.f32.mxu0 0.0
        %5185 = vmatmul.mubr.f32.gmra.mrb[0].mxu0 %v4955
        %v5186 = vpop.f32.mrb[0].mxu0
        %v5187 = vadd.f32 0.0, %v5186
        %v5188 = vpop.f32.mrb[0].mxu0
        %v5189 = vadd.f32 0.0, %v5188
        %5190 = vmatprep.mubr.f32.mxu0 0.0
        %5191 = vmatmul.mubr.f32.gmra.mrb[0].mxu0 %v4956
        %v5192 = vpop.f32.mrb[0].mxu0
        %v5193 = vadd.f32 0.0, %v5192
        %v5194 = vpop.f32.mrb[0].mxu0
        %v5195 = vadd.f32 0.0, %v5194
        %5196 = vmatprep.mubr.f32.mxu0 0.0
        %5197 = vmatmul.mubr.f32.gmra.mrb[0].mxu0 %v4957
        %v5198 = vpop.f32.mrb[0].mxu0
        %v5199 = vadd.f32 0.0, %v5198
        %v5200 = vpop.f32.mrb[0].mxu0
        %v5201 = vadd.f32 0.0, %v5200
        %5202 = vmatprep.mubr.f32.mxu0 0.0
        %5203 = vmatmul.mubr.f32.gmra.mrb[0].mxu0 %v4958
        %v5204 = vpop.f32.mrb[0].mxu0
        %v5205 = vadd.f32 0.0, %v5204
        %v5206 = vpop.f32.mrb[0].mxu0
        %v5207 = vadd.f32 0.0, %v5206
        %5208 = vmatprep.mubr.f32.mxu0 0.0
        %5209 = vmatmul.mubr.f32.gmra.mrb[0].mxu0 %v4959
        %v5210 = vpop.f32.mrb[0].mxu0
        %v5211 = vadd.f32 0.0, %v5210
        %v5212 = vpop.f32.mrb[0].mxu0
        %v5213 = vadd.f32 0.0, %v5212
        %5214 = vmatprep.mubr.f32.mxu0 0.0
        %5215 = vmatmul.mubr.f32.gmra.mrb[0].mxu0 %v4960
        %v5216 = vpop.f32.mrb[0].mxu0
        %v5217 = vadd.f32 0.0, %v5216
        %v5218 = vpop.f32.mrb[0].mxu0
        %v5219 = vadd.f32 0.0, %v5218
        %5220 = vmatprep.mubr.f32.mxu0 0.0
        %5221 = vmatmul.mubr.f32.gmra.mrb[0].mxu0 %v4961
        %v5222 = vpop.f32.mrb[0].mxu0
        %v5223 = vadd.f32 0.0, %v5222
        %v5224 = vpop.f32.mrb[0].mxu0
        %v5225 = vadd.f32 0.0, %v5224
        %5226 = vmatprep.mubr.f32.mxu0 0.0
        %5227 = vmatmul.mubr.f32.gmra.mrb[0].mxu0 %v4962
        %v5228 = vpop.f32.mrb[0].mxu0
        %v5229 = vadd.f32 0.0, %v5228
        %v5230 = vpop.f32.mrb[0].mxu0
        %v5231 = vadd.f32 0.0, %v5230
        %5232 = vmatprep.mubr.f32.mxu0 0.0
        %5233 = vmatmul.mubr.f32.gmra.mrb[0].mxu0 %v4963
        %v5234 = vpop.f32.mrb[0].mxu0
        %v5235 = vadd.f32 0.0, %v5234
        %v5236 = vpop.f32.mrb[0].mxu0
        %v5237 = vadd.f32 0.0, %v5236
        %5238 = vmatprep.mubr.f32.mxu0 0.0
        %5239 = vmatmul.mubr.f32.gmra.mrb[0].mxu0 %v4964
        %v5240 = vpop.f32.mrb[0].mxu0
        %v5241 = vadd.f32 0.0, %v5240
        %v5242 = vpop.f32.mrb[0].mxu0
        %v5243 = vadd.f32 0.0, %v5242
        %5244 = vmatprep.mubr.f32.mxu0 0.0
        %5245 = vmatmul.mubr.f32.gmra.mrb[0].mxu0 %v4965
        %v5246 = vpop.f32.mrb[0].mxu0
        %v5247 = vadd.f32 0.0, %v5246
        %v5248 = vpop.f32.mrb[0].mxu0
        %v5249 = vadd.f32 0.0, %v5248
        %5250 = vmatprep.mubr.f32.mxu0 0.0
        %5251 = vmatmul.mubr.f32.gmra.mrb[0].mxu0 %v4966
        %v5252 = vpop.f32.mrb[0].mxu0
        %v5253 = vadd.f32 0.0, %v5252
        %v5254 = vpop.f32.mrb[0].mxu0
        %v5255 = vadd.f32 0.0, %v5254
        %5256 = vmatprep.mubr.f32.mxu0 0.0
        %5257 = vmatmul.mubr.f32.gmra.mrb[0].mxu0 %v4967
        %v5258 = vpop.f32.mrb[0].mxu0
        %v5259 = vadd.f32 0.0, %v5258
        %v5260 = vpop.f32.mrb[0].mxu0
        %v5261 = vadd.f32 0.0, %v5260
        %5262 = vmatprep.mubr.f32.mxu0 0.0
        %5263 = vmatmul.mubr.f32.gmra.mrb[0].mxu0 %v4968
        %v5264 = vpop.f32.mrb[0].mxu0
        %v5265 = vadd.f32 0.0, %v5264
        %v5266 = vpop.f32.mrb[0].mxu0
        %v5267 = vadd.f32 0.0, %v5266
        %5268 = vmatprep.mubr.f32.mxu0 0.0
        %5269 = vmatmul.mubr.f32.gmra.mrb[0].mxu0 %v4969
        %v5270 = vpop.f32.mrb[0].mxu0
        %v5271 = vadd.f32 0.0, %v5270
        %v5272 = vpop.f32.mrb[0].mxu0
        %v5273 = vadd.f32 0.0, %v5272
        %5274 = vdwg.mxu0
        %5275 = vmatprep.subr.mxu0 0.0
        %5276 = vmatpush1.msra.mxu0 %v4972
        %5277 = vmatprep.subr.mxu0 0.0
        %5278 = vmatpush1.msra.mxu0 %v4975
        %5279 = vmatprep.subr.mxu0 0.0
        %5280 = vmatpush1.msra.mxu0 %v4978
        %5281 = vmatprep.subr.mxu0 0.0
        %5282 = vmatpush1.msra.mxu0 %v4981
        %5283 = vmatprep.subr.mxu0 0.0
        %5284 = vmatpush1.msra.mxu0 %v4984
        %5285 = vmatprep.subr.mxu0 0.0
        %5286 = vmatpush1.msra.mxu0 %v4987
        %5287 = vmatprep.subr.mxu0 0.0
        %5288 = vmatpush1.msra.mxu0 %v4990
        %5289 = vmatprep.subr.mxu0 0.0
        %5290 = vmatpush1.msra.mxu0 %v4993
        %5291 = vmatprep.subr.mxu0 0.0
        %5292 = vmatpush1.msra.mxu0 %v4996
        %5293 = vmatprep.subr.mxu0 0.0
        %5294 = vmatpush1.msra.mxu0 %v4999
        %5295 = vmatprep.subr.mxu0 0.0
        %5296 = vmatpush1.msra.mxu0 %v5002
        %5297 = vmatprep.subr.mxu0 0.0
        %5298 = vmatpush1.msra.mxu0 %v5005
        %5299 = vmatprep.subr.mxu0 0.0
        %5300 = vmatpush1.msra.mxu0 %v5008
        %5301 = vmatprep.subr.mxu0 0.0
        %5302 = vmatpush1.msra.mxu0 %v5011
        %5303 = vmatprep.subr.mxu0 0.0
        %5304 = vmatpush1.msra.mxu0 %v5014
        %5305 = vmatprep.subr.mxu0 0.0
        %5306 = vmatpush1.msra.mxu0 %v5017
        %5307 = vmatprep.subr.mxu0 0.0
        %5308 = vmatpush1.msra.mxu0 0.0
        %5309 = vmatprep.subr.mxu0 0.0
        %5310 = vmatpush1.msra.mxu0 0.0
        %5311 = vmatprep.subr.mxu0 0.0
        %5312 = vmatpush1.msra.mxu0 0.0
        %5313 = vmatprep.subr.mxu0 0.0
        %5314 = vmatpush1.msra.mxu0 0.0
        %5315 = vmatprep.subr.mxu0 0.0
        %5316 = vmatpush1.msra.mxu0 0.0
        %5317 = vmatprep.subr.mxu0 0.0
        %5318 = vmatpush1.msra.mxu0 0.0
        %5319 = vmatprep.subr.mxu0 0.0
        %5320 = vmatpush1.msra.mxu0 0.0
        %5321 = vmatprep.subr.mxu0 0.0
        %5322 = vmatpush1.msra.mxu0 0.0
        %5323 = vmatprep.subr.mxu0 0.0
        %5324 = vmatpush1.msra.mxu0 0.0
        %5325 = vmatprep.subr.mxu0 0.0
        %5326 = vmatpush1.msra.mxu0 0.0
        %5327 = vmatprep.subr.mxu0 0.0
        %5328 = vmatpush1.msra.mxu0 0.0
        %5329 = vmatprep.subr.mxu0 0.0
        %5330 = vmatpush1.msra.mxu0 0.0
        %5331 = vmatprep.subr.mxu0 0.0
        %5332 = vmatpush1.msra.mxu0 0.0
        %5333 = vmatprep.subr.mxu0 0.0
        %5334 = vmatpush1.msra.mxu0 0.0
        %5335 = vmatprep.subr.mxu0 0.0
        %5336 = vmatpush1.msra.mxu0 0.0
        %5337 = vmatprep.subr.mxu0 0.0
        %5338 = vmatpush1.msra.mxu0 0.0
        %5339 = vmatprep.mubr.f32.mxu0 0.0
        %5340 = vmatmul.mubr.f32.gmra.mrb[0].mxu0 %v4938
        %v5341 = vpop.f32.mrb[0].mxu0
        %v5342 = vadd.f32 0.0, %v5341
        %v5343 = vpop.f32.mrb[0].mxu0
        %5344 = vmatprep.mubr.f32.mxu0 0.0
        %5345 = vmatmul.mubr.f32.gmra.mrb[0].mxu0 %v4939
        %v5346 = vpop.f32.mrb[0].mxu0
        %v5347 = vadd.f32 0.0, %v5346
        %v5348 = vpop.f32.mrb[0].mxu0
        %5349 = vmatprep.mubr.f32.mxu0 0.0
        %5350 = vmatmul.mubr.f32.gmra.mrb[0].mxu0 %v4940
        %v5351 = vpop.f32.mrb[0].mxu0
        %v5352 = vadd.f32 0.0, %v5351
        %v5353 = vpop.f32.mrb[0].mxu0
        %5354 = vmatprep.mubr.f32.mxu0 0.0
        %5355 = vmatmul.mubr.f32.gmra.mrb[0].mxu0 %v4941
        %v5356 = vpop.f32.mrb[0].mxu0
        %v5357 = vadd.f32 0.0, %v5356
        %v5358 = vpop.f32.mrb[0].mxu0
        %5359 = vmatprep.mubr.f32.mxu0 0.0
        %5360 = vmatmul.mubr.f32.gmra.mrb[0].mxu0 %v4942
        %v5361 = vpop.f32.mrb[0].mxu0
        %v5362 = vadd.f32 0.0, %v5361
        %v5363 = vpop.f32.mrb[0].mxu0
        %5364 = vmatprep.mubr.f32.mxu0 0.0
        %5365 = vmatmul.mubr.f32.gmra.mrb[0].mxu0 %v4943
        %v5366 = vpop.f32.mrb[0].mxu0
        %v5367 = vadd.f32 0.0, %v5366
        %v5368 = vpop.f32.mrb[0].mxu0
        %5369 = vmatprep.mubr.f32.mxu0 0.0
        %5370 = vmatmul.mubr.f32.gmra.mrb[0].mxu0 %v4944
        %v5371 = vpop.f32.mrb[0].mxu0
        %v5372 = vadd.f32 0.0, %v5371
        %v5373 = vpop.f32.mrb[0].mxu0
        %5374 = vmatprep.mubr.f32.mxu0 0.0
        %5375 = vmatmul.mubr.f32.gmra.mrb[0].mxu0 %v4945
        %v5376 = vpop.f32.mrb[0].mxu0
        %v5377 = vadd.f32 0.0, %v5376
        %v5378 = vpop.f32.mrb[0].mxu0
        %5379 = vmatprep.mubr.f32.mxu0 0.0
        %5380 = vmatmul.mubr.f32.gmra.mrb[0].mxu0 %v4946
        %v5381 = vpop.f32.mrb[0].mxu0
        %v5382 = vadd.f32 0.0, %v5381
        %v5383 = vpop.f32.mrb[0].mxu0
        %5384 = vmatprep.mubr.f32.mxu0 0.0
        %5385 = vmatmul.mubr.f32.gmra.mrb[0].mxu0 %v4947
        %v5386 = vpop.f32.mrb[0].mxu0
        %v5387 = vadd.f32 0.0, %v5386
        %v5388 = vpop.f32.mrb[0].mxu0
        %5389 = vmatprep.mubr.f32.mxu0 0.0
        %5390 = vmatmul.mubr.f32.gmra.mrb[0].mxu0 %v4948
        %v5391 = vpop.f32.mrb[0].mxu0
        %v5392 = vadd.f32 0.0, %v5391
        %v5393 = vpop.f32.mrb[0].mxu0
        %5394 = vmatprep.mubr.f32.mxu0 0.0
        %5395 = vmatmul.mubr.f32.gmra.mrb[0].mxu0 %v4949
        %v5396 = vpop.f32.mrb[0].mxu0
        %v5397 = vadd.f32 0.0, %v5396
        %v5398 = vpop.f32.mrb[0].mxu0
        %5399 = vmatprep.mubr.f32.mxu0 0.0
        %5400 = vmatmul.mubr.f32.gmra.mrb[0].mxu0 %v4950
        %v5401 = vpop.f32.mrb[0].mxu0
        %v5402 = vadd.f32 0.0, %v5401
        %v5403 = vpop.f32.mrb[0].mxu0
        %5404 = vmatprep.mubr.f32.mxu0 0.0
        %5405 = vmatmul.mubr.f32.gmra.mrb[0].mxu0 %v4951
        %v5406 = vpop.f32.mrb[0].mxu0
        %v5407 = vadd.f32 0.0, %v5406
        %v5408 = vpop.f32.mrb[0].mxu0
        %5409 = vmatprep.mubr.f32.mxu0 0.0
        %5410 = vmatmul.mubr.f32.gmra.mrb[0].mxu0 %v4952
        %v5411 = vpop.f32.mrb[0].mxu0
        %v5412 = vadd.f32 0.0, %v5411
        %v5413 = vpop.f32.mrb[0].mxu0
        %5414 = vmatprep.mubr.f32.mxu0 0.0
        %5415 = vmatmul.mubr.f32.gmra.mrb[0].mxu0 %v4953
        %v5416 = vpop.f32.mrb[0].mxu0
        %v5417 = vadd.f32 0.0, %v5416
        %v5418 = vpop.f32.mrb[0].mxu0
        %5419 = vmatprep.mubr.f32.mxu0 0.0
        %5420 = vmatmul.mubr.f32.gmra.mrb[0].mxu0 %v4954
        %v5421 = vpop.f32.mrb[0].mxu0
        %v5422 = vadd.f32 0.0, %v5421
        %v5423 = vpop.f32.mrb[0].mxu0
        %5424 = vmatprep.mubr.f32.mxu0 0.0
        %5425 = vmatmul.mubr.f32.gmra.mrb[0].mxu0 %v4955
        %v5426 = vpop.f32.mrb[0].mxu0
        %v5427 = vadd.f32 0.0, %v5426
        %v5428 = vpop.f32.mrb[0].mxu0
        %5429 = vmatprep.mubr.f32.mxu0 0.0
        %5430 = vmatmul.mubr.f32.gmra.mrb[0].mxu0 %v4956
        %v5431 = vpop.f32.mrb[0].mxu0
        %v5432 = vadd.f32 0.0, %v5431
        %v5433 = vpop.f32.mrb[0].mxu0
        %5434 = vmatprep.mubr.f32.mxu0 0.0
        %5435 = vmatmul.mubr.f32.gmra.mrb[0].mxu0 %v4957
        %v5436 = vpop.f32.mrb[0].mxu0
        %v5437 = vadd.f32 0.0, %v5436
        %v5438 = vpop.f32.mrb[0].mxu0
        %5439 = vmatprep.mubr.f32.mxu0 0.0
        %5440 = vmatmul.mubr.f32.gmra.mrb[0].mxu0 %v4958
        %v5441 = vpop.f32.mrb[0].mxu0
        %v5442 = vadd.f32 0.0, %v5441
        %v5443 = vpop.f32.mrb[0].mxu0
        %5444 = vmatprep.mubr.f32.mxu0 0.0
        %5445 = vmatmul.mubr.f32.gmra.mrb[0].mxu0 %v4959
        %v5446 = vpop.f32.mrb[0].mxu0
        %v5447 = vadd.f32 0.0, %v5446
        %v5448 = vpop.f32.mrb[0].mxu0
        %5449 = vmatprep.mubr.f32.mxu0 0.0
        %5450 = vmatmul.mubr.f32.gmra.mrb[0].mxu0 %v4960
        %v5451 = vpop.f32.mrb[0].mxu0
        %v5452 = vadd.f32 0.0, %v5451
        %v5453 = vpop.f32.mrb[0].mxu0
        %5454 = vmatprep.mubr.f32.mxu0 0.0
        %5455 = vmatmul.mubr.f32.gmra.mrb[0].mxu0 %v4961
        %v5456 = vpop.f32.mrb[0].mxu0
        %v5457 = vadd.f32 0.0, %v5456
        %v5458 = vpop.f32.mrb[0].mxu0
        %5459 = vmatprep.mubr.f32.mxu0 0.0
        %5460 = vmatmul.mubr.f32.gmra.mrb[0].mxu0 %v4962
        %v5461 = vpop.f32.mrb[0].mxu0
        %v5462 = vadd.f32 0.0, %v5461
        %v5463 = vpop.f32.mrb[0].mxu0
        %5464 = vmatprep.mubr.f32.mxu0 0.0
        %5465 = vmatmul.mubr.f32.gmra.mrb[0].mxu0 %v4963
        %v5466 = vpop.f32.mrb[0].mxu0
        %v5467 = vadd.f32 0.0, %v5466
        %v5468 = vpop.f32.mrb[0].mxu0
        %5469 = vmatprep.mubr.f32.mxu0 0.0
        %5470 = vmatmul.mubr.f32.gmra.mrb[0].mxu0 %v4964
        %v5471 = vpop.f32.mrb[0].mxu0
        %v5472 = vadd.f32 0.0, %v5471
        %v5473 = vpop.f32.mrb[0].mxu0
        %5474 = vmatprep.mubr.f32.mxu0 0.0
        %5475 = vmatmul.mubr.f32.gmra.mrb[0].mxu0 %v4965
        %v5476 = vpop.f32.mrb[0].mxu0
        %v5477 = vadd.f32 0.0, %v5476
        %v5478 = vpop.f32.mrb[0].mxu0
        %5479 = vmatprep.mubr.f32.mxu0 0.0
        %5480 = vmatmul.mubr.f32.gmra.mrb[0].mxu0 %v4966
        %v5481 = vpop.f32.mrb[0].mxu0
        %v5482 = vadd.f32 0.0, %v5481
        %v5483 = vpop.f32.mrb[0].mxu0
        %5484 = vmatprep.mubr.f32.mxu0 0.0
        %5485 = vmatmul.mubr.f32.gmra.mrb[0].mxu0 %v4967
        %v5486 = vpop.f32.mrb[0].mxu0
        %v5487 = vadd.f32 0.0, %v5486
        %v5488 = vpop.f32.mrb[0].mxu0
        %5489 = vmatprep.mubr.f32.mxu0 0.0
        %5490 = vmatmul.mubr.f32.gmra.mrb[0].mxu0 %v4968
        %v5491 = vpop.f32.mrb[0].mxu0
        %v5492 = vadd.f32 0.0, %v5491
        %v5493 = vpop.f32.mrb[0].mxu0
        %5494 = vmatprep.mubr.f32.mxu0 0.0
        %5495 = vmatmul.mubr.f32.gmra.mrb[0].mxu0 %v4969
        %v5496 = vpop.f32.mrb[0].mxu0
        %v5497 = vadd.f32 0.0, %v5496
        %v5498 = vpop.f32.mrb[0].mxu0
        %5499 = vdwg.mxu0
        %v5500 = vrot.slane %v5085, 7
        %v5501 = vrot.slane %v5091, 7
        %v5502 = vrot.slane %v5097, 7
        %v5503 = vrot.slane %v5103, 7
        %v5504 = vrot.slane %v5109, 7
        %v5505 = vrot.slane %v5115, 7
        %v5506 = vrot.slane %v5121, 7
        %v5507 = vrot.slane %v5127, 7
        %v5508 = vrot.slane %v5133, 7
        %v5509 = vrot.slane %v5139, 7
        %v5510 = vrot.slane %v5145, 7
        %v5511 = vrot.slane %v5151, 7
        %v5512 = vrot.slane %v5157, 7
        %v5513 = vrot.slane %v5163, 7
        %v5514 = vrot.slane %v5169, 7
        %v5515 = vrot.slane %v5175, 7
        %v5516 = vrot.slane %v5181, 7
        %v5517 = vrot.slane %v5187, 7
        %v5518 = vrot.slane %v5193, 7
        %v5519 = vrot.slane %v5199, 7
        %v5520 = vrot.slane %v5205, 7
        %v5521 = vrot.slane %v5211, 7
        %v5522 = vrot.slane %v5217, 7
        %v5523 = vrot.slane %v5223, 7
        %v5524 = vrot.slane %v5229, 7
        %v5525 = vrot.slane %v5235, 7
        %v5526 = vrot.slane %v5241, 7
        %v5527 = vrot.slane %v5247, 7
        %v5528 = vrot.slane %v5253, 7
        %v5529 = vrot.slane %v5259, 7
        %v5530 = vrot.slane %v5265, 7
        %v5531 = vrot.slane %v5271, 7
        %v5532 = vsel %vm1326, %v5530, %v5531
        %v5533 = vsel %vm1326, %v5529, %v5530
        %v5534 = vsel %vm1326, %v5528, %v5529
        %v5535 = vsel %vm1326, %v5527, %v5528
        %v5536 = vsel %vm1326, %v5526, %v5527
        %v5537 = vsel %vm1326, %v5525, %v5526
        %v5538 = vsel %vm1326, %v5524, %v5525
        %v5539 = vsel %vm1326, %v5523, %v5524
        %v5540 = vsel %vm1326, %v5522, %v5523
        %v5541 = vsel %vm1326, %v5521, %v5522
        %v5542 = vsel %vm1326, %v5520, %v5521
        %v5543 = vsel %vm1326, %v5519, %v5520
        %v5544 = vsel %vm1326, %v5518, %v5519
        %v5545 = vsel %vm1326, %v5517, %v5518
        %v5546 = vsel %vm1326, %v5516, %v5517
        %v5547 = vsel %vm1326, %v5515, %v5516
        %v5548 = vsel %vm1326, %v5514, %v5515
        %v5549 = vsel %vm1326, %v5513, %v5514
        %v5550 = vsel %vm1326, %v5512, %v5513
        %v5551 = vsel %vm1326, %v5511, %v5512
        %v5552 = vsel %vm1326, %v5510, %v5511
        %v5553 = vsel %vm1326, %v5509, %v5510
        %v5554 = vsel %vm1326, %v5508, %v5509
        %v5555 = vsel %vm1326, %v5507, %v5508
        %v5556 = vsel %vm1326, %v5506, %v5507
        %v5557 = vsel %vm1326, %v5505, %v5506
        %v5558 = vsel %vm1326, %v5504, %v5505
        %v5559 = vsel %vm1326, %v5503, %v5504
        %v5560 = vsel %vm1326, %v5502, %v5503
        %v5561 = vsel %vm1326, %v5501, %v5502
        %v5562 = vsel %vm1326, %v5500, %v5501
        %v5563 = vsel %vm1326, %v5531, %v5500
        %v5564 = vsel %vm1391, %v5563, 0.0
        %v5565 = vsel %vm1392, %v5562, 0.0
        %v5566 = vsel %vm1393, %v5561, 0.0
        %v5567 = vsel %vm1394, %v5560, 0.0
        %v5568 = vsel %vm1395, %v5559, 0.0
        %v5569 = vsel %vm1396, %v5558, 0.0
        %v5570 = vsel %vm1397, %v5557, 0.0
        %v5571 = vsel %vm1398, %v5556, 0.0
        %v5572 = vsel %vm1399, %v5555, 0.0
        %v5573 = vsel %vm1400, %v5554, 0.0
        %v5574 = vsel %vm1401, %v5553, 0.0
        %v5575 = vsel %vm1402, %v5552, 0.0
        %v5576 = vsel %vm1403, %v5551, 0.0
        %v5577 = vsel %vm1404, %v5550, 0.0
        %v5578 = vsel %vm1405, %v5549, 0.0
        %v5579 = vsel %vm1406, %v5548, 0.0
        %v5580 = vsel %vm1407, %v5547, 0.0
        %v5581 = vsel %vm1408, %v5546, 0.0
        %v5582 = vsel %vm1409, %v5545, 0.0
        %v5583 = vsel %vm1410, %v5544, 0.0
        %v5584 = vsel %vm1411, %v5543, 0.0
        %v5585 = vsel %vm1412, %v5542, 0.0
        %v5586 = vsel %vm1413, %v5541, 0.0
        %v5587 = vsel %vm1414, %v5540, 0.0
        %v5588 = vsel %vm1415, %v5539, 0.0
        %v5589 = vsel %vm1416, %v5538, 0.0
        %v5590 = vsel %vm1417, %v5537, 0.0
        %v5591 = vsel %vm1418, %v5536, 0.0
        %v5592 = vsel %vm1419, %v5535, 0.0
        %v5593 = vsel %vm1420, %v5534, 0.0
        %v5594 = vsel %vm1421, %v5533, 0.0
        %v5595 = vsel %vm1422, %v5532, 0.0
        %v5596 = vrot.slane %v5342, 1
        %v5597 = vrot.slane %v5347, 1
        %v5598 = vrot.slane %v5352, 1
        %v5599 = vrot.slane %v5357, 1
        %v5600 = vrot.slane %v5362, 1
        %v5601 = vrot.slane %v5367, 1
        %v5602 = vrot.slane %v5372, 1
        %v5603 = vrot.slane %v5377, 1
        %v5604 = vrot.slane %v5382, 1
        %v5605 = vrot.slane %v5387, 1
        %v5606 = vrot.slane %v5392, 1
        %v5607 = vrot.slane %v5397, 1
        %v5608 = vrot.slane %v5402, 1
        %v5609 = vrot.slane %v5407, 1
        %v5610 = vrot.slane %v5412, 1
        %v5611 = vrot.slane %v5417, 1
        %v5612 = vrot.slane %v5422, 1
        %v5613 = vrot.slane %v5427, 1
        %v5614 = vrot.slane %v5432, 1
        %v5615 = vrot.slane %v5437, 1
        %v5616 = vrot.slane %v5442, 1
        %v5617 = vrot.slane %v5447, 1
        %v5618 = vrot.slane %v5452, 1
        %v5619 = vrot.slane %v5457, 1
        %v5620 = vrot.slane %v5462, 1
        %v5621 = vrot.slane %v5467, 1
        %v5622 = vrot.slane %v5472, 1
        %v5623 = vrot.slane %v5477, 1
        %v5624 = vrot.slane %v5482, 1
        %v5625 = vrot.slane %v5487, 1
        %v5626 = vrot.slane %v5492, 1
        %v5627 = vrot.slane %v5497, 1
        %v5628 = vsel %vm1487, %v5626, %v5627
        %v5629 = vsel %vm1487, %v5625, %v5626
        %v5630 = vsel %vm1487, %v5624, %v5625
        %v5631 = vsel %vm1487, %v5623, %v5624
        %v5632 = vsel %vm1487, %v5622, %v5623
        %v5633 = vsel %vm1487, %v5621, %v5622
        %v5634 = vsel %vm1487, %v5620, %v5621
        %v5635 = vsel %vm1487, %v5619, %v5620
        %v5636 = vsel %vm1487, %v5618, %v5619
        %v5637 = vsel %vm1487, %v5617, %v5618
        %v5638 = vsel %vm1487, %v5616, %v5617
        %v5639 = vsel %vm1487, %v5615, %v5616
        %v5640 = vsel %vm1487, %v5614, %v5615
        %v5641 = vsel %vm1487, %v5613, %v5614
        %v5642 = vsel %vm1487, %v5612, %v5613
        %v5643 = vsel %vm1487, %v5611, %v5612
        %v5644 = vsel %vm1487, %v5610, %v5611
        %v5645 = vsel %vm1487, %v5609, %v5610
        %v5646 = vsel %vm1487, %v5608, %v5609
        %v5647 = vsel %vm1487, %v5607, %v5608
        %v5648 = vsel %vm1487, %v5606, %v5607
        %v5649 = vsel %vm1487, %v5605, %v5606
        %v5650 = vsel %vm1487, %v5604, %v5605
        %v5651 = vsel %vm1487, %v5603, %v5604
        %v5652 = vsel %vm1487, %v5602, %v5603
        %v5653 = vsel %vm1487, %v5601, %v5602
        %v5654 = vsel %vm1487, %v5600, %v5601
        %v5655 = vsel %vm1487, %v5599, %v5600
        %v5656 = vsel %vm1487, %v5598, %v5599
        %v5657 = vsel %vm1487, %v5597, %v5598
        %v5658 = vsel %vm1487, %v5596, %v5597
        %v5659 = vsel %vm1487, %v5627, %v5596
        %v5660 = vsel %vm1552, %v5658, 0.0
        %v5661 = vsel %vm1553, %v5657, 0.0
        %v5662 = vsel %vm1554, %v5656, 0.0
        %v5663 = vsel %vm1555, %v5655, 0.0
        %v5664 = vsel %vm1556, %v5654, 0.0
        %v5665 = vsel %vm1557, %v5653, 0.0
        %v5666 = vsel %vm1558, %v5652, 0.0
        %v5667 = vsel %vm1559, %v5651, 0.0
        %v5668 = vsel %vm1560, %v5650, 0.0
        %v5669 = vsel %vm1561, %v5649, 0.0
        %v5670 = vsel %vm1562, %v5648, 0.0
        %v5671 = vsel %vm1563, %v5647, 0.0
        %v5672 = vsel %vm1564, %v5646, 0.0
        %v5673 = vsel %vm1565, %v5645, 0.0
        %v5674 = vsel %vm1566, %v5644, 0.0
        %v5675 = vsel %vm1567, %v5643, 0.0
        %v5676 = vsel %vm1568, %v5642, 0.0
        %v5677 = vsel %vm1569, %v5641, 0.0
        %v5678 = vsel %vm1570, %v5640, 0.0
        %v5679 = vsel %vm1571, %v5639, 0.0
        %v5680 = vsel %vm1572, %v5638, 0.0
        %v5681 = vsel %vm1573, %v5637, 0.0
        %v5682 = vsel %vm1574, %v5636, 0.0
        %v5683 = vsel %vm1575, %v5635, 0.0
        %v5684 = vsel %vm1576, %v5634, 0.0
        %v5685 = vsel %vm1577, %v5633, 0.0
        %v5686 = vsel %vm1578, %v5632, 0.0
        %v5687 = vsel %vm1579, %v5631, 0.0
        %v5688 = vsel %vm1580, %v5630, 0.0
        %v5689 = vsel %vm1581, %v5629, 0.0
        %v5690 = vsel %vm1582, %v5628, 0.0
        %v5691 = vsel %vm1583, %v5659, 0.0
        %v5692 = vadd.f32 %v5564, %v5087
        %v5693 = vadd.f32 %v5565, %v5093
        %v5694 = vadd.f32 %v5566, %v5099
        %v5695 = vadd.f32 %v5567, %v5105
        %v5696 = vadd.f32 %v5568, %v5111
        %v5697 = vadd.f32 %v5569, %v5117
        %v5698 = vadd.f32 %v5570, %v5123
        %v5699 = vadd.f32 %v5571, %v5129
        %v5700 = vadd.f32 %v5572, %v5135
        %v5701 = vadd.f32 %v5573, %v5141
        %v5702 = vadd.f32 %v5574, %v5147
        %v5703 = vadd.f32 %v5575, %v5153
        %v5704 = vadd.f32 %v5576, %v5159
        %v5705 = vadd.f32 %v5577, %v5165
        %v5706 = vadd.f32 %v5578, %v5171
        %v5707 = vadd.f32 %v5579, %v5177
        %v5708 = vadd.f32 %v5580, %v5183
        %v5709 = vadd.f32 %v5581, %v5189
        %v5710 = vadd.f32 %v5582, %v5195
        %v5711 = vadd.f32 %v5583, %v5201
        %v5712 = vadd.f32 %v5584, %v5207
        %v5713 = vadd.f32 %v5585, %v5213
        %v5714 = vadd.f32 %v5586, %v5219
        %v5715 = vadd.f32 %v5587, %v5225
        %v5716 = vadd.f32 %v5588, %v5231
        %v5717 = vadd.f32 %v5589, %v5237
        %v5718 = vadd.f32 %v5590, %v5243
        %v5719 = vadd.f32 %v5591, %v5249
        %v5720 = vadd.f32 %v5592, %v5255
        %v5721 = vadd.f32 %v5593, %v5261
        %v5722 = vadd.f32 %v5594, %v5267
        %v5723 = vadd.f32 %v5595, %v5273
        %v5724 = vadd.f32 %v5692, %v5660
        %v5725 = vadd.f32 %v5693, %v5661
        %v5726 = vadd.f32 %v5694, %v5662
        %v5727 = vadd.f32 %v5695, %v5663
        %v5728 = vadd.f32 %v5696, %v5664
        %v5729 = vadd.f32 %v5697, %v5665
        %v5730 = vadd.f32 %v5698, %v5666
        %v5731 = vadd.f32 %v5699, %v5667
        %v5732 = vadd.f32 %v5700, %v5668
        %v5733 = vadd.f32 %v5701, %v5669
        %v5734 = vadd.f32 %v5702, %v5670
        %v5735 = vadd.f32 %v5703, %v5671
        %v5736 = vadd.f32 %v5704, %v5672
        %v5737 = vadd.f32 %v5705, %v5673
        %v5738 = vadd.f32 %v5706, %v5674
        %v5739 = vadd.f32 %v5707, %v5675
        %v5740 = vadd.f32 %v5708, %v5676
        %v5741 = vadd.f32 %v5709, %v5677
        %v5742 = vadd.f32 %v5710, %v5678
        %v5743 = vadd.f32 %v5711, %v5679
        %v5744 = vadd.f32 %v5712, %v5680
        %v5745 = vadd.f32 %v5713, %v5681
        %v5746 = vadd.f32 %v5714, %v5682
        %v5747 = vadd.f32 %v5715, %v5683
        %v5748 = vadd.f32 %v5716, %v5684
        %v5749 = vadd.f32 %v5717, %v5685
        %v5750 = vadd.f32 %v5718, %v5686
        %v5751 = vadd.f32 %v5719, %v5687
        %v5752 = vadd.f32 %v5720, %v5688
        %v5753 = vadd.f32 %v5721, %v5689
        %v5754 = vadd.f32 %v5722, %v5690
        %v5755 = vadd.f32 %v5723, %v5691
        %v5756 = vld [vmem:[#allocation7 + $0x6] ss:$0 sm:$0xff]
        %v5757 = vadd.f32 %v5724, %v5756
        %v5758 = vadd.f32 %v5725, %v5756
        %v5759 = vadd.f32 %v5726, %v5756
        %v5760 = vadd.f32 %v5727, %v5756
        %v5761 = vadd.f32 %v5728, %v5756
        %v5762 = vadd.f32 %v5729, %v5756
        %v5763 = vadd.f32 %v5730, %v5756
        %v5764 = vadd.f32 %v5731, %v5756
        %v5765 = vadd.f32 %v5732, %v5756
        %v5766 = vadd.f32 %v5733, %v5756
        %v5767 = vadd.f32 %v5734, %v5756
        %v5768 = vadd.f32 %v5735, %v5756
        %v5769 = vadd.f32 %v5736, %v5756
        %v5770 = vadd.f32 %v5737, %v5756
        %v5771 = vadd.f32 %v5738, %v5756
        %v5772 = vadd.f32 %v5739, %v5756
        %v5773 = vadd.f32 %v5740, %v5756
        %v5774 = vadd.f32 %v5741, %v5756
        %v5775 = vadd.f32 %v5742, %v5756
        %v5776 = vadd.f32 %v5743, %v5756
        %v5777 = vadd.f32 %v5744, %v5756
        %v5778 = vadd.f32 %v5745, %v5756
        %v5779 = vadd.f32 %v5746, %v5756
        %v5780 = vadd.f32 %v5747, %v5756
        %v5781 = vadd.f32 %v5748, %v5756
        %v5782 = vadd.f32 %v5749, %v5756
        %v5783 = vadd.f32 %v5750, %v5756
        %v5784 = vadd.f32 %v5751, %v5756
        %v5785 = vadd.f32 %v5752, %v5756
        %v5786 = vadd.f32 %v5753, %v5756
        %v5787 = vadd.f32 %v5754, %v5756
        %v5788 = vadd.f32 %v5755, %v5756
        %v5789 = vld [vmem:[#allocation5 + $0xa80] sm:$0xff]
        %v5790 = vld [vmem:[#allocation5 + $0xa88] sm:$0xff]
        %v5791 = vld [vmem:[#allocation5 + $0xa90] sm:$0xff]
        %v5792 = vld [vmem:[#allocation5 + $0xa98] sm:$0xff]
        %v5793 = vld [vmem:[#allocation5 + $0xaa0] sm:$0xff]
        %v5794 = vld [vmem:[#allocation5 + $0xaa8] sm:$0xff]
        %v5795 = vld [vmem:[#allocation5 + $0xab0] sm:$0xff]
        %v5796 = vld [vmem:[#allocation5 + $0xab8] sm:$0xff]
        %v5797 = vld [vmem:[#allocation5 + $0xac0] sm:$0xff]
        %v5798 = vld [vmem:[#allocation5 + $0xac8] sm:$0xff]
        %v5799 = vld [vmem:[#allocation5 + $0xad0] sm:$0xff]
        %v5800 = vld [vmem:[#allocation5 + $0xad8] sm:$0xff]
        %v5801 = vld [vmem:[#allocation5 + $0xae0] sm:$0xff]
        %v5802 = vld [vmem:[#allocation5 + $0xae8] sm:$0xff]
        %v5803 = vld [vmem:[#allocation5 + $0xaf0] sm:$0xff]
        %v5804 = vld [vmem:[#allocation5 + $0xaf8] sm:$0xff]
        %v5805 = vld [vmem:[#allocation5 + $0xb00] sm:$0xff]
        %v5806 = vld [vmem:[#allocation5 + $0xb08] sm:$0xff]
        %v5807 = vld [vmem:[#allocation5 + $0xb10] sm:$0xff]
        %v5808 = vld [vmem:[#allocation5 + $0xb18] sm:$0xff]
        %v5809 = vld [vmem:[#allocation5 + $0xb20] sm:$0xff]
        %v5810 = vld [vmem:[#allocation5 + $0xb28] sm:$0xff]
        %v5811 = vld [vmem:[#allocation5 + $0xb30] sm:$0xff]
        %v5812 = vld [vmem:[#allocation5 + $0xb38] sm:$0xff]
        %v5813 = vld [vmem:[#allocation5 + $0xb40] sm:$0xff]
        %v5814 = vld [vmem:[#allocation5 + $0xb48] sm:$0xff]
        %v5815 = vld [vmem:[#allocation5 + $0xb50] sm:$0xff]
        %v5816 = vld [vmem:[#allocation5 + $0xb58] sm:$0xff]
        %v5817 = vld [vmem:[#allocation5 + $0xb60] sm:$0xff]
        %v5818 = vld [vmem:[#allocation5 + $0xb68] sm:$0xff]
        %v5819 = vld [vmem:[#allocation5 + $0xb70] sm:$0xff]
        %v5820 = vld [vmem:[#allocation5 + $0xb78] sm:$0xff]
        %v5821 = vld [vmem:[#allocation5 + $0xb80] sm:$0xff]
        %v5822 = vld [vmem:[#allocation5 + $0xb88] sm:$0xff]
        %v5823 = vld [vmem:[#allocation5 + $0xb90] sm:$0xff]
        %v5824 = vld [vmem:[#allocation5 + $0xb98] sm:$0xff]
        %v5825 = vld [vmem:[#allocation5 + $0xba0] sm:$0xff]
        %v5826 = vld [vmem:[#allocation5 + $0xba8] sm:$0xff]
        %v5827 = vld [vmem:[#allocation5 + $0xbb0] sm:$0xff]
        %v5828 = vld [vmem:[#allocation5 + $0xbb8] sm:$0xff]
        %v5829 = vld [vmem:[#allocation5 + $0xbc0] sm:$0xff]
        %v5830 = vld [vmem:[#allocation5 + $0xbc8] sm:$0xff]
        %v5831 = vld [vmem:[#allocation5 + $0xbd0] sm:$0xff]
        %v5832 = vld [vmem:[#allocation5 + $0xbd8] sm:$0xff]
        %v5833 = vld [vmem:[#allocation5 + $0xbe0] sm:$0xff]
        %v5834 = vld [vmem:[#allocation5 + $0xbe8] sm:$0xff]
        %v5835 = vld [vmem:[#allocation5 + $0xbf0] sm:$0xff]
        %v5836 = vld [vmem:[#allocation5 + $0xbf8] sm:$0xff]
        %5837 = vmatprep.subr.mxu0 %v5790
        %5838 = vmatpush1.msra.mxu0 %v5789
        %5839 = vmatprep.subr.mxu0 %v5793
        %5840 = vmatpush1.msra.mxu0 %v5792
        %5841 = vmatprep.subr.mxu0 %v5796
        %5842 = vmatpush1.msra.mxu0 %v5795
        %5843 = vmatprep.subr.mxu0 %v5799
        %5844 = vmatpush1.msra.mxu0 %v5798
        %5845 = vmatprep.subr.mxu0 %v5802
        %5846 = vmatpush1.msra.mxu0 %v5801
        %5847 = vmatprep.subr.mxu0 %v5805
        %5848 = vmatpush1.msra.mxu0 %v5804
        %5849 = vmatprep.subr.mxu0 %v5808
        %5850 = vmatpush1.msra.mxu0 %v5807
        %5851 = vmatprep.subr.mxu0 %v5811
        %5852 = vmatpush1.msra.mxu0 %v5810
        %5853 = vmatprep.subr.mxu0 %v5814
        %5854 = vmatpush1.msra.mxu0 %v5813
        %5855 = vmatprep.subr.mxu0 %v5817
        %5856 = vmatpush1.msra.mxu0 %v5816
        %5857 = vmatprep.subr.mxu0 %v5820
        %5858 = vmatpush1.msra.mxu0 %v5819
        %5859 = vmatprep.subr.mxu0 %v5823
        %5860 = vmatpush1.msra.mxu0 %v5822
        %5861 = vmatprep.subr.mxu0 %v5826
        %5862 = vmatpush1.msra.mxu0 %v5825
        %5863 = vmatprep.subr.mxu0 %v5829
        %5864 = vmatpush1.msra.mxu0 %v5828
        %5865 = vmatprep.subr.mxu0 %v5832
        %5866 = vmatpush1.msra.mxu0 %v5831
        %5867 = vmatprep.subr.mxu0 %v5835
        %5868 = vmatpush1.msra.mxu0 %v5834
        %5869 = vmatprep.subr.mxu0 0.0
        %5870 = vmatpush1.msra.mxu0 0.0
        %5871 = vmatprep.subr.mxu0 0.0
        %5872 = vmatpush1.msra.mxu0 0.0
        %5873 = vmatprep.subr.mxu0 0.0
        %5874 = vmatpush1.msra.mxu0 0.0
        %5875 = vmatprep.subr.mxu0 0.0
        %5876 = vmatpush1.msra.mxu0 0.0
        %5877 = vmatprep.subr.mxu0 0.0
        %5878 = vmatpush1.msra.mxu0 0.0
        %5879 = vmatprep.subr.mxu0 0.0
        %5880 = vmatpush1.msra.mxu0 0.0
        %5881 = vmatprep.subr.mxu0 0.0
        %5882 = vmatpush1.msra.mxu0 0.0
        %5883 = vmatprep.subr.mxu0 0.0
        %5884 = vmatpush1.msra.mxu0 0.0
        %5885 = vmatprep.subr.mxu0 0.0
        %5886 = vmatpush1.msra.mxu0 0.0
        %5887 = vmatprep.subr.mxu0 0.0
        %5888 = vmatpush1.msra.mxu0 0.0
        %5889 = vmatprep.subr.mxu0 0.0
        %5890 = vmatpush1.msra.mxu0 0.0
        %5891 = vmatprep.subr.mxu0 0.0
        %5892 = vmatpush1.msra.mxu0 0.0
        %5893 = vmatprep.subr.mxu0 0.0
        %5894 = vmatpush1.msra.mxu0 0.0
        %5895 = vmatprep.subr.mxu0 0.0
        %5896 = vmatpush1.msra.mxu0 0.0
        %5897 = vmatprep.subr.mxu0 0.0
        %5898 = vmatpush1.msra.mxu0 0.0
        %5899 = vmatprep.subr.mxu0 0.0
        %5900 = vmatpush1.msra.mxu0 0.0
        %5901 = vmatprep.mubr.f32.mxu0 0.0
        %5902 = vmatmul.mubr.f32.gmra.mrb[0].mxu0 %v5757
        %v5903 = vpop.f32.mrb[0].mxu0
        %v5904 = vadd.f32 0.0, %v5903
        %v5905 = vpop.f32.mrb[0].mxu0
        %v5906 = vadd.f32 0.0, %v5905
        %5907 = vmatprep.mubr.f32.mxu0 0.0
        %5908 = vmatmul.mubr.f32.gmra.mrb[0].mxu0 %v5758
        %v5909 = vpop.f32.mrb[0].mxu0
        %v5910 = vadd.f32 0.0, %v5909
        %v5911 = vpop.f32.mrb[0].mxu0
        %v5912 = vadd.f32 0.0, %v5911
        %5913 = vmatprep.mubr.f32.mxu0 0.0
        %5914 = vmatmul.mubr.f32.gmra.mrb[0].mxu0 %v5759
        %v5915 = vpop.f32.mrb[0].mxu0
        %v5916 = vadd.f32 0.0, %v5915
        %v5917 = vpop.f32.mrb[0].mxu0
        %v5918 = vadd.f32 0.0, %v5917
        %5919 = vmatprep.mubr.f32.mxu0 0.0
        %5920 = vmatmul.mubr.f32.gmra.mrb[0].mxu0 %v5760
        %v5921 = vpop.f32.mrb[0].mxu0
        %v5922 = vadd.f32 0.0, %v5921
        %v5923 = vpop.f32.mrb[0].mxu0
        %v5924 = vadd.f32 0.0, %v5923
        %5925 = vmatprep.mubr.f32.mxu0 0.0
        %5926 = vmatmul.mubr.f32.gmra.mrb[0].mxu0 %v5761
        %v5927 = vpop.f32.mrb[0].mxu0
        %v5928 = vadd.f32 0.0, %v5927
        %v5929 = vpop.f32.mrb[0].mxu0
        %v5930 = vadd.f32 0.0, %v5929
        %5931 = vmatprep.mubr.f32.mxu0 0.0
        %5932 = vmatmul.mubr.f32.gmra.mrb[0].mxu0 %v5762
        %v5933 = vpop.f32.mrb[0].mxu0
        %v5934 = vadd.f32 0.0, %v5933
        %v5935 = vpop.f32.mrb[0].mxu0
        %v5936 = vadd.f32 0.0, %v5935
        %5937 = vmatprep.mubr.f32.mxu0 0.0
        %5938 = vmatmul.mubr.f32.gmra.mrb[0].mxu0 %v5763
        %v5939 = vpop.f32.mrb[0].mxu0
        %v5940 = vadd.f32 0.0, %v5939
        %v5941 = vpop.f32.mrb[0].mxu0
        %v5942 = vadd.f32 0.0, %v5941
        %5943 = vmatprep.mubr.f32.mxu0 0.0
        %5944 = vmatmul.mubr.f32.gmra.mrb[0].mxu0 %v5764
        %v5945 = vpop.f32.mrb[0].mxu0
        %v5946 = vadd.f32 0.0, %v5945
        %v5947 = vpop.f32.mrb[0].mxu0
        %v5948 = vadd.f32 0.0, %v5947
        %5949 = vmatprep.mubr.f32.mxu0 0.0
        %5950 = vmatmul.mubr.f32.gmra.mrb[0].mxu0 %v5765
        %v5951 = vpop.f32.mrb[0].mxu0
        %v5952 = vadd.f32 0.0, %v5951
        %v5953 = vpop.f32.mrb[0].mxu0
        %v5954 = vadd.f32 0.0, %v5953
        %5955 = vmatprep.mubr.f32.mxu0 0.0
        %5956 = vmatmul.mubr.f32.gmra.mrb[0].mxu0 %v5766
        %v5957 = vpop.f32.mrb[0].mxu0
        %v5958 = vadd.f32 0.0, %v5957
        %v5959 = vpop.f32.mrb[0].mxu0
        %v5960 = vadd.f32 0.0, %v5959
        %5961 = vmatprep.mubr.f32.mxu0 0.0
        %5962 = vmatmul.mubr.f32.gmra.mrb[0].mxu0 %v5767
        %v5963 = vpop.f32.mrb[0].mxu0
        %v5964 = vadd.f32 0.0, %v5963
        %v5965 = vpop.f32.mrb[0].mxu0
        %v5966 = vadd.f32 0.0, %v5965
        %5967 = vmatprep.mubr.f32.mxu0 0.0
        %5968 = vmatmul.mubr.f32.gmra.mrb[0].mxu0 %v5768
        %v5969 = vpop.f32.mrb[0].mxu0
        %v5970 = vadd.f32 0.0, %v5969
        %v5971 = vpop.f32.mrb[0].mxu0
        %v5972 = vadd.f32 0.0, %v5971
        %5973 = vmatprep.mubr.f32.mxu0 0.0
        %5974 = vmatmul.mubr.f32.gmra.mrb[0].mxu0 %v5769
        %v5975 = vpop.f32.mrb[0].mxu0
        %v5976 = vadd.f32 0.0, %v5975
        %v5977 = vpop.f32.mrb[0].mxu0
        %v5978 = vadd.f32 0.0, %v5977
        %5979 = vmatprep.mubr.f32.mxu0 0.0
        %5980 = vmatmul.mubr.f32.gmra.mrb[0].mxu0 %v5770
        %v5981 = vpop.f32.mrb[0].mxu0
        %v5982 = vadd.f32 0.0, %v5981
        %v5983 = vpop.f32.mrb[0].mxu0
        %v5984 = vadd.f32 0.0, %v5983
        %5985 = vmatprep.mubr.f32.mxu0 0.0
        %5986 = vmatmul.mubr.f32.gmra.mrb[0].mxu0 %v5771
        %v5987 = vpop.f32.mrb[0].mxu0
        %v5988 = vadd.f32 0.0, %v5987
        %v5989 = vpop.f32.mrb[0].mxu0
        %v5990 = vadd.f32 0.0, %v5989
        %5991 = vmatprep.mubr.f32.mxu0 0.0
        %5992 = vmatmul.mubr.f32.gmra.mrb[0].mxu0 %v5772
        %v5993 = vpop.f32.mrb[0].mxu0
        %v5994 = vadd.f32 0.0, %v5993
        %v5995 = vpop.f32.mrb[0].mxu0
        %v5996 = vadd.f32 0.0, %v5995
        %5997 = vmatprep.mubr.f32.mxu0 0.0
        %5998 = vmatmul.mubr.f32.gmra.mrb[0].mxu0 %v5773
        %v5999 = vpop.f32.mrb[0].mxu0
        %v6000 = vadd.f32 0.0, %v5999
        %v6001 = vpop.f32.mrb[0].mxu0
        %v6002 = vadd.f32 0.0, %v6001
        %6003 = vmatprep.mubr.f32.mxu0 0.0
        %6004 = vmatmul.mubr.f32.gmra.mrb[0].mxu0 %v5774
        %v6005 = vpop.f32.mrb[0].mxu0
        %v6006 = vadd.f32 0.0, %v6005
        %v6007 = vpop.f32.mrb[0].mxu0
        %v6008 = vadd.f32 0.0, %v6007
        %6009 = vmatprep.mubr.f32.mxu0 0.0
        %6010 = vmatmul.mubr.f32.gmra.mrb[0].mxu0 %v5775
        %v6011 = vpop.f32.mrb[0].mxu0
        %v6012 = vadd.f32 0.0, %v6011
        %v6013 = vpop.f32.mrb[0].mxu0
        %v6014 = vadd.f32 0.0, %v6013
        %6015 = vmatprep.mubr.f32.mxu0 0.0
        %6016 = vmatmul.mubr.f32.gmra.mrb[0].mxu0 %v5776
        %v6017 = vpop.f32.mrb[0].mxu0
        %v6018 = vadd.f32 0.0, %v6017
        %v6019 = vpop.f32.mrb[0].mxu0
        %v6020 = vadd.f32 0.0, %v6019
        %6021 = vmatprep.mubr.f32.mxu0 0.0
        %6022 = vmatmul.mubr.f32.gmra.mrb[0].mxu0 %v5777
        %v6023 = vpop.f32.mrb[0].mxu0
        %v6024 = vadd.f32 0.0, %v6023
        %v6025 = vpop.f32.mrb[0].mxu0
        %v6026 = vadd.f32 0.0, %v6025
        %6027 = vmatprep.mubr.f32.mxu0 0.0
        %6028 = vmatmul.mubr.f32.gmra.mrb[0].mxu0 %v5778
        %v6029 = vpop.f32.mrb[0].mxu0
        %v6030 = vadd.f32 0.0, %v6029
        %v6031 = vpop.f32.mrb[0].mxu0
        %v6032 = vadd.f32 0.0, %v6031
        %6033 = vmatprep.mubr.f32.mxu0 0.0
        %6034 = vmatmul.mubr.f32.gmra.mrb[0].mxu0 %v5779
        %v6035 = vpop.f32.mrb[0].mxu0
        %v6036 = vadd.f32 0.0, %v6035
        %v6037 = vpop.f32.mrb[0].mxu0
        %v6038 = vadd.f32 0.0, %v6037
        %6039 = vmatprep.mubr.f32.mxu0 0.0
        %6040 = vmatmul.mubr.f32.gmra.mrb[0].mxu0 %v5780
        %v6041 = vpop.f32.mrb[0].mxu0
        %v6042 = vadd.f32 0.0, %v6041
        %v6043 = vpop.f32.mrb[0].mxu0
        %v6044 = vadd.f32 0.0, %v6043
        %6045 = vmatprep.mubr.f32.mxu0 0.0
        %6046 = vmatmul.mubr.f32.gmra.mrb[0].mxu0 %v5781
        %v6047 = vpop.f32.mrb[0].mxu0
        %v6048 = vadd.f32 0.0, %v6047
        %v6049 = vpop.f32.mrb[0].mxu0
        %v6050 = vadd.f32 0.0, %v6049
        %6051 = vmatprep.mubr.f32.mxu0 0.0
        %6052 = vmatmul.mubr.f32.gmra.mrb[0].mxu0 %v5782
        %v6053 = vpop.f32.mrb[0].mxu0
        %v6054 = vadd.f32 0.0, %v6053
        %v6055 = vpop.f32.mrb[0].mxu0
        %v6056 = vadd.f32 0.0, %v6055
        %6057 = vmatprep.mubr.f32.mxu0 0.0
        %6058 = vmatmul.mubr.f32.gmra.mrb[0].mxu0 %v5783
        %v6059 = vpop.f32.mrb[0].mxu0
        %v6060 = vadd.f32 0.0, %v6059
        %v6061 = vpop.f32.mrb[0].mxu0
        %v6062 = vadd.f32 0.0, %v6061
        %6063 = vmatprep.mubr.f32.mxu0 0.0
        %6064 = vmatmul.mubr.f32.gmra.mrb[0].mxu0 %v5784
        %v6065 = vpop.f32.mrb[0].mxu0
        %v6066 = vadd.f32 0.0, %v6065
        %v6067 = vpop.f32.mrb[0].mxu0
        %v6068 = vadd.f32 0.0, %v6067
        %6069 = vmatprep.mubr.f32.mxu0 0.0
        %6070 = vmatmul.mubr.f32.gmra.mrb[0].mxu0 %v5785
        %v6071 = vpop.f32.mrb[0].mxu0
        %v6072 = vadd.f32 0.0, %v6071
        %v6073 = vpop.f32.mrb[0].mxu0
        %v6074 = vadd.f32 0.0, %v6073
        %6075 = vmatprep.mubr.f32.mxu0 0.0
        %6076 = vmatmul.mubr.f32.gmra.mrb[0].mxu0 %v5786
        %v6077 = vpop.f32.mrb[0].mxu0
        %v6078 = vadd.f32 0.0, %v6077
        %v6079 = vpop.f32.mrb[0].mxu0
        %v6080 = vadd.f32 0.0, %v6079
        %6081 = vmatprep.mubr.f32.mxu0 0.0
        %6082 = vmatmul.mubr.f32.gmra.mrb[0].mxu0 %v5787
        %v6083 = vpop.f32.mrb[0].mxu0
        %v6084 = vadd.f32 0.0, %v6083
        %v6085 = vpop.f32.mrb[0].mxu0
        %v6086 = vadd.f32 0.0, %v6085
        %6087 = vmatprep.mubr.f32.mxu0 0.0
        %6088 = vmatmul.mubr.f32.gmra.mrb[0].mxu0 %v5788
        %v6089 = vpop.f32.mrb[0].mxu0
        %v6090 = vadd.f32 0.0, %v6089
        %v6091 = vpop.f32.mrb[0].mxu0
        %v6092 = vadd.f32 0.0, %v6091
        %6093 = vdwg.mxu0
        %6094 = vmatprep.subr.mxu0 0.0
        %6095 = vmatpush1.msra.mxu0 %v5791
        %6096 = vmatprep.subr.mxu0 0.0
        %6097 = vmatpush1.msra.mxu0 %v5794
        %6098 = vmatprep.subr.mxu0 0.0
        %6099 = vmatpush1.msra.mxu0 %v5797
        %6100 = vmatprep.subr.mxu0 0.0
        %6101 = vmatpush1.msra.mxu0 %v5800
        %6102 = vmatprep.subr.mxu0 0.0
        %6103 = vmatpush1.msra.mxu0 %v5803
        %6104 = vmatprep.subr.mxu0 0.0
        %6105 = vmatpush1.msra.mxu0 %v5806
        %6106 = vmatprep.subr.mxu0 0.0
        %6107 = vmatpush1.msra.mxu0 %v5809
        %6108 = vmatprep.subr.mxu0 0.0
        %6109 = vmatpush1.msra.mxu0 %v5812
        %6110 = vmatprep.subr.mxu0 0.0
        %6111 = vmatpush1.msra.mxu0 %v5815
        %6112 = vmatprep.subr.mxu0 0.0
        %6113 = vmatpush1.msra.mxu0 %v5818
        %6114 = vmatprep.subr.mxu0 0.0
        %6115 = vmatpush1.msra.mxu0 %v5821
        %6116 = vmatprep.subr.mxu0 0.0
        %6117 = vmatpush1.msra.mxu0 %v5824
        %6118 = vmatprep.subr.mxu0 0.0
        %6119 = vmatpush1.msra.mxu0 %v5827
        %6120 = vmatprep.subr.mxu0 0.0
        %6121 = vmatpush1.msra.mxu0 %v5830
        %6122 = vmatprep.subr.mxu0 0.0
        %6123 = vmatpush1.msra.mxu0 %v5833
        %6124 = vmatprep.subr.mxu0 0.0
        %6125 = vmatpush1.msra.mxu0 %v5836
        %6126 = vmatprep.subr.mxu0 0.0
        %6127 = vmatpush1.msra.mxu0 0.0
        %6128 = vmatprep.subr.mxu0 0.0
        %6129 = vmatpush1.msra.mxu0 0.0
        %6130 = vmatprep.subr.mxu0 0.0
        %6131 = vmatpush1.msra.mxu0 0.0
        %6132 = vmatprep.subr.mxu0 0.0
        %6133 = vmatpush1.msra.mxu0 0.0
        %6134 = vmatprep.subr.mxu0 0.0
        %6135 = vmatpush1.msra.mxu0 0.0
        %6136 = vmatprep.subr.mxu0 0.0
        %6137 = vmatpush1.msra.mxu0 0.0
        %6138 = vmatprep.subr.mxu0 0.0
        %6139 = vmatpush1.msra.mxu0 0.0
        %6140 = vmatprep.subr.mxu0 0.0
        %6141 = vmatpush1.msra.mxu0 0.0
        %6142 = vmatprep.subr.mxu0 0.0
        %6143 = vmatpush1.msra.mxu0 0.0
        %6144 = vmatprep.subr.mxu0 0.0
        %6145 = vmatpush1.msra.mxu0 0.0
        %6146 = vmatprep.subr.mxu0 0.0
        %6147 = vmatpush1.msra.mxu0 0.0
        %6148 = vmatprep.subr.mxu0 0.0
        %6149 = vmatpush1.msra.mxu0 0.0
        %6150 = vmatprep.subr.mxu0 0.0
        %6151 = vmatpush1.msra.mxu0 0.0
        %6152 = vmatprep.subr.mxu0 0.0
        %6153 = vmatpush1.msra.mxu0 0.0
        %6154 = vmatprep.subr.mxu0 0.0
        %6155 = vmatpush1.msra.mxu0 0.0
        %6156 = vmatprep.subr.mxu0 0.0
        %6157 = vmatpush1.msra.mxu0 0.0
        %6158 = vmatprep.mubr.f32.mxu0 0.0
        %6159 = vmatmul.mubr.f32.gmra.mrb[0].mxu0 %v5757
        %v6160 = vpop.f32.mrb[0].mxu0
        %v6161 = vadd.f32 0.0, %v6160
        %v6162 = vpop.f32.mrb[0].mxu0
        %6163 = vmatprep.mubr.f32.mxu0 0.0
        %6164 = vmatmul.mubr.f32.gmra.mrb[0].mxu0 %v5758
        %v6165 = vpop.f32.mrb[0].mxu0
        %v6166 = vadd.f32 0.0, %v6165
        %v6167 = vpop.f32.mrb[0].mxu0
        %6168 = vmatprep.mubr.f32.mxu0 0.0
        %6169 = vmatmul.mubr.f32.gmra.mrb[0].mxu0 %v5759
        %v6170 = vpop.f32.mrb[0].mxu0
        %v6171 = vadd.f32 0.0, %v6170
        %v6172 = vpop.f32.mrb[0].mxu0
        %6173 = vmatprep.mubr.f32.mxu0 0.0
        %6174 = vmatmul.mubr.f32.gmra.mrb[0].mxu0 %v5760
        %v6175 = vpop.f32.mrb[0].mxu0
        %v6176 = vadd.f32 0.0, %v6175
        %v6177 = vpop.f32.mrb[0].mxu0
        %6178 = vmatprep.mubr.f32.mxu0 0.0
        %6179 = vmatmul.mubr.f32.gmra.mrb[0].mxu0 %v5761
        %v6180 = vpop.f32.mrb[0].mxu0
        %v6181 = vadd.f32 0.0, %v6180
        %v6182 = vpop.f32.mrb[0].mxu0
        %6183 = vmatprep.mubr.f32.mxu0 0.0
        %6184 = vmatmul.mubr.f32.gmra.mrb[0].mxu0 %v5762
        %v6185 = vpop.f32.mrb[0].mxu0
        %v6186 = vadd.f32 0.0, %v6185
        %v6187 = vpop.f32.mrb[0].mxu0
        %6188 = vmatprep.mubr.f32.mxu0 0.0
        %6189 = vmatmul.mubr.f32.gmra.mrb[0].mxu0 %v5763
        %v6190 = vpop.f32.mrb[0].mxu0
        %v6191 = vadd.f32 0.0, %v6190
        %v6192 = vpop.f32.mrb[0].mxu0
        %6193 = vmatprep.mubr.f32.mxu0 0.0
        %6194 = vmatmul.mubr.f32.gmra.mrb[0].mxu0 %v5764
        %v6195 = vpop.f32.mrb[0].mxu0
        %v6196 = vadd.f32 0.0, %v6195
        %v6197 = vpop.f32.mrb[0].mxu0
        %6198 = vmatprep.mubr.f32.mxu0 0.0
        %6199 = vmatmul.mubr.f32.gmra.mrb[0].mxu0 %v5765
        %v6200 = vpop.f32.mrb[0].mxu0
        %v6201 = vadd.f32 0.0, %v6200
        %v6202 = vpop.f32.mrb[0].mxu0
        %6203 = vmatprep.mubr.f32.mxu0 0.0
        %6204 = vmatmul.mubr.f32.gmra.mrb[0].mxu0 %v5766
        %v6205 = vpop.f32.mrb[0].mxu0
        %v6206 = vadd.f32 0.0, %v6205
        %v6207 = vpop.f32.mrb[0].mxu0
        %6208 = vmatprep.mubr.f32.mxu0 0.0
        %6209 = vmatmul.mubr.f32.gmra.mrb[0].mxu0 %v5767
        %v6210 = vpop.f32.mrb[0].mxu0
        %v6211 = vadd.f32 0.0, %v6210
        %v6212 = vpop.f32.mrb[0].mxu0
        %6213 = vmatprep.mubr.f32.mxu0 0.0
        %6214 = vmatmul.mubr.f32.gmra.mrb[0].mxu0 %v5768
        %v6215 = vpop.f32.mrb[0].mxu0
        %v6216 = vadd.f32 0.0, %v6215
        %v6217 = vpop.f32.mrb[0].mxu0
        %6218 = vmatprep.mubr.f32.mxu0 0.0
        %6219 = vmatmul.mubr.f32.gmra.mrb[0].mxu0 %v5769
        %v6220 = vpop.f32.mrb[0].mxu0
        %v6221 = vadd.f32 0.0, %v6220
        %v6222 = vpop.f32.mrb[0].mxu0
        %6223 = vmatprep.mubr.f32.mxu0 0.0
        %6224 = vmatmul.mubr.f32.gmra.mrb[0].mxu0 %v5770
        %v6225 = vpop.f32.mrb[0].mxu0
        %v6226 = vadd.f32 0.0, %v6225
        %v6227 = vpop.f32.mrb[0].mxu0
        %6228 = vmatprep.mubr.f32.mxu0 0.0
        %6229 = vmatmul.mubr.f32.gmra.mrb[0].mxu0 %v5771
        %v6230 = vpop.f32.mrb[0].mxu0
        %v6231 = vadd.f32 0.0, %v6230
        %v6232 = vpop.f32.mrb[0].mxu0
        %6233 = vmatprep.mubr.f32.mxu0 0.0
        %6234 = vmatmul.mubr.f32.gmra.mrb[0].mxu0 %v5772
        %v6235 = vpop.f32.mrb[0].mxu0
        %v6236 = vadd.f32 0.0, %v6235
        %v6237 = vpop.f32.mrb[0].mxu0
        %6238 = vmatprep.mubr.f32.mxu0 0.0
        %6239 = vmatmul.mubr.f32.gmra.mrb[0].mxu0 %v5773
        %v6240 = vpop.f32.mrb[0].mxu0
        %v6241 = vadd.f32 0.0, %v6240
        %v6242 = vpop.f32.mrb[0].mxu0
        %6243 = vmatprep.mubr.f32.mxu0 0.0
        %6244 = vmatmul.mubr.f32.gmra.mrb[0].mxu0 %v5774
        %v6245 = vpop.f32.mrb[0].mxu0
        %v6246 = vadd.f32 0.0, %v6245
        %v6247 = vpop.f32.mrb[0].mxu0
        %6248 = vmatprep.mubr.f32.mxu0 0.0
        %6249 = vmatmul.mubr.f32.gmra.mrb[0].mxu0 %v5775
        %v6250 = vpop.f32.mrb[0].mxu0
        %v6251 = vadd.f32 0.0, %v6250
        %v6252 = vpop.f32.mrb[0].mxu0
        %6253 = vmatprep.mubr.f32.mxu0 0.0
        %6254 = vmatmul.mubr.f32.gmra.mrb[0].mxu0 %v5776
        %v6255 = vpop.f32.mrb[0].mxu0
        %v6256 = vadd.f32 0.0, %v6255
        %v6257 = vpop.f32.mrb[0].mxu0
        %6258 = vmatprep.mubr.f32.mxu0 0.0
        %6259 = vmatmul.mubr.f32.gmra.mrb[0].mxu0 %v5777
        %v6260 = vpop.f32.mrb[0].mxu0
        %v6261 = vadd.f32 0.0, %v6260
        %v6262 = vpop.f32.mrb[0].mxu0
        %6263 = vmatprep.mubr.f32.mxu0 0.0
        %6264 = vmatmul.mubr.f32.gmra.mrb[0].mxu0 %v5778
        %v6265 = vpop.f32.mrb[0].mxu0
        %v6266 = vadd.f32 0.0, %v6265
        %v6267 = vpop.f32.mrb[0].mxu0
        %6268 = vmatprep.mubr.f32.mxu0 0.0
        %6269 = vmatmul.mubr.f32.gmra.mrb[0].mxu0 %v5779
        %v6270 = vpop.f32.mrb[0].mxu0
        %v6271 = vadd.f32 0.0, %v6270
        %v6272 = vpop.f32.mrb[0].mxu0
        %6273 = vmatprep.mubr.f32.mxu0 0.0
        %6274 = vmatmul.mubr.f32.gmra.mrb[0].mxu0 %v5780
        %v6275 = vpop.f32.mrb[0].mxu0
        %v6276 = vadd.f32 0.0, %v6275
        %v6277 = vpop.f32.mrb[0].mxu0
        %6278 = vmatprep.mubr.f32.mxu0 0.0
        %6279 = vmatmul.mubr.f32.gmra.mrb[0].mxu0 %v5781
        %v6280 = vpop.f32.mrb[0].mxu0
        %v6281 = vadd.f32 0.0, %v6280
        %v6282 = vpop.f32.mrb[0].mxu0
        %6283 = vmatprep.mubr.f32.mxu0 0.0
        %6284 = vmatmul.mubr.f32.gmra.mrb[0].mxu0 %v5782
        %v6285 = vpop.f32.mrb[0].mxu0
        %v6286 = vadd.f32 0.0, %v6285
        %v6287 = vpop.f32.mrb[0].mxu0
        %6288 = vmatprep.mubr.f32.mxu0 0.0
        %6289 = vmatmul.mubr.f32.gmra.mrb[0].mxu0 %v5783
        %v6290 = vpop.f32.mrb[0].mxu0
        %v6291 = vadd.f32 0.0, %v6290
        %v6292 = vpop.f32.mrb[0].mxu0
        %6293 = vmatprep.mubr.f32.mxu0 0.0
        %6294 = vmatmul.mubr.f32.gmra.mrb[0].mxu0 %v5784
        %v6295 = vpop.f32.mrb[0].mxu0
        %v6296 = vadd.f32 0.0, %v6295
        %v6297 = vpop.f32.mrb[0].mxu0
        %6298 = vmatprep.mubr.f32.mxu0 0.0
        %6299 = vmatmul.mubr.f32.gmra.mrb[0].mxu0 %v5785
        %v6300 = vpop.f32.mrb[0].mxu0
        %v6301 = vadd.f32 0.0, %v6300
        %v6302 = vpop.f32.mrb[0].mxu0
        %6303 = vmatprep.mubr.f32.mxu0 0.0
        %6304 = vmatmul.mubr.f32.gmra.mrb[0].mxu0 %v5786
        %v6305 = vpop.f32.mrb[0].mxu0
        %v6306 = vadd.f32 0.0, %v6305
        %v6307 = vpop.f32.mrb[0].mxu0
        %6308 = vmatprep.mubr.f32.mxu0 0.0
        %6309 = vmatmul.mubr.f32.gmra.mrb[0].mxu0 %v5787
        %v6310 = vpop.f32.mrb[0].mxu0
        %v6311 = vadd.f32 0.0, %v6310
        %v6312 = vpop.f32.mrb[0].mxu0
        %6313 = vmatprep.mubr.f32.mxu0 0.0
        %6314 = vmatmul.mubr.f32.gmra.mrb[0].mxu0 %v5788
        %v6315 = vpop.f32.mrb[0].mxu0
        %v6316 = vadd.f32 0.0, %v6315
        %v6317 = vpop.f32.mrb[0].mxu0
        %6318 = vdwg.mxu0
        %v6319 = vrot.slane %v5904, 7
        %v6320 = vrot.slane %v5910, 7
        %v6321 = vrot.slane %v5916, 7
        %v6322 = vrot.slane %v5922, 7
        %v6323 = vrot.slane %v5928, 7
        %v6324 = vrot.slane %v5934, 7
        %v6325 = vrot.slane %v5940, 7
        %v6326 = vrot.slane %v5946, 7
        %v6327 = vrot.slane %v5952, 7
        %v6328 = vrot.slane %v5958, 7
        %v6329 = vrot.slane %v5964, 7
        %v6330 = vrot.slane %v5970, 7
        %v6331 = vrot.slane %v5976, 7
        %v6332 = vrot.slane %v5982, 7
        %v6333 = vrot.slane %v5988, 7
        %v6334 = vrot.slane %v5994, 7
        %v6335 = vrot.slane %v6000, 7
        %v6336 = vrot.slane %v6006, 7
        %v6337 = vrot.slane %v6012, 7
        %v6338 = vrot.slane %v6018, 7
        %v6339 = vrot.slane %v6024, 7
        %v6340 = vrot.slane %v6030, 7
        %v6341 = vrot.slane %v6036, 7
        %v6342 = vrot.slane %v6042, 7
        %v6343 = vrot.slane %v6048, 7
        %v6344 = vrot.slane %v6054, 7
        %v6345 = vrot.slane %v6060, 7
        %v6346 = vrot.slane %v6066, 7
        %v6347 = vrot.slane %v6072, 7
        %v6348 = vrot.slane %v6078, 7
        %v6349 = vrot.slane %v6084, 7
        %v6350 = vrot.slane %v6090, 7
        %v6351 = vsel %vm1326, %v6349, %v6350
        %v6352 = vsel %vm1326, %v6348, %v6349
        %v6353 = vsel %vm1326, %v6347, %v6348
        %v6354 = vsel %vm1326, %v6346, %v6347
        %v6355 = vsel %vm1326, %v6345, %v6346
        %v6356 = vsel %vm1326, %v6344, %v6345
        %v6357 = vsel %vm1326, %v6343, %v6344
        %v6358 = vsel %vm1326, %v6342, %v6343
        %v6359 = vsel %vm1326, %v6341, %v6342
        %v6360 = vsel %vm1326, %v6340, %v6341
        %v6361 = vsel %vm1326, %v6339, %v6340
        %v6362 = vsel %vm1326, %v6338, %v6339
        %v6363 = vsel %vm1326, %v6337, %v6338
        %v6364 = vsel %vm1326, %v6336, %v6337
        %v6365 = vsel %vm1326, %v6335, %v6336
        %v6366 = vsel %vm1326, %v6334, %v6335
        %v6367 = vsel %vm1326, %v6333, %v6334
        %v6368 = vsel %vm1326, %v6332, %v6333
        %v6369 = vsel %vm1326, %v6331, %v6332
        %v6370 = vsel %vm1326, %v6330, %v6331
        %v6371 = vsel %vm1326, %v6329, %v6330
        %v6372 = vsel %vm1326, %v6328, %v6329
        %v6373 = vsel %vm1326, %v6327, %v6328
        %v6374 = vsel %vm1326, %v6326, %v6327
        %v6375 = vsel %vm1326, %v6325, %v6326
        %v6376 = vsel %vm1326, %v6324, %v6325
        %v6377 = vsel %vm1326, %v6323, %v6324
        %v6378 = vsel %vm1326, %v6322, %v6323
        %v6379 = vsel %vm1326, %v6321, %v6322
        %v6380 = vsel %vm1326, %v6320, %v6321
        %v6381 = vsel %vm1326, %v6319, %v6320
        %v6382 = vsel %vm1326, %v6350, %v6319
        %v6383 = vsel %vm1391, %v6382, 0.0
        %v6384 = vsel %vm1392, %v6381, 0.0
        %v6385 = vsel %vm1393, %v6380, 0.0
        %v6386 = vsel %vm1394, %v6379, 0.0
        %v6387 = vsel %vm1395, %v6378, 0.0
        %v6388 = vsel %vm1396, %v6377, 0.0
        %v6389 = vsel %vm1397, %v6376, 0.0
        %v6390 = vsel %vm1398, %v6375, 0.0
        %v6391 = vsel %vm1399, %v6374, 0.0
        %v6392 = vsel %vm1400, %v6373, 0.0
        %v6393 = vsel %vm1401, %v6372, 0.0
        %v6394 = vsel %vm1402, %v6371, 0.0
        %v6395 = vsel %vm1403, %v6370, 0.0
        %v6396 = vsel %vm1404, %v6369, 0.0
        %v6397 = vsel %vm1405, %v6368, 0.0
        %v6398 = vsel %vm1406, %v6367, 0.0
        %v6399 = vsel %vm1407, %v6366, 0.0
        %v6400 = vsel %vm1408, %v6365, 0.0
        %v6401 = vsel %vm1409, %v6364, 0.0
        %v6402 = vsel %vm1410, %v6363, 0.0
        %v6403 = vsel %vm1411, %v6362, 0.0
        %v6404 = vsel %vm1412, %v6361, 0.0
        %v6405 = vsel %vm1413, %v6360, 0.0
        %v6406 = vsel %vm1414, %v6359, 0.0
        %v6407 = vsel %vm1415, %v6358, 0.0
        %v6408 = vsel %vm1416, %v6357, 0.0
        %v6409 = vsel %vm1417, %v6356, 0.0
        %v6410 = vsel %vm1418, %v6355, 0.0
        %v6411 = vsel %vm1419, %v6354, 0.0
        %v6412 = vsel %vm1420, %v6353, 0.0
        %v6413 = vsel %vm1421, %v6352, 0.0
        %v6414 = vsel %vm1422, %v6351, 0.0
        %v6415 = vrot.slane %v6161, 1
        %v6416 = vrot.slane %v6166, 1
        %v6417 = vrot.slane %v6171, 1
        %v6418 = vrot.slane %v6176, 1
        %v6419 = vrot.slane %v6181, 1
        %v6420 = vrot.slane %v6186, 1
        %v6421 = vrot.slane %v6191, 1
        %v6422 = vrot.slane %v6196, 1
        %v6423 = vrot.slane %v6201, 1
        %v6424 = vrot.slane %v6206, 1
        %v6425 = vrot.slane %v6211, 1
        %v6426 = vrot.slane %v6216, 1
        %v6427 = vrot.slane %v6221, 1
        %v6428 = vrot.slane %v6226, 1
        %v6429 = vrot.slane %v6231, 1
        %v6430 = vrot.slane %v6236, 1
        %v6431 = vrot.slane %v6241, 1
        %v6432 = vrot.slane %v6246, 1
        %v6433 = vrot.slane %v6251, 1
        %v6434 = vrot.slane %v6256, 1
        %v6435 = vrot.slane %v6261, 1
        %v6436 = vrot.slane %v6266, 1
        %v6437 = vrot.slane %v6271, 1
        %v6438 = vrot.slane %v6276, 1
        %v6439 = vrot.slane %v6281, 1
        %v6440 = vrot.slane %v6286, 1
        %v6441 = vrot.slane %v6291, 1
        %v6442 = vrot.slane %v6296, 1
        %v6443 = vrot.slane %v6301, 1
        %v6444 = vrot.slane %v6306, 1
        %v6445 = vrot.slane %v6311, 1
        %v6446 = vrot.slane %v6316, 1
        %v6447 = vsel %vm1487, %v6445, %v6446
        %v6448 = vsel %vm1487, %v6444, %v6445
        %v6449 = vsel %vm1487, %v6443, %v6444
        %v6450 = vsel %vm1487, %v6442, %v6443
        %v6451 = vsel %vm1487, %v6441, %v6442
        %v6452 = vsel %vm1487, %v6440, %v6441
        %v6453 = vsel %vm1487, %v6439, %v6440
        %v6454 = vsel %vm1487, %v6438, %v6439
        %v6455 = vsel %vm1487, %v6437, %v6438
        %v6456 = vsel %vm1487, %v6436, %v6437
        %v6457 = vsel %vm1487, %v6435, %v6436
        %v6458 = vsel %vm1487, %v6434, %v6435
        %v6459 = vsel %vm1487, %v6433, %v6434
        %v6460 = vsel %vm1487, %v6432, %v6433
        %v6461 = vsel %vm1487, %v6431, %v6432
        %v6462 = vsel %vm1487, %v6430, %v6431
        %v6463 = vsel %vm1487, %v6429, %v6430
        %v6464 = vsel %vm1487, %v6428, %v6429
        %v6465 = vsel %vm1487, %v6427, %v6428
        %v6466 = vsel %vm1487, %v6426, %v6427
        %v6467 = vsel %vm1487, %v6425, %v6426
        %v6468 = vsel %vm1487, %v6424, %v6425
        %v6469 = vsel %vm1487, %v6423, %v6424
        %v6470 = vsel %vm1487, %v6422, %v6423
        %v6471 = vsel %vm1487, %v6421, %v6422
        %v6472 = vsel %vm1487, %v6420, %v6421
        %v6473 = vsel %vm1487, %v6419, %v6420
        %v6474 = vsel %vm1487, %v6418, %v6419
        %v6475 = vsel %vm1487, %v6417, %v6418
        %v6476 = vsel %vm1487, %v6416, %v6417
        %v6477 = vsel %vm1487, %v6415, %v6416
        %v6478 = vsel %vm1487, %v6446, %v6415
        %v6479 = vsel %vm1552, %v6477, 0.0
        %v6480 = vsel %vm1553, %v6476, 0.0
        %v6481 = vsel %vm1554, %v6475, 0.0
        %v6482 = vsel %vm1555, %v6474, 0.0
        %v6483 = vsel %vm1556, %v6473, 0.0
        %v6484 = vsel %vm1557, %v6472, 0.0
        %v6485 = vsel %vm1558, %v6471, 0.0
        %v6486 = vsel %vm1559, %v6470, 0.0
        %v6487 = vsel %vm1560, %v6469, 0.0
        %v6488 = vsel %vm1561, %v6468, 0.0
        %v6489 = vsel %vm1562, %v6467, 0.0
        %v6490 = vsel %vm1563, %v6466, 0.0
        %v6491 = vsel %vm1564, %v6465, 0.0
        %v6492 = vsel %vm1565, %v6464, 0.0
        %v6493 = vsel %vm1566, %v6463, 0.0
        %v6494 = vsel %vm1567, %v6462, 0.0
        %v6495 = vsel %vm1568, %v6461, 0.0
        %v6496 = vsel %vm1569, %v6460, 0.0
        %v6497 = vsel %vm1570, %v6459, 0.0
        %v6498 = vsel %vm1571, %v6458, 0.0
        %v6499 = vsel %vm1572, %v6457, 0.0
        %v6500 = vsel %vm1573, %v6456, 0.0
        %v6501 = vsel %vm1574, %v6455, 0.0
        %v6502 = vsel %vm1575, %v6454, 0.0
        %v6503 = vsel %vm1576, %v6453, 0.0
        %v6504 = vsel %vm1577, %v6452, 0.0
        %v6505 = vsel %vm1578, %v6451, 0.0
        %v6506 = vsel %vm1579, %v6450, 0.0
        %v6507 = vsel %vm1580, %v6449, 0.0
        %v6508 = vsel %vm1581, %v6448, 0.0
        %v6509 = vsel %vm1582, %v6447, 0.0
        %v6510 = vsel %vm1583, %v6478, 0.0
        %v6511 = vadd.f32 %v6383, %v5906
        %v6512 = vadd.f32 %v6384, %v5912
        %v6513 = vadd.f32 %v6385, %v5918
        %v6514 = vadd.f32 %v6386, %v5924
        %v6515 = vadd.f32 %v6387, %v5930
        %v6516 = vadd.f32 %v6388, %v5936
        %v6517 = vadd.f32 %v6389, %v5942
        %v6518 = vadd.f32 %v6390, %v5948
        %v6519 = vadd.f32 %v6391, %v5954
        %v6520 = vadd.f32 %v6392, %v5960
        %v6521 = vadd.f32 %v6393, %v5966
        %v6522 = vadd.f32 %v6394, %v5972
        %v6523 = vadd.f32 %v6395, %v5978
        %v6524 = vadd.f32 %v6396, %v5984
        %v6525 = vadd.f32 %v6397, %v5990
        %v6526 = vadd.f32 %v6398, %v5996
        %v6527 = vadd.f32 %v6399, %v6002
        %v6528 = vadd.f32 %v6400, %v6008
        %v6529 = vadd.f32 %v6401, %v6014
        %v6530 = vadd.f32 %v6402, %v6020
        %v6531 = vadd.f32 %v6403, %v6026
        %v6532 = vadd.f32 %v6404, %v6032
        %v6533 = vadd.f32 %v6405, %v6038
        %v6534 = vadd.f32 %v6406, %v6044
        %v6535 = vadd.f32 %v6407, %v6050
        %v6536 = vadd.f32 %v6408, %v6056
        %v6537 = vadd.f32 %v6409, %v6062
        %v6538 = vadd.f32 %v6410, %v6068
        %v6539 = vadd.f32 %v6411, %v6074
        %v6540 = vadd.f32 %v6412, %v6080
        %v6541 = vadd.f32 %v6413, %v6086
        %v6542 = vadd.f32 %v6414, %v6092
        %v6543 = vadd.f32 %v6511, %v6479
        %v6544 = vadd.f32 %v6512, %v6480
        %v6545 = vadd.f32 %v6513, %v6481
        %v6546 = vadd.f32 %v6514, %v6482
        %v6547 = vadd.f32 %v6515, %v6483
        %v6548 = vadd.f32 %v6516, %v6484
        %v6549 = vadd.f32 %v6517, %v6485
        %v6550 = vadd.f32 %v6518, %v6486
        %v6551 = vadd.f32 %v6519, %v6487
        %v6552 = vadd.f32 %v6520, %v6488
        %v6553 = vadd.f32 %v6521, %v6489
        %v6554 = vadd.f32 %v6522, %v6490
        %v6555 = vadd.f32 %v6523, %v6491
        %v6556 = vadd.f32 %v6524, %v6492
        %v6557 = vadd.f32 %v6525, %v6493
        %v6558 = vadd.f32 %v6526, %v6494
        %v6559 = vadd.f32 %v6527, %v6495
        %v6560 = vadd.f32 %v6528, %v6496
        %v6561 = vadd.f32 %v6529, %v6497
        %v6562 = vadd.f32 %v6530, %v6498
        %v6563 = vadd.f32 %v6531, %v6499
        %v6564 = vadd.f32 %v6532, %v6500
        %v6565 = vadd.f32 %v6533, %v6501
        %v6566 = vadd.f32 %v6534, %v6502
        %v6567 = vadd.f32 %v6535, %v6503
        %v6568 = vadd.f32 %v6536, %v6504
        %v6569 = vadd.f32 %v6537, %v6505
        %v6570 = vadd.f32 %v6538, %v6506
        %v6571 = vadd.f32 %v6539, %v6507
        %v6572 = vadd.f32 %v6540, %v6508
        %v6573 = vadd.f32 %v6541, %v6509
        %v6574 = vadd.f32 %v6542, %v6510
        %v6575 = vld [vmem:[#allocation7 + $0x7] ss:$0 sm:$0xff]
        %v6576 = vadd.f32 %v6543, %v6575
        %v6577 = vadd.f32 %v6544, %v6575
        %v6578 = vadd.f32 %v6545, %v6575
        %v6579 = vadd.f32 %v6546, %v6575
        %v6580 = vadd.f32 %v6547, %v6575
        %v6581 = vadd.f32 %v6548, %v6575
        %v6582 = vadd.f32 %v6549, %v6575
        %v6583 = vadd.f32 %v6550, %v6575
        %v6584 = vadd.f32 %v6551, %v6575
        %v6585 = vadd.f32 %v6552, %v6575
        %v6586 = vadd.f32 %v6553, %v6575
        %v6587 = vadd.f32 %v6554, %v6575
        %v6588 = vadd.f32 %v6555, %v6575
        %v6589 = vadd.f32 %v6556, %v6575
        %v6590 = vadd.f32 %v6557, %v6575
        %v6591 = vadd.f32 %v6558, %v6575
        %v6592 = vadd.f32 %v6559, %v6575
        %v6593 = vadd.f32 %v6560, %v6575
        %v6594 = vadd.f32 %v6561, %v6575
        %v6595 = vadd.f32 %v6562, %v6575
        %v6596 = vadd.f32 %v6563, %v6575
        %v6597 = vadd.f32 %v6564, %v6575
        %v6598 = vadd.f32 %v6565, %v6575
        %v6599 = vadd.f32 %v6566, %v6575
        %v6600 = vadd.f32 %v6567, %v6575
        %v6601 = vadd.f32 %v6568, %v6575
        %v6602 = vadd.f32 %v6569, %v6575
        %v6603 = vadd.f32 %v6570, %v6575
        %v6604 = vadd.f32 %v6571, %v6575
        %v6605 = vadd.f32 %v6572, %v6575
        %v6606 = vadd.f32 %v6573, %v6575
        %v6607 = vadd.f32 %v6574, %v6575
        %6608 = vst [vmem:[%s216] sm:$0xff] %v6576
        %6609 = vst [vmem:[%s216 + $0x18] sm:$0xff] %v6577
        %6610 = vst [vmem:[%s216 + $0x30] sm:$0xff] %v6578
        %6611 = vst [vmem:[%s216 + $0x48] sm:$0xff] %v6579
        %6612 = vst [vmem:[%s216 + $0x60] sm:$0xff] %v6580
        %6613 = vst [vmem:[%s216 + $0x78] sm:$0xff] %v6581
        %6614 = vst [vmem:[%s216 + $0x90] sm:$0xff] %v6582
        %6615 = vst [vmem:[%s216 + $0xa8] sm:$0xff] %v6583
        %6616 = vst [vmem:[%s216 + $0xc0] sm:$0xff] %v6584
        %6617 = vst [vmem:[%s216 + $0xd8] sm:$0xff] %v6585
        %6618 = vst [vmem:[%s216 + $0xf0] sm:$0xff] %v6586
        %6619 = vst [vmem:[%s216 + $0x108] sm:$0xff] %v6587
        %6620 = vst [vmem:[%s216 + $0x120] sm:$0xff] %v6588
        %6621 = vst [vmem:[%s216 + $0x138] sm:$0xff] %v6589
        %6622 = vst [vmem:[%s216 + $0x150] sm:$0xff] %v6590
        %6623 = vst [vmem:[%s216 + $0x168] sm:$0xff] %v6591
        %6624 = vst [vmem:[%s216 + $0x180] sm:$0xff] %v6592
        %6625 = vst [vmem:[%s216 + $0x198] sm:$0xff] %v6593
        %6626 = vst [vmem:[%s216 + $0x1b0] sm:$0xff] %v6594
        %6627 = vst [vmem:[%s216 + $0x1c8] sm:$0xff] %v6595
        %6628 = vst [vmem:[%s216 + $0x1e0] sm:$0xff] %v6596
        %6629 = vst [vmem:[%s216 + $0x1f8] sm:$0xff] %v6597
        %6630 = vst [vmem:[%s216 + $0x210] sm:$0xff] %v6598
        %6631 = vst [vmem:[%s216 + $0x228] sm:$0xff] %v6599
        %6632 = vst [vmem:[%s216 + $0x240] sm:$0xff] %v6600
        %6633 = vst [vmem:[%s216 + $0x258] sm:$0xff] %v6601
        %6634 = vst [vmem:[%s216 + $0x270] sm:$0xff] %v6602
        %6635 = vst [vmem:[%s216 + $0x288] sm:$0xff] %v6603
        %6636 = vst [vmem:[%s216 + $0x2a0] sm:$0xff] %v6604
        %6637 = vst [vmem:[%s216 + $0x2b8] sm:$0xff] %v6605
        %6638 = vst [vmem:[%s216 + $0x2d0] sm:$0xff] %v6606
        %6639 = vst [vmem:[%s216 + $0x2e8] sm:$0xff] %v6607
        %6640 = vst [vmem:[%s216 + $0x8] sm:$0xff] %v3463
        %6641 = vst [vmem:[%s216 + $0x20] sm:$0xff] %v3469
        %6642 = vst [vmem:[%s216 + $0x38] sm:$0xff] %v3475
        %6643 = vst [vmem:[%s216 + $0x50] sm:$0xff] %v3481
        %6644 = vst [vmem:[%s216 + $0x68] sm:$0xff] %v3487
        %6645 = vst [vmem:[%s216 + $0x80] sm:$0xff] %v3493
        %6646 = vst [vmem:[%s216 + $0x98] sm:$0xff] %v3499
        %6647 = vst [vmem:[%s216 + $0xb0] sm:$0xff] %v3505
        %6648 = vst [vmem:[%s216 + $0xc8] sm:$0xff] %v3511
        %6649 = vst [vmem:[%s216 + $0xe0] sm:$0xff] %v3517
        %6650 = vst [vmem:[%s216 + $0xf8] sm:$0xff] %v3523
        %6651 = vst [vmem:[%s216 + $0x110] sm:$0xff] %v3529
        %6652 = vst [vmem:[%s216 + $0x128] sm:$0xff] %v3535
        %6653 = vst [vmem:[%s216 + $0x140] sm:$0xff] %v3541
        %6654 = vst [vmem:[%s216 + $0x158] sm:$0xff] %v3547
        %6655 = vst [vmem:[%s216 + $0x170] sm:$0xff] %v3553
        %6656 = vst [vmem:[%s216 + $0x188] sm:$0xff] %v3559
        %6657 = vst [vmem:[%s216 + $0x1a0] sm:$0xff] %v3565
        %6658 = vst [vmem:[%s216 + $0x1b8] sm:$0xff] %v3571
        %6659 = vst [vmem:[%s216 + $0x1d0] sm:$0xff] %v3577
        %6660 = vst [vmem:[%s216 + $0x1e8] sm:$0xff] %v3583
        %6661 = vst [vmem:[%s216 + $0x200] sm:$0xff] %v3589
        %6662 = vst [vmem:[%s216 + $0x218] sm:$0xff] %v3595
        %6663 = vst [vmem:[%s216 + $0x230] sm:$0xff] %v3601
        %6664 = vst [vmem:[%s216 + $0x248] sm:$0xff] %v3607
        %6665 = vst [vmem:[%s216 + $0x260] sm:$0xff] %v3613
        %6666 = vst [vmem:[%s216 + $0x278] sm:$0xff] %v3619
        %6667 = vst [vmem:[%s216 + $0x290] sm:$0xff] %v3625
        %6668 = vst [vmem:[%s216 + $0x2a8] sm:$0xff] %v3631
        %6669 = vst [vmem:[%s216 + $0x2c0] sm:$0xff] %v3637
        %6670 = vst [vmem:[%s216 + $0x2d8] sm:$0xff] %v3643
        %6671 = vst [vmem:[%s216 + $0x2f0] sm:$0xff] %v3649
        %6672 = vst [vmem:[%s216 + $0x10] sm:$0xff] %v3465
        %6673 = vst [vmem:[%s216 + $0x28] sm:$0xff] %v3471
        %6674 = vst [vmem:[%s216 + $0x40] sm:$0xff] %v3477
        %6675 = vst [vmem:[%s216 + $0x58] sm:$0xff] %v3483
        %6676 = vst [vmem:[%s216 + $0x70] sm:$0xff] %v3489
        %6677 = vst [vmem:[%s216 + $0x88] sm:$0xff] %v3495
        %6678 = vst [vmem:[%s216 + $0xa0] sm:$0xff] %v3501
        %6679 = vst [vmem:[%s216 + $0xb8] sm:$0xff] %v3507
        %6680 = vst [vmem:[%s216 + $0xd0] sm:$0xff] %v3513
        %6681 = vst [vmem:[%s216 + $0xe8] sm:$0xff] %v3519
        %6682 = vst [vmem:[%s216 + $0x100] sm:$0xff] %v3525
        %6683 = vst [vmem:[%s216 + $0x118] sm:$0xff] %v3531
        %6684 = vst [vmem:[%s216 + $0x130] sm:$0xff] %v3537
        %6685 = vst [vmem:[%s216 + $0x148] sm:$0xff] %v3543
        %6686 = vst [vmem:[%s216 + $0x160] sm:$0xff] %v3549
        %6687 = vst [vmem:[%s216 + $0x178] sm:$0xff] %v3555
        %6688 = vst [vmem:[%s216 + $0x190] sm:$0xff] %v3561
        %6689 = vst [vmem:[%s216 + $0x1a8] sm:$0xff] %v3567
        %6690 = vst [vmem:[%s216 + $0x1c0] sm:$0xff] %v3573
        %6691 = vst [vmem:[%s216 + $0x1d8] sm:$0xff] %v3579
        %6692 = vst [vmem:[%s216 + $0x1f0] sm:$0xff] %v3585
        %6693 = vst [vmem:[%s216 + $0x208] sm:$0xff] %v3591
        %6694 = vst [vmem:[%s216 + $0x220] sm:$0xff] %v3597
        %6695 = vst [vmem:[%s216 + $0x238] sm:$0xff] %v3603
        %6696 = vst [vmem:[%s216 + $0x250] sm:$0xff] %v3609
        %6697 = vst [vmem:[%s216 + $0x268] sm:$0xff] %v3615
        %6698 = vst [vmem:[%s216 + $0x280] sm:$0xff] %v3621
        %6699 = vst [vmem:[%s216 + $0x298] sm:$0xff] %v3627
        %6700 = vst [vmem:[%s216 + $0x2b0] sm:$0xff] %v3633
        %6701 = vst [vmem:[%s216 + $0x2c8] sm:$0xff] %v3639
        %6702 = vst [vmem:[%s216 + $0x2e0] sm:$0xff] %v3645
        %6703 = vst [vmem:[%s216 + $0x2f8] sm:$0xff] %v3651
        %s6704 = sand.u32 %s97, 1
        %s6705 = scalar_lea.sflag [#allocation4], %s6704
        %s6706 = sand.u32 %s97, 1
        %s6707 = smul.addr %s6706, 768
        %s6708 = scalar_lea.vmem [#allocation8], %s6707
        // Predicated region
        $region45: #{tpu_custom_call.1} parent=31 // pred_check
          %p6709 = pneg %p107
        $region46: #{tpu_custom_call.1} parent=31 // pred_check_branch
          %6711 = sbr.rel (%p6709) target = $region48
        $region47: #{tpu_custom_call.1} parent=31 // pred_region
          %s6712 = smul.u32 32, %s21
          %s6714 = ssub.s32 12288, 12288
          %6715 = vsyncadd %s6705, %s6714
          %s6716 = smul.addr %s6712, 3
          %s6717 = smul.addr %s6716, 128
          %s6718 = scalar_lea.hbm %s3, %s6717
          %s6719 = sshll.u32 %s6708, 4
          %s6720 = int_to_ptr.vmem [resolvable:$true] %s6719
          %6725 = dma.vmem_to_hbm [thread:$0]  %s6720, 12288, %s6718, %s6705, 384, 384, 24
        $region48: #{tpu_custom_call.1} parent=31 // pred_fallthru
          _
      $region32: #{tpu_custom_call.1} parent=5 // pred_fallthru
        _
      %p6726 = scmp.le.s32.totalorder 2, %s16
      // Predicated region
      $region49: #{tpu_custom_call.1} parent=5 // pred_check
        %p6727 = pneg %p6726
      $region50: #{tpu_custom_call.1} parent=5 // pred_check_branch
        %6729 = sbr.rel (%p6727) target = $region52
      $region51: #{tpu_custom_call.1} parent=5 // pred_region
        %s6730 = ssub.s32 %s16, 2
        // Predicated region
        $region53: #{tpu_custom_call.1} parent=51 // pred_check
          %p6731 = pneg %p113
        $region54: #{tpu_custom_call.1} parent=51 // pred_check_branch
          %6733 = sbr.rel (%p6731) target = $region56
        $region55: #{tpu_custom_call.1} parent=51 // pred_region
          %s6734 = sand.u32 %s98, 1
          %s6735 = scalar_lea.sflag [#allocation4], %s6734
          %s6736 = sand.u32 %s98, 1
          %s6737 = smul.addr %s6736, 768
          %s6738 = scalar_lea.vmem [#allocation8], %s6737
          %6739 = dma.done %s6735, 12288
        $region56: #{tpu_custom_call.1} parent=51 // pred_fallthru
          _
      $region52: #{tpu_custom_call.1} parent=5 // pred_fallthru
        _
    $region6: #{tpu_custom_call.1} parent=1 // loop_footer
      %s20 = sadd.s32 1, %s16
    $region7: #{tpu_custom_call.1} parent=1 // loop_footer_branch
      %15 = sbr.rel target = $region3
    $region8: #{tpu_custom_call.1} parent=1 // loop_exit
      _
    %6740 = vsyncpa [#allocation3], 1
    %s6741 = scalar_lea.sflag [#allocation3], 1
    %6742 = vsyncpa %s6741, 1
    %6743 = vsyncpa [#allocation6], 1
    %6744 = vsyncpa [#allocation4], 1
    %s6745 = scalar_lea.sflag [#allocation4], 1
    %6746 = vsyncpa %s6745, 1

</llo_original>
